<compile_context>
chip_gen: v7x
topology: tpu7x:2x2x1
jax: 0.10.0
libtpu: 0.0.40
codegen_flags: <defaults>
</compile_context>

<pallas_src>
import jax
import jax.numpy as jnp
from jax.experimental import pallas as pl
from jax.experimental.pallas import tpu as pltpu

_H1, _H2 = 64, 32
_LANES = 128
_ROW_GROUP = 8 * _LANES     # 1024 rows: lane-dense out block stays (8,128)-aligned


# --------------------------------------------------------------------------- #
# Kernels
# --------------------------------------------------------------------------- #
def _mlp_hidden(x_ref, w1_ref, b1_ref, w2_ref, b2_ref):
    x = x_ref[...]                                                     # (tb, D)
    h1 = jnp.dot(x, w1_ref[...], preferred_element_type=jnp.float32)   # (tb, 64)
    h1 = jnp.maximum(h1 + b1_ref[...], 0.0)
    # Dropout(0.2): identity in eval mode.
    h2 = jnp.dot(h1, w2_ref[...], preferred_element_type=jnp.float32)  # (tb, 32)
    h2 = jnp.maximum(h2 + b2_ref[...], 0.0)
    # Dropout(0.2): identity in eval mode.
    return h2


def _mlp_kernel_dense(x_ref, w1_ref, b1_ref, w2_ref, b2_ref, w3r_ref, b3_ref,
                      o_ref):
    """Lane-dense output.  o_ref block is (tb//128, 128); batch row r of this
    tile maps to o_ref[r // 128, r % 128].  Layer 3 (output width 1) is a VPU
    multiply + XLU reduce over the feature axis; the sublane->lane relayout of
    the narrow result is folded into the reduce (XLU slot is idle here)."""
    h2 = _mlp_hidden(x_ref, w1_ref, b1_ref, w2_ref, b2_ref)            # (tb, 32) f32
    prod = h2 * w3r_ref[...]                                           # (tb, 32)
    nb, lanes = o_ref.shape                                            # static
    prod3 = prod.reshape(nb, lanes, prod.shape[-1])                    # minor dim kept -> free
    o_ref[...] = jnp.sum(prod3, axis=-1) + b3_ref[...]                 # (nb, 128)


def _mlp_kernel_narrow(x_ref, w1_ref, b1_ref, w2_ref, b2_ref, w3r_ref, b3_ref,
                       o_ref):
    """Fallback: (tb, 1) output (lane-sparse, masked stores).  Known-good."""
    h2 = _mlp_hidden(x_ref, w1_ref, b1_ref, w2_ref, b2_ref)
    y = jnp.sum(h2 * w3r_ref[...], axis=-1, keepdims=True)             # (tb, 1)
    o_ref[...] = y + b3_ref[...]


# --------------------------------------------------------------------------- #
# Tiling / VMEM budgets
# --------------------------------------------------------------------------- #
def _vmem_limits():
    """Generation-aware budgets (v7x: 64 MiB physical VMEM, v5e/v6e: 128 MiB)."""
    try:
        cap = int(pltpu.get_tpu_info().vmem_capacity_bytes)
    except Exception:
        cap = 64 << 20                                   # conservative (v7x)
    vmem_limit = min((cap * 3) // 4, 100 << 20)          # ~48 MiB v7x, ~96 MiB v5e/v6e
    tile_budget = (vmem_limit * 2) // 3                  # headroom for weights/temps
    return vmem_limit, tile_budget


def _pick_batch_tile(B, D, x_itemsize, tile_budget):
    """Batch rows per grid step, sized by bytes.  Returns (tb, lane_dense)."""
    # x double-buffer + h1/h2/prod (each lane-padded to 128 f32) + dense out db.
    per_row = 2 * D * x_itemsize + 3 * _LANES * 4 + 2 * 4
    tb = (tile_budget // per_row // _ROW_GROUP) * _ROW_GROUP
    if tb >= _ROW_GROUP:
        tb = min(tb, 16 * _ROW_GROUP)                    # 16K-row ceiling
        # v7x megacore: keep >= 2 roughly balanced grid steps for large B,
        # and do not force tiny batches to pad past one row-group.
        half_rounded = -(-(-(-B // 2)) // _ROW_GROUP) * _ROW_GROUP
        tb = min(tb, max(_ROW_GROUP, half_rounded))
        return tb, True
    # Very large D: a 1024-row lane-dense tile does not fit the budget; use the
    # narrow-output kernel with a tile that is only a multiple of 8 rows.
    per_row = 2 * D * x_itemsize + 3 * _LANES * 4 + 2 * _LANES * 4
    tb = max(8, (tile_budget // per_row // 8) * 8)
    return tb, False


# --------------------------------------------------------------------------- #
# pallas_call wrapper
# --------------------------------------------------------------------------- #
def _const_spec(a):
    # Whole-array block, constant index -> DMA'd once, VMEM-resident across tiles.
    nd = a.ndim
    return pl.BlockSpec(a.shape, lambda i, _nd=nd: (0,) * _nd)


def _call(kernel, x, w1, b1, w2, b2, w3_row, b3, *, tb, lane_dense, vmem_limit):
    B_run, D = x.shape
    grid_n = pl.cdiv(B_run, tb)

    if lane_dense:
        nb_rows = pl.cdiv(B_run, _LANES)
        out_shape = jax.ShapeDtypeStruct((nb_rows, _LANES), jnp.float32)
        out_spec = pl.BlockSpec((tb // _LANES, _LANES), lambda i: (i, 0))
    else:
        out_shape = jax.ShapeDtypeStruct((B_run, 1), jnp.float32)
        out_spec = pl.BlockSpec((tb, 1), lambda i: (i, 0))

    weight_bytes = sum(int(a.size) * a.dtype.itemsize
                       for a in (w1, b1, w2, b2, w3_row, b3))
    cost = pl.CostEstimate(
        flops=2 * B_run * (D * _H1 + _H1 * _H2 + _H2),
        transcendentals=0,
        bytes_accessed=B_run * D * x.dtype.itemsize + B_run * 4 + weight_bytes,
    )

    out = pl.pallas_call(
        kernel,
        out_shape=out_shape,
        grid=(grid_n,),
        in_specs=[
            pl.BlockSpec((tb, D), lambda i: (i, 0)),     # x streams through VMEM
            _const_spec(w1), _const_spec(b1),
            _const_spec(w2), _const_spec(b2),
            _const_spec(w3_row), _const_spec(b3),
        ],
        out_specs=out_spec,
        compiler_params=pltpu.CompilerParams(
            dimension_semantics=("parallel",),           # megacore on v7x
            vmem_limit_bytes=vmem_limit,
        ),
        cost_estimate=cost,
    )(x, w1, b1, w2, b2, w3_row, b3)

    if lane_dense:
        out = out.reshape(-1, 1)                         # (nb_rows*128, 1), tiny
    return out


def regressor_forward(x, params):
    """x: (B, input_size).  params: (in, out) weights + (1, out) biases."""
    B, D = x.shape
    w1, b1, w2, b2, w3, b3 = (params["w1"], params["b1"], params["w2"],
                              params["b2"], params["w3"], params["b3"])
    assert w1.shape == (D, _H1), (w1.shape, D)

    # Matmul operands follow x's dtype (bf16 callers halve the x HBM stream);
    # biases / layer-3 weights / accumulation stay f32.
    w1 = w1.astype(x.dtype)
    w2 = w2.astype(x.dtype)
    b1 = b1.astype(jnp.float32).reshape(1, _H1)
    b2 = b2.astype(jnp.float32).reshape(1, _H2)
    w3_row = w3.astype(jnp.float32).reshape(1, _H2)
    b3 = b3.astype(jnp.float32).reshape(1, 1)

    vmem_limit, tile_budget = _vmem_limits()
    tb, lane_dense = _pick_batch_tile(B, D, x.dtype.itemsize, tile_budget)

    # Only tiny batches (smaller than one tile) are padded; large batches are
    # NOT padded (no extra HBM copy of the dominant stream) — the ragged final
    # block is safe because rows are independent and out-of-range output rows
    # are never written back.
    if B < tb:
        x = jnp.pad(x, ((0, tb - B), (0, 0)))

    args = (x, w1, b1, w2, b2, w3_row, b3)
    if lane_dense:
        try:
            out = _call(_mlp_kernel_dense, *args,
                        tb=tb, lane_dense=True, vmem_limit=vmem_limit)
            return out[:B]
        except Exception:
            # Defensive: if the lane-dense sublane->lane relayout does not
            # lower on this jax/Mosaic version, use the known-good narrow path.
            pass
    out = _call(_mlp_kernel_narrow, *args,
                tb=tb, lane_dense=False, vmem_limit=vmem_limit)
    return out[:B]


# --------------------------------------------------------------------------- #
# Reference, init, demo
# --------------------------------------------------------------------------- #
def init_params(key, input_size):
    """nn.Linear-style init (uniform +/- 1/sqrt(fan_in)); weights stored (in, out)."""
    ks = jax.random.split(key, 6)

    def linear(kw, kb, fan_in, fan_out):
        bound = 1.0 / jnp.sqrt(jnp.float32(fan_in))
        w = jax.random.uniform(kw, (fan_in, fan_out), jnp.float32, -bound, bound)
        b = jax.random.uniform(kb, (1, fan_out), jnp.float32, -bound, bound)
        return w, b

    w1, b1 = linear(ks[0], ks[1], input_size, _H1)
    w2, b2 = linear(ks[2], ks[3], _H1, _H2)
    w3, b3 = linear(ks[4], ks[5], _H2, 1)
    return dict(w1=w1, b1=b1, w2=w2, b2=b2, w3=w3, b3=b3)


def regressor_ref(x, p):
    """Pure-JAX reference (eval-mode dropout = identity)."""
    h1 = jnp.maximum(x @ p["w1"] + p["b1"], 0.0)
    h2 = jnp.maximum(h1 @ p["w2"] + p["b2"], 0.0)
    return h2 @ p["w3"] + p["b3"]


if __name__ == "__main__":
    key = jax.random.PRNGKey(0)
    k_x, k_p = jax.random.split(key)

    batch = 8
    input_size = 32
    x = jax.random.normal(k_x, (batch, input_size), jnp.float32)
    params = init_params(k_p, input_size)

    out = jax.block_until_ready(regressor_forward(x, params))
    ref = regressor_ref(x, params)
    assert out.shape == (batch, 1), out.shape
    assert jnp.allclose(out, ref, atol=1e-5, rtol=1e-5), (
        float(jnp.max(jnp.abs(out - ref))))

    # Batch that is not a multiple of 8/128 (exercises the small-batch pad path).
    x2 = jax.random.normal(k_x, (13, input_size), jnp.float32)
    out2 = jax.block_until_ready(regressor_forward(x2, params))
    ref2 = regressor_ref(x2, params)
    assert out2.shape == (13, 1), out2.shape
    assert jnp.allclose(out2, ref2, atol=1e-5, rtol=1e-5), (
        float(jnp.max(jnp.abs(out2 - ref2))))

    print("KERNEL_OK")
</pallas_src>

<mosaic_0001>
module attributes {stable_mosaic.version = 11 : i64} {
  func.func @_mlp_kernel_dense(%arg0: i32, %arg1: memref<1024x32xf32, #tpu.memory_space<vmem>>, %arg2: memref<32x64xf32, #tpu.memory_space<vmem>>, %arg3: memref<1x64xf32, #tpu.memory_space<vmem>>, %arg4: memref<64x32xf32, #tpu.memory_space<vmem>>, %arg5: memref<1x32xf32, #tpu.memory_space<vmem>>, %arg6: memref<1x32xf32, #tpu.memory_space<vmem>>, %arg7: memref<1x1xf32, #tpu.memory_space<vmem>>, %arg8: memref<8x128xf32, #tpu.memory_space<vmem>>) attributes {dimension_semantics = [#tpu.dimension_semantics<parallel>], iteration_bounds = array<i64: 1>, scalar_prefetch = 0 : i64, scratch_operands = 0 : i64, tpu.core_type = #tpu.core_type<tc>, window_params = [{transform_indices = @transform_0, window_bounds = array<i64: 1024, 32>}, {pipeline_mode = #tpu.pipeline_mode<synchronous>, transform_indices = @transform_1, window_bounds = array<i64: 32, 64>}, {pipeline_mode = #tpu.pipeline_mode<synchronous>, transform_indices = @transform_2, window_bounds = array<i64: 1, 64>}, {pipeline_mode = #tpu.pipeline_mode<synchronous>, transform_indices = @transform_3, window_bounds = array<i64: 64, 32>}, {pipeline_mode = #tpu.pipeline_mode<synchronous>, transform_indices = @transform_4, window_bounds = array<i64: 1, 32>}, {pipeline_mode = #tpu.pipeline_mode<synchronous>, transform_indices = @transform_5, window_bounds = array<i64: 1, 32>}, {pipeline_mode = #tpu.pipeline_mode<synchronous>, transform_indices = @transform_6, window_bounds = array<i64: 1, 1>}, {transform_indices = @transform_7, window_bounds = array<i64: 8, 128>}]} {
    %c0 = arith.constant 0 : index
    %c0_0 = arith.constant 0 : index
    %0 = vector.load %arg1[%c0, %c0_0] : memref<1024x32xf32, #tpu.memory_space<vmem>>, vector<1024x32xf32>
    %c0_1 = arith.constant 0 : index
    %c0_2 = arith.constant 0 : index
    %1 = vector.load %arg2[%c0_1, %c0_2] : memref<32x64xf32, #tpu.memory_space<vmem>>, vector<32x64xf32>
    %cst = arith.constant dense<0.000000e+00> : vector<1024x64xf32>
    %2 = tpu.matmul %0, %1, %cst {dimension_numbers = #tpu.dot_dimension_numbers<[1], [0], [0], [1], [0, 0, 1, 1], [], []>} : vector<1024x32xf32>, vector<32x64xf32>, vector<1024x64xf32> -> vector<1024x64xf32>
    %c0_3 = arith.constant 0 : index
    %c0_4 = arith.constant 0 : index
    %3 = vector.load %arg3[%c0_3, %c0_4] : memref<1x64xf32, #tpu.memory_space<vmem>>, vector<1x64xf32>
    %4 = vector.broadcast %3 : vector<1x64xf32> to vector<1024x64xf32>
    %5 = arith.addf %2, %4 : vector<1024x64xf32>
    %cst_5 = arith.constant 0.000000e+00 : f32
    %6 = vector.broadcast %cst_5 : f32 to vector<1024x64xf32>
    %7 = arith.maximumf %5, %6 : vector<1024x64xf32>
    %c0_6 = arith.constant 0 : index
    %c0_7 = arith.constant 0 : index
    %8 = vector.load %arg4[%c0_6, %c0_7] : memref<64x32xf32, #tpu.memory_space<vmem>>, vector<64x32xf32>
    %cst_8 = arith.constant dense<0.000000e+00> : vector<1024x32xf32>
    %9 = tpu.matmul %7, %8, %cst_8 {dimension_numbers = #tpu.dot_dimension_numbers<[1], [0], [0], [1], [0, 0, 1, 1], [], []>} : vector<1024x64xf32>, vector<64x32xf32>, vector<1024x32xf32> -> vector<1024x32xf32>
    %c0_9 = arith.constant 0 : index
    %c0_10 = arith.constant 0 : index
    %10 = vector.load %arg5[%c0_9, %c0_10] : memref<1x32xf32, #tpu.memory_space<vmem>>, vector<1x32xf32>
    %11 = vector.broadcast %10 : vector<1x32xf32> to vector<1024x32xf32>
    %12 = arith.addf %9, %11 : vector<1024x32xf32>
    %cst_11 = arith.constant 0.000000e+00 : f32
    %13 = vector.broadcast %cst_11 : f32 to vector<1024x32xf32>
    %14 = arith.maximumf %12, %13 : vector<1024x32xf32>
    %c0_12 = arith.constant 0 : index
    %c0_13 = arith.constant 0 : index
    %15 = vector.load %arg6[%c0_12, %c0_13] : memref<1x32xf32, #tpu.memory_space<vmem>>, vector<1x32xf32>
    %16 = vector.broadcast %15 : vector<1x32xf32> to vector<1024x32xf32>
    %17 = arith.mulf %14, %16 : vector<1024x32xf32>
    %18 = vector.shape_cast %17 : vector<1024x32xf32> to vector<8x128x32xf32>
    %cst_14 = arith.constant dense<0.000000e+00> : vector<8x128xf32>
    %19 = vector.multi_reduction <add>, %18, %cst_14 [2] : vector<8x128x32xf32> to vector<8x128xf32>
    %c0_15 = arith.constant 0 : index
    %c0_16 = arith.constant 0 : index
    %20 = vector.load %arg7[%c0_15, %c0_16] : memref<1x1xf32, #tpu.memory_space<vmem>>, vector<1x1xf32>
    %21 = vector.broadcast %20 : vector<1x1xf32> to vector<8x128xf32>
    %22 = arith.addf %19, %21 : vector<8x128xf32>
    %c0_17 = arith.constant 0 : index
    %c0_18 = arith.constant 0 : index
    %23 = vector.load %arg8[%c0_17, %c0_18] : memref<8x128xf32, #tpu.memory_space<vmem>>, vector<8x128xf32>
    tpu.vector_store %arg8[%c0_17, %c0_18], %22 {strides = array<i32>} : memref<8x128xf32, #tpu.memory_space<vmem>>, vector<8x128xf32>,
    return
  }
  func.func @transform_0(%arg0: i32) -> (i32, i32) {
    %c0_i32 = arith.constant 0 : i32
    %c0_i32_0 = arith.constant 0 : i32
    return %arg0, %c0_i32 : i32, i32
  }
  func.func @transform_1(%arg0: i32) -> (i32, i32) {
    %c0_i32 = arith.constant 0 : i32
    %c0_i32_0 = arith.constant 0 : i32
    %c0_i32_1 = arith.constant 0 : i32
    return %c0_i32, %c0_i32_0 : i32, i32
  }
  func.func @transform_2(%arg0: i32) -> (i32, i32) {
    %c0_i32 = arith.constant 0 : i32
    %c0_i32_0 = arith.constant 0 : i32
    %c0_i32_1 = arith.constant 0 : i32
    return %c0_i32, %c0_i32_0 : i32, i32
  }
  func.func @transform_3(%arg0: i32) -> (i32, i32) {
    %c0_i32 = arith.constant 0 : i32
    %c0_i32_0 = arith.constant 0 : i32
    %c0_i32_1 = arith.constant 0 : i32
    return %c0_i32, %c0_i32_0 : i32, i32
  }
  func.func @transform_4(%arg0: i32) -> (i32, i32) {
    %c0_i32 = arith.constant 0 : i32
    %c0_i32_0 = arith.constant 0 : i32
    %c0_i32_1 = arith.constant 0 : i32
    return %c0_i32, %c0_i32_0 : i32, i32
  }
  func.func @transform_5(%arg0: i32) -> (i32, i32) {
    %c0_i32 = arith.constant 0 : i32
    %c0_i32_0 = arith.constant 0 : i32
    %c0_i32_1 = arith.constant 0 : i32
    return %c0_i32, %c0_i32_0 : i32, i32
  }
  func.func @transform_6(%arg0: i32) -> (i32, i32) {
    %c0_i32 = arith.constant 0 : i32
    %c0_i32_0 = arith.constant 0 : i32
    %c0_i32_1 = arith.constant 0 : i32
    return %c0_i32, %c0_i32_0 : i32, i32
  }
  func.func @transform_7(%arg0: i32) -> (i32, i32) {
    %c0_i32 = arith.constant 0 : i32
    %c0_i32_0 = arith.constant 0 : i32
    return %arg0, %c0_i32 : i32, i32
  }
}

module attributes {stable_mosaic.version = 11 : i64} {
  func.func @_mlp_kernel_narrow(%arg0: i32, %arg1: memref<1024x32xf32, #tpu.memory_space<vmem>>, %arg2: memref<32x64xf32, #tpu.memory_space<vmem>>, %arg3: memref<1x64xf32, #tpu.memory_space<vmem>>, %arg4: memref<64x32xf32, #tpu.memory_space<vmem>>, %arg5: memref<1x32xf32, #tpu.memory_space<vmem>>, %arg6: memref<1x32xf32, #tpu.memory_space<vmem>>, %arg7: memref<1x1xf32, #tpu.memory_space<vmem>>, %arg8: memref<1024x1xf32, #tpu.memory_space<vmem>>) attributes {dimension_semantics = [#tpu.dimension_semantics<parallel>], iteration_bounds = array<i64: 1>, scalar_prefetch = 0 : i64, scratch_operands = 0 : i64, tpu.core_type = #tpu.core_type<tc>, window_params = [{transform_indices = @transform_0, window_bounds = array<i64: 1024, 32>}, {pipeline_mode = #tpu.pipeline_mode<synchronous>, transform_indices = @transform_1, window_bounds = array<i64: 32, 64>}, {pipeline_mode = #tpu.pipeline_mode<synchronous>, transform_indices = @transform_2, window_bounds = array<i64: 1, 64>}, {pipeline_mode = #tpu.pipeline_mode<synchronous>, transform_indices = @transform_3, window_bounds = array<i64: 64, 32>}, {pipeline_mode = #tpu.pipeline_mode<synchronous>, transform_indices = @transform_4, window_bounds = array<i64: 1, 32>}, {pipeline_mode = #tpu.pipeline_mode<synchronous>, transform_indices = @transform_5, window_bounds = array<i64: 1, 32>}, {pipeline_mode = #tpu.pipeline_mode<synchronous>, transform_indices = @transform_6, window_bounds = array<i64: 1, 1>}, {transform_indices = @transform_7, window_bounds = array<i64: 1024, 1>}]} {
    %c0 = arith.constant 0 : index
    %c0_0 = arith.constant 0 : index
    %0 = vector.load %arg1[%c0, %c0_0] : memref<1024x32xf32, #tpu.memory_space<vmem>>, vector<1024x32xf32>
    %c0_1 = arith.constant 0 : index
    %c0_2 = arith.constant 0 : index
    %1 = vector.load %arg2[%c0_1, %c0_2] : memref<32x64xf32, #tpu.memory_space<vmem>>, vector<32x64xf32>
    %cst = arith.constant dense<0.000000e+00> : vector<1024x64xf32>
    %2 = tpu.matmul %0, %1, %cst {dimension_numbers = #tpu.dot_dimension_numbers<[1], [0], [0], [1], [0, 0, 1, 1], [], []>} : vector<1024x32xf32>, vector<32x64xf32>, vector<1024x64xf32> -> vector<1024x64xf32>
    %c0_3 = arith.constant 0 : index
    %c0_4 = arith.constant 0 : index
    %3 = vector.load %arg3[%c0_3, %c0_4] : memref<1x64xf32, #tpu.memory_space<vmem>>, vector<1x64xf32>
    %4 = vector.broadcast %3 : vector<1x64xf32> to vector<1024x64xf32>
    %5 = arith.addf %2, %4 : vector<1024x64xf32>
    %cst_5 = arith.constant 0.000000e+00 : f32
    %6 = vector.broadcast %cst_5 : f32 to vector<1024x64xf32>
    %7 = arith.maximumf %5, %6 : vector<1024x64xf32>
    %c0_6 = arith.constant 0 : index
    %c0_7 = arith.constant 0 : index
    %8 = vector.load %arg4[%c0_6, %c0_7] : memref<64x32xf32, #tpu.memory_space<vmem>>, vector<64x32xf32>
    %cst_8 = arith.constant dense<0.000000e+00> : vector<1024x32xf32>
    %9 = tpu.matmul %7, %8, %cst_8 {dimension_numbers = #tpu.dot_dimension_numbers<[1], [0], [0], [1], [0, 0, 1, 1], [], []>} : vector<1024x64xf32>, vector<64x32xf32>, vector<1024x32xf32> -> vector<1024x32xf32>
    %c0_9 = arith.constant 0 : index
    %c0_10 = arith.constant 0 : index
    %10 = vector.load %arg5[%c0_9, %c0_10] : memref<1x32xf32, #tpu.memory_space<vmem>>, vector<1x32xf32>
    %11 = vector.broadcast %10 : vector<1x32xf32> to vector<1024x32xf32>
    %12 = arith.addf %9, %11 : vector<1024x32xf32>
    %cst_11 = arith.constant 0.000000e+00 : f32
    %13 = vector.broadcast %cst_11 : f32 to vector<1024x32xf32>
    %14 = arith.maximumf %12, %13 : vector<1024x32xf32>
    %c0_12 = arith.constant 0 : index
    %c0_13 = arith.constant 0 : index
    %15 = vector.load %arg6[%c0_12, %c0_13] : memref<1x32xf32, #tpu.memory_space<vmem>>, vector<1x32xf32>
    %16 = vector.broadcast %15 : vector<1x32xf32> to vector<1024x32xf32>
    %17 = arith.mulf %14, %16 : vector<1024x32xf32>
    %cst_14 = arith.constant dense<0.000000e+00> : vector<1024xf32>
    %18 = vector.multi_reduction <add>, %17, %cst_14 [1] : vector<1024x32xf32> to vector<1024xf32>
    %19 = vector.shape_cast %18 : vector<1024xf32> to vector<1024x1xf32>
    %c0_15 = arith.constant 0 : index
    %c0_16 = arith.constant 0 : index
    %20 = vector.load %arg7[%c0_15, %c0_16] : memref<1x1xf32, #tpu.memory_space<vmem>>, vector<1x1xf32>
    %21 = vector.broadcast %20 : vector<1x1xf32> to vector<1024x1xf32>
    %22 = arith.addf %19, %21 : vector<1024x1xf32>
    %c0_17 = arith.constant 0 : index
    %c0_18 = arith.constant 0 : index
    %23 = vector.load %arg8[%c0_17, %c0_18] : memref<1024x1xf32, #tpu.memory_space<vmem>>, vector<1024x1xf32>
    tpu.vector_store %arg8[%c0_17, %c0_18], %22 {strides = array<i32>} : memref<1024x1xf32, #tpu.memory_space<vmem>>, vector<1024x1xf32>,
    return
  }
  func.func @transform_0(%arg0: i32) -> (i32, i32) {
    %c0_i32 = arith.constant 0 : i32
    %c0_i32_0 = arith.constant 0 : i32
    return %arg0, %c0_i32 : i32, i32
  }
  func.func @transform_1(%arg0: i32) -> (i32, i32) {
    %c0_i32 = arith.constant 0 : i32
    %c0_i32_0 = arith.constant 0 : i32
    %c0_i32_1 = arith.constant 0 : i32
    return %c0_i32, %c0_i32_0 : i32, i32
  }
  func.func @transform_2(%arg0: i32) -> (i32, i32) {
    %c0_i32 = arith.constant 0 : i32
    %c0_i32_0 = arith.constant 0 : i32
    %c0_i32_1 = arith.constant 0 : i32
    return %c0_i32, %c0_i32_0 : i32, i32
  }
  func.func @transform_3(%arg0: i32) -> (i32, i32) {
    %c0_i32 = arith.constant 0 : i32
    %c0_i32_0 = arith.constant 0 : i32
    %c0_i32_1 = arith.constant 0 : i32
    return %c0_i32, %c0_i32_0 : i32, i32
  }
  func.func @transform_4(%arg0: i32) -> (i32, i32) {
    %c0_i32 = arith.constant 0 : i32
    %c0_i32_0 = arith.constant 0 : i32
    %c0_i32_1 = arith.constant 0 : i32
    return %c0_i32, %c0_i32_0 : i32, i32
  }
  func.func @transform_5(%arg0: i32) -> (i32, i32) {
    %c0_i32 = arith.constant 0 : i32
    %c0_i32_0 = arith.constant 0 : i32
    %c0_i32_1 = arith.constant 0 : i32
    return %c0_i32, %c0_i32_0 : i32, i32
  }
  func.func @transform_6(%arg0: i32) -> (i32, i32) {
    %c0_i32 = arith.constant 0 : i32
    %c0_i32_0 = arith.constant 0 : i32
    %c0_i32_1 = arith.constant 0 : i32
    return %c0_i32, %c0_i32_0 : i32, i32
  }
  func.func @transform_7(%arg0: i32) -> (i32, i32) {
    %c0_i32 = arith.constant 0 : i32
    %c0_i32_0 = arith.constant 0 : i32
    return %arg0, %c0_i32 : i32, i32
  }
}

</mosaic_0001>

<llo_original>
// kernel: tpu_custom_call.1
$region0: #{tpu_custom_call.1}
  #allocation0 [shape = 'u32[]', space=smem, size = 0x4, offset = 0x4, fixed_abs, tag = 'smem constant byte address 0x4 - core index']
  #allocation1 [shape = 'u32[144,128]{1,0:T(1,128)}', space=vmem, size = 0x12000, scoped, tag = 'internal scratch']
  #allocation2 [shape = 'f32[1,1]{1,0:T(1,128)S(1)}', space=vmem, size = 0x200, scoped, tag = 'scoped memory for tpu_custom_call.1']
  %s0 = inlined_call_operand.vmem [shape: f32[1024,32], index: 0, kind: input, shape index: {}]
  %s1 = inlined_call_operand.vmem [shape: f32[32,64], index: 1, kind: input, shape index: {}]
  %s2 = inlined_call_operand.vmem [shape: f32[1,64], index: 2, kind: input, shape index: {}]
  %s3 = inlined_call_operand.vmem [shape: f32[64,32], index: 3, kind: input, shape index: {}]
  %s4 = inlined_call_operand.vmem [shape: f32[1,32], index: 4, kind: input, shape index: {}]
  %s5 = inlined_call_operand.vmem [shape: f32[1,32], index: 5, kind: input, shape index: {}]
  %s6 = inlined_call_operand.<no memory space> [shape: f32[1,1], index: 6, kind: input, shape index: {}]
  %s7 = inlined_call_operand.hbm [shape: f32[8,128], index: 7, kind: output, shape index: {}]
  %s8 = sld [smem:[#allocation0]]
  $region38: #{tpu_custom_call.1} parent=0
    _
  %s10 = ssub.s32 1, %s8
  %s11 = scalar_select 0, %s10, %s8
  %v12 = vstv %s6
  %13 = vst [vmem:[#allocation2] sm:$0x1] %v12
  $region1: #{tpu_custom_call.1} parent=0
    #allocation3 [shape = 'u8[4096]{0}', space=vmem, size = 0x1000, scoped, tag = 'output window, operand 0, single buffered']
    #allocation4 [shape = 's32[1]{0}', space=sflag, size = 0x4, scoped, tag = 'scoped memory for tpu_custom_call.1']
    %14 = vsyncpa [#allocation4], 0
    // Predicated region
    $region2: #{tpu_custom_call.1} parent=1 // pred_check
      _
    $region3: #{tpu_custom_call.1} parent=1 // pred_check_branch
      %16 = sbr.rel (0) target = $region5
    $region4: #{tpu_custom_call.1} parent=1 // pred_region
      _
    $region5: #{tpu_custom_call.1} parent=1 // pred_fallthru
      _
    // Predicated region
    $region6: #{tpu_custom_call.1} parent=1 // pred_check
      _
    $region7: #{tpu_custom_call.1} parent=1 // pred_check_branch
      %18 = sbr.rel (0) target = $region9
    $region8: #{tpu_custom_call.1} parent=1 // pred_region
      _
    $region9: #{tpu_custom_call.1} parent=1 // pred_fallthru
      _
    // Predicated region
    $region10: #{tpu_custom_call.1} parent=1 // pred_check
      _
    $region11: #{tpu_custom_call.1} parent=1 // pred_check_branch
      %20 = sbr.rel (0) target = $region13
    $region12: #{tpu_custom_call.1} parent=1 // pred_region
      _
    $region13: #{tpu_custom_call.1} parent=1 // pred_fallthru
      _
    // Predicated region
    $region14: #{tpu_custom_call.1} parent=1 // pred_check
      _
    $region15: #{tpu_custom_call.1} parent=1 // pred_check_branch
      %22 = sbr.rel (0) target = $region17
    $region16: #{tpu_custom_call.1} parent=1 // pred_region
      _
    $region17: #{tpu_custom_call.1} parent=1 // pred_fallthru
      _
    // Predicated region
    $region18: #{tpu_custom_call.1} parent=1 // pred_check
      _
    $region19: #{tpu_custom_call.1} parent=1 // pred_check_branch
      %24 = sbr.rel (0) target = $region21
    $region20: #{tpu_custom_call.1} parent=1 // pred_region
      _
    $region21: #{tpu_custom_call.1} parent=1 // pred_fallthru
      _
    // Predicated region
    $region22: #{tpu_custom_call.1} parent=1 // pred_check
      _
    $region23: #{tpu_custom_call.1} parent=1 // pred_check_branch
      %26 = sbr.rel (0) target = $region25
    $region24: #{tpu_custom_call.1} parent=1 // pred_region
      _
    $region25: #{tpu_custom_call.1} parent=1 // pred_fallthru
      _
    // Predicated region
    $region26: #{tpu_custom_call.1} parent=1 // pred_check
      _
    $region27: #{tpu_custom_call.1} parent=1 // pred_check_branch
      %28 = sbr.rel (0) target = $region29
    $region28: #{tpu_custom_call.1} parent=1 // pred_region
      _
    $region29: #{tpu_custom_call.1} parent=1 // pred_fallthru
      _
    %v29 = vld [vmem:[%s0] sm:$0xff]
    %v30 = vld [vmem:[%s0 + $0x8] sm:$0xff]
    %v31 = vld [vmem:[%s0 + $0x10] sm:$0xff]
    %v32 = vld [vmem:[%s0 + $0x18] sm:$0xff]
    %v33 = vld [vmem:[%s0 + $0x20] sm:$0xff]
    %v34 = vld [vmem:[%s0 + $0x28] sm:$0xff]
    %v35 = vld [vmem:[%s0 + $0x30] sm:$0xff]
    %v36 = vld [vmem:[%s0 + $0x38] sm:$0xff]
    %v37 = vld [vmem:[%s0 + $0x40] sm:$0xff]
    %v38 = vld [vmem:[%s0 + $0x48] sm:$0xff]
    %v39 = vld [vmem:[%s0 + $0x50] sm:$0xff]
    %v40 = vld [vmem:[%s0 + $0x58] sm:$0xff]
    %v41 = vld [vmem:[%s0 + $0x60] sm:$0xff]
    %v42 = vld [vmem:[%s0 + $0x68] sm:$0xff]
    %v43 = vld [vmem:[%s0 + $0x70] sm:$0xff]
    %v44 = vld [vmem:[%s0 + $0x78] sm:$0xff]
    %v45 = vld [vmem:[%s0 + $0x80] sm:$0xff]
    %v46 = vld [vmem:[%s0 + $0x88] sm:$0xff]
    %v47 = vld [vmem:[%s0 + $0x90] sm:$0xff]
    %v48 = vld [vmem:[%s0 + $0x98] sm:$0xff]
    %v49 = vld [vmem:[%s0 + $0xa0] sm:$0xff]
    %v50 = vld [vmem:[%s0 + $0xa8] sm:$0xff]
    %v51 = vld [vmem:[%s0 + $0xb0] sm:$0xff]
    %v52 = vld [vmem:[%s0 + $0xb8] sm:$0xff]
    %v53 = vld [vmem:[%s0 + $0xc0] sm:$0xff]
    %v54 = vld [vmem:[%s0 + $0xc8] sm:$0xff]
    %v55 = vld [vmem:[%s0 + $0xd0] sm:$0xff]
    %v56 = vld [vmem:[%s0 + $0xd8] sm:$0xff]
    %v57 = vld [vmem:[%s0 + $0xe0] sm:$0xff]
    %v58 = vld [vmem:[%s0 + $0xe8] sm:$0xff]
    %v59 = vld [vmem:[%s0 + $0xf0] sm:$0xff]
    %v60 = vld [vmem:[%s0 + $0xf8] sm:$0xff]
    %v61 = vld [vmem:[%s0 + $0x100] sm:$0xff]
    %v62 = vld [vmem:[%s0 + $0x108] sm:$0xff]
    %v63 = vld [vmem:[%s0 + $0x110] sm:$0xff]
    %v64 = vld [vmem:[%s0 + $0x118] sm:$0xff]
    %v65 = vld [vmem:[%s0 + $0x120] sm:$0xff]
    %v66 = vld [vmem:[%s0 + $0x128] sm:$0xff]
    %v67 = vld [vmem:[%s0 + $0x130] sm:$0xff]
    %v68 = vld [vmem:[%s0 + $0x138] sm:$0xff]
    %v69 = vld [vmem:[%s0 + $0x140] sm:$0xff]
    %v70 = vld [vmem:[%s0 + $0x148] sm:$0xff]
    %v71 = vld [vmem:[%s0 + $0x150] sm:$0xff]
    %v72 = vld [vmem:[%s0 + $0x158] sm:$0xff]
    %v73 = vld [vmem:[%s0 + $0x160] sm:$0xff]
    %v74 = vld [vmem:[%s0 + $0x168] sm:$0xff]
    %v75 = vld [vmem:[%s0 + $0x170] sm:$0xff]
    %v76 = vld [vmem:[%s0 + $0x178] sm:$0xff]
    %v77 = vld [vmem:[%s0 + $0x180] sm:$0xff]
    %v78 = vld [vmem:[%s0 + $0x188] sm:$0xff]
    %v79 = vld [vmem:[%s0 + $0x190] sm:$0xff]
    %v80 = vld [vmem:[%s0 + $0x198] sm:$0xff]
    %v81 = vld [vmem:[%s0 + $0x1a0] sm:$0xff]
    %v82 = vld [vmem:[%s0 + $0x1a8] sm:$0xff]
    %v83 = vld [vmem:[%s0 + $0x1b0] sm:$0xff]
    %v84 = vld [vmem:[%s0 + $0x1b8] sm:$0xff]
    %v85 = vld [vmem:[%s0 + $0x1c0] sm:$0xff]
    %v86 = vld [vmem:[%s0 + $0x1c8] sm:$0xff]
    %v87 = vld [vmem:[%s0 + $0x1d0] sm:$0xff]
    %v88 = vld [vmem:[%s0 + $0x1d8] sm:$0xff]
    %v89 = vld [vmem:[%s0 + $0x1e0] sm:$0xff]
    %v90 = vld [vmem:[%s0 + $0x1e8] sm:$0xff]
    %v91 = vld [vmem:[%s0 + $0x1f0] sm:$0xff]
    %v92 = vld [vmem:[%s0 + $0x1f8] sm:$0xff]
    %v93 = vld [vmem:[%s0 + $0x200] sm:$0xff]
    %v94 = vld [vmem:[%s0 + $0x208] sm:$0xff]
    %v95 = vld [vmem:[%s0 + $0x210] sm:$0xff]
    %v96 = vld [vmem:[%s0 + $0x218] sm:$0xff]
    %v97 = vld [vmem:[%s0 + $0x220] sm:$0xff]
    %v98 = vld [vmem:[%s0 + $0x228] sm:$0xff]
    %v99 = vld [vmem:[%s0 + $0x230] sm:$0xff]
    %v100 = vld [vmem:[%s0 + $0x238] sm:$0xff]
    %v101 = vld [vmem:[%s0 + $0x240] sm:$0xff]
    %v102 = vld [vmem:[%s0 + $0x248] sm:$0xff]
    %v103 = vld [vmem:[%s0 + $0x250] sm:$0xff]
    %v104 = vld [vmem:[%s0 + $0x258] sm:$0xff]
    %v105 = vld [vmem:[%s0 + $0x260] sm:$0xff]
    %v106 = vld [vmem:[%s0 + $0x268] sm:$0xff]
    %v107 = vld [vmem:[%s0 + $0x270] sm:$0xff]
    %v108 = vld [vmem:[%s0 + $0x278] sm:$0xff]
    %v109 = vld [vmem:[%s0 + $0x280] sm:$0xff]
    %v110 = vld [vmem:[%s0 + $0x288] sm:$0xff]
    %v111 = vld [vmem:[%s0 + $0x290] sm:$0xff]
    %v112 = vld [vmem:[%s0 + $0x298] sm:$0xff]
    %v113 = vld [vmem:[%s0 + $0x2a0] sm:$0xff]
    %v114 = vld [vmem:[%s0 + $0x2a8] sm:$0xff]
    %v115 = vld [vmem:[%s0 + $0x2b0] sm:$0xff]
    %v116 = vld [vmem:[%s0 + $0x2b8] sm:$0xff]
    %v117 = vld [vmem:[%s0 + $0x2c0] sm:$0xff]
    %v118 = vld [vmem:[%s0 + $0x2c8] sm:$0xff]
    %v119 = vld [vmem:[%s0 + $0x2d0] sm:$0xff]
    %v120 = vld [vmem:[%s0 + $0x2d8] sm:$0xff]
    %v121 = vld [vmem:[%s0 + $0x2e0] sm:$0xff]
    %v122 = vld [vmem:[%s0 + $0x2e8] sm:$0xff]
    %v123 = vld [vmem:[%s0 + $0x2f0] sm:$0xff]
    %v124 = vld [vmem:[%s0 + $0x2f8] sm:$0xff]
    %v125 = vld [vmem:[%s0 + $0x300] sm:$0xff]
    %v126 = vld [vmem:[%s0 + $0x308] sm:$0xff]
    %v127 = vld [vmem:[%s0 + $0x310] sm:$0xff]
    %v128 = vld [vmem:[%s0 + $0x318] sm:$0xff]
    %v129 = vld [vmem:[%s0 + $0x320] sm:$0xff]
    %v130 = vld [vmem:[%s0 + $0x328] sm:$0xff]
    %v131 = vld [vmem:[%s0 + $0x330] sm:$0xff]
    %v132 = vld [vmem:[%s0 + $0x338] sm:$0xff]
    %v133 = vld [vmem:[%s0 + $0x340] sm:$0xff]
    %v134 = vld [vmem:[%s0 + $0x348] sm:$0xff]
    %v135 = vld [vmem:[%s0 + $0x350] sm:$0xff]
    %v136 = vld [vmem:[%s0 + $0x358] sm:$0xff]
    %v137 = vld [vmem:[%s0 + $0x360] sm:$0xff]
    %v138 = vld [vmem:[%s0 + $0x368] sm:$0xff]
    %v139 = vld [vmem:[%s0 + $0x370] sm:$0xff]
    %v140 = vld [vmem:[%s0 + $0x378] sm:$0xff]
    %v141 = vld [vmem:[%s0 + $0x380] sm:$0xff]
    %v142 = vld [vmem:[%s0 + $0x388] sm:$0xff]
    %v143 = vld [vmem:[%s0 + $0x390] sm:$0xff]
    %v144 = vld [vmem:[%s0 + $0x398] sm:$0xff]
    %v145 = vld [vmem:[%s0 + $0x3a0] sm:$0xff]
    %v146 = vld [vmem:[%s0 + $0x3a8] sm:$0xff]
    %v147 = vld [vmem:[%s0 + $0x3b0] sm:$0xff]
    %v148 = vld [vmem:[%s0 + $0x3b8] sm:$0xff]
    %v149 = vld [vmem:[%s0 + $0x3c0] sm:$0xff]
    %v150 = vld [vmem:[%s0 + $0x3c8] sm:$0xff]
    %v151 = vld [vmem:[%s0 + $0x3d0] sm:$0xff]
    %v152 = vld [vmem:[%s0 + $0x3d8] sm:$0xff]
    %v153 = vld [vmem:[%s0 + $0x3e0] sm:$0xff]
    %v154 = vld [vmem:[%s0 + $0x3e8] sm:$0xff]
    %v155 = vld [vmem:[%s0 + $0x3f0] sm:$0xff]
    %v156 = vld [vmem:[%s0 + $0x3f8] sm:$0xff]
    %v157 = vld [vmem:[%s1] sm:$0xff]
    %v158 = vld [vmem:[%s1 + $0x8] sm:$0xff]
    %v159 = vld [vmem:[%s1 + $0x10] sm:$0xff]
    %v160 = vld [vmem:[%s1 + $0x18] sm:$0xff]
    %v161 = vld [vmem:[%s2] sm:$0x1]
    %v163 = vlaneseq
    %v164 = vshrl.u32 %v163, 7
    %v165 = vsub.s32 0, %v164
    %v166 = vrot.slane %v161, %v165
    %vm168 = vcmask 261120
    %v170 = vsel %vm168, %v29, 0
    %v173 = vsel %vm168, %v30, 0
    %v176 = vsel %vm168, %v31, 0
    %v179 = vsel %vm168, %v32, 0
    %v182 = vsel %vm168, %v33, 0
    %v185 = vsel %vm168, %v34, 0
    %v188 = vsel %vm168, %v35, 0
    %v191 = vsel %vm168, %v36, 0
    %v194 = vsel %vm168, %v37, 0
    %v197 = vsel %vm168, %v38, 0
    %v200 = vsel %vm168, %v39, 0
    %v203 = vsel %vm168, %v40, 0
    %v206 = vsel %vm168, %v41, 0
    %v209 = vsel %vm168, %v42, 0
    %v212 = vsel %vm168, %v43, 0
    %v215 = vsel %vm168, %v44, 0
    %v218 = vsel %vm168, %v45, 0
    %v221 = vsel %vm168, %v46, 0
    %v224 = vsel %vm168, %v47, 0
    %v227 = vsel %vm168, %v48, 0
    %v230 = vsel %vm168, %v49, 0
    %v233 = vsel %vm168, %v50, 0
    %v236 = vsel %vm168, %v51, 0
    %v239 = vsel %vm168, %v52, 0
    %v242 = vsel %vm168, %v53, 0
    %v245 = vsel %vm168, %v54, 0
    %v248 = vsel %vm168, %v55, 0
    %v251 = vsel %vm168, %v56, 0
    %v254 = vsel %vm168, %v57, 0
    %v257 = vsel %vm168, %v58, 0
    %v260 = vsel %vm168, %v59, 0
    %v263 = vsel %vm168, %v60, 0
    %v266 = vsel %vm168, %v61, 0
    %v269 = vsel %vm168, %v62, 0
    %v272 = vsel %vm168, %v63, 0
    %v275 = vsel %vm168, %v64, 0
    %v278 = vsel %vm168, %v65, 0
    %v281 = vsel %vm168, %v66, 0
    %v284 = vsel %vm168, %v67, 0
    %v287 = vsel %vm168, %v68, 0
    %v290 = vsel %vm168, %v69, 0
    %v293 = vsel %vm168, %v70, 0
    %v296 = vsel %vm168, %v71, 0
    %v299 = vsel %vm168, %v72, 0
    %v302 = vsel %vm168, %v73, 0
    %v305 = vsel %vm168, %v74, 0
    %v308 = vsel %vm168, %v75, 0
    %v311 = vsel %vm168, %v76, 0
    %v314 = vsel %vm168, %v77, 0
    %v317 = vsel %vm168, %v78, 0
    %v320 = vsel %vm168, %v79, 0
    %v323 = vsel %vm168, %v80, 0
    %v326 = vsel %vm168, %v81, 0
    %v329 = vsel %vm168, %v82, 0
    %v332 = vsel %vm168, %v83, 0
    %v335 = vsel %vm168, %v84, 0
    %v338 = vsel %vm168, %v85, 0
    %v341 = vsel %vm168, %v86, 0
    %v344 = vsel %vm168, %v87, 0
    %v347 = vsel %vm168, %v88, 0
    %v350 = vsel %vm168, %v89, 0
    %v353 = vsel %vm168, %v90, 0
    %v356 = vsel %vm168, %v91, 0
    %v359 = vsel %vm168, %v92, 0
    %v362 = vsel %vm168, %v93, 0
    %v365 = vsel %vm168, %v94, 0
    %v368 = vsel %vm168, %v95, 0
    %v371 = vsel %vm168, %v96, 0
    %v374 = vsel %vm168, %v97, 0
    %v377 = vsel %vm168, %v98, 0
    %v380 = vsel %vm168, %v99, 0
    %v383 = vsel %vm168, %v100, 0
    %v386 = vsel %vm168, %v101, 0
    %v389 = vsel %vm168, %v102, 0
    %v392 = vsel %vm168, %v103, 0
    %v395 = vsel %vm168, %v104, 0
    %v398 = vsel %vm168, %v105, 0
    %v401 = vsel %vm168, %v106, 0
    %v404 = vsel %vm168, %v107, 0
    %v407 = vsel %vm168, %v108, 0
    %v410 = vsel %vm168, %v109, 0
    %v413 = vsel %vm168, %v110, 0
    %v416 = vsel %vm168, %v111, 0
    %v419 = vsel %vm168, %v112, 0
    %v422 = vsel %vm168, %v113, 0
    %v425 = vsel %vm168, %v114, 0
    %v428 = vsel %vm168, %v115, 0
    %v431 = vsel %vm168, %v116, 0
    %v434 = vsel %vm168, %v117, 0
    %v437 = vsel %vm168, %v118, 0
    %v440 = vsel %vm168, %v119, 0
    %v443 = vsel %vm168, %v120, 0
    %v446 = vsel %vm168, %v121, 0
    %v449 = vsel %vm168, %v122, 0
    %v452 = vsel %vm168, %v123, 0
    %v455 = vsel %vm168, %v124, 0
    %v458 = vsel %vm168, %v125, 0
    %v461 = vsel %vm168, %v126, 0
    %v464 = vsel %vm168, %v127, 0
    %v467 = vsel %vm168, %v128, 0
    %v470 = vsel %vm168, %v129, 0
    %v473 = vsel %vm168, %v130, 0
    %v476 = vsel %vm168, %v131, 0
    %v479 = vsel %vm168, %v132, 0
    %v482 = vsel %vm168, %v133, 0
    %v485 = vsel %vm168, %v134, 0
    %v488 = vsel %vm168, %v135, 0
    %v491 = vsel %vm168, %v136, 0
    %v494 = vsel %vm168, %v137, 0
    %v497 = vsel %vm168, %v138, 0
    %v500 = vsel %vm168, %v139, 0
    %v503 = vsel %vm168, %v140, 0
    %v506 = vsel %vm168, %v141, 0
    %v509 = vsel %vm168, %v142, 0
    %v512 = vsel %vm168, %v143, 0
    %v515 = vsel %vm168, %v144, 0
    %v518 = vsel %vm168, %v145, 0
    %v521 = vsel %vm168, %v146, 0
    %v524 = vsel %vm168, %v147, 0
    %v527 = vsel %vm168, %v148, 0
    %v530 = vsel %vm168, %v149, 0
    %v533 = vsel %vm168, %v150, 0
    %v536 = vsel %vm168, %v151, 0
    %v539 = vsel %vm168, %v152, 0
    %v542 = vsel %vm168, %v153, 0
    %v545 = vsel %vm168, %v154, 0
    %v548 = vsel %vm168, %v155, 0
    %v551 = vsel %vm168, %v156, 0
    %553 = vmatprep.subr.mxu0 0.0
    %554 = vmatpush1.msra.mxu0 %v157
    %555 = vmatprep.subr.mxu0 0.0
    %556 = vmatpush1.msra.mxu0 %v158
    %557 = vmatprep.subr.mxu0 0.0
    %558 = vmatpush1.msra.mxu0 %v159
    %559 = vmatprep.subr.mxu0 0.0
    %560 = vmatpush1.msra.mxu0 %v160
    %561 = vmatprep.subr.mxu0 0.0
    %562 = vmatpush1.msra.mxu0 0.0
    %563 = vmatprep.subr.mxu0 0.0
    %564 = vmatpush1.msra.mxu0 0.0
    %565 = vmatprep.subr.mxu0 0.0
    %566 = vmatpush1.msra.mxu0 0.0
    %567 = vmatprep.subr.mxu0 0.0
    %568 = vmatpush1.msra.mxu0 0.0
    %569 = vmatprep.subr.mxu0 0.0
    %570 = vmatpush1.msra.mxu0 0.0
    %571 = vmatprep.subr.mxu0 0.0
    %572 = vmatpush1.msra.mxu0 0.0
    %573 = vmatprep.subr.mxu0 0.0
    %574 = vmatpush1.msra.mxu0 0.0
    %575 = vmatprep.subr.mxu0 0.0
    %576 = vmatpush1.msra.mxu0 0.0
    %577 = vmatprep.subr.mxu0 0.0
    %578 = vmatpush1.msra.mxu0 0.0
    %579 = vmatprep.subr.mxu0 0.0
    %580 = vmatpush1.msra.mxu0 0.0
    %581 = vmatprep.subr.mxu0 0.0
    %582 = vmatpush1.msra.mxu0 0.0
    %583 = vmatprep.subr.mxu0 0.0
    %584 = vmatpush1.msra.mxu0 0.0
    %585 = vmatprep.subr.mxu0 0.0
    %586 = vmatpush1.msra.mxu0 0.0
    %587 = vmatprep.subr.mxu0 0.0
    %588 = vmatpush1.msra.mxu0 0.0
    %589 = vmatprep.subr.mxu0 0.0
    %590 = vmatpush1.msra.mxu0 0.0
    %591 = vmatprep.subr.mxu0 0.0
    %592 = vmatpush1.msra.mxu0 0.0
    %593 = vmatprep.subr.mxu0 0.0
    %594 = vmatpush1.msra.mxu0 0.0
    %595 = vmatprep.subr.mxu0 0.0
    %596 = vmatpush1.msra.mxu0 0.0
    %597 = vmatprep.subr.mxu0 0.0
    %598 = vmatpush1.msra.mxu0 0.0
    %599 = vmatprep.subr.mxu0 0.0
    %600 = vmatpush1.msra.mxu0 0.0
    %601 = vmatprep.subr.mxu0 0.0
    %602 = vmatpush1.msra.mxu0 0.0
    %603 = vmatprep.subr.mxu0 0.0
    %604 = vmatpush1.msra.mxu0 0.0
    %605 = vmatprep.subr.mxu0 0.0
    %606 = vmatpush1.msra.mxu0 0.0
    %607 = vmatprep.subr.mxu0 0.0
    %608 = vmatpush1.msra.mxu0 0.0
    %609 = vmatprep.subr.mxu0 0.0
    %610 = vmatpush1.msra.mxu0 0.0
    %611 = vmatprep.subr.mxu0 0.0
    %612 = vmatpush1.msra.mxu0 0.0
    %613 = vmatprep.subr.mxu0 0.0
    %614 = vmatpush1.msra.mxu0 0.0
    %615 = vmatprep.subr.mxu0 0.0
    %616 = vmatpush1.msra.mxu0 0.0
    %617 = vmatprep.mubr.f32.mxu0 0.0
    %618 = vmatmul.mubr.f32.gmra.mrb[0].mxu0 %v170
    %v619 = vpop.f32.mrb[0].mxu0
    %v620 = vadd.f32 %v166, %v619
    %v621 = vpop.f32.mrb[0].mxu0
    %622 = vmatprep.mubr.f32.mxu0 0.0
    %623 = vmatmul.mubr.f32.gmra.mrb[0].mxu0 %v173
    %v624 = vpop.f32.mrb[0].mxu0
    %v625 = vadd.f32 %v166, %v624
    %v626 = vpop.f32.mrb[0].mxu0
    %627 = vmatprep.mubr.f32.mxu0 0.0
    %628 = vmatmul.mubr.f32.gmra.mrb[0].mxu0 %v176
    %v629 = vpop.f32.mrb[0].mxu0
    %v630 = vadd.f32 %v166, %v629
    %v631 = vpop.f32.mrb[0].mxu0
    %632 = vmatprep.mubr.f32.mxu0 0.0
    %633 = vmatmul.mubr.f32.gmra.mrb[0].mxu0 %v179
    %v634 = vpop.f32.mrb[0].mxu0
    %v635 = vadd.f32 %v166, %v634
    %v636 = vpop.f32.mrb[0].mxu0
    %637 = vmatprep.mubr.f32.mxu0 0.0
    %638 = vmatmul.mubr.f32.gmra.mrb[0].mxu0 %v182
    %v639 = vpop.f32.mrb[0].mxu0
    %v640 = vadd.f32 %v166, %v639
    %v641 = vpop.f32.mrb[0].mxu0
    %642 = vmatprep.mubr.f32.mxu0 0.0
    %643 = vmatmul.mubr.f32.gmra.mrb[0].mxu0 %v185
    %v644 = vpop.f32.mrb[0].mxu0
    %v645 = vadd.f32 %v166, %v644
    %v646 = vpop.f32.mrb[0].mxu0
    %647 = vmatprep.mubr.f32.mxu0 0.0
    %648 = vmatmul.mubr.f32.gmra.mrb[0].mxu0 %v188
    %v649 = vpop.f32.mrb[0].mxu0
    %v650 = vadd.f32 %v166, %v649
    %v651 = vpop.f32.mrb[0].mxu0
    %652 = vmatprep.mubr.f32.mxu0 0.0
    %653 = vmatmul.mubr.f32.gmra.mrb[0].mxu0 %v191
    %v654 = vpop.f32.mrb[0].mxu0
    %v655 = vadd.f32 %v166, %v654
    %v656 = vpop.f32.mrb[0].mxu0
    %657 = vmatprep.mubr.f32.mxu0 0.0
    %658 = vmatmul.mubr.f32.gmra.mrb[0].mxu0 %v194
    %v659 = vpop.f32.mrb[0].mxu0
    %v660 = vadd.f32 %v166, %v659
    %v661 = vpop.f32.mrb[0].mxu0
    %662 = vmatprep.mubr.f32.mxu0 0.0
    %663 = vmatmul.mubr.f32.gmra.mrb[0].mxu0 %v197
    %v664 = vpop.f32.mrb[0].mxu0
    %v665 = vadd.f32 %v166, %v664
    %v666 = vpop.f32.mrb[0].mxu0
    %667 = vmatprep.mubr.f32.mxu0 0.0
    %668 = vmatmul.mubr.f32.gmra.mrb[0].mxu0 %v200
    %v669 = vpop.f32.mrb[0].mxu0
    %v670 = vadd.f32 %v166, %v669
    %v671 = vpop.f32.mrb[0].mxu0
    %672 = vmatprep.mubr.f32.mxu0 0.0
    %673 = vmatmul.mubr.f32.gmra.mrb[0].mxu0 %v203
    %v674 = vpop.f32.mrb[0].mxu0
    %v675 = vadd.f32 %v166, %v674
    %v676 = vpop.f32.mrb[0].mxu0
    %677 = vmatprep.mubr.f32.mxu0 0.0
    %678 = vmatmul.mubr.f32.gmra.mrb[0].mxu0 %v206
    %v679 = vpop.f32.mrb[0].mxu0
    %v680 = vadd.f32 %v166, %v679
    %v681 = vpop.f32.mrb[0].mxu0
    %682 = vmatprep.mubr.f32.mxu0 0.0
    %683 = vmatmul.mubr.f32.gmra.mrb[0].mxu0 %v209
    %v684 = vpop.f32.mrb[0].mxu0
    %v685 = vadd.f32 %v166, %v684
    %v686 = vpop.f32.mrb[0].mxu0
    %687 = vmatprep.mubr.f32.mxu0 0.0
    %688 = vmatmul.mubr.f32.gmra.mrb[0].mxu0 %v212
    %v689 = vpop.f32.mrb[0].mxu0
    %v690 = vadd.f32 %v166, %v689
    %v691 = vpop.f32.mrb[0].mxu0
    %692 = vmatprep.mubr.f32.mxu0 0.0
    %693 = vmatmul.mubr.f32.gmra.mrb[0].mxu0 %v215
    %v694 = vpop.f32.mrb[0].mxu0
    %v695 = vadd.f32 %v166, %v694
    %v696 = vpop.f32.mrb[0].mxu0
    %697 = vmatprep.mubr.f32.mxu0 0.0
    %698 = vmatmul.mubr.f32.gmra.mrb[0].mxu0 %v218
    %v699 = vpop.f32.mrb[0].mxu0
    %v700 = vadd.f32 %v166, %v699
    %v701 = vpop.f32.mrb[0].mxu0
    %702 = vmatprep.mubr.f32.mxu0 0.0
    %703 = vmatmul.mubr.f32.gmra.mrb[0].mxu0 %v221
    %v704 = vpop.f32.mrb[0].mxu0
    %v705 = vadd.f32 %v166, %v704
    %v706 = vpop.f32.mrb[0].mxu0
    %707 = vmatprep.mubr.f32.mxu0 0.0
    %708 = vmatmul.mubr.f32.gmra.mrb[0].mxu0 %v224
    %v709 = vpop.f32.mrb[0].mxu0
    %v710 = vadd.f32 %v166, %v709
    %v711 = vpop.f32.mrb[0].mxu0
    %712 = vmatprep.mubr.f32.mxu0 0.0
    %713 = vmatmul.mubr.f32.gmra.mrb[0].mxu0 %v227
    %v714 = vpop.f32.mrb[0].mxu0
    %v715 = vadd.f32 %v166, %v714
    %v716 = vpop.f32.mrb[0].mxu0
    %717 = vmatprep.mubr.f32.mxu0 0.0
    %718 = vmatmul.mubr.f32.gmra.mrb[0].mxu0 %v230
    %v719 = vpop.f32.mrb[0].mxu0
    %v720 = vadd.f32 %v166, %v719
    %v721 = vpop.f32.mrb[0].mxu0
    %722 = vmatprep.mubr.f32.mxu0 0.0
    %723 = vmatmul.mubr.f32.gmra.mrb[0].mxu0 %v233
    %v724 = vpop.f32.mrb[0].mxu0
    %v725 = vadd.f32 %v166, %v724
    %v726 = vpop.f32.mrb[0].mxu0
    %727 = vmatprep.mubr.f32.mxu0 0.0
    %728 = vmatmul.mubr.f32.gmra.mrb[0].mxu0 %v236
    %v729 = vpop.f32.mrb[0].mxu0
    %v730 = vadd.f32 %v166, %v729
    %v731 = vpop.f32.mrb[0].mxu0
    %732 = vmatprep.mubr.f32.mxu0 0.0
    %733 = vmatmul.mubr.f32.gmra.mrb[0].mxu0 %v239
    %v734 = vpop.f32.mrb[0].mxu0
    %v735 = vadd.f32 %v166, %v734
    %v736 = vpop.f32.mrb[0].mxu0
    %737 = vmatprep.mubr.f32.mxu0 0.0
    %738 = vmatmul.mubr.f32.gmra.mrb[0].mxu0 %v242
    %v739 = vpop.f32.mrb[0].mxu0
    %v740 = vadd.f32 %v166, %v739
    %v741 = vpop.f32.mrb[0].mxu0
    %742 = vmatprep.mubr.f32.mxu0 0.0
    %743 = vmatmul.mubr.f32.gmra.mrb[0].mxu0 %v245
    %v744 = vpop.f32.mrb[0].mxu0
    %v745 = vadd.f32 %v166, %v744
    %v746 = vpop.f32.mrb[0].mxu0
    %747 = vmatprep.mubr.f32.mxu0 0.0
    %748 = vmatmul.mubr.f32.gmra.mrb[0].mxu0 %v248
    %v749 = vpop.f32.mrb[0].mxu0
    %v750 = vadd.f32 %v166, %v749
    %v751 = vpop.f32.mrb[0].mxu0
    %752 = vmatprep.mubr.f32.mxu0 0.0
    %753 = vmatmul.mubr.f32.gmra.mrb[0].mxu0 %v251
    %v754 = vpop.f32.mrb[0].mxu0
    %v755 = vadd.f32 %v166, %v754
    %v756 = vpop.f32.mrb[0].mxu0
    %757 = vmatprep.mubr.f32.mxu0 0.0
    %758 = vmatmul.mubr.f32.gmra.mrb[0].mxu0 %v254
    %v759 = vpop.f32.mrb[0].mxu0
    %v760 = vadd.f32 %v166, %v759
    %v761 = vpop.f32.mrb[0].mxu0
    %762 = vmatprep.mubr.f32.mxu0 0.0
    %763 = vmatmul.mubr.f32.gmra.mrb[0].mxu0 %v257
    %v764 = vpop.f32.mrb[0].mxu0
    %v765 = vadd.f32 %v166, %v764
    %v766 = vpop.f32.mrb[0].mxu0
    %767 = vmatprep.mubr.f32.mxu0 0.0
    %768 = vmatmul.mubr.f32.gmra.mrb[0].mxu0 %v260
    %v769 = vpop.f32.mrb[0].mxu0
    %v770 = vadd.f32 %v166, %v769
    %v771 = vpop.f32.mrb[0].mxu0
    %772 = vmatprep.mubr.f32.mxu0 0.0
    %773 = vmatmul.mubr.f32.gmra.mrb[0].mxu0 %v263
    %v774 = vpop.f32.mrb[0].mxu0
    %v775 = vadd.f32 %v166, %v774
    %v776 = vpop.f32.mrb[0].mxu0
    %777 = vmatprep.mubr.f32.mxu0 0.0
    %778 = vmatmul.mubr.f32.gmra.mrb[0].mxu0 %v266
    %v779 = vpop.f32.mrb[0].mxu0
    %v780 = vadd.f32 %v166, %v779
    %v781 = vpop.f32.mrb[0].mxu0
    %782 = vmatprep.mubr.f32.mxu0 0.0
    %783 = vmatmul.mubr.f32.gmra.mrb[0].mxu0 %v269
    %v784 = vpop.f32.mrb[0].mxu0
    %v785 = vadd.f32 %v166, %v784
    %v786 = vpop.f32.mrb[0].mxu0
    %787 = vmatprep.mubr.f32.mxu0 0.0
    %788 = vmatmul.mubr.f32.gmra.mrb[0].mxu0 %v272
    %v789 = vpop.f32.mrb[0].mxu0
    %v790 = vadd.f32 %v166, %v789
    %v791 = vpop.f32.mrb[0].mxu0
    %792 = vmatprep.mubr.f32.mxu0 0.0
    %793 = vmatmul.mubr.f32.gmra.mrb[0].mxu0 %v275
    %v794 = vpop.f32.mrb[0].mxu0
    %v795 = vadd.f32 %v166, %v794
    %v796 = vpop.f32.mrb[0].mxu0
    %797 = vmatprep.mubr.f32.mxu0 0.0
    %798 = vmatmul.mubr.f32.gmra.mrb[0].mxu0 %v278
    %v799 = vpop.f32.mrb[0].mxu0
    %v800 = vadd.f32 %v166, %v799
    %v801 = vpop.f32.mrb[0].mxu0
    %802 = vmatprep.mubr.f32.mxu0 0.0
    %803 = vmatmul.mubr.f32.gmra.mrb[0].mxu0 %v281
    %v804 = vpop.f32.mrb[0].mxu0
    %v805 = vadd.f32 %v166, %v804
    %v806 = vpop.f32.mrb[0].mxu0
    %807 = vmatprep.mubr.f32.mxu0 0.0
    %808 = vmatmul.mubr.f32.gmra.mrb[0].mxu0 %v284
    %v809 = vpop.f32.mrb[0].mxu0
    %v810 = vadd.f32 %v166, %v809
    %v811 = vpop.f32.mrb[0].mxu0
    %812 = vmatprep.mubr.f32.mxu0 0.0
    %813 = vmatmul.mubr.f32.gmra.mrb[0].mxu0 %v287
    %v814 = vpop.f32.mrb[0].mxu0
    %v815 = vadd.f32 %v166, %v814
    %v816 = vpop.f32.mrb[0].mxu0
    %817 = vmatprep.mubr.f32.mxu0 0.0
    %818 = vmatmul.mubr.f32.gmra.mrb[0].mxu0 %v290
    %v819 = vpop.f32.mrb[0].mxu0
    %v820 = vadd.f32 %v166, %v819
    %v821 = vpop.f32.mrb[0].mxu0
    %822 = vmatprep.mubr.f32.mxu0 0.0
    %823 = vmatmul.mubr.f32.gmra.mrb[0].mxu0 %v293
    %v824 = vpop.f32.mrb[0].mxu0
    %v825 = vadd.f32 %v166, %v824
    %v826 = vpop.f32.mrb[0].mxu0
    %827 = vmatprep.mubr.f32.mxu0 0.0
    %828 = vmatmul.mubr.f32.gmra.mrb[0].mxu0 %v296
    %v829 = vpop.f32.mrb[0].mxu0
    %v830 = vadd.f32 %v166, %v829
    %v831 = vpop.f32.mrb[0].mxu0
    %832 = vmatprep.mubr.f32.mxu0 0.0
    %833 = vmatmul.mubr.f32.gmra.mrb[0].mxu0 %v299
    %v834 = vpop.f32.mrb[0].mxu0
    %v835 = vadd.f32 %v166, %v834
    %v836 = vpop.f32.mrb[0].mxu0
    %837 = vmatprep.mubr.f32.mxu0 0.0
    %838 = vmatmul.mubr.f32.gmra.mrb[0].mxu0 %v302
    %v839 = vpop.f32.mrb[0].mxu0
    %v840 = vadd.f32 %v166, %v839
    %v841 = vpop.f32.mrb[0].mxu0
    %842 = vmatprep.mubr.f32.mxu0 0.0
    %843 = vmatmul.mubr.f32.gmra.mrb[0].mxu0 %v305
    %v844 = vpop.f32.mrb[0].mxu0
    %v845 = vadd.f32 %v166, %v844
    %v846 = vpop.f32.mrb[0].mxu0
    %847 = vmatprep.mubr.f32.mxu0 0.0
    %848 = vmatmul.mubr.f32.gmra.mrb[0].mxu0 %v308
    %v849 = vpop.f32.mrb[0].mxu0
    %v850 = vadd.f32 %v166, %v849
    %v851 = vpop.f32.mrb[0].mxu0
    %852 = vmatprep.mubr.f32.mxu0 0.0
    %853 = vmatmul.mubr.f32.gmra.mrb[0].mxu0 %v311
    %v854 = vpop.f32.mrb[0].mxu0
    %v855 = vadd.f32 %v166, %v854
    %v856 = vpop.f32.mrb[0].mxu0
    %857 = vmatprep.mubr.f32.mxu0 0.0
    %858 = vmatmul.mubr.f32.gmra.mrb[0].mxu0 %v314
    %v859 = vpop.f32.mrb[0].mxu0
    %v860 = vadd.f32 %v166, %v859
    %v861 = vpop.f32.mrb[0].mxu0
    %862 = vmatprep.mubr.f32.mxu0 0.0
    %863 = vmatmul.mubr.f32.gmra.mrb[0].mxu0 %v317
    %v864 = vpop.f32.mrb[0].mxu0
    %v865 = vadd.f32 %v166, %v864
    %v866 = vpop.f32.mrb[0].mxu0
    %867 = vmatprep.mubr.f32.mxu0 0.0
    %868 = vmatmul.mubr.f32.gmra.mrb[0].mxu0 %v320
    %v869 = vpop.f32.mrb[0].mxu0
    %v870 = vadd.f32 %v166, %v869
    %v871 = vpop.f32.mrb[0].mxu0
    %872 = vmatprep.mubr.f32.mxu0 0.0
    %873 = vmatmul.mubr.f32.gmra.mrb[0].mxu0 %v323
    %v874 = vpop.f32.mrb[0].mxu0
    %v875 = vadd.f32 %v166, %v874
    %v876 = vpop.f32.mrb[0].mxu0
    %877 = vmatprep.mubr.f32.mxu0 0.0
    %878 = vmatmul.mubr.f32.gmra.mrb[0].mxu0 %v326
    %v879 = vpop.f32.mrb[0].mxu0
    %v880 = vadd.f32 %v166, %v879
    %v881 = vpop.f32.mrb[0].mxu0
    %882 = vmatprep.mubr.f32.mxu0 0.0
    %883 = vmatmul.mubr.f32.gmra.mrb[0].mxu0 %v329
    %v884 = vpop.f32.mrb[0].mxu0
    %v885 = vadd.f32 %v166, %v884
    %v886 = vpop.f32.mrb[0].mxu0
    %887 = vmatprep.mubr.f32.mxu0 0.0
    %888 = vmatmul.mubr.f32.gmra.mrb[0].mxu0 %v332
    %v889 = vpop.f32.mrb[0].mxu0
    %v890 = vadd.f32 %v166, %v889
    %v891 = vpop.f32.mrb[0].mxu0
    %892 = vmatprep.mubr.f32.mxu0 0.0
    %893 = vmatmul.mubr.f32.gmra.mrb[0].mxu0 %v335
    %v894 = vpop.f32.mrb[0].mxu0
    %v895 = vadd.f32 %v166, %v894
    %v896 = vpop.f32.mrb[0].mxu0
    %897 = vmatprep.mubr.f32.mxu0 0.0
    %898 = vmatmul.mubr.f32.gmra.mrb[0].mxu0 %v338
    %v899 = vpop.f32.mrb[0].mxu0
    %v900 = vadd.f32 %v166, %v899
    %v901 = vpop.f32.mrb[0].mxu0
    %902 = vmatprep.mubr.f32.mxu0 0.0
    %903 = vmatmul.mubr.f32.gmra.mrb[0].mxu0 %v341
    %v904 = vpop.f32.mrb[0].mxu0
    %v905 = vadd.f32 %v166, %v904
    %v906 = vpop.f32.mrb[0].mxu0
    %907 = vmatprep.mubr.f32.mxu0 0.0
    %908 = vmatmul.mubr.f32.gmra.mrb[0].mxu0 %v344
    %v909 = vpop.f32.mrb[0].mxu0
    %v910 = vadd.f32 %v166, %v909
    %v911 = vpop.f32.mrb[0].mxu0
    %912 = vmatprep.mubr.f32.mxu0 0.0
    %913 = vmatmul.mubr.f32.gmra.mrb[0].mxu0 %v347
    %v914 = vpop.f32.mrb[0].mxu0
    %v915 = vadd.f32 %v166, %v914
    %v916 = vpop.f32.mrb[0].mxu0
    %917 = vmatprep.mubr.f32.mxu0 0.0
    %918 = vmatmul.mubr.f32.gmra.mrb[0].mxu0 %v350
    %v919 = vpop.f32.mrb[0].mxu0
    %v920 = vadd.f32 %v166, %v919
    %v921 = vpop.f32.mrb[0].mxu0
    %922 = vmatprep.mubr.f32.mxu0 0.0
    %923 = vmatmul.mubr.f32.gmra.mrb[0].mxu0 %v353
    %v924 = vpop.f32.mrb[0].mxu0
    %v925 = vadd.f32 %v166, %v924
    %v926 = vpop.f32.mrb[0].mxu0
    %927 = vmatprep.mubr.f32.mxu0 0.0
    %928 = vmatmul.mubr.f32.gmra.mrb[0].mxu0 %v356
    %v929 = vpop.f32.mrb[0].mxu0
    %v930 = vadd.f32 %v166, %v929
    %v931 = vpop.f32.mrb[0].mxu0
    %932 = vmatprep.mubr.f32.mxu0 0.0
    %933 = vmatmul.mubr.f32.gmra.mrb[0].mxu0 %v359
    %v934 = vpop.f32.mrb[0].mxu0
    %v935 = vadd.f32 %v166, %v934
    %v936 = vpop.f32.mrb[0].mxu0
    %937 = vmatprep.mubr.f32.mxu0 0.0
    %938 = vmatmul.mubr.f32.gmra.mrb[0].mxu0 %v362
    %v939 = vpop.f32.mrb[0].mxu0
    %v940 = vadd.f32 %v166, %v939
    %v941 = vpop.f32.mrb[0].mxu0
    %942 = vmatprep.mubr.f32.mxu0 0.0
    %943 = vmatmul.mubr.f32.gmra.mrb[0].mxu0 %v365
    %v944 = vpop.f32.mrb[0].mxu0
    %v945 = vadd.f32 %v166, %v944
    %v946 = vpop.f32.mrb[0].mxu0
    %947 = vmatprep.mubr.f32.mxu0 0.0
    %948 = vmatmul.mubr.f32.gmra.mrb[0].mxu0 %v368
    %v949 = vpop.f32.mrb[0].mxu0
    %v950 = vadd.f32 %v166, %v949
    %v951 = vpop.f32.mrb[0].mxu0
    %952 = vmatprep.mubr.f32.mxu0 0.0
    %953 = vmatmul.mubr.f32.gmra.mrb[0].mxu0 %v371
    %v954 = vpop.f32.mrb[0].mxu0
    %v955 = vadd.f32 %v166, %v954
    %v956 = vpop.f32.mrb[0].mxu0
    %957 = vmatprep.mubr.f32.mxu0 0.0
    %958 = vmatmul.mubr.f32.gmra.mrb[0].mxu0 %v374
    %v959 = vpop.f32.mrb[0].mxu0
    %v960 = vadd.f32 %v166, %v959
    %v961 = vpop.f32.mrb[0].mxu0
    %962 = vmatprep.mubr.f32.mxu0 0.0
    %963 = vmatmul.mubr.f32.gmra.mrb[0].mxu0 %v377
    %v964 = vpop.f32.mrb[0].mxu0
    %v965 = vadd.f32 %v166, %v964
    %v966 = vpop.f32.mrb[0].mxu0
    %967 = vmatprep.mubr.f32.mxu0 0.0
    %968 = vmatmul.mubr.f32.gmra.mrb[0].mxu0 %v380
    %v969 = vpop.f32.mrb[0].mxu0
    %v970 = vadd.f32 %v166, %v969
    %v971 = vpop.f32.mrb[0].mxu0
    %972 = vmatprep.mubr.f32.mxu0 0.0
    %973 = vmatmul.mubr.f32.gmra.mrb[0].mxu0 %v383
    %v974 = vpop.f32.mrb[0].mxu0
    %v975 = vadd.f32 %v166, %v974
    %v976 = vpop.f32.mrb[0].mxu0
    %977 = vmatprep.mubr.f32.mxu0 0.0
    %978 = vmatmul.mubr.f32.gmra.mrb[0].mxu0 %v386
    %v979 = vpop.f32.mrb[0].mxu0
    %v980 = vadd.f32 %v166, %v979
    %v981 = vpop.f32.mrb[0].mxu0
    %982 = vmatprep.mubr.f32.mxu0 0.0
    %983 = vmatmul.mubr.f32.gmra.mrb[0].mxu0 %v389
    %v984 = vpop.f32.mrb[0].mxu0
    %v985 = vadd.f32 %v166, %v984
    %v986 = vpop.f32.mrb[0].mxu0
    %987 = vmatprep.mubr.f32.mxu0 0.0
    %988 = vmatmul.mubr.f32.gmra.mrb[0].mxu0 %v392
    %v989 = vpop.f32.mrb[0].mxu0
    %v990 = vadd.f32 %v166, %v989
    %v991 = vpop.f32.mrb[0].mxu0
    %992 = vmatprep.mubr.f32.mxu0 0.0
    %993 = vmatmul.mubr.f32.gmra.mrb[0].mxu0 %v395
    %v994 = vpop.f32.mrb[0].mxu0
    %v995 = vadd.f32 %v166, %v994
    %v996 = vpop.f32.mrb[0].mxu0
    %997 = vmatprep.mubr.f32.mxu0 0.0
    %998 = vmatmul.mubr.f32.gmra.mrb[0].mxu0 %v398
    %v999 = vpop.f32.mrb[0].mxu0
    %v1000 = vadd.f32 %v166, %v999
    %v1001 = vpop.f32.mrb[0].mxu0
    %1002 = vmatprep.mubr.f32.mxu0 0.0
    %1003 = vmatmul.mubr.f32.gmra.mrb[0].mxu0 %v401
    %v1004 = vpop.f32.mrb[0].mxu0
    %v1005 = vadd.f32 %v166, %v1004
    %v1006 = vpop.f32.mrb[0].mxu0
    %1007 = vmatprep.mubr.f32.mxu0 0.0
    %1008 = vmatmul.mubr.f32.gmra.mrb[0].mxu0 %v404
    %v1009 = vpop.f32.mrb[0].mxu0
    %v1010 = vadd.f32 %v166, %v1009
    %v1011 = vpop.f32.mrb[0].mxu0
    %1012 = vmatprep.mubr.f32.mxu0 0.0
    %1013 = vmatmul.mubr.f32.gmra.mrb[0].mxu0 %v407
    %v1014 = vpop.f32.mrb[0].mxu0
    %v1015 = vadd.f32 %v166, %v1014
    %v1016 = vpop.f32.mrb[0].mxu0
    %1017 = vmatprep.mubr.f32.mxu0 0.0
    %1018 = vmatmul.mubr.f32.gmra.mrb[0].mxu0 %v410
    %v1019 = vpop.f32.mrb[0].mxu0
    %v1020 = vadd.f32 %v166, %v1019
    %v1021 = vpop.f32.mrb[0].mxu0
    %1022 = vmatprep.mubr.f32.mxu0 0.0
    %1023 = vmatmul.mubr.f32.gmra.mrb[0].mxu0 %v413
    %v1024 = vpop.f32.mrb[0].mxu0
    %v1025 = vadd.f32 %v166, %v1024
    %v1026 = vpop.f32.mrb[0].mxu0
    %1027 = vmatprep.mubr.f32.mxu0 0.0
    %1028 = vmatmul.mubr.f32.gmra.mrb[0].mxu0 %v416
    %v1029 = vpop.f32.mrb[0].mxu0
    %v1030 = vadd.f32 %v166, %v1029
    %v1031 = vpop.f32.mrb[0].mxu0
    %1032 = vmatprep.mubr.f32.mxu0 0.0
    %1033 = vmatmul.mubr.f32.gmra.mrb[0].mxu0 %v419
    %v1034 = vpop.f32.mrb[0].mxu0
    %v1035 = vadd.f32 %v166, %v1034
    %v1036 = vpop.f32.mrb[0].mxu0
    %1037 = vmatprep.mubr.f32.mxu0 0.0
    %1038 = vmatmul.mubr.f32.gmra.mrb[0].mxu0 %v422
    %v1039 = vpop.f32.mrb[0].mxu0
    %v1040 = vadd.f32 %v166, %v1039
    %v1041 = vpop.f32.mrb[0].mxu0
    %1042 = vmatprep.mubr.f32.mxu0 0.0
    %1043 = vmatmul.mubr.f32.gmra.mrb[0].mxu0 %v425
    %v1044 = vpop.f32.mrb[0].mxu0
    %v1045 = vadd.f32 %v166, %v1044
    %v1046 = vpop.f32.mrb[0].mxu0
    %1047 = vmatprep.mubr.f32.mxu0 0.0
    %1048 = vmatmul.mubr.f32.gmra.mrb[0].mxu0 %v428
    %v1049 = vpop.f32.mrb[0].mxu0
    %v1050 = vadd.f32 %v166, %v1049
    %v1051 = vpop.f32.mrb[0].mxu0
    %1052 = vmatprep.mubr.f32.mxu0 0.0
    %1053 = vmatmul.mubr.f32.gmra.mrb[0].mxu0 %v431
    %v1054 = vpop.f32.mrb[0].mxu0
    %v1055 = vadd.f32 %v166, %v1054
    %v1056 = vpop.f32.mrb[0].mxu0
    %1057 = vmatprep.mubr.f32.mxu0 0.0
    %1058 = vmatmul.mubr.f32.gmra.mrb[0].mxu0 %v434
    %v1059 = vpop.f32.mrb[0].mxu0
    %v1060 = vadd.f32 %v166, %v1059
    %v1061 = vpop.f32.mrb[0].mxu0
    %1062 = vmatprep.mubr.f32.mxu0 0.0
    %1063 = vmatmul.mubr.f32.gmra.mrb[0].mxu0 %v437
    %v1064 = vpop.f32.mrb[0].mxu0
    %v1065 = vadd.f32 %v166, %v1064
    %v1066 = vpop.f32.mrb[0].mxu0
    %1067 = vmatprep.mubr.f32.mxu0 0.0
    %1068 = vmatmul.mubr.f32.gmra.mrb[0].mxu0 %v440
    %v1069 = vpop.f32.mrb[0].mxu0
    %v1070 = vadd.f32 %v166, %v1069
    %v1071 = vpop.f32.mrb[0].mxu0
    %1072 = vmatprep.mubr.f32.mxu0 0.0
    %1073 = vmatmul.mubr.f32.gmra.mrb[0].mxu0 %v443
    %v1074 = vpop.f32.mrb[0].mxu0
    %v1075 = vadd.f32 %v166, %v1074
    %v1076 = vpop.f32.mrb[0].mxu0
    %1077 = vmatprep.mubr.f32.mxu0 0.0
    %1078 = vmatmul.mubr.f32.gmra.mrb[0].mxu0 %v446
    %v1079 = vpop.f32.mrb[0].mxu0
    %v1080 = vadd.f32 %v166, %v1079
    %v1081 = vpop.f32.mrb[0].mxu0
    %1082 = vmatprep.mubr.f32.mxu0 0.0
    %1083 = vmatmul.mubr.f32.gmra.mrb[0].mxu0 %v449
    %v1084 = vpop.f32.mrb[0].mxu0
    %v1085 = vadd.f32 %v166, %v1084
    %v1086 = vpop.f32.mrb[0].mxu0
    %1087 = vmatprep.mubr.f32.mxu0 0.0
    %1088 = vmatmul.mubr.f32.gmra.mrb[0].mxu0 %v452
    %v1089 = vpop.f32.mrb[0].mxu0
    %v1090 = vadd.f32 %v166, %v1089
    %v1091 = vpop.f32.mrb[0].mxu0
    %1092 = vmatprep.mubr.f32.mxu0 0.0
    %1093 = vmatmul.mubr.f32.gmra.mrb[0].mxu0 %v455
    %v1094 = vpop.f32.mrb[0].mxu0
    %v1095 = vadd.f32 %v166, %v1094
    %v1096 = vpop.f32.mrb[0].mxu0
    %1097 = vmatprep.mubr.f32.mxu0 0.0
    %1098 = vmatmul.mubr.f32.gmra.mrb[0].mxu0 %v458
    %v1099 = vpop.f32.mrb[0].mxu0
    %v1100 = vadd.f32 %v166, %v1099
    %v1101 = vpop.f32.mrb[0].mxu0
    %1102 = vmatprep.mubr.f32.mxu0 0.0
    %1103 = vmatmul.mubr.f32.gmra.mrb[0].mxu0 %v461
    %v1104 = vpop.f32.mrb[0].mxu0
    %v1105 = vadd.f32 %v166, %v1104
    %v1106 = vpop.f32.mrb[0].mxu0
    %1107 = vmatprep.mubr.f32.mxu0 0.0
    %1108 = vmatmul.mubr.f32.gmra.mrb[0].mxu0 %v464
    %v1109 = vpop.f32.mrb[0].mxu0
    %v1110 = vadd.f32 %v166, %v1109
    %v1111 = vpop.f32.mrb[0].mxu0
    %1112 = vmatprep.mubr.f32.mxu0 0.0
    %1113 = vmatmul.mubr.f32.gmra.mrb[0].mxu0 %v467
    %v1114 = vpop.f32.mrb[0].mxu0
    %v1115 = vadd.f32 %v166, %v1114
    %v1116 = vpop.f32.mrb[0].mxu0
    %1117 = vmatprep.mubr.f32.mxu0 0.0
    %1118 = vmatmul.mubr.f32.gmra.mrb[0].mxu0 %v470
    %v1119 = vpop.f32.mrb[0].mxu0
    %v1120 = vadd.f32 %v166, %v1119
    %v1121 = vpop.f32.mrb[0].mxu0
    %1122 = vmatprep.mubr.f32.mxu0 0.0
    %1123 = vmatmul.mubr.f32.gmra.mrb[0].mxu0 %v473
    %v1124 = vpop.f32.mrb[0].mxu0
    %v1125 = vadd.f32 %v166, %v1124
    %v1126 = vpop.f32.mrb[0].mxu0
    %1127 = vmatprep.mubr.f32.mxu0 0.0
    %1128 = vmatmul.mubr.f32.gmra.mrb[0].mxu0 %v476
    %v1129 = vpop.f32.mrb[0].mxu0
    %v1130 = vadd.f32 %v166, %v1129
    %v1131 = vpop.f32.mrb[0].mxu0
    %1132 = vmatprep.mubr.f32.mxu0 0.0
    %1133 = vmatmul.mubr.f32.gmra.mrb[0].mxu0 %v479
    %v1134 = vpop.f32.mrb[0].mxu0
    %v1135 = vadd.f32 %v166, %v1134
    %v1136 = vpop.f32.mrb[0].mxu0
    %1137 = vmatprep.mubr.f32.mxu0 0.0
    %1138 = vmatmul.mubr.f32.gmra.mrb[0].mxu0 %v482
    %v1139 = vpop.f32.mrb[0].mxu0
    %v1140 = vadd.f32 %v166, %v1139
    %v1141 = vpop.f32.mrb[0].mxu0
    %1142 = vmatprep.mubr.f32.mxu0 0.0
    %1143 = vmatmul.mubr.f32.gmra.mrb[0].mxu0 %v485
    %v1144 = vpop.f32.mrb[0].mxu0
    %v1145 = vadd.f32 %v166, %v1144
    %v1146 = vpop.f32.mrb[0].mxu0
    %1147 = vmatprep.mubr.f32.mxu0 0.0
    %1148 = vmatmul.mubr.f32.gmra.mrb[0].mxu0 %v488
    %v1149 = vpop.f32.mrb[0].mxu0
    %v1150 = vadd.f32 %v166, %v1149
    %v1151 = vpop.f32.mrb[0].mxu0
    %1152 = vmatprep.mubr.f32.mxu0 0.0
    %1153 = vmatmul.mubr.f32.gmra.mrb[0].mxu0 %v491
    %v1154 = vpop.f32.mrb[0].mxu0
    %v1155 = vadd.f32 %v166, %v1154
    %v1156 = vpop.f32.mrb[0].mxu0
    %1157 = vmatprep.mubr.f32.mxu0 0.0
    %1158 = vmatmul.mubr.f32.gmra.mrb[0].mxu0 %v494
    %v1159 = vpop.f32.mrb[0].mxu0
    %v1160 = vadd.f32 %v166, %v1159
    %v1161 = vpop.f32.mrb[0].mxu0
    %1162 = vmatprep.mubr.f32.mxu0 0.0
    %1163 = vmatmul.mubr.f32.gmra.mrb[0].mxu0 %v497
    %v1164 = vpop.f32.mrb[0].mxu0
    %v1165 = vadd.f32 %v166, %v1164
    %v1166 = vpop.f32.mrb[0].mxu0
    %1167 = vmatprep.mubr.f32.mxu0 0.0
    %1168 = vmatmul.mubr.f32.gmra.mrb[0].mxu0 %v500
    %v1169 = vpop.f32.mrb[0].mxu0
    %v1170 = vadd.f32 %v166, %v1169
    %v1171 = vpop.f32.mrb[0].mxu0
    %1172 = vmatprep.mubr.f32.mxu0 0.0
    %1173 = vmatmul.mubr.f32.gmra.mrb[0].mxu0 %v503
    %v1174 = vpop.f32.mrb[0].mxu0
    %v1175 = vadd.f32 %v166, %v1174
    %v1176 = vpop.f32.mrb[0].mxu0
    %1177 = vmatprep.mubr.f32.mxu0 0.0
    %1178 = vmatmul.mubr.f32.gmra.mrb[0].mxu0 %v506
    %v1179 = vpop.f32.mrb[0].mxu0
    %v1180 = vadd.f32 %v166, %v1179
    %v1181 = vpop.f32.mrb[0].mxu0
    %1182 = vmatprep.mubr.f32.mxu0 0.0
    %1183 = vmatmul.mubr.f32.gmra.mrb[0].mxu0 %v509
    %v1184 = vpop.f32.mrb[0].mxu0
    %v1185 = vadd.f32 %v166, %v1184
    %v1186 = vpop.f32.mrb[0].mxu0
    %1187 = vmatprep.mubr.f32.mxu0 0.0
    %1188 = vmatmul.mubr.f32.gmra.mrb[0].mxu0 %v512
    %v1189 = vpop.f32.mrb[0].mxu0
    %v1190 = vadd.f32 %v166, %v1189
    %v1191 = vpop.f32.mrb[0].mxu0
    %1192 = vmatprep.mubr.f32.mxu0 0.0
    %1193 = vmatmul.mubr.f32.gmra.mrb[0].mxu0 %v515
    %v1194 = vpop.f32.mrb[0].mxu0
    %v1195 = vadd.f32 %v166, %v1194
    %v1196 = vpop.f32.mrb[0].mxu0
    %1197 = vmatprep.mubr.f32.mxu0 0.0
    %1198 = vmatmul.mubr.f32.gmra.mrb[0].mxu0 %v518
    %v1199 = vpop.f32.mrb[0].mxu0
    %v1200 = vadd.f32 %v166, %v1199
    %v1201 = vpop.f32.mrb[0].mxu0
    %1202 = vmatprep.mubr.f32.mxu0 0.0
    %1203 = vmatmul.mubr.f32.gmra.mrb[0].mxu0 %v521
    %v1204 = vpop.f32.mrb[0].mxu0
    %v1205 = vadd.f32 %v166, %v1204
    %v1206 = vpop.f32.mrb[0].mxu0
    %1207 = vmatprep.mubr.f32.mxu0 0.0
    %1208 = vmatmul.mubr.f32.gmra.mrb[0].mxu0 %v524
    %v1209 = vpop.f32.mrb[0].mxu0
    %v1210 = vadd.f32 %v166, %v1209
    %v1211 = vpop.f32.mrb[0].mxu0
    %1212 = vmatprep.mubr.f32.mxu0 0.0
    %1213 = vmatmul.mubr.f32.gmra.mrb[0].mxu0 %v527
    %v1214 = vpop.f32.mrb[0].mxu0
    %v1215 = vadd.f32 %v166, %v1214
    %v1216 = vpop.f32.mrb[0].mxu0
    %1217 = vmatprep.mubr.f32.mxu0 0.0
    %1218 = vmatmul.mubr.f32.gmra.mrb[0].mxu0 %v530
    %v1219 = vpop.f32.mrb[0].mxu0
    %v1220 = vadd.f32 %v166, %v1219
    %v1221 = vpop.f32.mrb[0].mxu0
    %1222 = vmatprep.mubr.f32.mxu0 0.0
    %1223 = vmatmul.mubr.f32.gmra.mrb[0].mxu0 %v533
    %v1224 = vpop.f32.mrb[0].mxu0
    %v1225 = vadd.f32 %v166, %v1224
    %v1226 = vpop.f32.mrb[0].mxu0
    %1227 = vmatprep.mubr.f32.mxu0 0.0
    %1228 = vmatmul.mubr.f32.gmra.mrb[0].mxu0 %v536
    %v1229 = vpop.f32.mrb[0].mxu0
    %v1230 = vadd.f32 %v166, %v1229
    %v1231 = vpop.f32.mrb[0].mxu0
    %1232 = vmatprep.mubr.f32.mxu0 0.0
    %1233 = vmatmul.mubr.f32.gmra.mrb[0].mxu0 %v539
    %v1234 = vpop.f32.mrb[0].mxu0
    %v1235 = vadd.f32 %v166, %v1234
    %v1236 = vpop.f32.mrb[0].mxu0
    %1237 = vmatprep.mubr.f32.mxu0 0.0
    %1238 = vmatmul.mubr.f32.gmra.mrb[0].mxu0 %v542
    %v1239 = vpop.f32.mrb[0].mxu0
    %v1240 = vadd.f32 %v166, %v1239
    %v1241 = vpop.f32.mrb[0].mxu0
    %1242 = vmatprep.mubr.f32.mxu0 0.0
    %1243 = vmatmul.mubr.f32.gmra.mrb[0].mxu0 %v545
    %v1244 = vpop.f32.mrb[0].mxu0
    %v1245 = vadd.f32 %v166, %v1244
    %v1246 = vpop.f32.mrb[0].mxu0
    %1247 = vmatprep.mubr.f32.mxu0 0.0
    %1248 = vmatmul.mubr.f32.gmra.mrb[0].mxu0 %v548
    %v1249 = vpop.f32.mrb[0].mxu0
    %v1250 = vadd.f32 %v166, %v1249
    %v1251 = vpop.f32.mrb[0].mxu0
    %1252 = vmatprep.mubr.f32.mxu0 0.0
    %1253 = vmatmul.mubr.f32.gmra.mrb[0].mxu0 %v551
    %v1254 = vpop.f32.mrb[0].mxu0
    %v1255 = vadd.f32 %v166, %v1254
    %v1256 = vpop.f32.mrb[0].mxu0
    %1257 = vdwg.mxu0
    %v1258 = vmax.f32 %v620, 0.0
    %v1259 = vmax.f32 %v625, 0.0
    %v1260 = vmax.f32 %v630, 0.0
    %v1261 = vmax.f32 %v635, 0.0
    %v1262 = vmax.f32 %v640, 0.0
    %v1263 = vmax.f32 %v645, 0.0
    %v1264 = vmax.f32 %v650, 0.0
    %v1265 = vmax.f32 %v655, 0.0
    %v1266 = vmax.f32 %v660, 0.0
    %v1267 = vmax.f32 %v665, 0.0
    %v1268 = vmax.f32 %v670, 0.0
    %v1269 = vmax.f32 %v675, 0.0
    %v1270 = vmax.f32 %v680, 0.0
    %v1271 = vmax.f32 %v685, 0.0
    %v1272 = vmax.f32 %v690, 0.0
    %v1273 = vmax.f32 %v695, 0.0
    %v1274 = vmax.f32 %v700, 0.0
    %v1275 = vmax.f32 %v705, 0.0
    %v1276 = vmax.f32 %v710, 0.0
    %v1277 = vmax.f32 %v715, 0.0
    %v1278 = vmax.f32 %v720, 0.0
    %v1279 = vmax.f32 %v725, 0.0
    %v1280 = vmax.f32 %v730, 0.0
    %v1281 = vmax.f32 %v735, 0.0
    %v1282 = vmax.f32 %v740, 0.0
    %v1283 = vmax.f32 %v745, 0.0
    %v1284 = vmax.f32 %v750, 0.0
    %v1285 = vmax.f32 %v755, 0.0
    %v1286 = vmax.f32 %v760, 0.0
    %v1287 = vmax.f32 %v765, 0.0
    %v1288 = vmax.f32 %v770, 0.0
    %v1289 = vmax.f32 %v775, 0.0
    %v1290 = vmax.f32 %v780, 0.0
    %v1291 = vmax.f32 %v785, 0.0
    %v1292 = vmax.f32 %v790, 0.0
    %v1293 = vmax.f32 %v795, 0.0
    %v1294 = vmax.f32 %v800, 0.0
    %v1295 = vmax.f32 %v805, 0.0
    %v1296 = vmax.f32 %v810, 0.0
    %v1297 = vmax.f32 %v815, 0.0
    %v1298 = vmax.f32 %v820, 0.0
    %v1299 = vmax.f32 %v825, 0.0
    %v1300 = vmax.f32 %v830, 0.0
    %v1301 = vmax.f32 %v835, 0.0
    %v1302 = vmax.f32 %v840, 0.0
    %v1303 = vmax.f32 %v845, 0.0
    %v1304 = vmax.f32 %v850, 0.0
    %v1305 = vmax.f32 %v855, 0.0
    %v1306 = vmax.f32 %v860, 0.0
    %v1307 = vmax.f32 %v865, 0.0
    %v1308 = vmax.f32 %v870, 0.0
    %v1309 = vmax.f32 %v875, 0.0
    %v1310 = vmax.f32 %v880, 0.0
    %v1311 = vmax.f32 %v885, 0.0
    %v1312 = vmax.f32 %v890, 0.0
    %v1313 = vmax.f32 %v895, 0.0
    %v1314 = vmax.f32 %v900, 0.0
    %v1315 = vmax.f32 %v905, 0.0
    %v1316 = vmax.f32 %v910, 0.0
    %v1317 = vmax.f32 %v915, 0.0
    %v1318 = vmax.f32 %v920, 0.0
    %v1319 = vmax.f32 %v925, 0.0
    %v1320 = vmax.f32 %v930, 0.0
    %v1321 = vmax.f32 %v935, 0.0
    %v1322 = vmax.f32 %v940, 0.0
    %v1323 = vmax.f32 %v945, 0.0
    %v1324 = vmax.f32 %v950, 0.0
    %v1325 = vmax.f32 %v955, 0.0
    %v1326 = vmax.f32 %v960, 0.0
    %v1327 = vmax.f32 %v965, 0.0
    %v1328 = vmax.f32 %v970, 0.0
    %v1329 = vmax.f32 %v975, 0.0
    %v1330 = vmax.f32 %v980, 0.0
    %v1331 = vmax.f32 %v985, 0.0
    %v1332 = vmax.f32 %v990, 0.0
    %v1333 = vmax.f32 %v995, 0.0
    %v1334 = vmax.f32 %v1000, 0.0
    %v1335 = vmax.f32 %v1005, 0.0
    %v1336 = vmax.f32 %v1010, 0.0
    %v1337 = vmax.f32 %v1015, 0.0
    %v1338 = vmax.f32 %v1020, 0.0
    %v1339 = vmax.f32 %v1025, 0.0
    %v1340 = vmax.f32 %v1030, 0.0
    %v1341 = vmax.f32 %v1035, 0.0
    %v1342 = vmax.f32 %v1040, 0.0
    %v1343 = vmax.f32 %v1045, 0.0
    %v1344 = vmax.f32 %v1050, 0.0
    %v1345 = vmax.f32 %v1055, 0.0
    %v1346 = vmax.f32 %v1060, 0.0
    %v1347 = vmax.f32 %v1065, 0.0
    %v1348 = vmax.f32 %v1070, 0.0
    %v1349 = vmax.f32 %v1075, 0.0
    %v1350 = vmax.f32 %v1080, 0.0
    %v1351 = vmax.f32 %v1085, 0.0
    %v1352 = vmax.f32 %v1090, 0.0
    %v1353 = vmax.f32 %v1095, 0.0
    %v1354 = vmax.f32 %v1100, 0.0
    %v1355 = vmax.f32 %v1105, 0.0
    %v1356 = vmax.f32 %v1110, 0.0
    %v1357 = vmax.f32 %v1115, 0.0
    %v1358 = vmax.f32 %v1120, 0.0
    %v1359 = vmax.f32 %v1125, 0.0
    %v1360 = vmax.f32 %v1130, 0.0
    %v1361 = vmax.f32 %v1135, 0.0
    %v1362 = vmax.f32 %v1140, 0.0
    %v1363 = vmax.f32 %v1145, 0.0
    %v1364 = vmax.f32 %v1150, 0.0
    %v1365 = vmax.f32 %v1155, 0.0
    %v1366 = vmax.f32 %v1160, 0.0
    %v1367 = vmax.f32 %v1165, 0.0
    %v1368 = vmax.f32 %v1170, 0.0
    %v1369 = vmax.f32 %v1175, 0.0
    %v1370 = vmax.f32 %v1180, 0.0
    %v1371 = vmax.f32 %v1185, 0.0
    %v1372 = vmax.f32 %v1190, 0.0
    %v1373 = vmax.f32 %v1195, 0.0
    %v1374 = vmax.f32 %v1200, 0.0
    %v1375 = vmax.f32 %v1205, 0.0
    %v1376 = vmax.f32 %v1210, 0.0
    %v1377 = vmax.f32 %v1215, 0.0
    %v1378 = vmax.f32 %v1220, 0.0
    %v1379 = vmax.f32 %v1225, 0.0
    %v1380 = vmax.f32 %v1230, 0.0
    %v1381 = vmax.f32 %v1235, 0.0
    %v1382 = vmax.f32 %v1240, 0.0
    %v1383 = vmax.f32 %v1245, 0.0
    %v1384 = vmax.f32 %v1250, 0.0
    %v1385 = vmax.f32 %v1255, 0.0
    %v1386 = vld [vmem:[%s3] sm:$0xff]
    %v1387 = vld [vmem:[%s3 + $0x8] sm:$0xff]
    %v1388 = vld [vmem:[%s3 + $0x10] sm:$0xff]
    %v1389 = vld [vmem:[%s3 + $0x18] sm:$0xff]
    %v1390 = vld [vmem:[%s3 + $0x20] sm:$0xff]
    %v1391 = vld [vmem:[%s3 + $0x28] sm:$0xff]
    %v1392 = vld [vmem:[%s3 + $0x30] sm:$0xff]
    %v1393 = vld [vmem:[%s3 + $0x38] sm:$0xff]
    %v1394 = vld [vmem:[%s4] sm:$0x1]
    %v1396 = vlaneseq
    %v1397 = vshrl.u32 %v1396, 7
    %v1398 = vsub.s32 0, %v1397
    %v1399 = vrot.slane %v1394, %v1398
    %vm1401 = vcmask 523264
    %v1403 = vsel %vm1401, %v1258, 0
    %v1406 = vsel %vm1401, %v1259, 0
    %v1409 = vsel %vm1401, %v1260, 0
    %v1412 = vsel %vm1401, %v1261, 0
    %v1415 = vsel %vm1401, %v1262, 0
    %v1418 = vsel %vm1401, %v1263, 0
    %v1421 = vsel %vm1401, %v1264, 0
    %v1424 = vsel %vm1401, %v1265, 0
    %v1427 = vsel %vm1401, %v1266, 0
    %v1430 = vsel %vm1401, %v1267, 0
    %v1433 = vsel %vm1401, %v1268, 0
    %v1436 = vsel %vm1401, %v1269, 0
    %v1439 = vsel %vm1401, %v1270, 0
    %v1442 = vsel %vm1401, %v1271, 0
    %v1445 = vsel %vm1401, %v1272, 0
    %v1448 = vsel %vm1401, %v1273, 0
    %v1451 = vsel %vm1401, %v1274, 0
    %v1454 = vsel %vm1401, %v1275, 0
    %v1457 = vsel %vm1401, %v1276, 0
    %v1460 = vsel %vm1401, %v1277, 0
    %v1463 = vsel %vm1401, %v1278, 0
    %v1466 = vsel %vm1401, %v1279, 0
    %v1469 = vsel %vm1401, %v1280, 0
    %v1472 = vsel %vm1401, %v1281, 0
    %v1475 = vsel %vm1401, %v1282, 0
    %v1478 = vsel %vm1401, %v1283, 0
    %v1481 = vsel %vm1401, %v1284, 0
    %v1484 = vsel %vm1401, %v1285, 0
    %v1487 = vsel %vm1401, %v1286, 0
    %v1490 = vsel %vm1401, %v1287, 0
    %v1493 = vsel %vm1401, %v1288, 0
    %v1496 = vsel %vm1401, %v1289, 0
    %v1499 = vsel %vm1401, %v1290, 0
    %v1502 = vsel %vm1401, %v1291, 0
    %v1505 = vsel %vm1401, %v1292, 0
    %v1508 = vsel %vm1401, %v1293, 0
    %v1511 = vsel %vm1401, %v1294, 0
    %v1514 = vsel %vm1401, %v1295, 0
    %v1517 = vsel %vm1401, %v1296, 0
    %v1520 = vsel %vm1401, %v1297, 0
    %v1523 = vsel %vm1401, %v1298, 0
    %v1526 = vsel %vm1401, %v1299, 0
    %v1529 = vsel %vm1401, %v1300, 0
    %v1532 = vsel %vm1401, %v1301, 0
    %v1535 = vsel %vm1401, %v1302, 0
    %v1538 = vsel %vm1401, %v1303, 0
    %v1541 = vsel %vm1401, %v1304, 0
    %v1544 = vsel %vm1401, %v1305, 0
    %v1547 = vsel %vm1401, %v1306, 0
    %v1550 = vsel %vm1401, %v1307, 0
    %v1553 = vsel %vm1401, %v1308, 0
    %v1556 = vsel %vm1401, %v1309, 0
    %v1559 = vsel %vm1401, %v1310, 0
    %v1562 = vsel %vm1401, %v1311, 0
    %v1565 = vsel %vm1401, %v1312, 0
    %v1568 = vsel %vm1401, %v1313, 0
    %v1571 = vsel %vm1401, %v1314, 0
    %v1574 = vsel %vm1401, %v1315, 0
    %v1577 = vsel %vm1401, %v1316, 0
    %v1580 = vsel %vm1401, %v1317, 0
    %v1583 = vsel %vm1401, %v1318, 0
    %v1586 = vsel %vm1401, %v1319, 0
    %v1589 = vsel %vm1401, %v1320, 0
    %v1592 = vsel %vm1401, %v1321, 0
    %v1595 = vsel %vm1401, %v1322, 0
    %v1598 = vsel %vm1401, %v1323, 0
    %v1601 = vsel %vm1401, %v1324, 0
    %v1604 = vsel %vm1401, %v1325, 0
    %v1607 = vsel %vm1401, %v1326, 0
    %v1610 = vsel %vm1401, %v1327, 0
    %v1613 = vsel %vm1401, %v1328, 0
    %v1616 = vsel %vm1401, %v1329, 0
    %v1619 = vsel %vm1401, %v1330, 0
    %v1622 = vsel %vm1401, %v1331, 0
    %v1625 = vsel %vm1401, %v1332, 0
    %v1628 = vsel %vm1401, %v1333, 0
    %v1631 = vsel %vm1401, %v1334, 0
    %v1634 = vsel %vm1401, %v1335, 0
    %v1637 = vsel %vm1401, %v1336, 0
    %v1640 = vsel %vm1401, %v1337, 0
    %v1643 = vsel %vm1401, %v1338, 0
    %v1646 = vsel %vm1401, %v1339, 0
    %v1649 = vsel %vm1401, %v1340, 0
    %v1652 = vsel %vm1401, %v1341, 0
    %v1655 = vsel %vm1401, %v1342, 0
    %v1658 = vsel %vm1401, %v1343, 0
    %v1661 = vsel %vm1401, %v1344, 0
    %v1664 = vsel %vm1401, %v1345, 0
    %v1667 = vsel %vm1401, %v1346, 0
    %v1670 = vsel %vm1401, %v1347, 0
    %v1673 = vsel %vm1401, %v1348, 0
    %v1676 = vsel %vm1401, %v1349, 0
    %v1679 = vsel %vm1401, %v1350, 0
    %v1682 = vsel %vm1401, %v1351, 0
    %v1685 = vsel %vm1401, %v1352, 0
    %v1688 = vsel %vm1401, %v1353, 0
    %v1691 = vsel %vm1401, %v1354, 0
    %v1694 = vsel %vm1401, %v1355, 0
    %v1697 = vsel %vm1401, %v1356, 0
    %v1700 = vsel %vm1401, %v1357, 0
    %v1703 = vsel %vm1401, %v1358, 0
    %v1706 = vsel %vm1401, %v1359, 0
    %v1709 = vsel %vm1401, %v1360, 0
    %v1712 = vsel %vm1401, %v1361, 0
    %v1715 = vsel %vm1401, %v1362, 0
    %v1718 = vsel %vm1401, %v1363, 0
    %v1721 = vsel %vm1401, %v1364, 0
    %v1724 = vsel %vm1401, %v1365, 0
    %v1727 = vsel %vm1401, %v1366, 0
    %v1730 = vsel %vm1401, %v1367, 0
    %v1733 = vsel %vm1401, %v1368, 0
    %v1736 = vsel %vm1401, %v1369, 0
    %v1739 = vsel %vm1401, %v1370, 0
    %v1742 = vsel %vm1401, %v1371, 0
    %v1745 = vsel %vm1401, %v1372, 0
    %v1748 = vsel %vm1401, %v1373, 0
    %v1751 = vsel %vm1401, %v1374, 0
    %v1754 = vsel %vm1401, %v1375, 0
    %v1757 = vsel %vm1401, %v1376, 0
    %v1760 = vsel %vm1401, %v1377, 0
    %v1763 = vsel %vm1401, %v1378, 0
    %v1766 = vsel %vm1401, %v1379, 0
    %v1769 = vsel %vm1401, %v1380, 0
    %v1772 = vsel %vm1401, %v1381, 0
    %v1775 = vsel %vm1401, %v1382, 0
    %v1778 = vsel %vm1401, %v1383, 0
    %v1781 = vsel %vm1401, %v1384, 0
    %v1784 = vsel %vm1401, %v1385, 0
    %1786 = vmatprep.subr.mxu0 0.0
    %1787 = vmatpush1.msra.mxu0 %v1386
    %1788 = vmatprep.subr.mxu0 0.0
    %1789 = vmatpush1.msra.mxu0 %v1387
    %1790 = vmatprep.subr.mxu0 0.0
    %1791 = vmatpush1.msra.mxu0 %v1388
    %1792 = vmatprep.subr.mxu0 0.0
    %1793 = vmatpush1.msra.mxu0 %v1389
    %1794 = vmatprep.subr.mxu0 0.0
    %1795 = vmatpush1.msra.mxu0 %v1390
    %1796 = vmatprep.subr.mxu0 0.0
    %1797 = vmatpush1.msra.mxu0 %v1391
    %1798 = vmatprep.subr.mxu0 0.0
    %1799 = vmatpush1.msra.mxu0 %v1392
    %1800 = vmatprep.subr.mxu0 0.0
    %1801 = vmatpush1.msra.mxu0 %v1393
    %1802 = vmatprep.subr.mxu0 0.0
    %1803 = vmatpush1.msra.mxu0 0.0
    %1804 = vmatprep.subr.mxu0 0.0
    %1805 = vmatpush1.msra.mxu0 0.0
    %1806 = vmatprep.subr.mxu0 0.0
    %1807 = vmatpush1.msra.mxu0 0.0
    %1808 = vmatprep.subr.mxu0 0.0
    %1809 = vmatpush1.msra.mxu0 0.0
    %1810 = vmatprep.subr.mxu0 0.0
    %1811 = vmatpush1.msra.mxu0 0.0
    %1812 = vmatprep.subr.mxu0 0.0
    %1813 = vmatpush1.msra.mxu0 0.0
    %1814 = vmatprep.subr.mxu0 0.0
    %1815 = vmatpush1.msra.mxu0 0.0
    %1816 = vmatprep.subr.mxu0 0.0
    %1817 = vmatpush1.msra.mxu0 0.0
    %1818 = vmatprep.subr.mxu0 0.0
    %1819 = vmatpush1.msra.mxu0 0.0
    %1820 = vmatprep.subr.mxu0 0.0
    %1821 = vmatpush1.msra.mxu0 0.0
    %1822 = vmatprep.subr.mxu0 0.0
    %1823 = vmatpush1.msra.mxu0 0.0
    %1824 = vmatprep.subr.mxu0 0.0
    %1825 = vmatpush1.msra.mxu0 0.0
    %1826 = vmatprep.subr.mxu0 0.0
    %1827 = vmatpush1.msra.mxu0 0.0
    %1828 = vmatprep.subr.mxu0 0.0
    %1829 = vmatpush1.msra.mxu0 0.0
    %1830 = vmatprep.subr.mxu0 0.0
    %1831 = vmatpush1.msra.mxu0 0.0
    %1832 = vmatprep.subr.mxu0 0.0
    %1833 = vmatpush1.msra.mxu0 0.0
    %1834 = vmatprep.subr.mxu0 0.0
    %1835 = vmatpush1.msra.mxu0 0.0
    %1836 = vmatprep.subr.mxu0 0.0
    %1837 = vmatpush1.msra.mxu0 0.0
    %1838 = vmatprep.subr.mxu0 0.0
    %1839 = vmatpush1.msra.mxu0 0.0
    %1840 = vmatprep.subr.mxu0 0.0
    %1841 = vmatpush1.msra.mxu0 0.0
    %1842 = vmatprep.subr.mxu0 0.0
    %1843 = vmatpush1.msra.mxu0 0.0
    %1844 = vmatprep.subr.mxu0 0.0
    %1845 = vmatpush1.msra.mxu0 0.0
    %1846 = vmatprep.subr.mxu0 0.0
    %1847 = vmatpush1.msra.mxu0 0.0
    %1848 = vmatprep.subr.mxu0 0.0
    %1849 = vmatpush1.msra.mxu0 0.0
    %1850 = vmatprep.mubr.f32.mxu0 0.0
    %1851 = vmatmul.mubr.f32.gmra.mrb[0].mxu0 %v1403
    %v1852 = vpop.f32.mrb[0].mxu0
    %v1853 = vadd.f32 %v1399, %v1852
    %v1854 = vpop.f32.mrb[0].mxu0
    %1855 = vmatprep.mubr.f32.mxu0 0.0
    %1856 = vmatmul.mubr.f32.gmra.mrb[0].mxu0 %v1406
    %v1857 = vpop.f32.mrb[0].mxu0
    %v1858 = vadd.f32 %v1399, %v1857
    %v1859 = vpop.f32.mrb[0].mxu0
    %1860 = vmatprep.mubr.f32.mxu0 0.0
    %1861 = vmatmul.mubr.f32.gmra.mrb[0].mxu0 %v1409
    %v1862 = vpop.f32.mrb[0].mxu0
    %v1863 = vadd.f32 %v1399, %v1862
    %v1864 = vpop.f32.mrb[0].mxu0
    %1865 = vmatprep.mubr.f32.mxu0 0.0
    %1866 = vmatmul.mubr.f32.gmra.mrb[0].mxu0 %v1412
    %v1867 = vpop.f32.mrb[0].mxu0
    %v1868 = vadd.f32 %v1399, %v1867
    %v1869 = vpop.f32.mrb[0].mxu0
    %1870 = vmatprep.mubr.f32.mxu0 0.0
    %1871 = vmatmul.mubr.f32.gmra.mrb[0].mxu0 %v1415
    %v1872 = vpop.f32.mrb[0].mxu0
    %v1873 = vadd.f32 %v1399, %v1872
    %v1874 = vpop.f32.mrb[0].mxu0
    %1875 = vmatprep.mubr.f32.mxu0 0.0
    %1876 = vmatmul.mubr.f32.gmra.mrb[0].mxu0 %v1418
    %v1877 = vpop.f32.mrb[0].mxu0
    %v1878 = vadd.f32 %v1399, %v1877
    %v1879 = vpop.f32.mrb[0].mxu0
    %1880 = vmatprep.mubr.f32.mxu0 0.0
    %1881 = vmatmul.mubr.f32.gmra.mrb[0].mxu0 %v1421
    %v1882 = vpop.f32.mrb[0].mxu0
    %v1883 = vadd.f32 %v1399, %v1882
    %v1884 = vpop.f32.mrb[0].mxu0
    %1885 = vmatprep.mubr.f32.mxu0 0.0
    %1886 = vmatmul.mubr.f32.gmra.mrb[0].mxu0 %v1424
    %v1887 = vpop.f32.mrb[0].mxu0
    %v1888 = vadd.f32 %v1399, %v1887
    %v1889 = vpop.f32.mrb[0].mxu0
    %1890 = vmatprep.mubr.f32.mxu0 0.0
    %1891 = vmatmul.mubr.f32.gmra.mrb[0].mxu0 %v1427
    %v1892 = vpop.f32.mrb[0].mxu0
    %v1893 = vadd.f32 %v1399, %v1892
    %v1894 = vpop.f32.mrb[0].mxu0
    %1895 = vmatprep.mubr.f32.mxu0 0.0
    %1896 = vmatmul.mubr.f32.gmra.mrb[0].mxu0 %v1430
    %v1897 = vpop.f32.mrb[0].mxu0
    %v1898 = vadd.f32 %v1399, %v1897
    %v1899 = vpop.f32.mrb[0].mxu0
    %1900 = vmatprep.mubr.f32.mxu0 0.0
    %1901 = vmatmul.mubr.f32.gmra.mrb[0].mxu0 %v1433
    %v1902 = vpop.f32.mrb[0].mxu0
    %v1903 = vadd.f32 %v1399, %v1902
    %v1904 = vpop.f32.mrb[0].mxu0
    %1905 = vmatprep.mubr.f32.mxu0 0.0
    %1906 = vmatmul.mubr.f32.gmra.mrb[0].mxu0 %v1436
    %v1907 = vpop.f32.mrb[0].mxu0
    %v1908 = vadd.f32 %v1399, %v1907
    %v1909 = vpop.f32.mrb[0].mxu0
    %1910 = vmatprep.mubr.f32.mxu0 0.0
    %1911 = vmatmul.mubr.f32.gmra.mrb[0].mxu0 %v1439
    %v1912 = vpop.f32.mrb[0].mxu0
    %v1913 = vadd.f32 %v1399, %v1912
    %v1914 = vpop.f32.mrb[0].mxu0
    %1915 = vmatprep.mubr.f32.mxu0 0.0
    %1916 = vmatmul.mubr.f32.gmra.mrb[0].mxu0 %v1442
    %v1917 = vpop.f32.mrb[0].mxu0
    %v1918 = vadd.f32 %v1399, %v1917
    %v1919 = vpop.f32.mrb[0].mxu0
    %1920 = vmatprep.mubr.f32.mxu0 0.0
    %1921 = vmatmul.mubr.f32.gmra.mrb[0].mxu0 %v1445
    %v1922 = vpop.f32.mrb[0].mxu0
    %v1923 = vadd.f32 %v1399, %v1922
    %v1924 = vpop.f32.mrb[0].mxu0
    %1925 = vmatprep.mubr.f32.mxu0 0.0
    %1926 = vmatmul.mubr.f32.gmra.mrb[0].mxu0 %v1448
    %v1927 = vpop.f32.mrb[0].mxu0
    %v1928 = vadd.f32 %v1399, %v1927
    %v1929 = vpop.f32.mrb[0].mxu0
    %1930 = vmatprep.mubr.f32.mxu0 0.0
    %1931 = vmatmul.mubr.f32.gmra.mrb[0].mxu0 %v1451
    %v1932 = vpop.f32.mrb[0].mxu0
    %v1933 = vadd.f32 %v1399, %v1932
    %v1934 = vpop.f32.mrb[0].mxu0
    %1935 = vmatprep.mubr.f32.mxu0 0.0
    %1936 = vmatmul.mubr.f32.gmra.mrb[0].mxu0 %v1454
    %v1937 = vpop.f32.mrb[0].mxu0
    %v1938 = vadd.f32 %v1399, %v1937
    %v1939 = vpop.f32.mrb[0].mxu0
    %1940 = vmatprep.mubr.f32.mxu0 0.0
    %1941 = vmatmul.mubr.f32.gmra.mrb[0].mxu0 %v1457
    %v1942 = vpop.f32.mrb[0].mxu0
    %v1943 = vadd.f32 %v1399, %v1942
    %v1944 = vpop.f32.mrb[0].mxu0
    %1945 = vmatprep.mubr.f32.mxu0 0.0
    %1946 = vmatmul.mubr.f32.gmra.mrb[0].mxu0 %v1460
    %v1947 = vpop.f32.mrb[0].mxu0
    %v1948 = vadd.f32 %v1399, %v1947
    %v1949 = vpop.f32.mrb[0].mxu0
    %1950 = vmatprep.mubr.f32.mxu0 0.0
    %1951 = vmatmul.mubr.f32.gmra.mrb[0].mxu0 %v1463
    %v1952 = vpop.f32.mrb[0].mxu0
    %v1953 = vadd.f32 %v1399, %v1952
    %v1954 = vpop.f32.mrb[0].mxu0
    %1955 = vmatprep.mubr.f32.mxu0 0.0
    %1956 = vmatmul.mubr.f32.gmra.mrb[0].mxu0 %v1466
    %v1957 = vpop.f32.mrb[0].mxu0
    %v1958 = vadd.f32 %v1399, %v1957
    %v1959 = vpop.f32.mrb[0].mxu0
    %1960 = vmatprep.mubr.f32.mxu0 0.0
    %1961 = vmatmul.mubr.f32.gmra.mrb[0].mxu0 %v1469
    %v1962 = vpop.f32.mrb[0].mxu0
    %v1963 = vadd.f32 %v1399, %v1962
    %v1964 = vpop.f32.mrb[0].mxu0
    %1965 = vmatprep.mubr.f32.mxu0 0.0
    %1966 = vmatmul.mubr.f32.gmra.mrb[0].mxu0 %v1472
    %v1967 = vpop.f32.mrb[0].mxu0
    %v1968 = vadd.f32 %v1399, %v1967
    %v1969 = vpop.f32.mrb[0].mxu0
    %1970 = vmatprep.mubr.f32.mxu0 0.0
    %1971 = vmatmul.mubr.f32.gmra.mrb[0].mxu0 %v1475
    %v1972 = vpop.f32.mrb[0].mxu0
    %v1973 = vadd.f32 %v1399, %v1972
    %v1974 = vpop.f32.mrb[0].mxu0
    %1975 = vmatprep.mubr.f32.mxu0 0.0
    %1976 = vmatmul.mubr.f32.gmra.mrb[0].mxu0 %v1478
    %v1977 = vpop.f32.mrb[0].mxu0
    %v1978 = vadd.f32 %v1399, %v1977
    %v1979 = vpop.f32.mrb[0].mxu0
    %1980 = vmatprep.mubr.f32.mxu0 0.0
    %1981 = vmatmul.mubr.f32.gmra.mrb[0].mxu0 %v1481
    %v1982 = vpop.f32.mrb[0].mxu0
    %v1983 = vadd.f32 %v1399, %v1982
    %v1984 = vpop.f32.mrb[0].mxu0
    %1985 = vmatprep.mubr.f32.mxu0 0.0
    %1986 = vmatmul.mubr.f32.gmra.mrb[0].mxu0 %v1484
    %v1987 = vpop.f32.mrb[0].mxu0
    %v1988 = vadd.f32 %v1399, %v1987
    %v1989 = vpop.f32.mrb[0].mxu0
    %1990 = vmatprep.mubr.f32.mxu0 0.0
    %1991 = vmatmul.mubr.f32.gmra.mrb[0].mxu0 %v1487
    %v1992 = vpop.f32.mrb[0].mxu0
    %v1993 = vadd.f32 %v1399, %v1992
    %v1994 = vpop.f32.mrb[0].mxu0
    %1995 = vmatprep.mubr.f32.mxu0 0.0
    %1996 = vmatmul.mubr.f32.gmra.mrb[0].mxu0 %v1490
    %v1997 = vpop.f32.mrb[0].mxu0
    %v1998 = vadd.f32 %v1399, %v1997
    %v1999 = vpop.f32.mrb[0].mxu0
    %2000 = vmatprep.mubr.f32.mxu0 0.0
    %2001 = vmatmul.mubr.f32.gmra.mrb[0].mxu0 %v1493
    %v2002 = vpop.f32.mrb[0].mxu0
    %v2003 = vadd.f32 %v1399, %v2002
    %v2004 = vpop.f32.mrb[0].mxu0
    %2005 = vmatprep.mubr.f32.mxu0 0.0
    %2006 = vmatmul.mubr.f32.gmra.mrb[0].mxu0 %v1496
    %v2007 = vpop.f32.mrb[0].mxu0
    %v2008 = vadd.f32 %v1399, %v2007
    %v2009 = vpop.f32.mrb[0].mxu0
    %2010 = vmatprep.mubr.f32.mxu0 0.0
    %2011 = vmatmul.mubr.f32.gmra.mrb[0].mxu0 %v1499
    %v2012 = vpop.f32.mrb[0].mxu0
    %v2013 = vadd.f32 %v1399, %v2012
    %v2014 = vpop.f32.mrb[0].mxu0
    %2015 = vmatprep.mubr.f32.mxu0 0.0
    %2016 = vmatmul.mubr.f32.gmra.mrb[0].mxu0 %v1502
    %v2017 = vpop.f32.mrb[0].mxu0
    %v2018 = vadd.f32 %v1399, %v2017
    %v2019 = vpop.f32.mrb[0].mxu0
    %2020 = vmatprep.mubr.f32.mxu0 0.0
    %2021 = vmatmul.mubr.f32.gmra.mrb[0].mxu0 %v1505
    %v2022 = vpop.f32.mrb[0].mxu0
    %v2023 = vadd.f32 %v1399, %v2022
    %v2024 = vpop.f32.mrb[0].mxu0
    %2025 = vmatprep.mubr.f32.mxu0 0.0
    %2026 = vmatmul.mubr.f32.gmra.mrb[0].mxu0 %v1508
    %v2027 = vpop.f32.mrb[0].mxu0
    %v2028 = vadd.f32 %v1399, %v2027
    %v2029 = vpop.f32.mrb[0].mxu0
    %2030 = vmatprep.mubr.f32.mxu0 0.0
    %2031 = vmatmul.mubr.f32.gmra.mrb[0].mxu0 %v1511
    %v2032 = vpop.f32.mrb[0].mxu0
    %v2033 = vadd.f32 %v1399, %v2032
    %v2034 = vpop.f32.mrb[0].mxu0
    %2035 = vmatprep.mubr.f32.mxu0 0.0
    %2036 = vmatmul.mubr.f32.gmra.mrb[0].mxu0 %v1514
    %v2037 = vpop.f32.mrb[0].mxu0
    %v2038 = vadd.f32 %v1399, %v2037
    %v2039 = vpop.f32.mrb[0].mxu0
    %2040 = vmatprep.mubr.f32.mxu0 0.0
    %2041 = vmatmul.mubr.f32.gmra.mrb[0].mxu0 %v1517
    %v2042 = vpop.f32.mrb[0].mxu0
    %v2043 = vadd.f32 %v1399, %v2042
    %v2044 = vpop.f32.mrb[0].mxu0
    %2045 = vmatprep.mubr.f32.mxu0 0.0
    %2046 = vmatmul.mubr.f32.gmra.mrb[0].mxu0 %v1520
    %v2047 = vpop.f32.mrb[0].mxu0
    %v2048 = vadd.f32 %v1399, %v2047
    %v2049 = vpop.f32.mrb[0].mxu0
    %2050 = vmatprep.mubr.f32.mxu0 0.0
    %2051 = vmatmul.mubr.f32.gmra.mrb[0].mxu0 %v1523
    %v2052 = vpop.f32.mrb[0].mxu0
    %v2053 = vadd.f32 %v1399, %v2052
    %v2054 = vpop.f32.mrb[0].mxu0
    %2055 = vmatprep.mubr.f32.mxu0 0.0
    %2056 = vmatmul.mubr.f32.gmra.mrb[0].mxu0 %v1526
    %v2057 = vpop.f32.mrb[0].mxu0
    %v2058 = vadd.f32 %v1399, %v2057
    %v2059 = vpop.f32.mrb[0].mxu0
    %2060 = vmatprep.mubr.f32.mxu0 0.0
    %2061 = vmatmul.mubr.f32.gmra.mrb[0].mxu0 %v1529
    %v2062 = vpop.f32.mrb[0].mxu0
    %v2063 = vadd.f32 %v1399, %v2062
    %v2064 = vpop.f32.mrb[0].mxu0
    %2065 = vmatprep.mubr.f32.mxu0 0.0
    %2066 = vmatmul.mubr.f32.gmra.mrb[0].mxu0 %v1532
    %v2067 = vpop.f32.mrb[0].mxu0
    %v2068 = vadd.f32 %v1399, %v2067
    %v2069 = vpop.f32.mrb[0].mxu0
    %2070 = vmatprep.mubr.f32.mxu0 0.0
    %2071 = vmatmul.mubr.f32.gmra.mrb[0].mxu0 %v1535
    %v2072 = vpop.f32.mrb[0].mxu0
    %v2073 = vadd.f32 %v1399, %v2072
    %v2074 = vpop.f32.mrb[0].mxu0
    %2075 = vmatprep.mubr.f32.mxu0 0.0
    %2076 = vmatmul.mubr.f32.gmra.mrb[0].mxu0 %v1538
    %v2077 = vpop.f32.mrb[0].mxu0
    %v2078 = vadd.f32 %v1399, %v2077
    %v2079 = vpop.f32.mrb[0].mxu0
    %2080 = vmatprep.mubr.f32.mxu0 0.0
    %2081 = vmatmul.mubr.f32.gmra.mrb[0].mxu0 %v1541
    %v2082 = vpop.f32.mrb[0].mxu0
    %v2083 = vadd.f32 %v1399, %v2082
    %v2084 = vpop.f32.mrb[0].mxu0
    %2085 = vmatprep.mubr.f32.mxu0 0.0
    %2086 = vmatmul.mubr.f32.gmra.mrb[0].mxu0 %v1544
    %v2087 = vpop.f32.mrb[0].mxu0
    %v2088 = vadd.f32 %v1399, %v2087
    %v2089 = vpop.f32.mrb[0].mxu0
    %2090 = vmatprep.mubr.f32.mxu0 0.0
    %2091 = vmatmul.mubr.f32.gmra.mrb[0].mxu0 %v1547
    %v2092 = vpop.f32.mrb[0].mxu0
    %v2093 = vadd.f32 %v1399, %v2092
    %v2094 = vpop.f32.mrb[0].mxu0
    %2095 = vmatprep.mubr.f32.mxu0 0.0
    %2096 = vmatmul.mubr.f32.gmra.mrb[0].mxu0 %v1550
    %v2097 = vpop.f32.mrb[0].mxu0
    %v2098 = vadd.f32 %v1399, %v2097
    %v2099 = vpop.f32.mrb[0].mxu0
    %2100 = vmatprep.mubr.f32.mxu0 0.0
    %2101 = vmatmul.mubr.f32.gmra.mrb[0].mxu0 %v1553
    %v2102 = vpop.f32.mrb[0].mxu0
    %v2103 = vadd.f32 %v1399, %v2102
    %v2104 = vpop.f32.mrb[0].mxu0
    %2105 = vmatprep.mubr.f32.mxu0 0.0
    %2106 = vmatmul.mubr.f32.gmra.mrb[0].mxu0 %v1556
    %v2107 = vpop.f32.mrb[0].mxu0
    %v2108 = vadd.f32 %v1399, %v2107
    %v2109 = vpop.f32.mrb[0].mxu0
    %2110 = vmatprep.mubr.f32.mxu0 0.0
    %2111 = vmatmul.mubr.f32.gmra.mrb[0].mxu0 %v1559
    %v2112 = vpop.f32.mrb[0].mxu0
    %v2113 = vadd.f32 %v1399, %v2112
    %v2114 = vpop.f32.mrb[0].mxu0
    %2115 = vmatprep.mubr.f32.mxu0 0.0
    %2116 = vmatmul.mubr.f32.gmra.mrb[0].mxu0 %v1562
    %v2117 = vpop.f32.mrb[0].mxu0
    %v2118 = vadd.f32 %v1399, %v2117
    %v2119 = vpop.f32.mrb[0].mxu0
    %2120 = vmatprep.mubr.f32.mxu0 0.0
    %2121 = vmatmul.mubr.f32.gmra.mrb[0].mxu0 %v1565
    %v2122 = vpop.f32.mrb[0].mxu0
    %v2123 = vadd.f32 %v1399, %v2122
    %v2124 = vpop.f32.mrb[0].mxu0
    %2125 = vmatprep.mubr.f32.mxu0 0.0
    %2126 = vmatmul.mubr.f32.gmra.mrb[0].mxu0 %v1568
    %v2127 = vpop.f32.mrb[0].mxu0
    %v2128 = vadd.f32 %v1399, %v2127
    %v2129 = vpop.f32.mrb[0].mxu0
    %2130 = vmatprep.mubr.f32.mxu0 0.0
    %2131 = vmatmul.mubr.f32.gmra.mrb[0].mxu0 %v1571
    %v2132 = vpop.f32.mrb[0].mxu0
    %v2133 = vadd.f32 %v1399, %v2132
    %v2134 = vpop.f32.mrb[0].mxu0
    %2135 = vmatprep.mubr.f32.mxu0 0.0
    %2136 = vmatmul.mubr.f32.gmra.mrb[0].mxu0 %v1574
    %v2137 = vpop.f32.mrb[0].mxu0
    %v2138 = vadd.f32 %v1399, %v2137
    %v2139 = vpop.f32.mrb[0].mxu0
    %2140 = vmatprep.mubr.f32.mxu0 0.0
    %2141 = vmatmul.mubr.f32.gmra.mrb[0].mxu0 %v1577
    %v2142 = vpop.f32.mrb[0].mxu0
    %v2143 = vadd.f32 %v1399, %v2142
    %v2144 = vpop.f32.mrb[0].mxu0
    %2145 = vmatprep.mubr.f32.mxu0 0.0
    %2146 = vmatmul.mubr.f32.gmra.mrb[0].mxu0 %v1580
    %v2147 = vpop.f32.mrb[0].mxu0
    %v2148 = vadd.f32 %v1399, %v2147
    %v2149 = vpop.f32.mrb[0].mxu0
    %2150 = vmatprep.mubr.f32.mxu0 0.0
    %2151 = vmatmul.mubr.f32.gmra.mrb[0].mxu0 %v1583
    %v2152 = vpop.f32.mrb[0].mxu0
    %v2153 = vadd.f32 %v1399, %v2152
    %v2154 = vpop.f32.mrb[0].mxu0
    %2155 = vmatprep.mubr.f32.mxu0 0.0
    %2156 = vmatmul.mubr.f32.gmra.mrb[0].mxu0 %v1586
    %v2157 = vpop.f32.mrb[0].mxu0
    %v2158 = vadd.f32 %v1399, %v2157
    %v2159 = vpop.f32.mrb[0].mxu0
    %2160 = vmatprep.mubr.f32.mxu0 0.0
    %2161 = vmatmul.mubr.f32.gmra.mrb[0].mxu0 %v1589
    %v2162 = vpop.f32.mrb[0].mxu0
    %v2163 = vadd.f32 %v1399, %v2162
    %v2164 = vpop.f32.mrb[0].mxu0
    %2165 = vmatprep.mubr.f32.mxu0 0.0
    %2166 = vmatmul.mubr.f32.gmra.mrb[0].mxu0 %v1592
    %v2167 = vpop.f32.mrb[0].mxu0
    %v2168 = vadd.f32 %v1399, %v2167
    %v2169 = vpop.f32.mrb[0].mxu0
    %2170 = vmatprep.mubr.f32.mxu0 0.0
    %2171 = vmatmul.mubr.f32.gmra.mrb[0].mxu0 %v1595
    %v2172 = vpop.f32.mrb[0].mxu0
    %v2173 = vadd.f32 %v1399, %v2172
    %v2174 = vpop.f32.mrb[0].mxu0
    %2175 = vmatprep.mubr.f32.mxu0 0.0
    %2176 = vmatmul.mubr.f32.gmra.mrb[0].mxu0 %v1598
    %v2177 = vpop.f32.mrb[0].mxu0
    %v2178 = vadd.f32 %v1399, %v2177
    %v2179 = vpop.f32.mrb[0].mxu0
    %2180 = vmatprep.mubr.f32.mxu0 0.0
    %2181 = vmatmul.mubr.f32.gmra.mrb[0].mxu0 %v1601
    %v2182 = vpop.f32.mrb[0].mxu0
    %v2183 = vadd.f32 %v1399, %v2182
    %v2184 = vpop.f32.mrb[0].mxu0
    %2185 = vmatprep.mubr.f32.mxu0 0.0
    %2186 = vmatmul.mubr.f32.gmra.mrb[0].mxu0 %v1604
    %v2187 = vpop.f32.mrb[0].mxu0
    %v2188 = vadd.f32 %v1399, %v2187
    %v2189 = vpop.f32.mrb[0].mxu0
    %2190 = vmatprep.mubr.f32.mxu0 0.0
    %2191 = vmatmul.mubr.f32.gmra.mrb[0].mxu0 %v1607
    %v2192 = vpop.f32.mrb[0].mxu0
    %v2193 = vadd.f32 %v1399, %v2192
    %v2194 = vpop.f32.mrb[0].mxu0
    %2195 = vmatprep.mubr.f32.mxu0 0.0
    %2196 = vmatmul.mubr.f32.gmra.mrb[0].mxu0 %v1610
    %v2197 = vpop.f32.mrb[0].mxu0
    %v2198 = vadd.f32 %v1399, %v2197
    %v2199 = vpop.f32.mrb[0].mxu0
    %2200 = vmatprep.mubr.f32.mxu0 0.0
    %2201 = vmatmul.mubr.f32.gmra.mrb[0].mxu0 %v1613
    %v2202 = vpop.f32.mrb[0].mxu0
    %v2203 = vadd.f32 %v1399, %v2202
    %v2204 = vpop.f32.mrb[0].mxu0
    %2205 = vmatprep.mubr.f32.mxu0 0.0
    %2206 = vmatmul.mubr.f32.gmra.mrb[0].mxu0 %v1616
    %v2207 = vpop.f32.mrb[0].mxu0
    %v2208 = vadd.f32 %v1399, %v2207
    %v2209 = vpop.f32.mrb[0].mxu0
    %2210 = vmatprep.mubr.f32.mxu0 0.0
    %2211 = vmatmul.mubr.f32.gmra.mrb[0].mxu0 %v1619
    %v2212 = vpop.f32.mrb[0].mxu0
    %v2213 = vadd.f32 %v1399, %v2212
    %v2214 = vpop.f32.mrb[0].mxu0
    %2215 = vmatprep.mubr.f32.mxu0 0.0
    %2216 = vmatmul.mubr.f32.gmra.mrb[0].mxu0 %v1622
    %v2217 = vpop.f32.mrb[0].mxu0
    %v2218 = vadd.f32 %v1399, %v2217
    %v2219 = vpop.f32.mrb[0].mxu0
    %2220 = vmatprep.mubr.f32.mxu0 0.0
    %2221 = vmatmul.mubr.f32.gmra.mrb[0].mxu0 %v1625
    %v2222 = vpop.f32.mrb[0].mxu0
    %v2223 = vadd.f32 %v1399, %v2222
    %v2224 = vpop.f32.mrb[0].mxu0
    %2225 = vmatprep.mubr.f32.mxu0 0.0
    %2226 = vmatmul.mubr.f32.gmra.mrb[0].mxu0 %v1628
    %v2227 = vpop.f32.mrb[0].mxu0
    %v2228 = vadd.f32 %v1399, %v2227
    %v2229 = vpop.f32.mrb[0].mxu0
    %2230 = vmatprep.mubr.f32.mxu0 0.0
    %2231 = vmatmul.mubr.f32.gmra.mrb[0].mxu0 %v1631
    %v2232 = vpop.f32.mrb[0].mxu0
    %v2233 = vadd.f32 %v1399, %v2232
    %v2234 = vpop.f32.mrb[0].mxu0
    %2235 = vmatprep.mubr.f32.mxu0 0.0
    %2236 = vmatmul.mubr.f32.gmra.mrb[0].mxu0 %v1634
    %v2237 = vpop.f32.mrb[0].mxu0
    %v2238 = vadd.f32 %v1399, %v2237
    %v2239 = vpop.f32.mrb[0].mxu0
    %2240 = vmatprep.mubr.f32.mxu0 0.0
    %2241 = vmatmul.mubr.f32.gmra.mrb[0].mxu0 %v1637
    %v2242 = vpop.f32.mrb[0].mxu0
    %v2243 = vadd.f32 %v1399, %v2242
    %v2244 = vpop.f32.mrb[0].mxu0
    %2245 = vmatprep.mubr.f32.mxu0 0.0
    %2246 = vmatmul.mubr.f32.gmra.mrb[0].mxu0 %v1640
    %v2247 = vpop.f32.mrb[0].mxu0
    %v2248 = vadd.f32 %v1399, %v2247
    %v2249 = vpop.f32.mrb[0].mxu0
    %2250 = vmatprep.mubr.f32.mxu0 0.0
    %2251 = vmatmul.mubr.f32.gmra.mrb[0].mxu0 %v1643
    %v2252 = vpop.f32.mrb[0].mxu0
    %v2253 = vadd.f32 %v1399, %v2252
    %v2254 = vpop.f32.mrb[0].mxu0
    %2255 = vmatprep.mubr.f32.mxu0 0.0
    %2256 = vmatmul.mubr.f32.gmra.mrb[0].mxu0 %v1646
    %v2257 = vpop.f32.mrb[0].mxu0
    %v2258 = vadd.f32 %v1399, %v2257
    %v2259 = vpop.f32.mrb[0].mxu0
    %2260 = vmatprep.mubr.f32.mxu0 0.0
    %2261 = vmatmul.mubr.f32.gmra.mrb[0].mxu0 %v1649
    %v2262 = vpop.f32.mrb[0].mxu0
    %v2263 = vadd.f32 %v1399, %v2262
    %v2264 = vpop.f32.mrb[0].mxu0
    %2265 = vmatprep.mubr.f32.mxu0 0.0
    %2266 = vmatmul.mubr.f32.gmra.mrb[0].mxu0 %v1652
    %v2267 = vpop.f32.mrb[0].mxu0
    %v2268 = vadd.f32 %v1399, %v2267
    %v2269 = vpop.f32.mrb[0].mxu0
    %2270 = vmatprep.mubr.f32.mxu0 0.0
    %2271 = vmatmul.mubr.f32.gmra.mrb[0].mxu0 %v1655
    %v2272 = vpop.f32.mrb[0].mxu0
    %v2273 = vadd.f32 %v1399, %v2272
    %v2274 = vpop.f32.mrb[0].mxu0
    %2275 = vmatprep.mubr.f32.mxu0 0.0
    %2276 = vmatmul.mubr.f32.gmra.mrb[0].mxu0 %v1658
    %v2277 = vpop.f32.mrb[0].mxu0
    %v2278 = vadd.f32 %v1399, %v2277
    %v2279 = vpop.f32.mrb[0].mxu0
    %2280 = vmatprep.mubr.f32.mxu0 0.0
    %2281 = vmatmul.mubr.f32.gmra.mrb[0].mxu0 %v1661
    %v2282 = vpop.f32.mrb[0].mxu0
    %v2283 = vadd.f32 %v1399, %v2282
    %v2284 = vpop.f32.mrb[0].mxu0
    %2285 = vmatprep.mubr.f32.mxu0 0.0
    %2286 = vmatmul.mubr.f32.gmra.mrb[0].mxu0 %v1664
    %v2287 = vpop.f32.mrb[0].mxu0
    %v2288 = vadd.f32 %v1399, %v2287
    %v2289 = vpop.f32.mrb[0].mxu0
    %2290 = vmatprep.mubr.f32.mxu0 0.0
    %2291 = vmatmul.mubr.f32.gmra.mrb[0].mxu0 %v1667
    %v2292 = vpop.f32.mrb[0].mxu0
    %v2293 = vadd.f32 %v1399, %v2292
    %v2294 = vpop.f32.mrb[0].mxu0
    %2295 = vmatprep.mubr.f32.mxu0 0.0
    %2296 = vmatmul.mubr.f32.gmra.mrb[0].mxu0 %v1670
    %v2297 = vpop.f32.mrb[0].mxu0
    %v2298 = vadd.f32 %v1399, %v2297
    %v2299 = vpop.f32.mrb[0].mxu0
    %2300 = vmatprep.mubr.f32.mxu0 0.0
    %2301 = vmatmul.mubr.f32.gmra.mrb[0].mxu0 %v1673
    %v2302 = vpop.f32.mrb[0].mxu0
    %v2303 = vadd.f32 %v1399, %v2302
    %v2304 = vpop.f32.mrb[0].mxu0
    %2305 = vmatprep.mubr.f32.mxu0 0.0
    %2306 = vmatmul.mubr.f32.gmra.mrb[0].mxu0 %v1676
    %v2307 = vpop.f32.mrb[0].mxu0
    %v2308 = vadd.f32 %v1399, %v2307
    %v2309 = vpop.f32.mrb[0].mxu0
    %2310 = vmatprep.mubr.f32.mxu0 0.0
    %2311 = vmatmul.mubr.f32.gmra.mrb[0].mxu0 %v1679
    %v2312 = vpop.f32.mrb[0].mxu0
    %v2313 = vadd.f32 %v1399, %v2312
    %v2314 = vpop.f32.mrb[0].mxu0
    %2315 = vmatprep.mubr.f32.mxu0 0.0
    %2316 = vmatmul.mubr.f32.gmra.mrb[0].mxu0 %v1682
    %v2317 = vpop.f32.mrb[0].mxu0
    %v2318 = vadd.f32 %v1399, %v2317
    %v2319 = vpop.f32.mrb[0].mxu0
    %2320 = vmatprep.mubr.f32.mxu0 0.0
    %2321 = vmatmul.mubr.f32.gmra.mrb[0].mxu0 %v1685
    %v2322 = vpop.f32.mrb[0].mxu0
    %v2323 = vadd.f32 %v1399, %v2322
    %v2324 = vpop.f32.mrb[0].mxu0
    %2325 = vmatprep.mubr.f32.mxu0 0.0
    %2326 = vmatmul.mubr.f32.gmra.mrb[0].mxu0 %v1688
    %v2327 = vpop.f32.mrb[0].mxu0
    %v2328 = vadd.f32 %v1399, %v2327
    %v2329 = vpop.f32.mrb[0].mxu0
    %2330 = vmatprep.mubr.f32.mxu0 0.0
    %2331 = vmatmul.mubr.f32.gmra.mrb[0].mxu0 %v1691
    %v2332 = vpop.f32.mrb[0].mxu0
    %v2333 = vadd.f32 %v1399, %v2332
    %v2334 = vpop.f32.mrb[0].mxu0
    %2335 = vmatprep.mubr.f32.mxu0 0.0
    %2336 = vmatmul.mubr.f32.gmra.mrb[0].mxu0 %v1694
    %v2337 = vpop.f32.mrb[0].mxu0
    %v2338 = vadd.f32 %v1399, %v2337
    %v2339 = vpop.f32.mrb[0].mxu0
    %2340 = vmatprep.mubr.f32.mxu0 0.0
    %2341 = vmatmul.mubr.f32.gmra.mrb[0].mxu0 %v1697
    %v2342 = vpop.f32.mrb[0].mxu0
    %v2343 = vadd.f32 %v1399, %v2342
    %v2344 = vpop.f32.mrb[0].mxu0
    %2345 = vmatprep.mubr.f32.mxu0 0.0
    %2346 = vmatmul.mubr.f32.gmra.mrb[0].mxu0 %v1700
    %v2347 = vpop.f32.mrb[0].mxu0
    %v2348 = vadd.f32 %v1399, %v2347
    %v2349 = vpop.f32.mrb[0].mxu0
    %2350 = vmatprep.mubr.f32.mxu0 0.0
    %2351 = vmatmul.mubr.f32.gmra.mrb[0].mxu0 %v1703
    %v2352 = vpop.f32.mrb[0].mxu0
    %v2353 = vadd.f32 %v1399, %v2352
    %v2354 = vpop.f32.mrb[0].mxu0
    %2355 = vmatprep.mubr.f32.mxu0 0.0
    %2356 = vmatmul.mubr.f32.gmra.mrb[0].mxu0 %v1706
    %v2357 = vpop.f32.mrb[0].mxu0
    %v2358 = vadd.f32 %v1399, %v2357
    %v2359 = vpop.f32.mrb[0].mxu0
    %2360 = vmatprep.mubr.f32.mxu0 0.0
    %2361 = vmatmul.mubr.f32.gmra.mrb[0].mxu0 %v1709
    %v2362 = vpop.f32.mrb[0].mxu0
    %v2363 = vadd.f32 %v1399, %v2362
    %v2364 = vpop.f32.mrb[0].mxu0
    %2365 = vmatprep.mubr.f32.mxu0 0.0
    %2366 = vmatmul.mubr.f32.gmra.mrb[0].mxu0 %v1712
    %v2367 = vpop.f32.mrb[0].mxu0
    %v2368 = vadd.f32 %v1399, %v2367
    %v2369 = vpop.f32.mrb[0].mxu0
    %2370 = vmatprep.mubr.f32.mxu0 0.0
    %2371 = vmatmul.mubr.f32.gmra.mrb[0].mxu0 %v1715
    %v2372 = vpop.f32.mrb[0].mxu0
    %v2373 = vadd.f32 %v1399, %v2372
    %v2374 = vpop.f32.mrb[0].mxu0
    %2375 = vmatprep.mubr.f32.mxu0 0.0
    %2376 = vmatmul.mubr.f32.gmra.mrb[0].mxu0 %v1718
    %v2377 = vpop.f32.mrb[0].mxu0
    %v2378 = vadd.f32 %v1399, %v2377
    %v2379 = vpop.f32.mrb[0].mxu0
    %2380 = vmatprep.mubr.f32.mxu0 0.0
    %2381 = vmatmul.mubr.f32.gmra.mrb[0].mxu0 %v1721
    %v2382 = vpop.f32.mrb[0].mxu0
    %v2383 = vadd.f32 %v1399, %v2382
    %v2384 = vpop.f32.mrb[0].mxu0
    %2385 = vmatprep.mubr.f32.mxu0 0.0
    %2386 = vmatmul.mubr.f32.gmra.mrb[0].mxu0 %v1724
    %v2387 = vpop.f32.mrb[0].mxu0
    %v2388 = vadd.f32 %v1399, %v2387
    %v2389 = vpop.f32.mrb[0].mxu0
    %2390 = vmatprep.mubr.f32.mxu0 0.0
    %2391 = vmatmul.mubr.f32.gmra.mrb[0].mxu0 %v1727
    %v2392 = vpop.f32.mrb[0].mxu0
    %v2393 = vadd.f32 %v1399, %v2392
    %v2394 = vpop.f32.mrb[0].mxu0
    %2395 = vmatprep.mubr.f32.mxu0 0.0
    %2396 = vmatmul.mubr.f32.gmra.mrb[0].mxu0 %v1730
    %v2397 = vpop.f32.mrb[0].mxu0
    %v2398 = vadd.f32 %v1399, %v2397
    %v2399 = vpop.f32.mrb[0].mxu0
    %2400 = vmatprep.mubr.f32.mxu0 0.0
    %2401 = vmatmul.mubr.f32.gmra.mrb[0].mxu0 %v1733
    %v2402 = vpop.f32.mrb[0].mxu0
    %v2403 = vadd.f32 %v1399, %v2402
    %v2404 = vpop.f32.mrb[0].mxu0
    %2405 = vmatprep.mubr.f32.mxu0 0.0
    %2406 = vmatmul.mubr.f32.gmra.mrb[0].mxu0 %v1736
    %v2407 = vpop.f32.mrb[0].mxu0
    %v2408 = vadd.f32 %v1399, %v2407
    %v2409 = vpop.f32.mrb[0].mxu0
    %2410 = vmatprep.mubr.f32.mxu0 0.0
    %2411 = vmatmul.mubr.f32.gmra.mrb[0].mxu0 %v1739
    %v2412 = vpop.f32.mrb[0].mxu0
    %v2413 = vadd.f32 %v1399, %v2412
    %v2414 = vpop.f32.mrb[0].mxu0
    %2415 = vmatprep.mubr.f32.mxu0 0.0
    %2416 = vmatmul.mubr.f32.gmra.mrb[0].mxu0 %v1742
    %v2417 = vpop.f32.mrb[0].mxu0
    %v2418 = vadd.f32 %v1399, %v2417
    %v2419 = vpop.f32.mrb[0].mxu0
    %2420 = vmatprep.mubr.f32.mxu0 0.0
    %2421 = vmatmul.mubr.f32.gmra.mrb[0].mxu0 %v1745
    %v2422 = vpop.f32.mrb[0].mxu0
    %v2423 = vadd.f32 %v1399, %v2422
    %v2424 = vpop.f32.mrb[0].mxu0
    %2425 = vmatprep.mubr.f32.mxu0 0.0
    %2426 = vmatmul.mubr.f32.gmra.mrb[0].mxu0 %v1748
    %v2427 = vpop.f32.mrb[0].mxu0
    %v2428 = vadd.f32 %v1399, %v2427
    %v2429 = vpop.f32.mrb[0].mxu0
    %2430 = vmatprep.mubr.f32.mxu0 0.0
    %2431 = vmatmul.mubr.f32.gmra.mrb[0].mxu0 %v1751
    %v2432 = vpop.f32.mrb[0].mxu0
    %v2433 = vadd.f32 %v1399, %v2432
    %v2434 = vpop.f32.mrb[0].mxu0
    %2435 = vmatprep.mubr.f32.mxu0 0.0
    %2436 = vmatmul.mubr.f32.gmra.mrb[0].mxu0 %v1754
    %v2437 = vpop.f32.mrb[0].mxu0
    %v2438 = vadd.f32 %v1399, %v2437
    %v2439 = vpop.f32.mrb[0].mxu0
    %2440 = vmatprep.mubr.f32.mxu0 0.0
    %2441 = vmatmul.mubr.f32.gmra.mrb[0].mxu0 %v1757
    %v2442 = vpop.f32.mrb[0].mxu0
    %v2443 = vadd.f32 %v1399, %v2442
    %v2444 = vpop.f32.mrb[0].mxu0
    %2445 = vmatprep.mubr.f32.mxu0 0.0
    %2446 = vmatmul.mubr.f32.gmra.mrb[0].mxu0 %v1760
    %v2447 = vpop.f32.mrb[0].mxu0
    %v2448 = vadd.f32 %v1399, %v2447
    %v2449 = vpop.f32.mrb[0].mxu0
    %2450 = vmatprep.mubr.f32.mxu0 0.0
    %2451 = vmatmul.mubr.f32.gmra.mrb[0].mxu0 %v1763
    %v2452 = vpop.f32.mrb[0].mxu0
    %v2453 = vadd.f32 %v1399, %v2452
    %v2454 = vpop.f32.mrb[0].mxu0
    %2455 = vmatprep.mubr.f32.mxu0 0.0
    %2456 = vmatmul.mubr.f32.gmra.mrb[0].mxu0 %v1766
    %v2457 = vpop.f32.mrb[0].mxu0
    %v2458 = vadd.f32 %v1399, %v2457
    %v2459 = vpop.f32.mrb[0].mxu0
    %2460 = vmatprep.mubr.f32.mxu0 0.0
    %2461 = vmatmul.mubr.f32.gmra.mrb[0].mxu0 %v1769
    %v2462 = vpop.f32.mrb[0].mxu0
    %v2463 = vadd.f32 %v1399, %v2462
    %v2464 = vpop.f32.mrb[0].mxu0
    %2465 = vmatprep.mubr.f32.mxu0 0.0
    %2466 = vmatmul.mubr.f32.gmra.mrb[0].mxu0 %v1772
    %v2467 = vpop.f32.mrb[0].mxu0
    %v2468 = vadd.f32 %v1399, %v2467
    %v2469 = vpop.f32.mrb[0].mxu0
    %2470 = vmatprep.mubr.f32.mxu0 0.0
    %2471 = vmatmul.mubr.f32.gmra.mrb[0].mxu0 %v1775
    %v2472 = vpop.f32.mrb[0].mxu0
    %v2473 = vadd.f32 %v1399, %v2472
    %v2474 = vpop.f32.mrb[0].mxu0
    %2475 = vmatprep.mubr.f32.mxu0 0.0
    %2476 = vmatmul.mubr.f32.gmra.mrb[0].mxu0 %v1778
    %v2477 = vpop.f32.mrb[0].mxu0
    %v2478 = vadd.f32 %v1399, %v2477
    %v2479 = vpop.f32.mrb[0].mxu0
    %2480 = vmatprep.mubr.f32.mxu0 0.0
    %2481 = vmatmul.mubr.f32.gmra.mrb[0].mxu0 %v1781
    %v2482 = vpop.f32.mrb[0].mxu0
    %v2483 = vadd.f32 %v1399, %v2482
    %v2484 = vpop.f32.mrb[0].mxu0
    %2485 = vmatprep.mubr.f32.mxu0 0.0
    %2486 = vmatmul.mubr.f32.gmra.mrb[0].mxu0 %v1784
    %v2487 = vpop.f32.mrb[0].mxu0
    %v2488 = vadd.f32 %v1399, %v2487
    %v2489 = vpop.f32.mrb[0].mxu0
    %2490 = vdwg.mxu0
    %v2491 = vmax.f32 %v1853, 0.0
    %v2492 = vmax.f32 %v1858, 0.0
    %v2493 = vmax.f32 %v1863, 0.0
    %v2494 = vmax.f32 %v1868, 0.0
    %v2495 = vmax.f32 %v1873, 0.0
    %v2496 = vmax.f32 %v1878, 0.0
    %v2497 = vmax.f32 %v1883, 0.0
    %v2498 = vmax.f32 %v1888, 0.0
    %v2499 = vmax.f32 %v1893, 0.0
    %v2500 = vmax.f32 %v1898, 0.0
    %v2501 = vmax.f32 %v1903, 0.0
    %v2502 = vmax.f32 %v1908, 0.0
    %v2503 = vmax.f32 %v1913, 0.0
    %v2504 = vmax.f32 %v1918, 0.0
    %v2505 = vmax.f32 %v1923, 0.0
    %v2506 = vmax.f32 %v1928, 0.0
    %v2507 = vmax.f32 %v1933, 0.0
    %v2508 = vmax.f32 %v1938, 0.0
    %v2509 = vmax.f32 %v1943, 0.0
    %v2510 = vmax.f32 %v1948, 0.0
    %v2511 = vmax.f32 %v1953, 0.0
    %v2512 = vmax.f32 %v1958, 0.0
    %v2513 = vmax.f32 %v1963, 0.0
    %v2514 = vmax.f32 %v1968, 0.0
    %v2515 = vmax.f32 %v1973, 0.0
    %v2516 = vmax.f32 %v1978, 0.0
    %v2517 = vmax.f32 %v1983, 0.0
    %v2518 = vmax.f32 %v1988, 0.0
    %v2519 = vmax.f32 %v1993, 0.0
    %v2520 = vmax.f32 %v1998, 0.0
    %v2521 = vmax.f32 %v2003, 0.0
    %v2522 = vmax.f32 %v2008, 0.0
    %v2523 = vmax.f32 %v2013, 0.0
    %v2524 = vmax.f32 %v2018, 0.0
    %v2525 = vmax.f32 %v2023, 0.0
    %v2526 = vmax.f32 %v2028, 0.0
    %v2527 = vmax.f32 %v2033, 0.0
    %v2528 = vmax.f32 %v2038, 0.0
    %v2529 = vmax.f32 %v2043, 0.0
    %v2530 = vmax.f32 %v2048, 0.0
    %v2531 = vmax.f32 %v2053, 0.0
    %v2532 = vmax.f32 %v2058, 0.0
    %v2533 = vmax.f32 %v2063, 0.0
    %v2534 = vmax.f32 %v2068, 0.0
    %v2535 = vmax.f32 %v2073, 0.0
    %v2536 = vmax.f32 %v2078, 0.0
    %v2537 = vmax.f32 %v2083, 0.0
    %v2538 = vmax.f32 %v2088, 0.0
    %v2539 = vmax.f32 %v2093, 0.0
    %v2540 = vmax.f32 %v2098, 0.0
    %v2541 = vmax.f32 %v2103, 0.0
    %v2542 = vmax.f32 %v2108, 0.0
    %v2543 = vmax.f32 %v2113, 0.0
    %v2544 = vmax.f32 %v2118, 0.0
    %v2545 = vmax.f32 %v2123, 0.0
    %v2546 = vmax.f32 %v2128, 0.0
    %v2547 = vmax.f32 %v2133, 0.0
    %v2548 = vmax.f32 %v2138, 0.0
    %v2549 = vmax.f32 %v2143, 0.0
    %v2550 = vmax.f32 %v2148, 0.0
    %v2551 = vmax.f32 %v2153, 0.0
    %v2552 = vmax.f32 %v2158, 0.0
    %v2553 = vmax.f32 %v2163, 0.0
    %v2554 = vmax.f32 %v2168, 0.0
    %v2555 = vmax.f32 %v2173, 0.0
    %v2556 = vmax.f32 %v2178, 0.0
    %v2557 = vmax.f32 %v2183, 0.0
    %v2558 = vmax.f32 %v2188, 0.0
    %v2559 = vmax.f32 %v2193, 0.0
    %v2560 = vmax.f32 %v2198, 0.0
    %v2561 = vmax.f32 %v2203, 0.0
    %v2562 = vmax.f32 %v2208, 0.0
    %v2563 = vmax.f32 %v2213, 0.0
    %v2564 = vmax.f32 %v2218, 0.0
    %v2565 = vmax.f32 %v2223, 0.0
    %v2566 = vmax.f32 %v2228, 0.0
    %v2567 = vmax.f32 %v2233, 0.0
    %v2568 = vmax.f32 %v2238, 0.0
    %v2569 = vmax.f32 %v2243, 0.0
    %v2570 = vmax.f32 %v2248, 0.0
    %v2571 = vmax.f32 %v2253, 0.0
    %v2572 = vmax.f32 %v2258, 0.0
    %v2573 = vmax.f32 %v2263, 0.0
    %v2574 = vmax.f32 %v2268, 0.0
    %v2575 = vmax.f32 %v2273, 0.0
    %v2576 = vmax.f32 %v2278, 0.0
    %v2577 = vmax.f32 %v2283, 0.0
    %v2578 = vmax.f32 %v2288, 0.0
    %v2579 = vmax.f32 %v2293, 0.0
    %v2580 = vmax.f32 %v2298, 0.0
    %v2581 = vmax.f32 %v2303, 0.0
    %v2582 = vmax.f32 %v2308, 0.0
    %v2583 = vmax.f32 %v2313, 0.0
    %v2584 = vmax.f32 %v2318, 0.0
    %v2585 = vmax.f32 %v2323, 0.0
    %v2586 = vmax.f32 %v2328, 0.0
    %v2587 = vmax.f32 %v2333, 0.0
    %v2588 = vmax.f32 %v2338, 0.0
    %v2589 = vmax.f32 %v2343, 0.0
    %v2590 = vmax.f32 %v2348, 0.0
    %v2591 = vmax.f32 %v2353, 0.0
    %v2592 = vmax.f32 %v2358, 0.0
    %v2593 = vmax.f32 %v2363, 0.0
    %v2594 = vmax.f32 %v2368, 0.0
    %v2595 = vmax.f32 %v2373, 0.0
    %v2596 = vmax.f32 %v2378, 0.0
    %v2597 = vmax.f32 %v2383, 0.0
    %v2598 = vmax.f32 %v2388, 0.0
    %v2599 = vmax.f32 %v2393, 0.0
    %v2600 = vmax.f32 %v2398, 0.0
    %v2601 = vmax.f32 %v2403, 0.0
    %v2602 = vmax.f32 %v2408, 0.0
    %v2603 = vmax.f32 %v2413, 0.0
    %v2604 = vmax.f32 %v2418, 0.0
    %v2605 = vmax.f32 %v2423, 0.0
    %v2606 = vmax.f32 %v2428, 0.0
    %v2607 = vmax.f32 %v2433, 0.0
    %v2608 = vmax.f32 %v2438, 0.0
    %v2609 = vmax.f32 %v2443, 0.0
    %v2610 = vmax.f32 %v2448, 0.0
    %v2611 = vmax.f32 %v2453, 0.0
    %v2612 = vmax.f32 %v2458, 0.0
    %v2613 = vmax.f32 %v2463, 0.0
    %v2614 = vmax.f32 %v2468, 0.0
    %v2615 = vmax.f32 %v2473, 0.0
    %v2616 = vmax.f32 %v2478, 0.0
    %v2617 = vmax.f32 %v2483, 0.0
    %v2618 = vmax.f32 %v2488, 0.0
    %v2619 = vld [vmem:[%s5] sm:$0x1]
    %v2621 = vlaneseq
    %v2622 = vshrl.u32 %v2621, 7
    %v2623 = vsub.s32 0, %v2622
    %v2624 = vrot.slane %v2619, %v2623
    %v2626 = vmul.f32 %v2491, %v2624
    %v2627 = vmul.f32 %v2492, %v2624
    %v2628 = vmul.f32 %v2493, %v2624
    %v2629 = vmul.f32 %v2494, %v2624
    %v2630 = vmul.f32 %v2495, %v2624
    %v2631 = vmul.f32 %v2496, %v2624
    %v2632 = vmul.f32 %v2497, %v2624
    %v2633 = vmul.f32 %v2498, %v2624
    %v2634 = vmul.f32 %v2499, %v2624
    %v2635 = vmul.f32 %v2500, %v2624
    %v2636 = vmul.f32 %v2501, %v2624
    %v2637 = vmul.f32 %v2502, %v2624
    %v2638 = vmul.f32 %v2503, %v2624
    %v2639 = vmul.f32 %v2504, %v2624
    %v2640 = vmul.f32 %v2505, %v2624
    %v2641 = vmul.f32 %v2506, %v2624
    %v2642 = vmul.f32 %v2507, %v2624
    %v2643 = vmul.f32 %v2508, %v2624
    %v2644 = vmul.f32 %v2509, %v2624
    %v2645 = vmul.f32 %v2510, %v2624
    %v2646 = vmul.f32 %v2511, %v2624
    %v2647 = vmul.f32 %v2512, %v2624
    %v2648 = vmul.f32 %v2513, %v2624
    %v2649 = vmul.f32 %v2514, %v2624
    %v2650 = vmul.f32 %v2515, %v2624
    %v2651 = vmul.f32 %v2516, %v2624
    %v2652 = vmul.f32 %v2517, %v2624
    %v2653 = vmul.f32 %v2518, %v2624
    %v2654 = vmul.f32 %v2519, %v2624
    %v2655 = vmul.f32 %v2520, %v2624
    %v2656 = vmul.f32 %v2521, %v2624
    %v2657 = vmul.f32 %v2522, %v2624
    %v2658 = vmul.f32 %v2523, %v2624
    %v2659 = vmul.f32 %v2524, %v2624
    %v2660 = vmul.f32 %v2525, %v2624
    %v2661 = vmul.f32 %v2526, %v2624
    %v2662 = vmul.f32 %v2527, %v2624
    %v2663 = vmul.f32 %v2528, %v2624
    %v2664 = vmul.f32 %v2529, %v2624
    %v2665 = vmul.f32 %v2530, %v2624
    %v2666 = vmul.f32 %v2531, %v2624
    %v2667 = vmul.f32 %v2532, %v2624
    %v2668 = vmul.f32 %v2533, %v2624
    %v2669 = vmul.f32 %v2534, %v2624
    %v2670 = vmul.f32 %v2535, %v2624
    %v2671 = vmul.f32 %v2536, %v2624
    %v2672 = vmul.f32 %v2537, %v2624
    %v2673 = vmul.f32 %v2538, %v2624
    %v2674 = vmul.f32 %v2539, %v2624
    %v2675 = vmul.f32 %v2540, %v2624
    %v2676 = vmul.f32 %v2541, %v2624
    %v2677 = vmul.f32 %v2542, %v2624
    %v2678 = vmul.f32 %v2543, %v2624
    %v2679 = vmul.f32 %v2544, %v2624
    %v2680 = vmul.f32 %v2545, %v2624
    %v2681 = vmul.f32 %v2546, %v2624
    %v2682 = vmul.f32 %v2547, %v2624
    %v2683 = vmul.f32 %v2548, %v2624
    %v2684 = vmul.f32 %v2549, %v2624
    %v2685 = vmul.f32 %v2550, %v2624
    %v2686 = vmul.f32 %v2551, %v2624
    %v2687 = vmul.f32 %v2552, %v2624
    %v2688 = vmul.f32 %v2553, %v2624
    %v2689 = vmul.f32 %v2554, %v2624
    %v2690 = vmul.f32 %v2555, %v2624
    %v2691 = vmul.f32 %v2556, %v2624
    %v2692 = vmul.f32 %v2557, %v2624
    %v2693 = vmul.f32 %v2558, %v2624
    %v2694 = vmul.f32 %v2559, %v2624
    %v2695 = vmul.f32 %v2560, %v2624
    %v2696 = vmul.f32 %v2561, %v2624
    %v2697 = vmul.f32 %v2562, %v2624
    %v2698 = vmul.f32 %v2563, %v2624
    %v2699 = vmul.f32 %v2564, %v2624
    %v2700 = vmul.f32 %v2565, %v2624
    %v2701 = vmul.f32 %v2566, %v2624
    %v2702 = vmul.f32 %v2567, %v2624
    %v2703 = vmul.f32 %v2568, %v2624
    %v2704 = vmul.f32 %v2569, %v2624
    %v2705 = vmul.f32 %v2570, %v2624
    %v2706 = vmul.f32 %v2571, %v2624
    %v2707 = vmul.f32 %v2572, %v2624
    %v2708 = vmul.f32 %v2573, %v2624
    %v2709 = vmul.f32 %v2574, %v2624
    %v2710 = vmul.f32 %v2575, %v2624
    %v2711 = vmul.f32 %v2576, %v2624
    %v2712 = vmul.f32 %v2577, %v2624
    %v2713 = vmul.f32 %v2578, %v2624
    %v2714 = vmul.f32 %v2579, %v2624
    %v2715 = vmul.f32 %v2580, %v2624
    %v2716 = vmul.f32 %v2581, %v2624
    %v2717 = vmul.f32 %v2582, %v2624
    %v2718 = vmul.f32 %v2583, %v2624
    %v2719 = vmul.f32 %v2584, %v2624
    %v2720 = vmul.f32 %v2585, %v2624
    %v2721 = vmul.f32 %v2586, %v2624
    %v2722 = vmul.f32 %v2587, %v2624
    %v2723 = vmul.f32 %v2588, %v2624
    %v2724 = vmul.f32 %v2589, %v2624
    %v2725 = vmul.f32 %v2590, %v2624
    %v2726 = vmul.f32 %v2591, %v2624
    %v2727 = vmul.f32 %v2592, %v2624
    %v2728 = vmul.f32 %v2593, %v2624
    %v2729 = vmul.f32 %v2594, %v2624
    %v2730 = vmul.f32 %v2595, %v2624
    %v2731 = vmul.f32 %v2596, %v2624
    %v2732 = vmul.f32 %v2597, %v2624
    %v2733 = vmul.f32 %v2598, %v2624
    %v2734 = vmul.f32 %v2599, %v2624
    %v2735 = vmul.f32 %v2600, %v2624
    %v2736 = vmul.f32 %v2601, %v2624
    %v2737 = vmul.f32 %v2602, %v2624
    %v2738 = vmul.f32 %v2603, %v2624
    %v2739 = vmul.f32 %v2604, %v2624
    %v2740 = vmul.f32 %v2605, %v2624
    %v2741 = vmul.f32 %v2606, %v2624
    %v2742 = vmul.f32 %v2607, %v2624
    %v2743 = vmul.f32 %v2608, %v2624
    %v2744 = vmul.f32 %v2609, %v2624
    %v2745 = vmul.f32 %v2610, %v2624
    %v2746 = vmul.f32 %v2611, %v2624
    %v2747 = vmul.f32 %v2612, %v2624
    %v2748 = vmul.f32 %v2613, %v2624
    %v2749 = vmul.f32 %v2614, %v2624
    %v2750 = vmul.f32 %v2615, %v2624
    %v2751 = vmul.f32 %v2616, %v2624
    %v2752 = vmul.f32 %v2617, %v2624
    %v2753 = vmul.f32 %v2618, %v2624
    %v2754 = vsel %vm168, %v2626, 0.0
    %2755 = vadd.xlane.f32.xlu0 %v2754
    %v2756 = vpop.xlane.xlu0 %2755
    %v2757 = vsel %vm168, %v2627, 0.0
    %2758 = vadd.xlane.f32.xlu0 %v2757
    %v2759 = vpop.xlane.xlu0 %2758
    %v2760 = vsel %vm168, %v2628, 0.0
    %2761 = vadd.xlane.f32.xlu0 %v2760
    %v2762 = vpop.xlane.xlu0 %2761
    %v2763 = vsel %vm168, %v2629, 0.0
    %2764 = vadd.xlane.f32.xlu0 %v2763
    %v2765 = vpop.xlane.xlu0 %2764
    %v2766 = vsel %vm168, %v2630, 0.0
    %2767 = vadd.xlane.f32.xlu0 %v2766
    %v2768 = vpop.xlane.xlu0 %2767
    %v2769 = vsel %vm168, %v2631, 0.0
    %2770 = vadd.xlane.f32.xlu0 %v2769
    %v2771 = vpop.xlane.xlu0 %2770
    %v2772 = vsel %vm168, %v2632, 0.0
    %2773 = vadd.xlane.f32.xlu0 %v2772
    %v2774 = vpop.xlane.xlu0 %2773
    %v2775 = vsel %vm168, %v2633, 0.0
    %2776 = vadd.xlane.f32.xlu0 %v2775
    %v2777 = vpop.xlane.xlu0 %2776
    %v2778 = vsel %vm168, %v2634, 0.0
    %2779 = vadd.xlane.f32.xlu0 %v2778
    %v2780 = vpop.xlane.xlu0 %2779
    %v2781 = vsel %vm168, %v2635, 0.0
    %2782 = vadd.xlane.f32.xlu0 %v2781
    %v2783 = vpop.xlane.xlu0 %2782
    %v2784 = vsel %vm168, %v2636, 0.0
    %2785 = vadd.xlane.f32.xlu0 %v2784
    %v2786 = vpop.xlane.xlu0 %2785
    %v2787 = vsel %vm168, %v2637, 0.0
    %2788 = vadd.xlane.f32.xlu0 %v2787
    %v2789 = vpop.xlane.xlu0 %2788
    %v2790 = vsel %vm168, %v2638, 0.0
    %2791 = vadd.xlane.f32.xlu0 %v2790
    %v2792 = vpop.xlane.xlu0 %2791
    %v2793 = vsel %vm168, %v2639, 0.0
    %2794 = vadd.xlane.f32.xlu0 %v2793
    %v2795 = vpop.xlane.xlu0 %2794
    %v2796 = vsel %vm168, %v2640, 0.0
    %2797 = vadd.xlane.f32.xlu0 %v2796
    %v2798 = vpop.xlane.xlu0 %2797
    %v2799 = vsel %vm168, %v2641, 0.0
    %2800 = vadd.xlane.f32.xlu0 %v2799
    %v2801 = vpop.xlane.xlu0 %2800
    %v2802 = vsel %vm168, %v2642, 0.0
    %2803 = vadd.xlane.f32.xlu0 %v2802
    %v2804 = vpop.xlane.xlu0 %2803
    %v2805 = vsel %vm168, %v2643, 0.0
    %2806 = vadd.xlane.f32.xlu0 %v2805
    %v2807 = vpop.xlane.xlu0 %2806
    %v2808 = vsel %vm168, %v2644, 0.0
    %2809 = vadd.xlane.f32.xlu0 %v2808
    %v2810 = vpop.xlane.xlu0 %2809
    %v2811 = vsel %vm168, %v2645, 0.0
    %2812 = vadd.xlane.f32.xlu0 %v2811
    %v2813 = vpop.xlane.xlu0 %2812
    %v2814 = vsel %vm168, %v2646, 0.0
    %2815 = vadd.xlane.f32.xlu0 %v2814
    %v2816 = vpop.xlane.xlu0 %2815
    %v2817 = vsel %vm168, %v2647, 0.0
    %2818 = vadd.xlane.f32.xlu0 %v2817
    %v2819 = vpop.xlane.xlu0 %2818
    %v2820 = vsel %vm168, %v2648, 0.0
    %2821 = vadd.xlane.f32.xlu0 %v2820
    %v2822 = vpop.xlane.xlu0 %2821
    %v2823 = vsel %vm168, %v2649, 0.0
    %2824 = vadd.xlane.f32.xlu0 %v2823
    %v2825 = vpop.xlane.xlu0 %2824
    %v2826 = vsel %vm168, %v2650, 0.0
    %2827 = vadd.xlane.f32.xlu0 %v2826
    %v2828 = vpop.xlane.xlu0 %2827
    %v2829 = vsel %vm168, %v2651, 0.0
    %2830 = vadd.xlane.f32.xlu0 %v2829
    %v2831 = vpop.xlane.xlu0 %2830
    %v2832 = vsel %vm168, %v2652, 0.0
    %2833 = vadd.xlane.f32.xlu0 %v2832
    %v2834 = vpop.xlane.xlu0 %2833
    %v2835 = vsel %vm168, %v2653, 0.0
    %2836 = vadd.xlane.f32.xlu0 %v2835
    %v2837 = vpop.xlane.xlu0 %2836
    %v2838 = vsel %vm168, %v2654, 0.0
    %2839 = vadd.xlane.f32.xlu0 %v2838
    %v2840 = vpop.xlane.xlu0 %2839
    %v2841 = vsel %vm168, %v2655, 0.0
    %2842 = vadd.xlane.f32.xlu0 %v2841
    %v2843 = vpop.xlane.xlu0 %2842
    %v2844 = vsel %vm168, %v2656, 0.0
    %2845 = vadd.xlane.f32.xlu0 %v2844
    %v2846 = vpop.xlane.xlu0 %2845
    %v2847 = vsel %vm168, %v2657, 0.0
    %2848 = vadd.xlane.f32.xlu0 %v2847
    %v2849 = vpop.xlane.xlu0 %2848
    %v2850 = vsel %vm168, %v2658, 0.0
    %2851 = vadd.xlane.f32.xlu0 %v2850
    %v2852 = vpop.xlane.xlu0 %2851
    %v2853 = vsel %vm168, %v2659, 0.0
    %2854 = vadd.xlane.f32.xlu0 %v2853
    %v2855 = vpop.xlane.xlu0 %2854
    %v2856 = vsel %vm168, %v2660, 0.0
    %2857 = vadd.xlane.f32.xlu0 %v2856
    %v2858 = vpop.xlane.xlu0 %2857
    %v2859 = vsel %vm168, %v2661, 0.0
    %2860 = vadd.xlane.f32.xlu0 %v2859
    %v2861 = vpop.xlane.xlu0 %2860
    %v2862 = vsel %vm168, %v2662, 0.0
    %2863 = vadd.xlane.f32.xlu0 %v2862
    %v2864 = vpop.xlane.xlu0 %2863
    %v2865 = vsel %vm168, %v2663, 0.0
    %2866 = vadd.xlane.f32.xlu0 %v2865
    %v2867 = vpop.xlane.xlu0 %2866
    %v2868 = vsel %vm168, %v2664, 0.0
    %2869 = vadd.xlane.f32.xlu0 %v2868
    %v2870 = vpop.xlane.xlu0 %2869
    %v2871 = vsel %vm168, %v2665, 0.0
    %2872 = vadd.xlane.f32.xlu0 %v2871
    %v2873 = vpop.xlane.xlu0 %2872
    %v2874 = vsel %vm168, %v2666, 0.0
    %2875 = vadd.xlane.f32.xlu0 %v2874
    %v2876 = vpop.xlane.xlu0 %2875
    %v2877 = vsel %vm168, %v2667, 0.0
    %2878 = vadd.xlane.f32.xlu0 %v2877
    %v2879 = vpop.xlane.xlu0 %2878
    %v2880 = vsel %vm168, %v2668, 0.0
    %2881 = vadd.xlane.f32.xlu0 %v2880
    %v2882 = vpop.xlane.xlu0 %2881
    %v2883 = vsel %vm168, %v2669, 0.0
    %2884 = vadd.xlane.f32.xlu0 %v2883
    %v2885 = vpop.xlane.xlu0 %2884
    %v2886 = vsel %vm168, %v2670, 0.0
    %2887 = vadd.xlane.f32.xlu0 %v2886
    %v2888 = vpop.xlane.xlu0 %2887
    %v2889 = vsel %vm168, %v2671, 0.0
    %2890 = vadd.xlane.f32.xlu0 %v2889
    %v2891 = vpop.xlane.xlu0 %2890
    %v2892 = vsel %vm168, %v2672, 0.0
    %2893 = vadd.xlane.f32.xlu0 %v2892
    %v2894 = vpop.xlane.xlu0 %2893
    %v2895 = vsel %vm168, %v2673, 0.0
    %2896 = vadd.xlane.f32.xlu0 %v2895
    %v2897 = vpop.xlane.xlu0 %2896
    %v2898 = vsel %vm168, %v2674, 0.0
    %2899 = vadd.xlane.f32.xlu0 %v2898
    %v2900 = vpop.xlane.xlu0 %2899
    %v2901 = vsel %vm168, %v2675, 0.0
    %2902 = vadd.xlane.f32.xlu0 %v2901
    %v2903 = vpop.xlane.xlu0 %2902
    %v2904 = vsel %vm168, %v2676, 0.0
    %2905 = vadd.xlane.f32.xlu0 %v2904
    %v2906 = vpop.xlane.xlu0 %2905
    %v2907 = vsel %vm168, %v2677, 0.0
    %2908 = vadd.xlane.f32.xlu0 %v2907
    %v2909 = vpop.xlane.xlu0 %2908
    %v2910 = vsel %vm168, %v2678, 0.0
    %2911 = vadd.xlane.f32.xlu0 %v2910
    %v2912 = vpop.xlane.xlu0 %2911
    %v2913 = vsel %vm168, %v2679, 0.0
    %2914 = vadd.xlane.f32.xlu0 %v2913
    %v2915 = vpop.xlane.xlu0 %2914
    %v2916 = vsel %vm168, %v2680, 0.0
    %2917 = vadd.xlane.f32.xlu0 %v2916
    %v2918 = vpop.xlane.xlu0 %2917
    %v2919 = vsel %vm168, %v2681, 0.0
    %2920 = vadd.xlane.f32.xlu0 %v2919
    %v2921 = vpop.xlane.xlu0 %2920
    %v2922 = vsel %vm168, %v2682, 0.0
    %2923 = vadd.xlane.f32.xlu0 %v2922
    %v2924 = vpop.xlane.xlu0 %2923
    %v2925 = vsel %vm168, %v2683, 0.0
    %2926 = vadd.xlane.f32.xlu0 %v2925
    %v2927 = vpop.xlane.xlu0 %2926
    %v2928 = vsel %vm168, %v2684, 0.0
    %2929 = vadd.xlane.f32.xlu0 %v2928
    %v2930 = vpop.xlane.xlu0 %2929
    %v2931 = vsel %vm168, %v2685, 0.0
    %2932 = vadd.xlane.f32.xlu0 %v2931
    %v2933 = vpop.xlane.xlu0 %2932
    %v2934 = vsel %vm168, %v2686, 0.0
    %2935 = vadd.xlane.f32.xlu0 %v2934
    %v2936 = vpop.xlane.xlu0 %2935
    %v2937 = vsel %vm168, %v2687, 0.0
    %2938 = vadd.xlane.f32.xlu0 %v2937
    %v2939 = vpop.xlane.xlu0 %2938
    %v2940 = vsel %vm168, %v2688, 0.0
    %2941 = vadd.xlane.f32.xlu0 %v2940
    %v2942 = vpop.xlane.xlu0 %2941
    %v2943 = vsel %vm168, %v2689, 0.0
    %2944 = vadd.xlane.f32.xlu0 %v2943
    %v2945 = vpop.xlane.xlu0 %2944
    %v2946 = vsel %vm168, %v2690, 0.0
    %2947 = vadd.xlane.f32.xlu0 %v2946
    %v2948 = vpop.xlane.xlu0 %2947
    %v2949 = vsel %vm168, %v2691, 0.0
    %2950 = vadd.xlane.f32.xlu0 %v2949
    %v2951 = vpop.xlane.xlu0 %2950
    %v2952 = vsel %vm168, %v2692, 0.0
    %2953 = vadd.xlane.f32.xlu0 %v2952
    %v2954 = vpop.xlane.xlu0 %2953
    %v2955 = vsel %vm168, %v2693, 0.0
    %2956 = vadd.xlane.f32.xlu0 %v2955
    %v2957 = vpop.xlane.xlu0 %2956
    %v2958 = vsel %vm168, %v2694, 0.0
    %2959 = vadd.xlane.f32.xlu0 %v2958
    %v2960 = vpop.xlane.xlu0 %2959
    %v2961 = vsel %vm168, %v2695, 0.0
    %2962 = vadd.xlane.f32.xlu0 %v2961
    %v2963 = vpop.xlane.xlu0 %2962
    %v2964 = vsel %vm168, %v2696, 0.0
    %2965 = vadd.xlane.f32.xlu0 %v2964
    %v2966 = vpop.xlane.xlu0 %2965
    %v2967 = vsel %vm168, %v2697, 0.0
    %2968 = vadd.xlane.f32.xlu0 %v2967
    %v2969 = vpop.xlane.xlu0 %2968
    %v2970 = vsel %vm168, %v2698, 0.0
    %2971 = vadd.xlane.f32.xlu0 %v2970
    %v2972 = vpop.xlane.xlu0 %2971
    %v2973 = vsel %vm168, %v2699, 0.0
    %2974 = vadd.xlane.f32.xlu0 %v2973
    %v2975 = vpop.xlane.xlu0 %2974
    %v2976 = vsel %vm168, %v2700, 0.0
    %2977 = vadd.xlane.f32.xlu0 %v2976
    %v2978 = vpop.xlane.xlu0 %2977
    %v2979 = vsel %vm168, %v2701, 0.0
    %2980 = vadd.xlane.f32.xlu0 %v2979
    %v2981 = vpop.xlane.xlu0 %2980
    %v2982 = vsel %vm168, %v2702, 0.0
    %2983 = vadd.xlane.f32.xlu0 %v2982
    %v2984 = vpop.xlane.xlu0 %2983
    %v2985 = vsel %vm168, %v2703, 0.0
    %2986 = vadd.xlane.f32.xlu0 %v2985
    %v2987 = vpop.xlane.xlu0 %2986
    %v2988 = vsel %vm168, %v2704, 0.0
    %2989 = vadd.xlane.f32.xlu0 %v2988
    %v2990 = vpop.xlane.xlu0 %2989
    %v2991 = vsel %vm168, %v2705, 0.0
    %2992 = vadd.xlane.f32.xlu0 %v2991
    %v2993 = vpop.xlane.xlu0 %2992
    %v2994 = vsel %vm168, %v2706, 0.0
    %2995 = vadd.xlane.f32.xlu0 %v2994
    %v2996 = vpop.xlane.xlu0 %2995
    %v2997 = vsel %vm168, %v2707, 0.0
    %2998 = vadd.xlane.f32.xlu0 %v2997
    %v2999 = vpop.xlane.xlu0 %2998
    %v3000 = vsel %vm168, %v2708, 0.0
    %3001 = vadd.xlane.f32.xlu0 %v3000
    %v3002 = vpop.xlane.xlu0 %3001
    %v3003 = vsel %vm168, %v2709, 0.0
    %3004 = vadd.xlane.f32.xlu0 %v3003
    %v3005 = vpop.xlane.xlu0 %3004
    %v3006 = vsel %vm168, %v2710, 0.0
    %3007 = vadd.xlane.f32.xlu0 %v3006
    %v3008 = vpop.xlane.xlu0 %3007
    %v3009 = vsel %vm168, %v2711, 0.0
    %3010 = vadd.xlane.f32.xlu0 %v3009
    %v3011 = vpop.xlane.xlu0 %3010
    %v3012 = vsel %vm168, %v2712, 0.0
    %3013 = vadd.xlane.f32.xlu0 %v3012
    %v3014 = vpop.xlane.xlu0 %3013
    %v3015 = vsel %vm168, %v2713, 0.0
    %3016 = vadd.xlane.f32.xlu0 %v3015
    %v3017 = vpop.xlane.xlu0 %3016
    %v3018 = vsel %vm168, %v2714, 0.0
    %3019 = vadd.xlane.f32.xlu0 %v3018
    %v3020 = vpop.xlane.xlu0 %3019
    %v3021 = vsel %vm168, %v2715, 0.0
    %3022 = vadd.xlane.f32.xlu0 %v3021
    %v3023 = vpop.xlane.xlu0 %3022
    %v3024 = vsel %vm168, %v2716, 0.0
    %3025 = vadd.xlane.f32.xlu0 %v3024
    %v3026 = vpop.xlane.xlu0 %3025
    %v3027 = vsel %vm168, %v2717, 0.0
    %3028 = vadd.xlane.f32.xlu0 %v3027
    %v3029 = vpop.xlane.xlu0 %3028
    %v3030 = vsel %vm168, %v2718, 0.0
    %3031 = vadd.xlane.f32.xlu0 %v3030
    %v3032 = vpop.xlane.xlu0 %3031
    %v3033 = vsel %vm168, %v2719, 0.0
    %3034 = vadd.xlane.f32.xlu0 %v3033
    %v3035 = vpop.xlane.xlu0 %3034
    %v3036 = vsel %vm168, %v2720, 0.0
    %3037 = vadd.xlane.f32.xlu0 %v3036
    %v3038 = vpop.xlane.xlu0 %3037
    %v3039 = vsel %vm168, %v2721, 0.0
    %3040 = vadd.xlane.f32.xlu0 %v3039
    %v3041 = vpop.xlane.xlu0 %3040
    %v3042 = vsel %vm168, %v2722, 0.0
    %3043 = vadd.xlane.f32.xlu0 %v3042
    %v3044 = vpop.xlane.xlu0 %3043
    %v3045 = vsel %vm168, %v2723, 0.0
    %3046 = vadd.xlane.f32.xlu0 %v3045
    %v3047 = vpop.xlane.xlu0 %3046
    %v3048 = vsel %vm168, %v2724, 0.0
    %3049 = vadd.xlane.f32.xlu0 %v3048
    %v3050 = vpop.xlane.xlu0 %3049
    %v3051 = vsel %vm168, %v2725, 0.0
    %3052 = vadd.xlane.f32.xlu0 %v3051
    %v3053 = vpop.xlane.xlu0 %3052
    %v3054 = vsel %vm168, %v2726, 0.0
    %3055 = vadd.xlane.f32.xlu0 %v3054
    %v3056 = vpop.xlane.xlu0 %3055
    %v3057 = vsel %vm168, %v2727, 0.0
    %3058 = vadd.xlane.f32.xlu0 %v3057
    %v3059 = vpop.xlane.xlu0 %3058
    %v3060 = vsel %vm168, %v2728, 0.0
    %3061 = vadd.xlane.f32.xlu0 %v3060
    %v3062 = vpop.xlane.xlu0 %3061
    %v3063 = vsel %vm168, %v2729, 0.0
    %3064 = vadd.xlane.f32.xlu0 %v3063
    %v3065 = vpop.xlane.xlu0 %3064
    %v3066 = vsel %vm168, %v2730, 0.0
    %3067 = vadd.xlane.f32.xlu0 %v3066
    %v3068 = vpop.xlane.xlu0 %3067
    %v3069 = vsel %vm168, %v2731, 0.0
    %3070 = vadd.xlane.f32.xlu0 %v3069
    %v3071 = vpop.xlane.xlu0 %3070
    %v3072 = vsel %vm168, %v2732, 0.0
    %3073 = vadd.xlane.f32.xlu0 %v3072
    %v3074 = vpop.xlane.xlu0 %3073
    %v3075 = vsel %vm168, %v2733, 0.0
    %3076 = vadd.xlane.f32.xlu0 %v3075
    %v3077 = vpop.xlane.xlu0 %3076
    %v3078 = vsel %vm168, %v2734, 0.0
    %3079 = vadd.xlane.f32.xlu0 %v3078
    %v3080 = vpop.xlane.xlu0 %3079
    %v3081 = vsel %vm168, %v2735, 0.0
    %3082 = vadd.xlane.f32.xlu0 %v3081
    %v3083 = vpop.xlane.xlu0 %3082
    %v3084 = vsel %vm168, %v2736, 0.0
    %3085 = vadd.xlane.f32.xlu0 %v3084
    %v3086 = vpop.xlane.xlu0 %3085
    %v3087 = vsel %vm168, %v2737, 0.0
    %3088 = vadd.xlane.f32.xlu0 %v3087
    %v3089 = vpop.xlane.xlu0 %3088
    %v3090 = vsel %vm168, %v2738, 0.0
    %3091 = vadd.xlane.f32.xlu0 %v3090
    %v3092 = vpop.xlane.xlu0 %3091
    %v3093 = vsel %vm168, %v2739, 0.0
    %3094 = vadd.xlane.f32.xlu0 %v3093
    %v3095 = vpop.xlane.xlu0 %3094
    %v3096 = vsel %vm168, %v2740, 0.0
    %3097 = vadd.xlane.f32.xlu0 %v3096
    %v3098 = vpop.xlane.xlu0 %3097
    %v3099 = vsel %vm168, %v2741, 0.0
    %3100 = vadd.xlane.f32.xlu0 %v3099
    %v3101 = vpop.xlane.xlu0 %3100
    %v3102 = vsel %vm168, %v2742, 0.0
    %3103 = vadd.xlane.f32.xlu0 %v3102
    %v3104 = vpop.xlane.xlu0 %3103
    %v3105 = vsel %vm168, %v2743, 0.0
    %3106 = vadd.xlane.f32.xlu0 %v3105
    %v3107 = vpop.xlane.xlu0 %3106
    %v3108 = vsel %vm168, %v2744, 0.0
    %3109 = vadd.xlane.f32.xlu0 %v3108
    %v3110 = vpop.xlane.xlu0 %3109
    %v3111 = vsel %vm168, %v2745, 0.0
    %3112 = vadd.xlane.f32.xlu0 %v3111
    %v3113 = vpop.xlane.xlu0 %3112
    %v3114 = vsel %vm168, %v2746, 0.0
    %3115 = vadd.xlane.f32.xlu0 %v3114
    %v3116 = vpop.xlane.xlu0 %3115
    %v3117 = vsel %vm168, %v2747, 0.0
    %3118 = vadd.xlane.f32.xlu0 %v3117
    %v3119 = vpop.xlane.xlu0 %3118
    %v3120 = vsel %vm168, %v2748, 0.0
    %3121 = vadd.xlane.f32.xlu0 %v3120
    %v3122 = vpop.xlane.xlu0 %3121
    %v3123 = vsel %vm168, %v2749, 0.0
    %3124 = vadd.xlane.f32.xlu0 %v3123
    %v3125 = vpop.xlane.xlu0 %3124
    %v3126 = vsel %vm168, %v2750, 0.0
    %3127 = vadd.xlane.f32.xlu0 %v3126
    %v3128 = vpop.xlane.xlu0 %3127
    %v3129 = vsel %vm168, %v2751, 0.0
    %3130 = vadd.xlane.f32.xlu0 %v3129
    %v3131 = vpop.xlane.xlu0 %3130
    %v3132 = vsel %vm168, %v2752, 0.0
    %3133 = vadd.xlane.f32.xlu0 %v3132
    %v3134 = vpop.xlane.xlu0 %3133
    %v3135 = vsel %vm168, %v2753, 0.0
    %3136 = vadd.xlane.f32.xlu0 %v3135
    %v3137 = vpop.xlane.xlu0 %3136
    %v3138 = vld [vmem:[#allocation2] sm:$0x1]
    %v3140 = vlaneseq
    %v3141 = vshrl.u32 %v3140, 7
    %v3142 = vsub.s32 0, %v3141
    %v3143 = vrot.slane %v3138, %v3142
    %3144 = vset.pattern.permute.xlu0 0
    %3145 = vperm.xlu0 %3144, %v3143
    %v3146 = vpop.permute.xlu0 %3145
    %v3148 = vadd.f32 %v2756, %v3146
    %v3149 = vadd.f32 %v2759, %v3146
    %v3150 = vadd.f32 %v2762, %v3146
    %v3151 = vadd.f32 %v2765, %v3146
    %v3152 = vadd.f32 %v2768, %v3146
    %v3153 = vadd.f32 %v2771, %v3146
    %v3154 = vadd.f32 %v2774, %v3146
    %v3155 = vadd.f32 %v2777, %v3146
    %v3156 = vadd.f32 %v2780, %v3146
    %v3157 = vadd.f32 %v2783, %v3146
    %v3158 = vadd.f32 %v2786, %v3146
    %v3159 = vadd.f32 %v2789, %v3146
    %v3160 = vadd.f32 %v2792, %v3146
    %v3161 = vadd.f32 %v2795, %v3146
    %v3162 = vadd.f32 %v2798, %v3146
    %v3163 = vadd.f32 %v2801, %v3146
    %v3164 = vadd.f32 %v2804, %v3146
    %v3165 = vadd.f32 %v2807, %v3146
    %v3166 = vadd.f32 %v2810, %v3146
    %v3167 = vadd.f32 %v2813, %v3146
    %v3168 = vadd.f32 %v2816, %v3146
    %v3169 = vadd.f32 %v2819, %v3146
    %v3170 = vadd.f32 %v2822, %v3146
    %v3171 = vadd.f32 %v2825, %v3146
    %v3172 = vadd.f32 %v2828, %v3146
    %v3173 = vadd.f32 %v2831, %v3146
    %v3174 = vadd.f32 %v2834, %v3146
    %v3175 = vadd.f32 %v2837, %v3146
    %v3176 = vadd.f32 %v2840, %v3146
    %v3177 = vadd.f32 %v2843, %v3146
    %v3178 = vadd.f32 %v2846, %v3146
    %v3179 = vadd.f32 %v2849, %v3146
    %v3180 = vadd.f32 %v2852, %v3146
    %v3181 = vadd.f32 %v2855, %v3146
    %v3182 = vadd.f32 %v2858, %v3146
    %v3183 = vadd.f32 %v2861, %v3146
    %v3184 = vadd.f32 %v2864, %v3146
    %v3185 = vadd.f32 %v2867, %v3146
    %v3186 = vadd.f32 %v2870, %v3146
    %v3187 = vadd.f32 %v2873, %v3146
    %v3188 = vadd.f32 %v2876, %v3146
    %v3189 = vadd.f32 %v2879, %v3146
    %v3190 = vadd.f32 %v2882, %v3146
    %v3191 = vadd.f32 %v2885, %v3146
    %v3192 = vadd.f32 %v2888, %v3146
    %v3193 = vadd.f32 %v2891, %v3146
    %v3194 = vadd.f32 %v2894, %v3146
    %v3195 = vadd.f32 %v2897, %v3146
    %v3196 = vadd.f32 %v2900, %v3146
    %v3197 = vadd.f32 %v2903, %v3146
    %v3198 = vadd.f32 %v2906, %v3146
    %v3199 = vadd.f32 %v2909, %v3146
    %v3200 = vadd.f32 %v2912, %v3146
    %v3201 = vadd.f32 %v2915, %v3146
    %v3202 = vadd.f32 %v2918, %v3146
    %v3203 = vadd.f32 %v2921, %v3146
    %v3204 = vadd.f32 %v2924, %v3146
    %v3205 = vadd.f32 %v2927, %v3146
    %v3206 = vadd.f32 %v2930, %v3146
    %v3207 = vadd.f32 %v2933, %v3146
    %v3208 = vadd.f32 %v2936, %v3146
    %v3209 = vadd.f32 %v2939, %v3146
    %v3210 = vadd.f32 %v2942, %v3146
    %v3211 = vadd.f32 %v2945, %v3146
    %v3212 = vadd.f32 %v2948, %v3146
    %v3213 = vadd.f32 %v2951, %v3146
    %v3214 = vadd.f32 %v2954, %v3146
    %v3215 = vadd.f32 %v2957, %v3146
    %v3216 = vadd.f32 %v2960, %v3146
    %v3217 = vadd.f32 %v2963, %v3146
    %v3218 = vadd.f32 %v2966, %v3146
    %v3219 = vadd.f32 %v2969, %v3146
    %v3220 = vadd.f32 %v2972, %v3146
    %v3221 = vadd.f32 %v2975, %v3146
    %v3222 = vadd.f32 %v2978, %v3146
    %v3223 = vadd.f32 %v2981, %v3146
    %v3224 = vadd.f32 %v2984, %v3146
    %v3225 = vadd.f32 %v2987, %v3146
    %v3226 = vadd.f32 %v2990, %v3146
    %v3227 = vadd.f32 %v2993, %v3146
    %v3228 = vadd.f32 %v2996, %v3146
    %v3229 = vadd.f32 %v2999, %v3146
    %v3230 = vadd.f32 %v3002, %v3146
    %v3231 = vadd.f32 %v3005, %v3146
    %v3232 = vadd.f32 %v3008, %v3146
    %v3233 = vadd.f32 %v3011, %v3146
    %v3234 = vadd.f32 %v3014, %v3146
    %v3235 = vadd.f32 %v3017, %v3146
    %v3236 = vadd.f32 %v3020, %v3146
    %v3237 = vadd.f32 %v3023, %v3146
    %v3238 = vadd.f32 %v3026, %v3146
    %v3239 = vadd.f32 %v3029, %v3146
    %v3240 = vadd.f32 %v3032, %v3146
    %v3241 = vadd.f32 %v3035, %v3146
    %v3242 = vadd.f32 %v3038, %v3146
    %v3243 = vadd.f32 %v3041, %v3146
    %v3244 = vadd.f32 %v3044, %v3146
    %v3245 = vadd.f32 %v3047, %v3146
    %v3246 = vadd.f32 %v3050, %v3146
    %v3247 = vadd.f32 %v3053, %v3146
    %v3248 = vadd.f32 %v3056, %v3146
    %v3249 = vadd.f32 %v3059, %v3146
    %v3250 = vadd.f32 %v3062, %v3146
    %v3251 = vadd.f32 %v3065, %v3146
    %v3252 = vadd.f32 %v3068, %v3146
    %v3253 = vadd.f32 %v3071, %v3146
    %v3254 = vadd.f32 %v3074, %v3146
    %v3255 = vadd.f32 %v3077, %v3146
    %v3256 = vadd.f32 %v3080, %v3146
    %v3257 = vadd.f32 %v3083, %v3146
    %v3258 = vadd.f32 %v3086, %v3146
    %v3259 = vadd.f32 %v3089, %v3146
    %v3260 = vadd.f32 %v3092, %v3146
    %v3261 = vadd.f32 %v3095, %v3146
    %v3262 = vadd.f32 %v3098, %v3146
    %v3263 = vadd.f32 %v3101, %v3146
    %v3264 = vadd.f32 %v3104, %v3146
    %v3265 = vadd.f32 %v3107, %v3146
    %v3266 = vadd.f32 %v3110, %v3146
    %v3267 = vadd.f32 %v3113, %v3146
    %v3268 = vadd.f32 %v3116, %v3146
    %v3269 = vadd.f32 %v3119, %v3146
    %v3270 = vadd.f32 %v3122, %v3146
    %v3271 = vadd.f32 %v3125, %v3146
    %v3272 = vadd.f32 %v3128, %v3146
    %v3273 = vadd.f32 %v3131, %v3146
    %v3274 = vadd.f32 %v3134, %v3146
    %v3275 = vadd.f32 %v3137, %v3146
    %v3404 = vlaneseq
    %v3405 = vand.u32 %v3404, 127
    %v3406 = vlaneseq
    %v3407 = vshrl.u32 %v3406, 7
    %v3408 = vsub.s32 %v3405, %v3407
    %v3409 = vrot.slane %v3148, %v3408
    %v3410 = vadd.s32 %v3405, 4294967288
    %v3411 = vlaneseq
    %v3412 = vshrl.u32 %v3411, 7
    %v3413 = vsub.s32 %v3410, %v3412
    %v3414 = vrot.slane %v3149, %v3413
    %vm3415 = vcmask 130112
    %v3416 = vsel %vm3415, %v3414, %v3409
    %v3417 = vadd.s32 %v3405, 4294967280
    %v3418 = vlaneseq
    %v3419 = vshrl.u32 %v3418, 7
    %v3420 = vsub.s32 %v3417, %v3419
    %v3421 = vrot.slane %v3150, %v3420
    %vm3422 = vcmask 195712
    %v3423 = vsel %vm3422, %v3421, %v3416
    %v3424 = vadd.s32 %v3405, 4294967272
    %v3425 = vlaneseq
    %v3426 = vshrl.u32 %v3425, 7
    %v3427 = vsub.s32 %v3424, %v3426
    %v3428 = vrot.slane %v3151, %v3427
    %vm3429 = vcmask 261312
    %v3430 = vsel %vm3429, %v3428, %v3423
    %v3431 = vadd.s32 %v3405, 4294967264
    %v3432 = vlaneseq
    %v3433 = vshrl.u32 %v3432, 7
    %v3434 = vsub.s32 %v3431, %v3433
    %v3435 = vrot.slane %v3152, %v3434
    %vm3436 = vcmask 326912
    %v3437 = vsel %vm3436, %v3435, %v3430
    %v3438 = vadd.s32 %v3405, 4294967256
    %v3439 = vlaneseq
    %v3440 = vshrl.u32 %v3439, 7
    %v3441 = vsub.s32 %v3438, %v3440
    %v3442 = vrot.slane %v3153, %v3441
    %vm3443 = vcmask 392512
    %v3444 = vsel %vm3443, %v3442, %v3437
    %v3445 = vadd.s32 %v3405, 4294967248
    %v3446 = vlaneseq
    %v3447 = vshrl.u32 %v3446, 7
    %v3448 = vsub.s32 %v3445, %v3447
    %v3449 = vrot.slane %v3154, %v3448
    %vm3450 = vcmask 458112
    %v3451 = vsel %vm3450, %v3449, %v3444
    %v3452 = vadd.s32 %v3405, 4294967240
    %v3453 = vlaneseq
    %v3454 = vshrl.u32 %v3453, 7
    %v3455 = vsub.s32 %v3452, %v3454
    %v3456 = vrot.slane %v3155, %v3455
    %vm3457 = vcmask 523712
    %v3458 = vsel %vm3457, %v3456, %v3451
    %v3459 = vadd.s32 %v3405, 4294967232
    %v3460 = vlaneseq
    %v3461 = vshrl.u32 %v3460, 7
    %v3462 = vsub.s32 %v3459, %v3461
    %v3463 = vrot.slane %v3156, %v3462
    %vm3464 = vcmask 589312
    %v3465 = vsel %vm3464, %v3463, %v3458
    %v3466 = vadd.s32 %v3405, 4294967224
    %v3467 = vlaneseq
    %v3468 = vshrl.u32 %v3467, 7
    %v3469 = vsub.s32 %v3466, %v3468
    %v3470 = vrot.slane %v3157, %v3469
    %vm3471 = vcmask 654912
    %v3472 = vsel %vm3471, %v3470, %v3465
    %v3473 = vadd.s32 %v3405, 4294967216
    %v3474 = vlaneseq
    %v3475 = vshrl.u32 %v3474, 7
    %v3476 = vsub.s32 %v3473, %v3475
    %v3477 = vrot.slane %v3158, %v3476
    %vm3478 = vcmask 720512
    %v3479 = vsel %vm3478, %v3477, %v3472
    %v3480 = vadd.s32 %v3405, 4294967208
    %v3481 = vlaneseq
    %v3482 = vshrl.u32 %v3481, 7
    %v3483 = vsub.s32 %v3480, %v3482
    %v3484 = vrot.slane %v3159, %v3483
    %vm3485 = vcmask 786112
    %v3486 = vsel %vm3485, %v3484, %v3479
    %v3487 = vadd.s32 %v3405, 4294967200
    %v3488 = vlaneseq
    %v3489 = vshrl.u32 %v3488, 7
    %v3490 = vsub.s32 %v3487, %v3489
    %v3491 = vrot.slane %v3160, %v3490
    %vm3492 = vcmask 851712
    %v3493 = vsel %vm3492, %v3491, %v3486
    %v3494 = vadd.s32 %v3405, 4294967192
    %v3495 = vlaneseq
    %v3496 = vshrl.u32 %v3495, 7
    %v3497 = vsub.s32 %v3494, %v3496
    %v3498 = vrot.slane %v3161, %v3497
    %vm3499 = vcmask 917312
    %v3500 = vsel %vm3499, %v3498, %v3493
    %v3501 = vadd.s32 %v3405, 4294967184
    %v3502 = vlaneseq
    %v3503 = vshrl.u32 %v3502, 7
    %v3504 = vsub.s32 %v3501, %v3503
    %v3505 = vrot.slane %v3162, %v3504
    %vm3506 = vcmask 982912
    %v3507 = vsel %vm3506, %v3505, %v3500
    %v3508 = vadd.s32 %v3405, 4294967176
    %v3509 = vlaneseq
    %v3510 = vshrl.u32 %v3509, 7
    %v3511 = vsub.s32 %v3508, %v3510
    %v3512 = vrot.slane %v3163, %v3511
    %vm3513 = vcmask 1048512
    %v3514 = vsel %vm3513, %v3512, %v3507
    %v3515 = vlaneseq
    %v3516 = vshrl.u32 %v3515, 7
    %v3517 = vsub.s32 %v3405, %v3516
    %v3518 = vrot.slane %v3164, %v3517
    %v3519 = vlaneseq
    %v3520 = vshrl.u32 %v3519, 7
    %v3521 = vsub.s32 %v3410, %v3520
    %v3522 = vrot.slane %v3165, %v3521
    %v3523 = vsel %vm3415, %v3522, %v3518
    %v3524 = vlaneseq
    %v3525 = vshrl.u32 %v3524, 7
    %v3526 = vsub.s32 %v3417, %v3525
    %v3527 = vrot.slane %v3166, %v3526
    %v3528 = vsel %vm3422, %v3527, %v3523
    %v3529 = vlaneseq
    %v3530 = vshrl.u32 %v3529, 7
    %v3531 = vsub.s32 %v3424, %v3530
    %v3532 = vrot.slane %v3167, %v3531
    %v3533 = vsel %vm3429, %v3532, %v3528
    %v3534 = vlaneseq
    %v3535 = vshrl.u32 %v3534, 7
    %v3536 = vsub.s32 %v3431, %v3535
    %v3537 = vrot.slane %v3168, %v3536
    %v3538 = vsel %vm3436, %v3537, %v3533
    %v3539 = vlaneseq
    %v3540 = vshrl.u32 %v3539, 7
    %v3541 = vsub.s32 %v3438, %v3540
    %v3542 = vrot.slane %v3169, %v3541
    %v3543 = vsel %vm3443, %v3542, %v3538
    %v3544 = vlaneseq
    %v3545 = vshrl.u32 %v3544, 7
    %v3546 = vsub.s32 %v3445, %v3545
    %v3547 = vrot.slane %v3170, %v3546
    %v3548 = vsel %vm3450, %v3547, %v3543
    %v3549 = vlaneseq
    %v3550 = vshrl.u32 %v3549, 7
    %v3551 = vsub.s32 %v3452, %v3550
    %v3552 = vrot.slane %v3171, %v3551
    %v3553 = vsel %vm3457, %v3552, %v3548
    %v3554 = vlaneseq
    %v3555 = vshrl.u32 %v3554, 7
    %v3556 = vsub.s32 %v3459, %v3555
    %v3557 = vrot.slane %v3172, %v3556
    %v3558 = vsel %vm3464, %v3557, %v3553
    %v3559 = vlaneseq
    %v3560 = vshrl.u32 %v3559, 7
    %v3561 = vsub.s32 %v3466, %v3560
    %v3562 = vrot.slane %v3173, %v3561
    %v3563 = vsel %vm3471, %v3562, %v3558
    %v3564 = vlaneseq
    %v3565 = vshrl.u32 %v3564, 7
    %v3566 = vsub.s32 %v3473, %v3565
    %v3567 = vrot.slane %v3174, %v3566
    %v3568 = vsel %vm3478, %v3567, %v3563
    %v3569 = vlaneseq
    %v3570 = vshrl.u32 %v3569, 7
    %v3571 = vsub.s32 %v3480, %v3570
    %v3572 = vrot.slane %v3175, %v3571
    %v3573 = vsel %vm3485, %v3572, %v3568
    %v3574 = vlaneseq
    %v3575 = vshrl.u32 %v3574, 7
    %v3576 = vsub.s32 %v3487, %v3575
    %v3577 = vrot.slane %v3176, %v3576
    %v3578 = vsel %vm3492, %v3577, %v3573
    %v3579 = vlaneseq
    %v3580 = vshrl.u32 %v3579, 7
    %v3581 = vsub.s32 %v3494, %v3580
    %v3582 = vrot.slane %v3177, %v3581
    %v3583 = vsel %vm3499, %v3582, %v3578
    %v3584 = vlaneseq
    %v3585 = vshrl.u32 %v3584, 7
    %v3586 = vsub.s32 %v3501, %v3585
    %v3587 = vrot.slane %v3178, %v3586
    %v3588 = vsel %vm3506, %v3587, %v3583
    %v3589 = vlaneseq
    %v3590 = vshrl.u32 %v3589, 7
    %v3591 = vsub.s32 %v3508, %v3590
    %v3592 = vrot.slane %v3179, %v3591
    %v3593 = vsel %vm3513, %v3592, %v3588
    %v3594 = vlaneseq
    %v3595 = vshrl.u32 %v3594, 7
    %v3596 = vsub.s32 %v3405, %v3595
    %v3597 = vrot.slane %v3180, %v3596
    %v3598 = vlaneseq
    %v3599 = vshrl.u32 %v3598, 7
    %v3600 = vsub.s32 %v3410, %v3599
    %v3601 = vrot.slane %v3181, %v3600
    %v3602 = vsel %vm3415, %v3601, %v3597
    %v3603 = vlaneseq
    %v3604 = vshrl.u32 %v3603, 7
    %v3605 = vsub.s32 %v3417, %v3604
    %v3606 = vrot.slane %v3182, %v3605
    %v3607 = vsel %vm3422, %v3606, %v3602
    %v3608 = vlaneseq
    %v3609 = vshrl.u32 %v3608, 7
    %v3610 = vsub.s32 %v3424, %v3609
    %v3611 = vrot.slane %v3183, %v3610
    %v3612 = vsel %vm3429, %v3611, %v3607
    %v3613 = vlaneseq
    %v3614 = vshrl.u32 %v3613, 7
    %v3615 = vsub.s32 %v3431, %v3614
    %v3616 = vrot.slane %v3184, %v3615
    %v3617 = vsel %vm3436, %v3616, %v3612
    %v3618 = vlaneseq
    %v3619 = vshrl.u32 %v3618, 7
    %v3620 = vsub.s32 %v3438, %v3619
    %v3621 = vrot.slane %v3185, %v3620
    %v3622 = vsel %vm3443, %v3621, %v3617
    %v3623 = vlaneseq
    %v3624 = vshrl.u32 %v3623, 7
    %v3625 = vsub.s32 %v3445, %v3624
    %v3626 = vrot.slane %v3186, %v3625
    %v3627 = vsel %vm3450, %v3626, %v3622
    %v3628 = vlaneseq
    %v3629 = vshrl.u32 %v3628, 7
    %v3630 = vsub.s32 %v3452, %v3629
    %v3631 = vrot.slane %v3187, %v3630
    %v3632 = vsel %vm3457, %v3631, %v3627
    %v3633 = vlaneseq
    %v3634 = vshrl.u32 %v3633, 7
    %v3635 = vsub.s32 %v3459, %v3634
    %v3636 = vrot.slane %v3188, %v3635
    %v3637 = vsel %vm3464, %v3636, %v3632
    %v3638 = vlaneseq
    %v3639 = vshrl.u32 %v3638, 7
    %v3640 = vsub.s32 %v3466, %v3639
    %v3641 = vrot.slane %v3189, %v3640
    %v3642 = vsel %vm3471, %v3641, %v3637
    %v3643 = vlaneseq
    %v3644 = vshrl.u32 %v3643, 7
    %v3645 = vsub.s32 %v3473, %v3644
    %v3646 = vrot.slane %v3190, %v3645
    %v3647 = vsel %vm3478, %v3646, %v3642
    %v3648 = vlaneseq
    %v3649 = vshrl.u32 %v3648, 7
    %v3650 = vsub.s32 %v3480, %v3649
    %v3651 = vrot.slane %v3191, %v3650
    %v3652 = vsel %vm3485, %v3651, %v3647
    %v3653 = vlaneseq
    %v3654 = vshrl.u32 %v3653, 7
    %v3655 = vsub.s32 %v3487, %v3654
    %v3656 = vrot.slane %v3192, %v3655
    %v3657 = vsel %vm3492, %v3656, %v3652
    %v3658 = vlaneseq
    %v3659 = vshrl.u32 %v3658, 7
    %v3660 = vsub.s32 %v3494, %v3659
    %v3661 = vrot.slane %v3193, %v3660
    %v3662 = vsel %vm3499, %v3661, %v3657
    %v3663 = vlaneseq
    %v3664 = vshrl.u32 %v3663, 7
    %v3665 = vsub.s32 %v3501, %v3664
    %v3666 = vrot.slane %v3194, %v3665
    %v3667 = vsel %vm3506, %v3666, %v3662
    %v3668 = vlaneseq
    %v3669 = vshrl.u32 %v3668, 7
    %v3670 = vsub.s32 %v3508, %v3669
    %v3671 = vrot.slane %v3195, %v3670
    %v3672 = vsel %vm3513, %v3671, %v3667
    %v3673 = vlaneseq
    %v3674 = vshrl.u32 %v3673, 7
    %v3675 = vsub.s32 %v3405, %v3674
    %v3676 = vrot.slane %v3196, %v3675
    %v3677 = vlaneseq
    %v3678 = vshrl.u32 %v3677, 7
    %v3679 = vsub.s32 %v3410, %v3678
    %v3680 = vrot.slane %v3197, %v3679
    %v3681 = vsel %vm3415, %v3680, %v3676
    %v3682 = vlaneseq
    %v3683 = vshrl.u32 %v3682, 7
    %v3684 = vsub.s32 %v3417, %v3683
    %v3685 = vrot.slane %v3198, %v3684
    %v3686 = vsel %vm3422, %v3685, %v3681
    %v3687 = vlaneseq
    %v3688 = vshrl.u32 %v3687, 7
    %v3689 = vsub.s32 %v3424, %v3688
    %v3690 = vrot.slane %v3199, %v3689
    %v3691 = vsel %vm3429, %v3690, %v3686
    %v3692 = vlaneseq
    %v3693 = vshrl.u32 %v3692, 7
    %v3694 = vsub.s32 %v3431, %v3693
    %v3695 = vrot.slane %v3200, %v3694
    %v3696 = vsel %vm3436, %v3695, %v3691
    %v3697 = vlaneseq
    %v3698 = vshrl.u32 %v3697, 7
    %v3699 = vsub.s32 %v3438, %v3698
    %v3700 = vrot.slane %v3201, %v3699
    %v3701 = vsel %vm3443, %v3700, %v3696
    %v3702 = vlaneseq
    %v3703 = vshrl.u32 %v3702, 7
    %v3704 = vsub.s32 %v3445, %v3703
    %v3705 = vrot.slane %v3202, %v3704
    %v3706 = vsel %vm3450, %v3705, %v3701
    %v3707 = vlaneseq
    %v3708 = vshrl.u32 %v3707, 7
    %v3709 = vsub.s32 %v3452, %v3708
    %v3710 = vrot.slane %v3203, %v3709
    %v3711 = vsel %vm3457, %v3710, %v3706
    %v3712 = vlaneseq
    %v3713 = vshrl.u32 %v3712, 7
    %v3714 = vsub.s32 %v3459, %v3713
    %v3715 = vrot.slane %v3204, %v3714
    %v3716 = vsel %vm3464, %v3715, %v3711
    %v3717 = vlaneseq
    %v3718 = vshrl.u32 %v3717, 7
    %v3719 = vsub.s32 %v3466, %v3718
    %v3720 = vrot.slane %v3205, %v3719
    %v3721 = vsel %vm3471, %v3720, %v3716
    %v3722 = vlaneseq
    %v3723 = vshrl.u32 %v3722, 7
    %v3724 = vsub.s32 %v3473, %v3723
    %v3725 = vrot.slane %v3206, %v3724
    %v3726 = vsel %vm3478, %v3725, %v3721
    %v3727 = vlaneseq
    %v3728 = vshrl.u32 %v3727, 7
    %v3729 = vsub.s32 %v3480, %v3728
    %v3730 = vrot.slane %v3207, %v3729
    %v3731 = vsel %vm3485, %v3730, %v3726
    %v3732 = vlaneseq
    %v3733 = vshrl.u32 %v3732, 7
    %v3734 = vsub.s32 %v3487, %v3733
    %v3735 = vrot.slane %v3208, %v3734
    %v3736 = vsel %vm3492, %v3735, %v3731
    %v3737 = vlaneseq
    %v3738 = vshrl.u32 %v3737, 7
    %v3739 = vsub.s32 %v3494, %v3738
    %v3740 = vrot.slane %v3209, %v3739
    %v3741 = vsel %vm3499, %v3740, %v3736
    %v3742 = vlaneseq
    %v3743 = vshrl.u32 %v3742, 7
    %v3744 = vsub.s32 %v3501, %v3743
    %v3745 = vrot.slane %v3210, %v3744
    %v3746 = vsel %vm3506, %v3745, %v3741
    %v3747 = vlaneseq
    %v3748 = vshrl.u32 %v3747, 7
    %v3749 = vsub.s32 %v3508, %v3748
    %v3750 = vrot.slane %v3211, %v3749
    %v3751 = vsel %vm3513, %v3750, %v3746
    %v3752 = vlaneseq
    %v3753 = vshrl.u32 %v3752, 7
    %v3754 = vsub.s32 %v3405, %v3753
    %v3755 = vrot.slane %v3212, %v3754
    %v3756 = vlaneseq
    %v3757 = vshrl.u32 %v3756, 7
    %v3758 = vsub.s32 %v3410, %v3757
    %v3759 = vrot.slane %v3213, %v3758
    %v3760 = vsel %vm3415, %v3759, %v3755
    %v3761 = vlaneseq
    %v3762 = vshrl.u32 %v3761, 7
    %v3763 = vsub.s32 %v3417, %v3762
    %v3764 = vrot.slane %v3214, %v3763
    %v3765 = vsel %vm3422, %v3764, %v3760
    %v3766 = vlaneseq
    %v3767 = vshrl.u32 %v3766, 7
    %v3768 = vsub.s32 %v3424, %v3767
    %v3769 = vrot.slane %v3215, %v3768
    %v3770 = vsel %vm3429, %v3769, %v3765
    %v3771 = vlaneseq
    %v3772 = vshrl.u32 %v3771, 7
    %v3773 = vsub.s32 %v3431, %v3772
    %v3774 = vrot.slane %v3216, %v3773
    %v3775 = vsel %vm3436, %v3774, %v3770
    %v3776 = vlaneseq
    %v3777 = vshrl.u32 %v3776, 7
    %v3778 = vsub.s32 %v3438, %v3777
    %v3779 = vrot.slane %v3217, %v3778
    %v3780 = vsel %vm3443, %v3779, %v3775
    %v3781 = vlaneseq
    %v3782 = vshrl.u32 %v3781, 7
    %v3783 = vsub.s32 %v3445, %v3782
    %v3784 = vrot.slane %v3218, %v3783
    %v3785 = vsel %vm3450, %v3784, %v3780
    %v3786 = vlaneseq
    %v3787 = vshrl.u32 %v3786, 7
    %v3788 = vsub.s32 %v3452, %v3787
    %v3789 = vrot.slane %v3219, %v3788
    %v3790 = vsel %vm3457, %v3789, %v3785
    %v3791 = vlaneseq
    %v3792 = vshrl.u32 %v3791, 7
    %v3793 = vsub.s32 %v3459, %v3792
    %v3794 = vrot.slane %v3220, %v3793
    %v3795 = vsel %vm3464, %v3794, %v3790
    %v3796 = vlaneseq
    %v3797 = vshrl.u32 %v3796, 7
    %v3798 = vsub.s32 %v3466, %v3797
    %v3799 = vrot.slane %v3221, %v3798
    %v3800 = vsel %vm3471, %v3799, %v3795
    %v3801 = vlaneseq
    %v3802 = vshrl.u32 %v3801, 7
    %v3803 = vsub.s32 %v3473, %v3802
    %v3804 = vrot.slane %v3222, %v3803
    %v3805 = vsel %vm3478, %v3804, %v3800
    %v3806 = vlaneseq
    %v3807 = vshrl.u32 %v3806, 7
    %v3808 = vsub.s32 %v3480, %v3807
    %v3809 = vrot.slane %v3223, %v3808
    %v3810 = vsel %vm3485, %v3809, %v3805
    %v3811 = vlaneseq
    %v3812 = vshrl.u32 %v3811, 7
    %v3813 = vsub.s32 %v3487, %v3812
    %v3814 = vrot.slane %v3224, %v3813
    %v3815 = vsel %vm3492, %v3814, %v3810
    %v3816 = vlaneseq
    %v3817 = vshrl.u32 %v3816, 7
    %v3818 = vsub.s32 %v3494, %v3817
    %v3819 = vrot.slane %v3225, %v3818
    %v3820 = vsel %vm3499, %v3819, %v3815
    %v3821 = vlaneseq
    %v3822 = vshrl.u32 %v3821, 7
    %v3823 = vsub.s32 %v3501, %v3822
    %v3824 = vrot.slane %v3226, %v3823
    %v3825 = vsel %vm3506, %v3824, %v3820
    %v3826 = vlaneseq
    %v3827 = vshrl.u32 %v3826, 7
    %v3828 = vsub.s32 %v3508, %v3827
    %v3829 = vrot.slane %v3227, %v3828
    %v3830 = vsel %vm3513, %v3829, %v3825
    %v3831 = vlaneseq
    %v3832 = vshrl.u32 %v3831, 7
    %v3833 = vsub.s32 %v3405, %v3832
    %v3834 = vrot.slane %v3228, %v3833
    %v3835 = vlaneseq
    %v3836 = vshrl.u32 %v3835, 7
    %v3837 = vsub.s32 %v3410, %v3836
    %v3838 = vrot.slane %v3229, %v3837
    %v3839 = vsel %vm3415, %v3838, %v3834
    %v3840 = vlaneseq
    %v3841 = vshrl.u32 %v3840, 7
    %v3842 = vsub.s32 %v3417, %v3841
    %v3843 = vrot.slane %v3230, %v3842
    %v3844 = vsel %vm3422, %v3843, %v3839
    %v3845 = vlaneseq
    %v3846 = vshrl.u32 %v3845, 7
    %v3847 = vsub.s32 %v3424, %v3846
    %v3848 = vrot.slane %v3231, %v3847
    %v3849 = vsel %vm3429, %v3848, %v3844
    %v3850 = vlaneseq
    %v3851 = vshrl.u32 %v3850, 7
    %v3852 = vsub.s32 %v3431, %v3851
    %v3853 = vrot.slane %v3232, %v3852
    %v3854 = vsel %vm3436, %v3853, %v3849
    %v3855 = vlaneseq
    %v3856 = vshrl.u32 %v3855, 7
    %v3857 = vsub.s32 %v3438, %v3856
    %v3858 = vrot.slane %v3233, %v3857
    %v3859 = vsel %vm3443, %v3858, %v3854
    %v3860 = vlaneseq
    %v3861 = vshrl.u32 %v3860, 7
    %v3862 = vsub.s32 %v3445, %v3861
    %v3863 = vrot.slane %v3234, %v3862
    %v3864 = vsel %vm3450, %v3863, %v3859
    %v3865 = vlaneseq
    %v3866 = vshrl.u32 %v3865, 7
    %v3867 = vsub.s32 %v3452, %v3866
    %v3868 = vrot.slane %v3235, %v3867
    %v3869 = vsel %vm3457, %v3868, %v3864
    %v3870 = vlaneseq
    %v3871 = vshrl.u32 %v3870, 7
    %v3872 = vsub.s32 %v3459, %v3871
    %v3873 = vrot.slane %v3236, %v3872
    %v3874 = vsel %vm3464, %v3873, %v3869
    %v3875 = vlaneseq
    %v3876 = vshrl.u32 %v3875, 7
    %v3877 = vsub.s32 %v3466, %v3876
    %v3878 = vrot.slane %v3237, %v3877
    %v3879 = vsel %vm3471, %v3878, %v3874
    %v3880 = vlaneseq
    %v3881 = vshrl.u32 %v3880, 7
    %v3882 = vsub.s32 %v3473, %v3881
    %v3883 = vrot.slane %v3238, %v3882
    %v3884 = vsel %vm3478, %v3883, %v3879
    %v3885 = vlaneseq
    %v3886 = vshrl.u32 %v3885, 7
    %v3887 = vsub.s32 %v3480, %v3886
    %v3888 = vrot.slane %v3239, %v3887
    %v3889 = vsel %vm3485, %v3888, %v3884
    %v3890 = vlaneseq
    %v3891 = vshrl.u32 %v3890, 7
    %v3892 = vsub.s32 %v3487, %v3891
    %v3893 = vrot.slane %v3240, %v3892
    %v3894 = vsel %vm3492, %v3893, %v3889
    %v3895 = vlaneseq
    %v3896 = vshrl.u32 %v3895, 7
    %v3897 = vsub.s32 %v3494, %v3896
    %v3898 = vrot.slane %v3241, %v3897
    %v3899 = vsel %vm3499, %v3898, %v3894
    %v3900 = vlaneseq
    %v3901 = vshrl.u32 %v3900, 7
    %v3902 = vsub.s32 %v3501, %v3901
    %v3903 = vrot.slane %v3242, %v3902
    %v3904 = vsel %vm3506, %v3903, %v3899
    %v3905 = vlaneseq
    %v3906 = vshrl.u32 %v3905, 7
    %v3907 = vsub.s32 %v3508, %v3906
    %v3908 = vrot.slane %v3243, %v3907
    %v3909 = vsel %vm3513, %v3908, %v3904
    %v3910 = vlaneseq
    %v3911 = vshrl.u32 %v3910, 7
    %v3912 = vsub.s32 %v3405, %v3911
    %v3913 = vrot.slane %v3244, %v3912
    %v3914 = vlaneseq
    %v3915 = vshrl.u32 %v3914, 7
    %v3916 = vsub.s32 %v3410, %v3915
    %v3917 = vrot.slane %v3245, %v3916
    %v3918 = vsel %vm3415, %v3917, %v3913
    %v3919 = vlaneseq
    %v3920 = vshrl.u32 %v3919, 7
    %v3921 = vsub.s32 %v3417, %v3920
    %v3922 = vrot.slane %v3246, %v3921
    %v3923 = vsel %vm3422, %v3922, %v3918
    %v3924 = vlaneseq
    %v3925 = vshrl.u32 %v3924, 7
    %v3926 = vsub.s32 %v3424, %v3925
    %v3927 = vrot.slane %v3247, %v3926
    %v3928 = vsel %vm3429, %v3927, %v3923
    %v3929 = vlaneseq
    %v3930 = vshrl.u32 %v3929, 7
    %v3931 = vsub.s32 %v3431, %v3930
    %v3932 = vrot.slane %v3248, %v3931
    %v3933 = vsel %vm3436, %v3932, %v3928
    %v3934 = vlaneseq
    %v3935 = vshrl.u32 %v3934, 7
    %v3936 = vsub.s32 %v3438, %v3935
    %v3937 = vrot.slane %v3249, %v3936
    %v3938 = vsel %vm3443, %v3937, %v3933
    %v3939 = vlaneseq
    %v3940 = vshrl.u32 %v3939, 7
    %v3941 = vsub.s32 %v3445, %v3940
    %v3942 = vrot.slane %v3250, %v3941
    %v3943 = vsel %vm3450, %v3942, %v3938
    %v3944 = vlaneseq
    %v3945 = vshrl.u32 %v3944, 7
    %v3946 = vsub.s32 %v3452, %v3945
    %v3947 = vrot.slane %v3251, %v3946
    %v3948 = vsel %vm3457, %v3947, %v3943
    %v3949 = vlaneseq
    %v3950 = vshrl.u32 %v3949, 7
    %v3951 = vsub.s32 %v3459, %v3950
    %v3952 = vrot.slane %v3252, %v3951
    %v3953 = vsel %vm3464, %v3952, %v3948
    %v3954 = vlaneseq
    %v3955 = vshrl.u32 %v3954, 7
    %v3956 = vsub.s32 %v3466, %v3955
    %v3957 = vrot.slane %v3253, %v3956
    %v3958 = vsel %vm3471, %v3957, %v3953
    %v3959 = vlaneseq
    %v3960 = vshrl.u32 %v3959, 7
    %v3961 = vsub.s32 %v3473, %v3960
    %v3962 = vrot.slane %v3254, %v3961
    %v3963 = vsel %vm3478, %v3962, %v3958
    %v3964 = vlaneseq
    %v3965 = vshrl.u32 %v3964, 7
    %v3966 = vsub.s32 %v3480, %v3965
    %v3967 = vrot.slane %v3255, %v3966
    %v3968 = vsel %vm3485, %v3967, %v3963
    %v3969 = vlaneseq
    %v3970 = vshrl.u32 %v3969, 7
    %v3971 = vsub.s32 %v3487, %v3970
    %v3972 = vrot.slane %v3256, %v3971
    %v3973 = vsel %vm3492, %v3972, %v3968
    %v3974 = vlaneseq
    %v3975 = vshrl.u32 %v3974, 7
    %v3976 = vsub.s32 %v3494, %v3975
    %v3977 = vrot.slane %v3257, %v3976
    %v3978 = vsel %vm3499, %v3977, %v3973
    %v3979 = vlaneseq
    %v3980 = vshrl.u32 %v3979, 7
    %v3981 = vsub.s32 %v3501, %v3980
    %v3982 = vrot.slane %v3258, %v3981
    %v3983 = vsel %vm3506, %v3982, %v3978
    %v3984 = vlaneseq
    %v3985 = vshrl.u32 %v3984, 7
    %v3986 = vsub.s32 %v3508, %v3985
    %v3987 = vrot.slane %v3259, %v3986
    %v3988 = vsel %vm3513, %v3987, %v3983
    %v3989 = vlaneseq
    %v3990 = vshrl.u32 %v3989, 7
    %v3991 = vsub.s32 %v3405, %v3990
    %v3992 = vrot.slane %v3260, %v3991
    %v3993 = vlaneseq
    %v3994 = vshrl.u32 %v3993, 7
    %v3995 = vsub.s32 %v3410, %v3994
    %v3996 = vrot.slane %v3261, %v3995
    %v3997 = vsel %vm3415, %v3996, %v3992
    %v3998 = vlaneseq
    %v3999 = vshrl.u32 %v3998, 7
    %v4000 = vsub.s32 %v3417, %v3999
    %v4001 = vrot.slane %v3262, %v4000
    %v4002 = vsel %vm3422, %v4001, %v3997
    %v4003 = vlaneseq
    %v4004 = vshrl.u32 %v4003, 7
    %v4005 = vsub.s32 %v3424, %v4004
    %v4006 = vrot.slane %v3263, %v4005
    %v4007 = vsel %vm3429, %v4006, %v4002
    %v4008 = vlaneseq
    %v4009 = vshrl.u32 %v4008, 7
    %v4010 = vsub.s32 %v3431, %v4009
    %v4011 = vrot.slane %v3264, %v4010
    %v4012 = vsel %vm3436, %v4011, %v4007
    %v4013 = vlaneseq
    %v4014 = vshrl.u32 %v4013, 7
    %v4015 = vsub.s32 %v3438, %v4014
    %v4016 = vrot.slane %v3265, %v4015
    %v4017 = vsel %vm3443, %v4016, %v4012
    %v4018 = vlaneseq
    %v4019 = vshrl.u32 %v4018, 7
    %v4020 = vsub.s32 %v3445, %v4019
    %v4021 = vrot.slane %v3266, %v4020
    %v4022 = vsel %vm3450, %v4021, %v4017
    %v4023 = vlaneseq
    %v4024 = vshrl.u32 %v4023, 7
    %v4025 = vsub.s32 %v3452, %v4024
    %v4026 = vrot.slane %v3267, %v4025
    %v4027 = vsel %vm3457, %v4026, %v4022
    %v4028 = vlaneseq
    %v4029 = vshrl.u32 %v4028, 7
    %v4030 = vsub.s32 %v3459, %v4029
    %v4031 = vrot.slane %v3268, %v4030
    %v4032 = vsel %vm3464, %v4031, %v4027
    %v4033 = vlaneseq
    %v4034 = vshrl.u32 %v4033, 7
    %v4035 = vsub.s32 %v3466, %v4034
    %v4036 = vrot.slane %v3269, %v4035
    %v4037 = vsel %vm3471, %v4036, %v4032
    %v4038 = vlaneseq
    %v4039 = vshrl.u32 %v4038, 7
    %v4040 = vsub.s32 %v3473, %v4039
    %v4041 = vrot.slane %v3270, %v4040
    %v4042 = vsel %vm3478, %v4041, %v4037
    %v4043 = vlaneseq
    %v4044 = vshrl.u32 %v4043, 7
    %v4045 = vsub.s32 %v3480, %v4044
    %v4046 = vrot.slane %v3271, %v4045
    %v4047 = vsel %vm3485, %v4046, %v4042
    %v4048 = vlaneseq
    %v4049 = vshrl.u32 %v4048, 7
    %v4050 = vsub.s32 %v3487, %v4049
    %v4051 = vrot.slane %v3272, %v4050
    %v4052 = vsel %vm3492, %v4051, %v4047
    %v4053 = vlaneseq
    %v4054 = vshrl.u32 %v4053, 7
    %v4055 = vsub.s32 %v3494, %v4054
    %v4056 = vrot.slane %v3273, %v4055
    %v4057 = vsel %vm3499, %v4056, %v4052
    %v4058 = vlaneseq
    %v4059 = vshrl.u32 %v4058, 7
    %v4060 = vsub.s32 %v3501, %v4059
    %v4061 = vrot.slane %v3274, %v4060
    %v4062 = vsel %vm3506, %v4061, %v4057
    %v4063 = vlaneseq
    %v4064 = vshrl.u32 %v4063, 7
    %v4065 = vsub.s32 %v3508, %v4064
    %v4066 = vrot.slane %v3275, %v4065
    %v4067 = vsel %vm3513, %v4066, %v4062
    %vm4068 = vcmask 1041409
    %v4069 = vsel %vm4068, %v3593, %v3514
    %vm4070 = vcmask 1042434
    %v4071 = vsel %vm4070, %v3672, %v4069
    %vm4072 = vcmask 1043459
    %v4073 = vsel %vm4072, %v3751, %v4071
    %vm4074 = vcmask 1044484
    %v4075 = vsel %vm4074, %v3830, %v4073
    %vm4076 = vcmask 1045509
    %v4077 = vsel %vm4076, %v3909, %v4075
    %vm4078 = vcmask 1046534
    %v4079 = vsel %vm4078, %v3988, %v4077
    %vm4080 = vcmask 1047559
    %v4081 = vsel %vm4080, %v4067, %v4079
    %4083 = vst [vmem:[#allocation3] sm:$0xff] %v4081
    // Predicated region
    $region30: #{tpu_custom_call.1} parent=1 // pred_check
      _
    $region31: #{tpu_custom_call.1} parent=1 // pred_check_branch
      %4085 = sbr.rel (0) target = $region33
    $region32: #{tpu_custom_call.1} parent=1 // pred_region
      %s4087 = ssub.s32 128, 128
      %4088 = vsyncadd [#allocation4], %s4087
      %s4090 = sshll.u32 [#allocation3], 4
      %s4091 = int_to_ptr.vmem [resolvable:$true] %s4090
      %4093 = dma.vmem_to_hbm [thread:$0]  %s4091, 128, %s7, [#allocation4]
    $region33: #{tpu_custom_call.1} parent=1 // pred_fallthru
      _
    // Predicated region
    $region34: #{tpu_custom_call.1} parent=1 // pred_check
      _
    $region35: #{tpu_custom_call.1} parent=1 // pred_check_branch
      %4095 = sbr.rel (0) target = $region37
    $region36: #{tpu_custom_call.1} parent=1 // pred_region
      %4096 = dma.done [#allocation4], 128
    $region37: #{tpu_custom_call.1} parent=1 // pred_fallthru
      _
    %4097 = vsyncpa [#allocation4], 1

// kernel: tpu_custom_call.1
$region0: #{tpu_custom_call.1}
  #allocation0 [shape = 'u32[]', space=smem, size = 0x4, offset = 0x4, fixed_abs, tag = 'smem constant byte address 0x4 - core index']
  #allocation1 [shape = 'u32[144,128]{1,0:T(1,128)}', space=vmem, size = 0x12000, scoped, tag = 'internal scratch']
  #allocation2 [shape = 'f32[1,1]{1,0:T(1,128)S(1)}', space=vmem, size = 0x200, scoped, tag = 'scoped memory for tpu_custom_call.1']
  %s0 = inlined_call_operand.vmem [shape: f32[1024,32], index: 0, kind: input, shape index: {}]
  %s1 = inlined_call_operand.vmem [shape: f32[32,64], index: 1, kind: input, shape index: {}]
  %s2 = inlined_call_operand.vmem [shape: f32[1,64], index: 2, kind: input, shape index: {}]
  %s3 = inlined_call_operand.vmem [shape: f32[64,32], index: 3, kind: input, shape index: {}]
  %s4 = inlined_call_operand.vmem [shape: f32[1,32], index: 4, kind: input, shape index: {}]
  %s5 = inlined_call_operand.vmem [shape: f32[1,32], index: 5, kind: input, shape index: {}]
  %s6 = inlined_call_operand.<no memory space> [shape: f32[1,1], index: 6, kind: input, shape index: {}]
  %s7 = inlined_call_operand.vmem [shape: f32[1024,1], index: 7, kind: output, shape index: {}]
  %s8 = sld [smem:[#allocation0]]
  $region38: #{tpu_custom_call.1} parent=0
    _
  %s10 = ssub.s32 1, %s8
  %s11 = scalar_select 0, %s10, %s8
  %v12 = vstv %s6
  %13 = vst [vmem:[#allocation2] sm:$0x1] %v12
  // Predicated region
  $region2: #{tpu_custom_call.1} parent=0 // pred_check
    _
  $region3: #{tpu_custom_call.1} parent=0 // pred_check_branch
    %15 = sbr.rel (0) target = $region5
  $region4: #{tpu_custom_call.1} parent=0 // pred_region
    _
  $region5: #{tpu_custom_call.1} parent=0 // pred_fallthru
    _
  // Predicated region
  $region6: #{tpu_custom_call.1} parent=0 // pred_check
    _
  $region7: #{tpu_custom_call.1} parent=0 // pred_check_branch
    %17 = sbr.rel (0) target = $region9
  $region8: #{tpu_custom_call.1} parent=0 // pred_region
    _
  $region9: #{tpu_custom_call.1} parent=0 // pred_fallthru
    _
  // Predicated region
  $region10: #{tpu_custom_call.1} parent=0 // pred_check
    _
  $region11: #{tpu_custom_call.1} parent=0 // pred_check_branch
    %19 = sbr.rel (0) target = $region13
  $region12: #{tpu_custom_call.1} parent=0 // pred_region
    _
  $region13: #{tpu_custom_call.1} parent=0 // pred_fallthru
    _
  // Predicated region
  $region14: #{tpu_custom_call.1} parent=0 // pred_check
    _
  $region15: #{tpu_custom_call.1} parent=0 // pred_check_branch
    %21 = sbr.rel (0) target = $region17
  $region16: #{tpu_custom_call.1} parent=0 // pred_region
    _
  $region17: #{tpu_custom_call.1} parent=0 // pred_fallthru
    _
  // Predicated region
  $region18: #{tpu_custom_call.1} parent=0 // pred_check
    _
  $region19: #{tpu_custom_call.1} parent=0 // pred_check_branch
    %23 = sbr.rel (0) target = $region21
  $region20: #{tpu_custom_call.1} parent=0 // pred_region
    _
  $region21: #{tpu_custom_call.1} parent=0 // pred_fallthru
    _
  // Predicated region
  $region22: #{tpu_custom_call.1} parent=0 // pred_check
    _
  $region23: #{tpu_custom_call.1} parent=0 // pred_check_branch
    %25 = sbr.rel (0) target = $region25
  $region24: #{tpu_custom_call.1} parent=0 // pred_region
    _
  $region25: #{tpu_custom_call.1} parent=0 // pred_fallthru
    _
  // Predicated region
  $region26: #{tpu_custom_call.1} parent=0 // pred_check
    _
  $region27: #{tpu_custom_call.1} parent=0 // pred_check_branch
    %27 = sbr.rel (0) target = $region29
  $region28: #{tpu_custom_call.1} parent=0 // pred_region
    _
  $region29: #{tpu_custom_call.1} parent=0 // pred_fallthru
    _
  %v28 = vld [vmem:[%s0] sm:$0xff]
  %v29 = vld [vmem:[%s0 + $0x8] sm:$0xff]
  %v30 = vld [vmem:[%s0 + $0x10] sm:$0xff]
  %v31 = vld [vmem:[%s0 + $0x18] sm:$0xff]
  %v32 = vld [vmem:[%s0 + $0x20] sm:$0xff]
  %v33 = vld [vmem:[%s0 + $0x28] sm:$0xff]
  %v34 = vld [vmem:[%s0 + $0x30] sm:$0xff]
  %v35 = vld [vmem:[%s0 + $0x38] sm:$0xff]
  %v36 = vld [vmem:[%s0 + $0x40] sm:$0xff]
  %v37 = vld [vmem:[%s0 + $0x48] sm:$0xff]
  %v38 = vld [vmem:[%s0 + $0x50] sm:$0xff]
  %v39 = vld [vmem:[%s0 + $0x58] sm:$0xff]
  %v40 = vld [vmem:[%s0 + $0x60] sm:$0xff]
  %v41 = vld [vmem:[%s0 + $0x68] sm:$0xff]
  %v42 = vld [vmem:[%s0 + $0x70] sm:$0xff]
  %v43 = vld [vmem:[%s0 + $0x78] sm:$0xff]
  %v44 = vld [vmem:[%s0 + $0x80] sm:$0xff]
  %v45 = vld [vmem:[%s0 + $0x88] sm:$0xff]
  %v46 = vld [vmem:[%s0 + $0x90] sm:$0xff]
  %v47 = vld [vmem:[%s0 + $0x98] sm:$0xff]
  %v48 = vld [vmem:[%s0 + $0xa0] sm:$0xff]
  %v49 = vld [vmem:[%s0 + $0xa8] sm:$0xff]
  %v50 = vld [vmem:[%s0 + $0xb0] sm:$0xff]
  %v51 = vld [vmem:[%s0 + $0xb8] sm:$0xff]
  %v52 = vld [vmem:[%s0 + $0xc0] sm:$0xff]
  %v53 = vld [vmem:[%s0 + $0xc8] sm:$0xff]
  %v54 = vld [vmem:[%s0 + $0xd0] sm:$0xff]
  %v55 = vld [vmem:[%s0 + $0xd8] sm:$0xff]
  %v56 = vld [vmem:[%s0 + $0xe0] sm:$0xff]
  %v57 = vld [vmem:[%s0 + $0xe8] sm:$0xff]
  %v58 = vld [vmem:[%s0 + $0xf0] sm:$0xff]
  %v59 = vld [vmem:[%s0 + $0xf8] sm:$0xff]
  %v60 = vld [vmem:[%s0 + $0x100] sm:$0xff]
  %v61 = vld [vmem:[%s0 + $0x108] sm:$0xff]
  %v62 = vld [vmem:[%s0 + $0x110] sm:$0xff]
  %v63 = vld [vmem:[%s0 + $0x118] sm:$0xff]
  %v64 = vld [vmem:[%s0 + $0x120] sm:$0xff]
  %v65 = vld [vmem:[%s0 + $0x128] sm:$0xff]
  %v66 = vld [vmem:[%s0 + $0x130] sm:$0xff]
  %v67 = vld [vmem:[%s0 + $0x138] sm:$0xff]
  %v68 = vld [vmem:[%s0 + $0x140] sm:$0xff]
  %v69 = vld [vmem:[%s0 + $0x148] sm:$0xff]
  %v70 = vld [vmem:[%s0 + $0x150] sm:$0xff]
  %v71 = vld [vmem:[%s0 + $0x158] sm:$0xff]
  %v72 = vld [vmem:[%s0 + $0x160] sm:$0xff]
  %v73 = vld [vmem:[%s0 + $0x168] sm:$0xff]
  %v74 = vld [vmem:[%s0 + $0x170] sm:$0xff]
  %v75 = vld [vmem:[%s0 + $0x178] sm:$0xff]
  %v76 = vld [vmem:[%s0 + $0x180] sm:$0xff]
  %v77 = vld [vmem:[%s0 + $0x188] sm:$0xff]
  %v78 = vld [vmem:[%s0 + $0x190] sm:$0xff]
  %v79 = vld [vmem:[%s0 + $0x198] sm:$0xff]
  %v80 = vld [vmem:[%s0 + $0x1a0] sm:$0xff]
  %v81 = vld [vmem:[%s0 + $0x1a8] sm:$0xff]
  %v82 = vld [vmem:[%s0 + $0x1b0] sm:$0xff]
  %v83 = vld [vmem:[%s0 + $0x1b8] sm:$0xff]
  %v84 = vld [vmem:[%s0 + $0x1c0] sm:$0xff]
  %v85 = vld [vmem:[%s0 + $0x1c8] sm:$0xff]
  %v86 = vld [vmem:[%s0 + $0x1d0] sm:$0xff]
  %v87 = vld [vmem:[%s0 + $0x1d8] sm:$0xff]
  %v88 = vld [vmem:[%s0 + $0x1e0] sm:$0xff]
  %v89 = vld [vmem:[%s0 + $0x1e8] sm:$0xff]
  %v90 = vld [vmem:[%s0 + $0x1f0] sm:$0xff]
  %v91 = vld [vmem:[%s0 + $0x1f8] sm:$0xff]
  %v92 = vld [vmem:[%s0 + $0x200] sm:$0xff]
  %v93 = vld [vmem:[%s0 + $0x208] sm:$0xff]
  %v94 = vld [vmem:[%s0 + $0x210] sm:$0xff]
  %v95 = vld [vmem:[%s0 + $0x218] sm:$0xff]
  %v96 = vld [vmem:[%s0 + $0x220] sm:$0xff]
  %v97 = vld [vmem:[%s0 + $0x228] sm:$0xff]
  %v98 = vld [vmem:[%s0 + $0x230] sm:$0xff]
  %v99 = vld [vmem:[%s0 + $0x238] sm:$0xff]
  %v100 = vld [vmem:[%s0 + $0x240] sm:$0xff]
  %v101 = vld [vmem:[%s0 + $0x248] sm:$0xff]
  %v102 = vld [vmem:[%s0 + $0x250] sm:$0xff]
  %v103 = vld [vmem:[%s0 + $0x258] sm:$0xff]
  %v104 = vld [vmem:[%s0 + $0x260] sm:$0xff]
  %v105 = vld [vmem:[%s0 + $0x268] sm:$0xff]
  %v106 = vld [vmem:[%s0 + $0x270] sm:$0xff]
  %v107 = vld [vmem:[%s0 + $0x278] sm:$0xff]
  %v108 = vld [vmem:[%s0 + $0x280] sm:$0xff]
  %v109 = vld [vmem:[%s0 + $0x288] sm:$0xff]
  %v110 = vld [vmem:[%s0 + $0x290] sm:$0xff]
  %v111 = vld [vmem:[%s0 + $0x298] sm:$0xff]
  %v112 = vld [vmem:[%s0 + $0x2a0] sm:$0xff]
  %v113 = vld [vmem:[%s0 + $0x2a8] sm:$0xff]
  %v114 = vld [vmem:[%s0 + $0x2b0] sm:$0xff]
  %v115 = vld [vmem:[%s0 + $0x2b8] sm:$0xff]
  %v116 = vld [vmem:[%s0 + $0x2c0] sm:$0xff]
  %v117 = vld [vmem:[%s0 + $0x2c8] sm:$0xff]
  %v118 = vld [vmem:[%s0 + $0x2d0] sm:$0xff]
  %v119 = vld [vmem:[%s0 + $0x2d8] sm:$0xff]
  %v120 = vld [vmem:[%s0 + $0x2e0] sm:$0xff]
  %v121 = vld [vmem:[%s0 + $0x2e8] sm:$0xff]
  %v122 = vld [vmem:[%s0 + $0x2f0] sm:$0xff]
  %v123 = vld [vmem:[%s0 + $0x2f8] sm:$0xff]
  %v124 = vld [vmem:[%s0 + $0x300] sm:$0xff]
  %v125 = vld [vmem:[%s0 + $0x308] sm:$0xff]
  %v126 = vld [vmem:[%s0 + $0x310] sm:$0xff]
  %v127 = vld [vmem:[%s0 + $0x318] sm:$0xff]
  %v128 = vld [vmem:[%s0 + $0x320] sm:$0xff]
  %v129 = vld [vmem:[%s0 + $0x328] sm:$0xff]
  %v130 = vld [vmem:[%s0 + $0x330] sm:$0xff]
  %v131 = vld [vmem:[%s0 + $0x338] sm:$0xff]
  %v132 = vld [vmem:[%s0 + $0x340] sm:$0xff]
  %v133 = vld [vmem:[%s0 + $0x348] sm:$0xff]
  %v134 = vld [vmem:[%s0 + $0x350] sm:$0xff]
  %v135 = vld [vmem:[%s0 + $0x358] sm:$0xff]
  %v136 = vld [vmem:[%s0 + $0x360] sm:$0xff]
  %v137 = vld [vmem:[%s0 + $0x368] sm:$0xff]
  %v138 = vld [vmem:[%s0 + $0x370] sm:$0xff]
  %v139 = vld [vmem:[%s0 + $0x378] sm:$0xff]
  %v140 = vld [vmem:[%s0 + $0x380] sm:$0xff]
  %v141 = vld [vmem:[%s0 + $0x388] sm:$0xff]
  %v142 = vld [vmem:[%s0 + $0x390] sm:$0xff]
  %v143 = vld [vmem:[%s0 + $0x398] sm:$0xff]
  %v144 = vld [vmem:[%s0 + $0x3a0] sm:$0xff]
  %v145 = vld [vmem:[%s0 + $0x3a8] sm:$0xff]
  %v146 = vld [vmem:[%s0 + $0x3b0] sm:$0xff]
  %v147 = vld [vmem:[%s0 + $0x3b8] sm:$0xff]
  %v148 = vld [vmem:[%s0 + $0x3c0] sm:$0xff]
  %v149 = vld [vmem:[%s0 + $0x3c8] sm:$0xff]
  %v150 = vld [vmem:[%s0 + $0x3d0] sm:$0xff]
  %v151 = vld [vmem:[%s0 + $0x3d8] sm:$0xff]
  %v152 = vld [vmem:[%s0 + $0x3e0] sm:$0xff]
  %v153 = vld [vmem:[%s0 + $0x3e8] sm:$0xff]
  %v154 = vld [vmem:[%s0 + $0x3f0] sm:$0xff]
  %v155 = vld [vmem:[%s0 + $0x3f8] sm:$0xff]
  %v156 = vld [vmem:[%s1] sm:$0xff]
  %v157 = vld [vmem:[%s1 + $0x8] sm:$0xff]
  %v158 = vld [vmem:[%s1 + $0x10] sm:$0xff]
  %v159 = vld [vmem:[%s1 + $0x18] sm:$0xff]
  %v160 = vld [vmem:[%s2] sm:$0x1]
  %v162 = vlaneseq
  %v163 = vshrl.u32 %v162, 7
  %v164 = vsub.s32 0, %v163
  %v165 = vrot.slane %v160, %v164
  %vm167 = vcmask 261120
  %v169 = vsel %vm167, %v28, 0
  %v172 = vsel %vm167, %v29, 0
  %v175 = vsel %vm167, %v30, 0
  %v178 = vsel %vm167, %v31, 0
  %v181 = vsel %vm167, %v32, 0
  %v184 = vsel %vm167, %v33, 0
  %v187 = vsel %vm167, %v34, 0
  %v190 = vsel %vm167, %v35, 0
  %v193 = vsel %vm167, %v36, 0
  %v196 = vsel %vm167, %v37, 0
  %v199 = vsel %vm167, %v38, 0
  %v202 = vsel %vm167, %v39, 0
  %v205 = vsel %vm167, %v40, 0
  %v208 = vsel %vm167, %v41, 0
  %v211 = vsel %vm167, %v42, 0
  %v214 = vsel %vm167, %v43, 0
  %v217 = vsel %vm167, %v44, 0
  %v220 = vsel %vm167, %v45, 0
  %v223 = vsel %vm167, %v46, 0
  %v226 = vsel %vm167, %v47, 0
  %v229 = vsel %vm167, %v48, 0
  %v232 = vsel %vm167, %v49, 0
  %v235 = vsel %vm167, %v50, 0
  %v238 = vsel %vm167, %v51, 0
  %v241 = vsel %vm167, %v52, 0
  %v244 = vsel %vm167, %v53, 0
  %v247 = vsel %vm167, %v54, 0
  %v250 = vsel %vm167, %v55, 0
  %v253 = vsel %vm167, %v56, 0
  %v256 = vsel %vm167, %v57, 0
  %v259 = vsel %vm167, %v58, 0
  %v262 = vsel %vm167, %v59, 0
  %v265 = vsel %vm167, %v60, 0
  %v268 = vsel %vm167, %v61, 0
  %v271 = vsel %vm167, %v62, 0
  %v274 = vsel %vm167, %v63, 0
  %v277 = vsel %vm167, %v64, 0
  %v280 = vsel %vm167, %v65, 0
  %v283 = vsel %vm167, %v66, 0
  %v286 = vsel %vm167, %v67, 0
  %v289 = vsel %vm167, %v68, 0
  %v292 = vsel %vm167, %v69, 0
  %v295 = vsel %vm167, %v70, 0
  %v298 = vsel %vm167, %v71, 0
  %v301 = vsel %vm167, %v72, 0
  %v304 = vsel %vm167, %v73, 0
  %v307 = vsel %vm167, %v74, 0
  %v310 = vsel %vm167, %v75, 0
  %v313 = vsel %vm167, %v76, 0
  %v316 = vsel %vm167, %v77, 0
  %v319 = vsel %vm167, %v78, 0
  %v322 = vsel %vm167, %v79, 0
  %v325 = vsel %vm167, %v80, 0
  %v328 = vsel %vm167, %v81, 0
  %v331 = vsel %vm167, %v82, 0
  %v334 = vsel %vm167, %v83, 0
  %v337 = vsel %vm167, %v84, 0
  %v340 = vsel %vm167, %v85, 0
  %v343 = vsel %vm167, %v86, 0
  %v346 = vsel %vm167, %v87, 0
  %v349 = vsel %vm167, %v88, 0
  %v352 = vsel %vm167, %v89, 0
  %v355 = vsel %vm167, %v90, 0
  %v358 = vsel %vm167, %v91, 0
  %v361 = vsel %vm167, %v92, 0
  %v364 = vsel %vm167, %v93, 0
  %v367 = vsel %vm167, %v94, 0
  %v370 = vsel %vm167, %v95, 0
  %v373 = vsel %vm167, %v96, 0
  %v376 = vsel %vm167, %v97, 0
  %v379 = vsel %vm167, %v98, 0
  %v382 = vsel %vm167, %v99, 0
  %v385 = vsel %vm167, %v100, 0
  %v388 = vsel %vm167, %v101, 0
  %v391 = vsel %vm167, %v102, 0
  %v394 = vsel %vm167, %v103, 0
  %v397 = vsel %vm167, %v104, 0
  %v400 = vsel %vm167, %v105, 0
  %v403 = vsel %vm167, %v106, 0
  %v406 = vsel %vm167, %v107, 0
  %v409 = vsel %vm167, %v108, 0
  %v412 = vsel %vm167, %v109, 0
  %v415 = vsel %vm167, %v110, 0
  %v418 = vsel %vm167, %v111, 0
  %v421 = vsel %vm167, %v112, 0
  %v424 = vsel %vm167, %v113, 0
  %v427 = vsel %vm167, %v114, 0
  %v430 = vsel %vm167, %v115, 0
  %v433 = vsel %vm167, %v116, 0
  %v436 = vsel %vm167, %v117, 0
  %v439 = vsel %vm167, %v118, 0
  %v442 = vsel %vm167, %v119, 0
  %v445 = vsel %vm167, %v120, 0
  %v448 = vsel %vm167, %v121, 0
  %v451 = vsel %vm167, %v122, 0
  %v454 = vsel %vm167, %v123, 0
  %v457 = vsel %vm167, %v124, 0
  %v460 = vsel %vm167, %v125, 0
  %v463 = vsel %vm167, %v126, 0
  %v466 = vsel %vm167, %v127, 0
  %v469 = vsel %vm167, %v128, 0
  %v472 = vsel %vm167, %v129, 0
  %v475 = vsel %vm167, %v130, 0
  %v478 = vsel %vm167, %v131, 0
  %v481 = vsel %vm167, %v132, 0
  %v484 = vsel %vm167, %v133, 0
  %v487 = vsel %vm167, %v134, 0
  %v490 = vsel %vm167, %v135, 0
  %v493 = vsel %vm167, %v136, 0
  %v496 = vsel %vm167, %v137, 0
  %v499 = vsel %vm167, %v138, 0
  %v502 = vsel %vm167, %v139, 0
  %v505 = vsel %vm167, %v140, 0
  %v508 = vsel %vm167, %v141, 0
  %v511 = vsel %vm167, %v142, 0
  %v514 = vsel %vm167, %v143, 0
  %v517 = vsel %vm167, %v144, 0
  %v520 = vsel %vm167, %v145, 0
  %v523 = vsel %vm167, %v146, 0
  %v526 = vsel %vm167, %v147, 0
  %v529 = vsel %vm167, %v148, 0
  %v532 = vsel %vm167, %v149, 0
  %v535 = vsel %vm167, %v150, 0
  %v538 = vsel %vm167, %v151, 0
  %v541 = vsel %vm167, %v152, 0
  %v544 = vsel %vm167, %v153, 0
  %v547 = vsel %vm167, %v154, 0
  %v550 = vsel %vm167, %v155, 0
  %552 = vmatprep.subr.mxu0 0.0
  %553 = vmatpush1.msra.mxu0 %v156
  %554 = vmatprep.subr.mxu0 0.0
  %555 = vmatpush1.msra.mxu0 %v157
  %556 = vmatprep.subr.mxu0 0.0
  %557 = vmatpush1.msra.mxu0 %v158
  %558 = vmatprep.subr.mxu0 0.0
  %559 = vmatpush1.msra.mxu0 %v159
  %560 = vmatprep.subr.mxu0 0.0
  %561 = vmatpush1.msra.mxu0 0.0
  %562 = vmatprep.subr.mxu0 0.0
  %563 = vmatpush1.msra.mxu0 0.0
  %564 = vmatprep.subr.mxu0 0.0
  %565 = vmatpush1.msra.mxu0 0.0
  %566 = vmatprep.subr.mxu0 0.0
  %567 = vmatpush1.msra.mxu0 0.0
  %568 = vmatprep.subr.mxu0 0.0
  %569 = vmatpush1.msra.mxu0 0.0
  %570 = vmatprep.subr.mxu0 0.0
  %571 = vmatpush1.msra.mxu0 0.0
  %572 = vmatprep.subr.mxu0 0.0
  %573 = vmatpush1.msra.mxu0 0.0
  %574 = vmatprep.subr.mxu0 0.0
  %575 = vmatpush1.msra.mxu0 0.0
  %576 = vmatprep.subr.mxu0 0.0
  %577 = vmatpush1.msra.mxu0 0.0
  %578 = vmatprep.subr.mxu0 0.0
  %579 = vmatpush1.msra.mxu0 0.0
  %580 = vmatprep.subr.mxu0 0.0
  %581 = vmatpush1.msra.mxu0 0.0
  %582 = vmatprep.subr.mxu0 0.0
  %583 = vmatpush1.msra.mxu0 0.0
  %584 = vmatprep.subr.mxu0 0.0
  %585 = vmatpush1.msra.mxu0 0.0
  %586 = vmatprep.subr.mxu0 0.0
  %587 = vmatpush1.msra.mxu0 0.0
  %588 = vmatprep.subr.mxu0 0.0
  %589 = vmatpush1.msra.mxu0 0.0
  %590 = vmatprep.subr.mxu0 0.0
  %591 = vmatpush1.msra.mxu0 0.0
  %592 = vmatprep.subr.mxu0 0.0
  %593 = vmatpush1.msra.mxu0 0.0
  %594 = vmatprep.subr.mxu0 0.0
  %595 = vmatpush1.msra.mxu0 0.0
  %596 = vmatprep.subr.mxu0 0.0
  %597 = vmatpush1.msra.mxu0 0.0
  %598 = vmatprep.subr.mxu0 0.0
  %599 = vmatpush1.msra.mxu0 0.0
  %600 = vmatprep.subr.mxu0 0.0
  %601 = vmatpush1.msra.mxu0 0.0
  %602 = vmatprep.subr.mxu0 0.0
  %603 = vmatpush1.msra.mxu0 0.0
  %604 = vmatprep.subr.mxu0 0.0
  %605 = vmatpush1.msra.mxu0 0.0
  %606 = vmatprep.subr.mxu0 0.0
  %607 = vmatpush1.msra.mxu0 0.0
  %608 = vmatprep.subr.mxu0 0.0
  %609 = vmatpush1.msra.mxu0 0.0
  %610 = vmatprep.subr.mxu0 0.0
  %611 = vmatpush1.msra.mxu0 0.0
  %612 = vmatprep.subr.mxu0 0.0
  %613 = vmatpush1.msra.mxu0 0.0
  %614 = vmatprep.subr.mxu0 0.0
  %615 = vmatpush1.msra.mxu0 0.0
  %616 = vmatprep.mubr.f32.mxu0 0.0
  %617 = vmatmul.mubr.f32.gmra.mrb[0].mxu0 %v169
  %v618 = vpop.f32.mrb[0].mxu0
  %v619 = vadd.f32 %v165, %v618
  %v620 = vpop.f32.mrb[0].mxu0
  %621 = vmatprep.mubr.f32.mxu0 0.0
  %622 = vmatmul.mubr.f32.gmra.mrb[0].mxu0 %v172
  %v623 = vpop.f32.mrb[0].mxu0
  %v624 = vadd.f32 %v165, %v623
  %v625 = vpop.f32.mrb[0].mxu0
  %626 = vmatprep.mubr.f32.mxu0 0.0
  %627 = vmatmul.mubr.f32.gmra.mrb[0].mxu0 %v175
  %v628 = vpop.f32.mrb[0].mxu0
  %v629 = vadd.f32 %v165, %v628
  %v630 = vpop.f32.mrb[0].mxu0
  %631 = vmatprep.mubr.f32.mxu0 0.0
  %632 = vmatmul.mubr.f32.gmra.mrb[0].mxu0 %v178
  %v633 = vpop.f32.mrb[0].mxu0
  %v634 = vadd.f32 %v165, %v633
  %v635 = vpop.f32.mrb[0].mxu0
  %636 = vmatprep.mubr.f32.mxu0 0.0
  %637 = vmatmul.mubr.f32.gmra.mrb[0].mxu0 %v181
  %v638 = vpop.f32.mrb[0].mxu0
  %v639 = vadd.f32 %v165, %v638
  %v640 = vpop.f32.mrb[0].mxu0
  %641 = vmatprep.mubr.f32.mxu0 0.0
  %642 = vmatmul.mubr.f32.gmra.mrb[0].mxu0 %v184
  %v643 = vpop.f32.mrb[0].mxu0
  %v644 = vadd.f32 %v165, %v643
  %v645 = vpop.f32.mrb[0].mxu0
  %646 = vmatprep.mubr.f32.mxu0 0.0
  %647 = vmatmul.mubr.f32.gmra.mrb[0].mxu0 %v187
  %v648 = vpop.f32.mrb[0].mxu0
  %v649 = vadd.f32 %v165, %v648
  %v650 = vpop.f32.mrb[0].mxu0
  %651 = vmatprep.mubr.f32.mxu0 0.0
  %652 = vmatmul.mubr.f32.gmra.mrb[0].mxu0 %v190
  %v653 = vpop.f32.mrb[0].mxu0
  %v654 = vadd.f32 %v165, %v653
  %v655 = vpop.f32.mrb[0].mxu0
  %656 = vmatprep.mubr.f32.mxu0 0.0
  %657 = vmatmul.mubr.f32.gmra.mrb[0].mxu0 %v193
  %v658 = vpop.f32.mrb[0].mxu0
  %v659 = vadd.f32 %v165, %v658
  %v660 = vpop.f32.mrb[0].mxu0
  %661 = vmatprep.mubr.f32.mxu0 0.0
  %662 = vmatmul.mubr.f32.gmra.mrb[0].mxu0 %v196
  %v663 = vpop.f32.mrb[0].mxu0
  %v664 = vadd.f32 %v165, %v663
  %v665 = vpop.f32.mrb[0].mxu0
  %666 = vmatprep.mubr.f32.mxu0 0.0
  %667 = vmatmul.mubr.f32.gmra.mrb[0].mxu0 %v199
  %v668 = vpop.f32.mrb[0].mxu0
  %v669 = vadd.f32 %v165, %v668
  %v670 = vpop.f32.mrb[0].mxu0
  %671 = vmatprep.mubr.f32.mxu0 0.0
  %672 = vmatmul.mubr.f32.gmra.mrb[0].mxu0 %v202
  %v673 = vpop.f32.mrb[0].mxu0
  %v674 = vadd.f32 %v165, %v673
  %v675 = vpop.f32.mrb[0].mxu0
  %676 = vmatprep.mubr.f32.mxu0 0.0
  %677 = vmatmul.mubr.f32.gmra.mrb[0].mxu0 %v205
  %v678 = vpop.f32.mrb[0].mxu0
  %v679 = vadd.f32 %v165, %v678
  %v680 = vpop.f32.mrb[0].mxu0
  %681 = vmatprep.mubr.f32.mxu0 0.0
  %682 = vmatmul.mubr.f32.gmra.mrb[0].mxu0 %v208
  %v683 = vpop.f32.mrb[0].mxu0
  %v684 = vadd.f32 %v165, %v683
  %v685 = vpop.f32.mrb[0].mxu0
  %686 = vmatprep.mubr.f32.mxu0 0.0
  %687 = vmatmul.mubr.f32.gmra.mrb[0].mxu0 %v211
  %v688 = vpop.f32.mrb[0].mxu0
  %v689 = vadd.f32 %v165, %v688
  %v690 = vpop.f32.mrb[0].mxu0
  %691 = vmatprep.mubr.f32.mxu0 0.0
  %692 = vmatmul.mubr.f32.gmra.mrb[0].mxu0 %v214
  %v693 = vpop.f32.mrb[0].mxu0
  %v694 = vadd.f32 %v165, %v693
  %v695 = vpop.f32.mrb[0].mxu0
  %696 = vmatprep.mubr.f32.mxu0 0.0
  %697 = vmatmul.mubr.f32.gmra.mrb[0].mxu0 %v217
  %v698 = vpop.f32.mrb[0].mxu0
  %v699 = vadd.f32 %v165, %v698
  %v700 = vpop.f32.mrb[0].mxu0
  %701 = vmatprep.mubr.f32.mxu0 0.0
  %702 = vmatmul.mubr.f32.gmra.mrb[0].mxu0 %v220
  %v703 = vpop.f32.mrb[0].mxu0
  %v704 = vadd.f32 %v165, %v703
  %v705 = vpop.f32.mrb[0].mxu0
  %706 = vmatprep.mubr.f32.mxu0 0.0
  %707 = vmatmul.mubr.f32.gmra.mrb[0].mxu0 %v223
  %v708 = vpop.f32.mrb[0].mxu0
  %v709 = vadd.f32 %v165, %v708
  %v710 = vpop.f32.mrb[0].mxu0
  %711 = vmatprep.mubr.f32.mxu0 0.0
  %712 = vmatmul.mubr.f32.gmra.mrb[0].mxu0 %v226
  %v713 = vpop.f32.mrb[0].mxu0
  %v714 = vadd.f32 %v165, %v713
  %v715 = vpop.f32.mrb[0].mxu0
  %716 = vmatprep.mubr.f32.mxu0 0.0
  %717 = vmatmul.mubr.f32.gmra.mrb[0].mxu0 %v229
  %v718 = vpop.f32.mrb[0].mxu0
  %v719 = vadd.f32 %v165, %v718
  %v720 = vpop.f32.mrb[0].mxu0
  %721 = vmatprep.mubr.f32.mxu0 0.0
  %722 = vmatmul.mubr.f32.gmra.mrb[0].mxu0 %v232
  %v723 = vpop.f32.mrb[0].mxu0
  %v724 = vadd.f32 %v165, %v723
  %v725 = vpop.f32.mrb[0].mxu0
  %726 = vmatprep.mubr.f32.mxu0 0.0
  %727 = vmatmul.mubr.f32.gmra.mrb[0].mxu0 %v235
  %v728 = vpop.f32.mrb[0].mxu0
  %v729 = vadd.f32 %v165, %v728
  %v730 = vpop.f32.mrb[0].mxu0
  %731 = vmatprep.mubr.f32.mxu0 0.0
  %732 = vmatmul.mubr.f32.gmra.mrb[0].mxu0 %v238
  %v733 = vpop.f32.mrb[0].mxu0
  %v734 = vadd.f32 %v165, %v733
  %v735 = vpop.f32.mrb[0].mxu0
  %736 = vmatprep.mubr.f32.mxu0 0.0
  %737 = vmatmul.mubr.f32.gmra.mrb[0].mxu0 %v241
  %v738 = vpop.f32.mrb[0].mxu0
  %v739 = vadd.f32 %v165, %v738
  %v740 = vpop.f32.mrb[0].mxu0
  %741 = vmatprep.mubr.f32.mxu0 0.0
  %742 = vmatmul.mubr.f32.gmra.mrb[0].mxu0 %v244
  %v743 = vpop.f32.mrb[0].mxu0
  %v744 = vadd.f32 %v165, %v743
  %v745 = vpop.f32.mrb[0].mxu0
  %746 = vmatprep.mubr.f32.mxu0 0.0
  %747 = vmatmul.mubr.f32.gmra.mrb[0].mxu0 %v247
  %v748 = vpop.f32.mrb[0].mxu0
  %v749 = vadd.f32 %v165, %v748
  %v750 = vpop.f32.mrb[0].mxu0
  %751 = vmatprep.mubr.f32.mxu0 0.0
  %752 = vmatmul.mubr.f32.gmra.mrb[0].mxu0 %v250
  %v753 = vpop.f32.mrb[0].mxu0
  %v754 = vadd.f32 %v165, %v753
  %v755 = vpop.f32.mrb[0].mxu0
  %756 = vmatprep.mubr.f32.mxu0 0.0
  %757 = vmatmul.mubr.f32.gmra.mrb[0].mxu0 %v253
  %v758 = vpop.f32.mrb[0].mxu0
  %v759 = vadd.f32 %v165, %v758
  %v760 = vpop.f32.mrb[0].mxu0
  %761 = vmatprep.mubr.f32.mxu0 0.0
  %762 = vmatmul.mubr.f32.gmra.mrb[0].mxu0 %v256
  %v763 = vpop.f32.mrb[0].mxu0
  %v764 = vadd.f32 %v165, %v763
  %v765 = vpop.f32.mrb[0].mxu0
  %766 = vmatprep.mubr.f32.mxu0 0.0
  %767 = vmatmul.mubr.f32.gmra.mrb[0].mxu0 %v259
  %v768 = vpop.f32.mrb[0].mxu0
  %v769 = vadd.f32 %v165, %v768
  %v770 = vpop.f32.mrb[0].mxu0
  %771 = vmatprep.mubr.f32.mxu0 0.0
  %772 = vmatmul.mubr.f32.gmra.mrb[0].mxu0 %v262
  %v773 = vpop.f32.mrb[0].mxu0
  %v774 = vadd.f32 %v165, %v773
  %v775 = vpop.f32.mrb[0].mxu0
  %776 = vmatprep.mubr.f32.mxu0 0.0
  %777 = vmatmul.mubr.f32.gmra.mrb[0].mxu0 %v265
  %v778 = vpop.f32.mrb[0].mxu0
  %v779 = vadd.f32 %v165, %v778
  %v780 = vpop.f32.mrb[0].mxu0
  %781 = vmatprep.mubr.f32.mxu0 0.0
  %782 = vmatmul.mubr.f32.gmra.mrb[0].mxu0 %v268
  %v783 = vpop.f32.mrb[0].mxu0
  %v784 = vadd.f32 %v165, %v783
  %v785 = vpop.f32.mrb[0].mxu0
  %786 = vmatprep.mubr.f32.mxu0 0.0
  %787 = vmatmul.mubr.f32.gmra.mrb[0].mxu0 %v271
  %v788 = vpop.f32.mrb[0].mxu0
  %v789 = vadd.f32 %v165, %v788
  %v790 = vpop.f32.mrb[0].mxu0
  %791 = vmatprep.mubr.f32.mxu0 0.0
  %792 = vmatmul.mubr.f32.gmra.mrb[0].mxu0 %v274
  %v793 = vpop.f32.mrb[0].mxu0
  %v794 = vadd.f32 %v165, %v793
  %v795 = vpop.f32.mrb[0].mxu0
  %796 = vmatprep.mubr.f32.mxu0 0.0
  %797 = vmatmul.mubr.f32.gmra.mrb[0].mxu0 %v277
  %v798 = vpop.f32.mrb[0].mxu0
  %v799 = vadd.f32 %v165, %v798
  %v800 = vpop.f32.mrb[0].mxu0
  %801 = vmatprep.mubr.f32.mxu0 0.0
  %802 = vmatmul.mubr.f32.gmra.mrb[0].mxu0 %v280
  %v803 = vpop.f32.mrb[0].mxu0
  %v804 = vadd.f32 %v165, %v803
  %v805 = vpop.f32.mrb[0].mxu0
  %806 = vmatprep.mubr.f32.mxu0 0.0
  %807 = vmatmul.mubr.f32.gmra.mrb[0].mxu0 %v283
  %v808 = vpop.f32.mrb[0].mxu0
  %v809 = vadd.f32 %v165, %v808
  %v810 = vpop.f32.mrb[0].mxu0
  %811 = vmatprep.mubr.f32.mxu0 0.0
  %812 = vmatmul.mubr.f32.gmra.mrb[0].mxu0 %v286
  %v813 = vpop.f32.mrb[0].mxu0
  %v814 = vadd.f32 %v165, %v813
  %v815 = vpop.f32.mrb[0].mxu0
  %816 = vmatprep.mubr.f32.mxu0 0.0
  %817 = vmatmul.mubr.f32.gmra.mrb[0].mxu0 %v289
  %v818 = vpop.f32.mrb[0].mxu0
  %v819 = vadd.f32 %v165, %v818
  %v820 = vpop.f32.mrb[0].mxu0
  %821 = vmatprep.mubr.f32.mxu0 0.0
  %822 = vmatmul.mubr.f32.gmra.mrb[0].mxu0 %v292
  %v823 = vpop.f32.mrb[0].mxu0
  %v824 = vadd.f32 %v165, %v823
  %v825 = vpop.f32.mrb[0].mxu0
  %826 = vmatprep.mubr.f32.mxu0 0.0
  %827 = vmatmul.mubr.f32.gmra.mrb[0].mxu0 %v295
  %v828 = vpop.f32.mrb[0].mxu0
  %v829 = vadd.f32 %v165, %v828
  %v830 = vpop.f32.mrb[0].mxu0
  %831 = vmatprep.mubr.f32.mxu0 0.0
  %832 = vmatmul.mubr.f32.gmra.mrb[0].mxu0 %v298
  %v833 = vpop.f32.mrb[0].mxu0
  %v834 = vadd.f32 %v165, %v833
  %v835 = vpop.f32.mrb[0].mxu0
  %836 = vmatprep.mubr.f32.mxu0 0.0
  %837 = vmatmul.mubr.f32.gmra.mrb[0].mxu0 %v301
  %v838 = vpop.f32.mrb[0].mxu0
  %v839 = vadd.f32 %v165, %v838
  %v840 = vpop.f32.mrb[0].mxu0
  %841 = vmatprep.mubr.f32.mxu0 0.0
  %842 = vmatmul.mubr.f32.gmra.mrb[0].mxu0 %v304
  %v843 = vpop.f32.mrb[0].mxu0
  %v844 = vadd.f32 %v165, %v843
  %v845 = vpop.f32.mrb[0].mxu0
  %846 = vmatprep.mubr.f32.mxu0 0.0
  %847 = vmatmul.mubr.f32.gmra.mrb[0].mxu0 %v307
  %v848 = vpop.f32.mrb[0].mxu0
  %v849 = vadd.f32 %v165, %v848
  %v850 = vpop.f32.mrb[0].mxu0
  %851 = vmatprep.mubr.f32.mxu0 0.0
  %852 = vmatmul.mubr.f32.gmra.mrb[0].mxu0 %v310
  %v853 = vpop.f32.mrb[0].mxu0
  %v854 = vadd.f32 %v165, %v853
  %v855 = vpop.f32.mrb[0].mxu0
  %856 = vmatprep.mubr.f32.mxu0 0.0
  %857 = vmatmul.mubr.f32.gmra.mrb[0].mxu0 %v313
  %v858 = vpop.f32.mrb[0].mxu0
  %v859 = vadd.f32 %v165, %v858
  %v860 = vpop.f32.mrb[0].mxu0
  %861 = vmatprep.mubr.f32.mxu0 0.0
  %862 = vmatmul.mubr.f32.gmra.mrb[0].mxu0 %v316
  %v863 = vpop.f32.mrb[0].mxu0
  %v864 = vadd.f32 %v165, %v863
  %v865 = vpop.f32.mrb[0].mxu0
  %866 = vmatprep.mubr.f32.mxu0 0.0
  %867 = vmatmul.mubr.f32.gmra.mrb[0].mxu0 %v319
  %v868 = vpop.f32.mrb[0].mxu0
  %v869 = vadd.f32 %v165, %v868
  %v870 = vpop.f32.mrb[0].mxu0
  %871 = vmatprep.mubr.f32.mxu0 0.0
  %872 = vmatmul.mubr.f32.gmra.mrb[0].mxu0 %v322
  %v873 = vpop.f32.mrb[0].mxu0
  %v874 = vadd.f32 %v165, %v873
  %v875 = vpop.f32.mrb[0].mxu0
  %876 = vmatprep.mubr.f32.mxu0 0.0
  %877 = vmatmul.mubr.f32.gmra.mrb[0].mxu0 %v325
  %v878 = vpop.f32.mrb[0].mxu0
  %v879 = vadd.f32 %v165, %v878
  %v880 = vpop.f32.mrb[0].mxu0
  %881 = vmatprep.mubr.f32.mxu0 0.0
  %882 = vmatmul.mubr.f32.gmra.mrb[0].mxu0 %v328
  %v883 = vpop.f32.mrb[0].mxu0
  %v884 = vadd.f32 %v165, %v883
  %v885 = vpop.f32.mrb[0].mxu0
  %886 = vmatprep.mubr.f32.mxu0 0.0
  %887 = vmatmul.mubr.f32.gmra.mrb[0].mxu0 %v331
  %v888 = vpop.f32.mrb[0].mxu0
  %v889 = vadd.f32 %v165, %v888
  %v890 = vpop.f32.mrb[0].mxu0
  %891 = vmatprep.mubr.f32.mxu0 0.0
  %892 = vmatmul.mubr.f32.gmra.mrb[0].mxu0 %v334
  %v893 = vpop.f32.mrb[0].mxu0
  %v894 = vadd.f32 %v165, %v893
  %v895 = vpop.f32.mrb[0].mxu0
  %896 = vmatprep.mubr.f32.mxu0 0.0
  %897 = vmatmul.mubr.f32.gmra.mrb[0].mxu0 %v337
  %v898 = vpop.f32.mrb[0].mxu0
  %v899 = vadd.f32 %v165, %v898
  %v900 = vpop.f32.mrb[0].mxu0
  %901 = vmatprep.mubr.f32.mxu0 0.0
  %902 = vmatmul.mubr.f32.gmra.mrb[0].mxu0 %v340
  %v903 = vpop.f32.mrb[0].mxu0
  %v904 = vadd.f32 %v165, %v903
  %v905 = vpop.f32.mrb[0].mxu0
  %906 = vmatprep.mubr.f32.mxu0 0.0
  %907 = vmatmul.mubr.f32.gmra.mrb[0].mxu0 %v343
  %v908 = vpop.f32.mrb[0].mxu0
  %v909 = vadd.f32 %v165, %v908
  %v910 = vpop.f32.mrb[0].mxu0
  %911 = vmatprep.mubr.f32.mxu0 0.0
  %912 = vmatmul.mubr.f32.gmra.mrb[0].mxu0 %v346
  %v913 = vpop.f32.mrb[0].mxu0
  %v914 = vadd.f32 %v165, %v913
  %v915 = vpop.f32.mrb[0].mxu0
  %916 = vmatprep.mubr.f32.mxu0 0.0
  %917 = vmatmul.mubr.f32.gmra.mrb[0].mxu0 %v349
  %v918 = vpop.f32.mrb[0].mxu0
  %v919 = vadd.f32 %v165, %v918
  %v920 = vpop.f32.mrb[0].mxu0
  %921 = vmatprep.mubr.f32.mxu0 0.0
  %922 = vmatmul.mubr.f32.gmra.mrb[0].mxu0 %v352
  %v923 = vpop.f32.mrb[0].mxu0
  %v924 = vadd.f32 %v165, %v923
  %v925 = vpop.f32.mrb[0].mxu0
  %926 = vmatprep.mubr.f32.mxu0 0.0
  %927 = vmatmul.mubr.f32.gmra.mrb[0].mxu0 %v355
  %v928 = vpop.f32.mrb[0].mxu0
  %v929 = vadd.f32 %v165, %v928
  %v930 = vpop.f32.mrb[0].mxu0
  %931 = vmatprep.mubr.f32.mxu0 0.0
  %932 = vmatmul.mubr.f32.gmra.mrb[0].mxu0 %v358
  %v933 = vpop.f32.mrb[0].mxu0
  %v934 = vadd.f32 %v165, %v933
  %v935 = vpop.f32.mrb[0].mxu0
  %936 = vmatprep.mubr.f32.mxu0 0.0
  %937 = vmatmul.mubr.f32.gmra.mrb[0].mxu0 %v361
  %v938 = vpop.f32.mrb[0].mxu0
  %v939 = vadd.f32 %v165, %v938
  %v940 = vpop.f32.mrb[0].mxu0
  %941 = vmatprep.mubr.f32.mxu0 0.0
  %942 = vmatmul.mubr.f32.gmra.mrb[0].mxu0 %v364
  %v943 = vpop.f32.mrb[0].mxu0
  %v944 = vadd.f32 %v165, %v943
  %v945 = vpop.f32.mrb[0].mxu0
  %946 = vmatprep.mubr.f32.mxu0 0.0
  %947 = vmatmul.mubr.f32.gmra.mrb[0].mxu0 %v367
  %v948 = vpop.f32.mrb[0].mxu0
  %v949 = vadd.f32 %v165, %v948
  %v950 = vpop.f32.mrb[0].mxu0
  %951 = vmatprep.mubr.f32.mxu0 0.0
  %952 = vmatmul.mubr.f32.gmra.mrb[0].mxu0 %v370
  %v953 = vpop.f32.mrb[0].mxu0
  %v954 = vadd.f32 %v165, %v953
  %v955 = vpop.f32.mrb[0].mxu0
  %956 = vmatprep.mubr.f32.mxu0 0.0
  %957 = vmatmul.mubr.f32.gmra.mrb[0].mxu0 %v373
  %v958 = vpop.f32.mrb[0].mxu0
  %v959 = vadd.f32 %v165, %v958
  %v960 = vpop.f32.mrb[0].mxu0
  %961 = vmatprep.mubr.f32.mxu0 0.0
  %962 = vmatmul.mubr.f32.gmra.mrb[0].mxu0 %v376
  %v963 = vpop.f32.mrb[0].mxu0
  %v964 = vadd.f32 %v165, %v963
  %v965 = vpop.f32.mrb[0].mxu0
  %966 = vmatprep.mubr.f32.mxu0 0.0
  %967 = vmatmul.mubr.f32.gmra.mrb[0].mxu0 %v379
  %v968 = vpop.f32.mrb[0].mxu0
  %v969 = vadd.f32 %v165, %v968
  %v970 = vpop.f32.mrb[0].mxu0
  %971 = vmatprep.mubr.f32.mxu0 0.0
  %972 = vmatmul.mubr.f32.gmra.mrb[0].mxu0 %v382
  %v973 = vpop.f32.mrb[0].mxu0
  %v974 = vadd.f32 %v165, %v973
  %v975 = vpop.f32.mrb[0].mxu0
  %976 = vmatprep.mubr.f32.mxu0 0.0
  %977 = vmatmul.mubr.f32.gmra.mrb[0].mxu0 %v385
  %v978 = vpop.f32.mrb[0].mxu0
  %v979 = vadd.f32 %v165, %v978
  %v980 = vpop.f32.mrb[0].mxu0
  %981 = vmatprep.mubr.f32.mxu0 0.0
  %982 = vmatmul.mubr.f32.gmra.mrb[0].mxu0 %v388
  %v983 = vpop.f32.mrb[0].mxu0
  %v984 = vadd.f32 %v165, %v983
  %v985 = vpop.f32.mrb[0].mxu0
  %986 = vmatprep.mubr.f32.mxu0 0.0
  %987 = vmatmul.mubr.f32.gmra.mrb[0].mxu0 %v391
  %v988 = vpop.f32.mrb[0].mxu0
  %v989 = vadd.f32 %v165, %v988
  %v990 = vpop.f32.mrb[0].mxu0
  %991 = vmatprep.mubr.f32.mxu0 0.0
  %992 = vmatmul.mubr.f32.gmra.mrb[0].mxu0 %v394
  %v993 = vpop.f32.mrb[0].mxu0
  %v994 = vadd.f32 %v165, %v993
  %v995 = vpop.f32.mrb[0].mxu0
  %996 = vmatprep.mubr.f32.mxu0 0.0
  %997 = vmatmul.mubr.f32.gmra.mrb[0].mxu0 %v397
  %v998 = vpop.f32.mrb[0].mxu0
  %v999 = vadd.f32 %v165, %v998
  %v1000 = vpop.f32.mrb[0].mxu0
  %1001 = vmatprep.mubr.f32.mxu0 0.0
  %1002 = vmatmul.mubr.f32.gmra.mrb[0].mxu0 %v400
  %v1003 = vpop.f32.mrb[0].mxu0
  %v1004 = vadd.f32 %v165, %v1003
  %v1005 = vpop.f32.mrb[0].mxu0
  %1006 = vmatprep.mubr.f32.mxu0 0.0
  %1007 = vmatmul.mubr.f32.gmra.mrb[0].mxu0 %v403
  %v1008 = vpop.f32.mrb[0].mxu0
  %v1009 = vadd.f32 %v165, %v1008
  %v1010 = vpop.f32.mrb[0].mxu0
  %1011 = vmatprep.mubr.f32.mxu0 0.0
  %1012 = vmatmul.mubr.f32.gmra.mrb[0].mxu0 %v406
  %v1013 = vpop.f32.mrb[0].mxu0
  %v1014 = vadd.f32 %v165, %v1013
  %v1015 = vpop.f32.mrb[0].mxu0
  %1016 = vmatprep.mubr.f32.mxu0 0.0
  %1017 = vmatmul.mubr.f32.gmra.mrb[0].mxu0 %v409
  %v1018 = vpop.f32.mrb[0].mxu0
  %v1019 = vadd.f32 %v165, %v1018
  %v1020 = vpop.f32.mrb[0].mxu0
  %1021 = vmatprep.mubr.f32.mxu0 0.0
  %1022 = vmatmul.mubr.f32.gmra.mrb[0].mxu0 %v412
  %v1023 = vpop.f32.mrb[0].mxu0
  %v1024 = vadd.f32 %v165, %v1023
  %v1025 = vpop.f32.mrb[0].mxu0
  %1026 = vmatprep.mubr.f32.mxu0 0.0
  %1027 = vmatmul.mubr.f32.gmra.mrb[0].mxu0 %v415
  %v1028 = vpop.f32.mrb[0].mxu0
  %v1029 = vadd.f32 %v165, %v1028
  %v1030 = vpop.f32.mrb[0].mxu0
  %1031 = vmatprep.mubr.f32.mxu0 0.0
  %1032 = vmatmul.mubr.f32.gmra.mrb[0].mxu0 %v418
  %v1033 = vpop.f32.mrb[0].mxu0
  %v1034 = vadd.f32 %v165, %v1033
  %v1035 = vpop.f32.mrb[0].mxu0
  %1036 = vmatprep.mubr.f32.mxu0 0.0
  %1037 = vmatmul.mubr.f32.gmra.mrb[0].mxu0 %v421
  %v1038 = vpop.f32.mrb[0].mxu0
  %v1039 = vadd.f32 %v165, %v1038
  %v1040 = vpop.f32.mrb[0].mxu0
  %1041 = vmatprep.mubr.f32.mxu0 0.0
  %1042 = vmatmul.mubr.f32.gmra.mrb[0].mxu0 %v424
  %v1043 = vpop.f32.mrb[0].mxu0
  %v1044 = vadd.f32 %v165, %v1043
  %v1045 = vpop.f32.mrb[0].mxu0
  %1046 = vmatprep.mubr.f32.mxu0 0.0
  %1047 = vmatmul.mubr.f32.gmra.mrb[0].mxu0 %v427
  %v1048 = vpop.f32.mrb[0].mxu0
  %v1049 = vadd.f32 %v165, %v1048
  %v1050 = vpop.f32.mrb[0].mxu0
  %1051 = vmatprep.mubr.f32.mxu0 0.0
  %1052 = vmatmul.mubr.f32.gmra.mrb[0].mxu0 %v430
  %v1053 = vpop.f32.mrb[0].mxu0
  %v1054 = vadd.f32 %v165, %v1053
  %v1055 = vpop.f32.mrb[0].mxu0
  %1056 = vmatprep.mubr.f32.mxu0 0.0
  %1057 = vmatmul.mubr.f32.gmra.mrb[0].mxu0 %v433
  %v1058 = vpop.f32.mrb[0].mxu0
  %v1059 = vadd.f32 %v165, %v1058
  %v1060 = vpop.f32.mrb[0].mxu0
  %1061 = vmatprep.mubr.f32.mxu0 0.0
  %1062 = vmatmul.mubr.f32.gmra.mrb[0].mxu0 %v436
  %v1063 = vpop.f32.mrb[0].mxu0
  %v1064 = vadd.f32 %v165, %v1063
  %v1065 = vpop.f32.mrb[0].mxu0
  %1066 = vmatprep.mubr.f32.mxu0 0.0
  %1067 = vmatmul.mubr.f32.gmra.mrb[0].mxu0 %v439
  %v1068 = vpop.f32.mrb[0].mxu0
  %v1069 = vadd.f32 %v165, %v1068
  %v1070 = vpop.f32.mrb[0].mxu0
  %1071 = vmatprep.mubr.f32.mxu0 0.0
  %1072 = vmatmul.mubr.f32.gmra.mrb[0].mxu0 %v442
  %v1073 = vpop.f32.mrb[0].mxu0
  %v1074 = vadd.f32 %v165, %v1073
  %v1075 = vpop.f32.mrb[0].mxu0
  %1076 = vmatprep.mubr.f32.mxu0 0.0
  %1077 = vmatmul.mubr.f32.gmra.mrb[0].mxu0 %v445
  %v1078 = vpop.f32.mrb[0].mxu0
  %v1079 = vadd.f32 %v165, %v1078
  %v1080 = vpop.f32.mrb[0].mxu0
  %1081 = vmatprep.mubr.f32.mxu0 0.0
  %1082 = vmatmul.mubr.f32.gmra.mrb[0].mxu0 %v448
  %v1083 = vpop.f32.mrb[0].mxu0
  %v1084 = vadd.f32 %v165, %v1083
  %v1085 = vpop.f32.mrb[0].mxu0
  %1086 = vmatprep.mubr.f32.mxu0 0.0
  %1087 = vmatmul.mubr.f32.gmra.mrb[0].mxu0 %v451
  %v1088 = vpop.f32.mrb[0].mxu0
  %v1089 = vadd.f32 %v165, %v1088
  %v1090 = vpop.f32.mrb[0].mxu0
  %1091 = vmatprep.mubr.f32.mxu0 0.0
  %1092 = vmatmul.mubr.f32.gmra.mrb[0].mxu0 %v454
  %v1093 = vpop.f32.mrb[0].mxu0
  %v1094 = vadd.f32 %v165, %v1093
  %v1095 = vpop.f32.mrb[0].mxu0
  %1096 = vmatprep.mubr.f32.mxu0 0.0
  %1097 = vmatmul.mubr.f32.gmra.mrb[0].mxu0 %v457
  %v1098 = vpop.f32.mrb[0].mxu0
  %v1099 = vadd.f32 %v165, %v1098
  %v1100 = vpop.f32.mrb[0].mxu0
  %1101 = vmatprep.mubr.f32.mxu0 0.0
  %1102 = vmatmul.mubr.f32.gmra.mrb[0].mxu0 %v460
  %v1103 = vpop.f32.mrb[0].mxu0
  %v1104 = vadd.f32 %v165, %v1103
  %v1105 = vpop.f32.mrb[0].mxu0
  %1106 = vmatprep.mubr.f32.mxu0 0.0
  %1107 = vmatmul.mubr.f32.gmra.mrb[0].mxu0 %v463
  %v1108 = vpop.f32.mrb[0].mxu0
  %v1109 = vadd.f32 %v165, %v1108
  %v1110 = vpop.f32.mrb[0].mxu0
  %1111 = vmatprep.mubr.f32.mxu0 0.0
  %1112 = vmatmul.mubr.f32.gmra.mrb[0].mxu0 %v466
  %v1113 = vpop.f32.mrb[0].mxu0
  %v1114 = vadd.f32 %v165, %v1113
  %v1115 = vpop.f32.mrb[0].mxu0
  %1116 = vmatprep.mubr.f32.mxu0 0.0
  %1117 = vmatmul.mubr.f32.gmra.mrb[0].mxu0 %v469
  %v1118 = vpop.f32.mrb[0].mxu0
  %v1119 = vadd.f32 %v165, %v1118
  %v1120 = vpop.f32.mrb[0].mxu0
  %1121 = vmatprep.mubr.f32.mxu0 0.0
  %1122 = vmatmul.mubr.f32.gmra.mrb[0].mxu0 %v472
  %v1123 = vpop.f32.mrb[0].mxu0
  %v1124 = vadd.f32 %v165, %v1123
  %v1125 = vpop.f32.mrb[0].mxu0
  %1126 = vmatprep.mubr.f32.mxu0 0.0
  %1127 = vmatmul.mubr.f32.gmra.mrb[0].mxu0 %v475
  %v1128 = vpop.f32.mrb[0].mxu0
  %v1129 = vadd.f32 %v165, %v1128
  %v1130 = vpop.f32.mrb[0].mxu0
  %1131 = vmatprep.mubr.f32.mxu0 0.0
  %1132 = vmatmul.mubr.f32.gmra.mrb[0].mxu0 %v478
  %v1133 = vpop.f32.mrb[0].mxu0
  %v1134 = vadd.f32 %v165, %v1133
  %v1135 = vpop.f32.mrb[0].mxu0
  %1136 = vmatprep.mubr.f32.mxu0 0.0
  %1137 = vmatmul.mubr.f32.gmra.mrb[0].mxu0 %v481
  %v1138 = vpop.f32.mrb[0].mxu0
  %v1139 = vadd.f32 %v165, %v1138
  %v1140 = vpop.f32.mrb[0].mxu0
  %1141 = vmatprep.mubr.f32.mxu0 0.0
  %1142 = vmatmul.mubr.f32.gmra.mrb[0].mxu0 %v484
  %v1143 = vpop.f32.mrb[0].mxu0
  %v1144 = vadd.f32 %v165, %v1143
  %v1145 = vpop.f32.mrb[0].mxu0
  %1146 = vmatprep.mubr.f32.mxu0 0.0
  %1147 = vmatmul.mubr.f32.gmra.mrb[0].mxu0 %v487
  %v1148 = vpop.f32.mrb[0].mxu0
  %v1149 = vadd.f32 %v165, %v1148
  %v1150 = vpop.f32.mrb[0].mxu0
  %1151 = vmatprep.mubr.f32.mxu0 0.0
  %1152 = vmatmul.mubr.f32.gmra.mrb[0].mxu0 %v490
  %v1153 = vpop.f32.mrb[0].mxu0
  %v1154 = vadd.f32 %v165, %v1153
  %v1155 = vpop.f32.mrb[0].mxu0
  %1156 = vmatprep.mubr.f32.mxu0 0.0
  %1157 = vmatmul.mubr.f32.gmra.mrb[0].mxu0 %v493
  %v1158 = vpop.f32.mrb[0].mxu0
  %v1159 = vadd.f32 %v165, %v1158
  %v1160 = vpop.f32.mrb[0].mxu0
  %1161 = vmatprep.mubr.f32.mxu0 0.0
  %1162 = vmatmul.mubr.f32.gmra.mrb[0].mxu0 %v496
  %v1163 = vpop.f32.mrb[0].mxu0
  %v1164 = vadd.f32 %v165, %v1163
  %v1165 = vpop.f32.mrb[0].mxu0
  %1166 = vmatprep.mubr.f32.mxu0 0.0
  %1167 = vmatmul.mubr.f32.gmra.mrb[0].mxu0 %v499
  %v1168 = vpop.f32.mrb[0].mxu0
  %v1169 = vadd.f32 %v165, %v1168
  %v1170 = vpop.f32.mrb[0].mxu0
  %1171 = vmatprep.mubr.f32.mxu0 0.0
  %1172 = vmatmul.mubr.f32.gmra.mrb[0].mxu0 %v502
  %v1173 = vpop.f32.mrb[0].mxu0
  %v1174 = vadd.f32 %v165, %v1173
  %v1175 = vpop.f32.mrb[0].mxu0
  %1176 = vmatprep.mubr.f32.mxu0 0.0
  %1177 = vmatmul.mubr.f32.gmra.mrb[0].mxu0 %v505
  %v1178 = vpop.f32.mrb[0].mxu0
  %v1179 = vadd.f32 %v165, %v1178
  %v1180 = vpop.f32.mrb[0].mxu0
  %1181 = vmatprep.mubr.f32.mxu0 0.0
  %1182 = vmatmul.mubr.f32.gmra.mrb[0].mxu0 %v508
  %v1183 = vpop.f32.mrb[0].mxu0
  %v1184 = vadd.f32 %v165, %v1183
  %v1185 = vpop.f32.mrb[0].mxu0
  %1186 = vmatprep.mubr.f32.mxu0 0.0
  %1187 = vmatmul.mubr.f32.gmra.mrb[0].mxu0 %v511
  %v1188 = vpop.f32.mrb[0].mxu0
  %v1189 = vadd.f32 %v165, %v1188
  %v1190 = vpop.f32.mrb[0].mxu0
  %1191 = vmatprep.mubr.f32.mxu0 0.0
  %1192 = vmatmul.mubr.f32.gmra.mrb[0].mxu0 %v514
  %v1193 = vpop.f32.mrb[0].mxu0
  %v1194 = vadd.f32 %v165, %v1193
  %v1195 = vpop.f32.mrb[0].mxu0
  %1196 = vmatprep.mubr.f32.mxu0 0.0
  %1197 = vmatmul.mubr.f32.gmra.mrb[0].mxu0 %v517
  %v1198 = vpop.f32.mrb[0].mxu0
  %v1199 = vadd.f32 %v165, %v1198
  %v1200 = vpop.f32.mrb[0].mxu0
  %1201 = vmatprep.mubr.f32.mxu0 0.0
  %1202 = vmatmul.mubr.f32.gmra.mrb[0].mxu0 %v520
  %v1203 = vpop.f32.mrb[0].mxu0
  %v1204 = vadd.f32 %v165, %v1203
  %v1205 = vpop.f32.mrb[0].mxu0
  %1206 = vmatprep.mubr.f32.mxu0 0.0
  %1207 = vmatmul.mubr.f32.gmra.mrb[0].mxu0 %v523
  %v1208 = vpop.f32.mrb[0].mxu0
  %v1209 = vadd.f32 %v165, %v1208
  %v1210 = vpop.f32.mrb[0].mxu0
  %1211 = vmatprep.mubr.f32.mxu0 0.0
  %1212 = vmatmul.mubr.f32.gmra.mrb[0].mxu0 %v526
  %v1213 = vpop.f32.mrb[0].mxu0
  %v1214 = vadd.f32 %v165, %v1213
  %v1215 = vpop.f32.mrb[0].mxu0
  %1216 = vmatprep.mubr.f32.mxu0 0.0
  %1217 = vmatmul.mubr.f32.gmra.mrb[0].mxu0 %v529
  %v1218 = vpop.f32.mrb[0].mxu0
  %v1219 = vadd.f32 %v165, %v1218
  %v1220 = vpop.f32.mrb[0].mxu0
  %1221 = vmatprep.mubr.f32.mxu0 0.0
  %1222 = vmatmul.mubr.f32.gmra.mrb[0].mxu0 %v532
  %v1223 = vpop.f32.mrb[0].mxu0
  %v1224 = vadd.f32 %v165, %v1223
  %v1225 = vpop.f32.mrb[0].mxu0
  %1226 = vmatprep.mubr.f32.mxu0 0.0
  %1227 = vmatmul.mubr.f32.gmra.mrb[0].mxu0 %v535
  %v1228 = vpop.f32.mrb[0].mxu0
  %v1229 = vadd.f32 %v165, %v1228
  %v1230 = vpop.f32.mrb[0].mxu0
  %1231 = vmatprep.mubr.f32.mxu0 0.0
  %1232 = vmatmul.mubr.f32.gmra.mrb[0].mxu0 %v538
  %v1233 = vpop.f32.mrb[0].mxu0
  %v1234 = vadd.f32 %v165, %v1233
  %v1235 = vpop.f32.mrb[0].mxu0
  %1236 = vmatprep.mubr.f32.mxu0 0.0
  %1237 = vmatmul.mubr.f32.gmra.mrb[0].mxu0 %v541
  %v1238 = vpop.f32.mrb[0].mxu0
  %v1239 = vadd.f32 %v165, %v1238
  %v1240 = vpop.f32.mrb[0].mxu0
  %1241 = vmatprep.mubr.f32.mxu0 0.0
  %1242 = vmatmul.mubr.f32.gmra.mrb[0].mxu0 %v544
  %v1243 = vpop.f32.mrb[0].mxu0
  %v1244 = vadd.f32 %v165, %v1243
  %v1245 = vpop.f32.mrb[0].mxu0
  %1246 = vmatprep.mubr.f32.mxu0 0.0
  %1247 = vmatmul.mubr.f32.gmra.mrb[0].mxu0 %v547
  %v1248 = vpop.f32.mrb[0].mxu0
  %v1249 = vadd.f32 %v165, %v1248
  %v1250 = vpop.f32.mrb[0].mxu0
  %1251 = vmatprep.mubr.f32.mxu0 0.0
  %1252 = vmatmul.mubr.f32.gmra.mrb[0].mxu0 %v550
  %v1253 = vpop.f32.mrb[0].mxu0
  %v1254 = vadd.f32 %v165, %v1253
  %v1255 = vpop.f32.mrb[0].mxu0
  %1256 = vdwg.mxu0
  %v1257 = vmax.f32 %v619, 0.0
  %v1258 = vmax.f32 %v624, 0.0
  %v1259 = vmax.f32 %v629, 0.0
  %v1260 = vmax.f32 %v634, 0.0
  %v1261 = vmax.f32 %v639, 0.0
  %v1262 = vmax.f32 %v644, 0.0
  %v1263 = vmax.f32 %v649, 0.0
  %v1264 = vmax.f32 %v654, 0.0
  %v1265 = vmax.f32 %v659, 0.0
  %v1266 = vmax.f32 %v664, 0.0
  %v1267 = vmax.f32 %v669, 0.0
  %v1268 = vmax.f32 %v674, 0.0
  %v1269 = vmax.f32 %v679, 0.0
  %v1270 = vmax.f32 %v684, 0.0
  %v1271 = vmax.f32 %v689, 0.0
  %v1272 = vmax.f32 %v694, 0.0
  %v1273 = vmax.f32 %v699, 0.0
  %v1274 = vmax.f32 %v704, 0.0
  %v1275 = vmax.f32 %v709, 0.0
  %v1276 = vmax.f32 %v714, 0.0
  %v1277 = vmax.f32 %v719, 0.0
  %v1278 = vmax.f32 %v724, 0.0
  %v1279 = vmax.f32 %v729, 0.0
  %v1280 = vmax.f32 %v734, 0.0
  %v1281 = vmax.f32 %v739, 0.0
  %v1282 = vmax.f32 %v744, 0.0
  %v1283 = vmax.f32 %v749, 0.0
  %v1284 = vmax.f32 %v754, 0.0
  %v1285 = vmax.f32 %v759, 0.0
  %v1286 = vmax.f32 %v764, 0.0
  %v1287 = vmax.f32 %v769, 0.0
  %v1288 = vmax.f32 %v774, 0.0
  %v1289 = vmax.f32 %v779, 0.0
  %v1290 = vmax.f32 %v784, 0.0
  %v1291 = vmax.f32 %v789, 0.0
  %v1292 = vmax.f32 %v794, 0.0
  %v1293 = vmax.f32 %v799, 0.0
  %v1294 = vmax.f32 %v804, 0.0
  %v1295 = vmax.f32 %v809, 0.0
  %v1296 = vmax.f32 %v814, 0.0
  %v1297 = vmax.f32 %v819, 0.0
  %v1298 = vmax.f32 %v824, 0.0
  %v1299 = vmax.f32 %v829, 0.0
  %v1300 = vmax.f32 %v834, 0.0
  %v1301 = vmax.f32 %v839, 0.0
  %v1302 = vmax.f32 %v844, 0.0
  %v1303 = vmax.f32 %v849, 0.0
  %v1304 = vmax.f32 %v854, 0.0
  %v1305 = vmax.f32 %v859, 0.0
  %v1306 = vmax.f32 %v864, 0.0
  %v1307 = vmax.f32 %v869, 0.0
  %v1308 = vmax.f32 %v874, 0.0
  %v1309 = vmax.f32 %v879, 0.0
  %v1310 = vmax.f32 %v884, 0.0
  %v1311 = vmax.f32 %v889, 0.0
  %v1312 = vmax.f32 %v894, 0.0
  %v1313 = vmax.f32 %v899, 0.0
  %v1314 = vmax.f32 %v904, 0.0
  %v1315 = vmax.f32 %v909, 0.0
  %v1316 = vmax.f32 %v914, 0.0
  %v1317 = vmax.f32 %v919, 0.0
  %v1318 = vmax.f32 %v924, 0.0
  %v1319 = vmax.f32 %v929, 0.0
  %v1320 = vmax.f32 %v934, 0.0
  %v1321 = vmax.f32 %v939, 0.0
  %v1322 = vmax.f32 %v944, 0.0
  %v1323 = vmax.f32 %v949, 0.0
  %v1324 = vmax.f32 %v954, 0.0
  %v1325 = vmax.f32 %v959, 0.0
  %v1326 = vmax.f32 %v964, 0.0
  %v1327 = vmax.f32 %v969, 0.0
  %v1328 = vmax.f32 %v974, 0.0
  %v1329 = vmax.f32 %v979, 0.0
  %v1330 = vmax.f32 %v984, 0.0
  %v1331 = vmax.f32 %v989, 0.0
  %v1332 = vmax.f32 %v994, 0.0
  %v1333 = vmax.f32 %v999, 0.0
  %v1334 = vmax.f32 %v1004, 0.0
  %v1335 = vmax.f32 %v1009, 0.0
  %v1336 = vmax.f32 %v1014, 0.0
  %v1337 = vmax.f32 %v1019, 0.0
  %v1338 = vmax.f32 %v1024, 0.0
  %v1339 = vmax.f32 %v1029, 0.0
  %v1340 = vmax.f32 %v1034, 0.0
  %v1341 = vmax.f32 %v1039, 0.0
  %v1342 = vmax.f32 %v1044, 0.0
  %v1343 = vmax.f32 %v1049, 0.0
  %v1344 = vmax.f32 %v1054, 0.0
  %v1345 = vmax.f32 %v1059, 0.0
  %v1346 = vmax.f32 %v1064, 0.0
  %v1347 = vmax.f32 %v1069, 0.0
  %v1348 = vmax.f32 %v1074, 0.0
  %v1349 = vmax.f32 %v1079, 0.0
  %v1350 = vmax.f32 %v1084, 0.0
  %v1351 = vmax.f32 %v1089, 0.0
  %v1352 = vmax.f32 %v1094, 0.0
  %v1353 = vmax.f32 %v1099, 0.0
  %v1354 = vmax.f32 %v1104, 0.0
  %v1355 = vmax.f32 %v1109, 0.0
  %v1356 = vmax.f32 %v1114, 0.0
  %v1357 = vmax.f32 %v1119, 0.0
  %v1358 = vmax.f32 %v1124, 0.0
  %v1359 = vmax.f32 %v1129, 0.0
  %v1360 = vmax.f32 %v1134, 0.0
  %v1361 = vmax.f32 %v1139, 0.0
  %v1362 = vmax.f32 %v1144, 0.0
  %v1363 = vmax.f32 %v1149, 0.0
  %v1364 = vmax.f32 %v1154, 0.0
  %v1365 = vmax.f32 %v1159, 0.0
  %v1366 = vmax.f32 %v1164, 0.0
  %v1367 = vmax.f32 %v1169, 0.0
  %v1368 = vmax.f32 %v1174, 0.0
  %v1369 = vmax.f32 %v1179, 0.0
  %v1370 = vmax.f32 %v1184, 0.0
  %v1371 = vmax.f32 %v1189, 0.0
  %v1372 = vmax.f32 %v1194, 0.0
  %v1373 = vmax.f32 %v1199, 0.0
  %v1374 = vmax.f32 %v1204, 0.0
  %v1375 = vmax.f32 %v1209, 0.0
  %v1376 = vmax.f32 %v1214, 0.0
  %v1377 = vmax.f32 %v1219, 0.0
  %v1378 = vmax.f32 %v1224, 0.0
  %v1379 = vmax.f32 %v1229, 0.0
  %v1380 = vmax.f32 %v1234, 0.0
  %v1381 = vmax.f32 %v1239, 0.0
  %v1382 = vmax.f32 %v1244, 0.0
  %v1383 = vmax.f32 %v1249, 0.0
  %v1384 = vmax.f32 %v1254, 0.0
  %v1385 = vld [vmem:[%s3] sm:$0xff]
  %v1386 = vld [vmem:[%s3 + $0x8] sm:$0xff]
  %v1387 = vld [vmem:[%s3 + $0x10] sm:$0xff]
  %v1388 = vld [vmem:[%s3 + $0x18] sm:$0xff]
  %v1389 = vld [vmem:[%s3 + $0x20] sm:$0xff]
  %v1390 = vld [vmem:[%s3 + $0x28] sm:$0xff]
  %v1391 = vld [vmem:[%s3 + $0x30] sm:$0xff]
  %v1392 = vld [vmem:[%s3 + $0x38] sm:$0xff]
  %v1393 = vld [vmem:[%s4] sm:$0x1]
  %v1395 = vlaneseq
  %v1396 = vshrl.u32 %v1395, 7
  %v1397 = vsub.s32 0, %v1396
  %v1398 = vrot.slane %v1393, %v1397
  %vm1400 = vcmask 523264
  %v1402 = vsel %vm1400, %v1257, 0
  %v1405 = vsel %vm1400, %v1258, 0
  %v1408 = vsel %vm1400, %v1259, 0
  %v1411 = vsel %vm1400, %v1260, 0
  %v1414 = vsel %vm1400, %v1261, 0
  %v1417 = vsel %vm1400, %v1262, 0
  %v1420 = vsel %vm1400, %v1263, 0
  %v1423 = vsel %vm1400, %v1264, 0
  %v1426 = vsel %vm1400, %v1265, 0
  %v1429 = vsel %vm1400, %v1266, 0
  %v1432 = vsel %vm1400, %v1267, 0
  %v1435 = vsel %vm1400, %v1268, 0
  %v1438 = vsel %vm1400, %v1269, 0
  %v1441 = vsel %vm1400, %v1270, 0
  %v1444 = vsel %vm1400, %v1271, 0
  %v1447 = vsel %vm1400, %v1272, 0
  %v1450 = vsel %vm1400, %v1273, 0
  %v1453 = vsel %vm1400, %v1274, 0
  %v1456 = vsel %vm1400, %v1275, 0
  %v1459 = vsel %vm1400, %v1276, 0
  %v1462 = vsel %vm1400, %v1277, 0
  %v1465 = vsel %vm1400, %v1278, 0
  %v1468 = vsel %vm1400, %v1279, 0
  %v1471 = vsel %vm1400, %v1280, 0
  %v1474 = vsel %vm1400, %v1281, 0
  %v1477 = vsel %vm1400, %v1282, 0
  %v1480 = vsel %vm1400, %v1283, 0
  %v1483 = vsel %vm1400, %v1284, 0
  %v1486 = vsel %vm1400, %v1285, 0
  %v1489 = vsel %vm1400, %v1286, 0
  %v1492 = vsel %vm1400, %v1287, 0
  %v1495 = vsel %vm1400, %v1288, 0
  %v1498 = vsel %vm1400, %v1289, 0
  %v1501 = vsel %vm1400, %v1290, 0
  %v1504 = vsel %vm1400, %v1291, 0
  %v1507 = vsel %vm1400, %v1292, 0
  %v1510 = vsel %vm1400, %v1293, 0
  %v1513 = vsel %vm1400, %v1294, 0
  %v1516 = vsel %vm1400, %v1295, 0
  %v1519 = vsel %vm1400, %v1296, 0
  %v1522 = vsel %vm1400, %v1297, 0
  %v1525 = vsel %vm1400, %v1298, 0
  %v1528 = vsel %vm1400, %v1299, 0
  %v1531 = vsel %vm1400, %v1300, 0
  %v1534 = vsel %vm1400, %v1301, 0
  %v1537 = vsel %vm1400, %v1302, 0
  %v1540 = vsel %vm1400, %v1303, 0
  %v1543 = vsel %vm1400, %v1304, 0
  %v1546 = vsel %vm1400, %v1305, 0
  %v1549 = vsel %vm1400, %v1306, 0
  %v1552 = vsel %vm1400, %v1307, 0
  %v1555 = vsel %vm1400, %v1308, 0
  %v1558 = vsel %vm1400, %v1309, 0
  %v1561 = vsel %vm1400, %v1310, 0
  %v1564 = vsel %vm1400, %v1311, 0
  %v1567 = vsel %vm1400, %v1312, 0
  %v1570 = vsel %vm1400, %v1313, 0
  %v1573 = vsel %vm1400, %v1314, 0
  %v1576 = vsel %vm1400, %v1315, 0
  %v1579 = vsel %vm1400, %v1316, 0
  %v1582 = vsel %vm1400, %v1317, 0
  %v1585 = vsel %vm1400, %v1318, 0
  %v1588 = vsel %vm1400, %v1319, 0
  %v1591 = vsel %vm1400, %v1320, 0
  %v1594 = vsel %vm1400, %v1321, 0
  %v1597 = vsel %vm1400, %v1322, 0
  %v1600 = vsel %vm1400, %v1323, 0
  %v1603 = vsel %vm1400, %v1324, 0
  %v1606 = vsel %vm1400, %v1325, 0
  %v1609 = vsel %vm1400, %v1326, 0
  %v1612 = vsel %vm1400, %v1327, 0
  %v1615 = vsel %vm1400, %v1328, 0
  %v1618 = vsel %vm1400, %v1329, 0
  %v1621 = vsel %vm1400, %v1330, 0
  %v1624 = vsel %vm1400, %v1331, 0
  %v1627 = vsel %vm1400, %v1332, 0
  %v1630 = vsel %vm1400, %v1333, 0
  %v1633 = vsel %vm1400, %v1334, 0
  %v1636 = vsel %vm1400, %v1335, 0
  %v1639 = vsel %vm1400, %v1336, 0
  %v1642 = vsel %vm1400, %v1337, 0
  %v1645 = vsel %vm1400, %v1338, 0
  %v1648 = vsel %vm1400, %v1339, 0
  %v1651 = vsel %vm1400, %v1340, 0
  %v1654 = vsel %vm1400, %v1341, 0
  %v1657 = vsel %vm1400, %v1342, 0
  %v1660 = vsel %vm1400, %v1343, 0
  %v1663 = vsel %vm1400, %v1344, 0
  %v1666 = vsel %vm1400, %v1345, 0
  %v1669 = vsel %vm1400, %v1346, 0
  %v1672 = vsel %vm1400, %v1347, 0
  %v1675 = vsel %vm1400, %v1348, 0
  %v1678 = vsel %vm1400, %v1349, 0
  %v1681 = vsel %vm1400, %v1350, 0
  %v1684 = vsel %vm1400, %v1351, 0
  %v1687 = vsel %vm1400, %v1352, 0
  %v1690 = vsel %vm1400, %v1353, 0
  %v1693 = vsel %vm1400, %v1354, 0
  %v1696 = vsel %vm1400, %v1355, 0
  %v1699 = vsel %vm1400, %v1356, 0
  %v1702 = vsel %vm1400, %v1357, 0
  %v1705 = vsel %vm1400, %v1358, 0
  %v1708 = vsel %vm1400, %v1359, 0
  %v1711 = vsel %vm1400, %v1360, 0
  %v1714 = vsel %vm1400, %v1361, 0
  %v1717 = vsel %vm1400, %v1362, 0
  %v1720 = vsel %vm1400, %v1363, 0
  %v1723 = vsel %vm1400, %v1364, 0
  %v1726 = vsel %vm1400, %v1365, 0
  %v1729 = vsel %vm1400, %v1366, 0
  %v1732 = vsel %vm1400, %v1367, 0
  %v1735 = vsel %vm1400, %v1368, 0
  %v1738 = vsel %vm1400, %v1369, 0
  %v1741 = vsel %vm1400, %v1370, 0
  %v1744 = vsel %vm1400, %v1371, 0
  %v1747 = vsel %vm1400, %v1372, 0
  %v1750 = vsel %vm1400, %v1373, 0
  %v1753 = vsel %vm1400, %v1374, 0
  %v1756 = vsel %vm1400, %v1375, 0
  %v1759 = vsel %vm1400, %v1376, 0
  %v1762 = vsel %vm1400, %v1377, 0
  %v1765 = vsel %vm1400, %v1378, 0
  %v1768 = vsel %vm1400, %v1379, 0
  %v1771 = vsel %vm1400, %v1380, 0
  %v1774 = vsel %vm1400, %v1381, 0
  %v1777 = vsel %vm1400, %v1382, 0
  %v1780 = vsel %vm1400, %v1383, 0
  %v1783 = vsel %vm1400, %v1384, 0
  %1785 = vmatprep.subr.mxu0 0.0
  %1786 = vmatpush1.msra.mxu0 %v1385
  %1787 = vmatprep.subr.mxu0 0.0
  %1788 = vmatpush1.msra.mxu0 %v1386
  %1789 = vmatprep.subr.mxu0 0.0
  %1790 = vmatpush1.msra.mxu0 %v1387
  %1791 = vmatprep.subr.mxu0 0.0
  %1792 = vmatpush1.msra.mxu0 %v1388
  %1793 = vmatprep.subr.mxu0 0.0
  %1794 = vmatpush1.msra.mxu0 %v1389
  %1795 = vmatprep.subr.mxu0 0.0
  %1796 = vmatpush1.msra.mxu0 %v1390
  %1797 = vmatprep.subr.mxu0 0.0
  %1798 = vmatpush1.msra.mxu0 %v1391
  %1799 = vmatprep.subr.mxu0 0.0
  %1800 = vmatpush1.msra.mxu0 %v1392
  %1801 = vmatprep.subr.mxu0 0.0
  %1802 = vmatpush1.msra.mxu0 0.0
  %1803 = vmatprep.subr.mxu0 0.0
  %1804 = vmatpush1.msra.mxu0 0.0
  %1805 = vmatprep.subr.mxu0 0.0
  %1806 = vmatpush1.msra.mxu0 0.0
  %1807 = vmatprep.subr.mxu0 0.0
  %1808 = vmatpush1.msra.mxu0 0.0
  %1809 = vmatprep.subr.mxu0 0.0
  %1810 = vmatpush1.msra.mxu0 0.0
  %1811 = vmatprep.subr.mxu0 0.0
  %1812 = vmatpush1.msra.mxu0 0.0
  %1813 = vmatprep.subr.mxu0 0.0
  %1814 = vmatpush1.msra.mxu0 0.0
  %1815 = vmatprep.subr.mxu0 0.0
  %1816 = vmatpush1.msra.mxu0 0.0
  %1817 = vmatprep.subr.mxu0 0.0
  %1818 = vmatpush1.msra.mxu0 0.0
  %1819 = vmatprep.subr.mxu0 0.0
  %1820 = vmatpush1.msra.mxu0 0.0
  %1821 = vmatprep.subr.mxu0 0.0
  %1822 = vmatpush1.msra.mxu0 0.0
  %1823 = vmatprep.subr.mxu0 0.0
  %1824 = vmatpush1.msra.mxu0 0.0
  %1825 = vmatprep.subr.mxu0 0.0
  %1826 = vmatpush1.msra.mxu0 0.0
  %1827 = vmatprep.subr.mxu0 0.0
  %1828 = vmatpush1.msra.mxu0 0.0
  %1829 = vmatprep.subr.mxu0 0.0
  %1830 = vmatpush1.msra.mxu0 0.0
  %1831 = vmatprep.subr.mxu0 0.0
  %1832 = vmatpush1.msra.mxu0 0.0
  %1833 = vmatprep.subr.mxu0 0.0
  %1834 = vmatpush1.msra.mxu0 0.0
  %1835 = vmatprep.subr.mxu0 0.0
  %1836 = vmatpush1.msra.mxu0 0.0
  %1837 = vmatprep.subr.mxu0 0.0
  %1838 = vmatpush1.msra.mxu0 0.0
  %1839 = vmatprep.subr.mxu0 0.0
  %1840 = vmatpush1.msra.mxu0 0.0
  %1841 = vmatprep.subr.mxu0 0.0
  %1842 = vmatpush1.msra.mxu0 0.0
  %1843 = vmatprep.subr.mxu0 0.0
  %1844 = vmatpush1.msra.mxu0 0.0
  %1845 = vmatprep.subr.mxu0 0.0
  %1846 = vmatpush1.msra.mxu0 0.0
  %1847 = vmatprep.subr.mxu0 0.0
  %1848 = vmatpush1.msra.mxu0 0.0
  %1849 = vmatprep.mubr.f32.mxu0 0.0
  %1850 = vmatmul.mubr.f32.gmra.mrb[0].mxu0 %v1402
  %v1851 = vpop.f32.mrb[0].mxu0
  %v1852 = vadd.f32 %v1398, %v1851
  %v1853 = vpop.f32.mrb[0].mxu0
  %1854 = vmatprep.mubr.f32.mxu0 0.0
  %1855 = vmatmul.mubr.f32.gmra.mrb[0].mxu0 %v1405
  %v1856 = vpop.f32.mrb[0].mxu0
  %v1857 = vadd.f32 %v1398, %v1856
  %v1858 = vpop.f32.mrb[0].mxu0
  %1859 = vmatprep.mubr.f32.mxu0 0.0
  %1860 = vmatmul.mubr.f32.gmra.mrb[0].mxu0 %v1408
  %v1861 = vpop.f32.mrb[0].mxu0
  %v1862 = vadd.f32 %v1398, %v1861
  %v1863 = vpop.f32.mrb[0].mxu0
  %1864 = vmatprep.mubr.f32.mxu0 0.0
  %1865 = vmatmul.mubr.f32.gmra.mrb[0].mxu0 %v1411
  %v1866 = vpop.f32.mrb[0].mxu0
  %v1867 = vadd.f32 %v1398, %v1866
  %v1868 = vpop.f32.mrb[0].mxu0
  %1869 = vmatprep.mubr.f32.mxu0 0.0
  %1870 = vmatmul.mubr.f32.gmra.mrb[0].mxu0 %v1414
  %v1871 = vpop.f32.mrb[0].mxu0
  %v1872 = vadd.f32 %v1398, %v1871
  %v1873 = vpop.f32.mrb[0].mxu0
  %1874 = vmatprep.mubr.f32.mxu0 0.0
  %1875 = vmatmul.mubr.f32.gmra.mrb[0].mxu0 %v1417
  %v1876 = vpop.f32.mrb[0].mxu0
  %v1877 = vadd.f32 %v1398, %v1876
  %v1878 = vpop.f32.mrb[0].mxu0
  %1879 = vmatprep.mubr.f32.mxu0 0.0
  %1880 = vmatmul.mubr.f32.gmra.mrb[0].mxu0 %v1420
  %v1881 = vpop.f32.mrb[0].mxu0
  %v1882 = vadd.f32 %v1398, %v1881
  %v1883 = vpop.f32.mrb[0].mxu0
  %1884 = vmatprep.mubr.f32.mxu0 0.0
  %1885 = vmatmul.mubr.f32.gmra.mrb[0].mxu0 %v1423
  %v1886 = vpop.f32.mrb[0].mxu0
  %v1887 = vadd.f32 %v1398, %v1886
  %v1888 = vpop.f32.mrb[0].mxu0
  %1889 = vmatprep.mubr.f32.mxu0 0.0
  %1890 = vmatmul.mubr.f32.gmra.mrb[0].mxu0 %v1426
  %v1891 = vpop.f32.mrb[0].mxu0
  %v1892 = vadd.f32 %v1398, %v1891
  %v1893 = vpop.f32.mrb[0].mxu0
  %1894 = vmatprep.mubr.f32.mxu0 0.0
  %1895 = vmatmul.mubr.f32.gmra.mrb[0].mxu0 %v1429
  %v1896 = vpop.f32.mrb[0].mxu0
  %v1897 = vadd.f32 %v1398, %v1896
  %v1898 = vpop.f32.mrb[0].mxu0
  %1899 = vmatprep.mubr.f32.mxu0 0.0
  %1900 = vmatmul.mubr.f32.gmra.mrb[0].mxu0 %v1432
  %v1901 = vpop.f32.mrb[0].mxu0
  %v1902 = vadd.f32 %v1398, %v1901
  %v1903 = vpop.f32.mrb[0].mxu0
  %1904 = vmatprep.mubr.f32.mxu0 0.0
  %1905 = vmatmul.mubr.f32.gmra.mrb[0].mxu0 %v1435
  %v1906 = vpop.f32.mrb[0].mxu0
  %v1907 = vadd.f32 %v1398, %v1906
  %v1908 = vpop.f32.mrb[0].mxu0
  %1909 = vmatprep.mubr.f32.mxu0 0.0
  %1910 = vmatmul.mubr.f32.gmra.mrb[0].mxu0 %v1438
  %v1911 = vpop.f32.mrb[0].mxu0
  %v1912 = vadd.f32 %v1398, %v1911
  %v1913 = vpop.f32.mrb[0].mxu0
  %1914 = vmatprep.mubr.f32.mxu0 0.0
  %1915 = vmatmul.mubr.f32.gmra.mrb[0].mxu0 %v1441
  %v1916 = vpop.f32.mrb[0].mxu0
  %v1917 = vadd.f32 %v1398, %v1916
  %v1918 = vpop.f32.mrb[0].mxu0
  %1919 = vmatprep.mubr.f32.mxu0 0.0
  %1920 = vmatmul.mubr.f32.gmra.mrb[0].mxu0 %v1444
  %v1921 = vpop.f32.mrb[0].mxu0
  %v1922 = vadd.f32 %v1398, %v1921
  %v1923 = vpop.f32.mrb[0].mxu0
  %1924 = vmatprep.mubr.f32.mxu0 0.0
  %1925 = vmatmul.mubr.f32.gmra.mrb[0].mxu0 %v1447
  %v1926 = vpop.f32.mrb[0].mxu0
  %v1927 = vadd.f32 %v1398, %v1926
  %v1928 = vpop.f32.mrb[0].mxu0
  %1929 = vmatprep.mubr.f32.mxu0 0.0
  %1930 = vmatmul.mubr.f32.gmra.mrb[0].mxu0 %v1450
  %v1931 = vpop.f32.mrb[0].mxu0
  %v1932 = vadd.f32 %v1398, %v1931
  %v1933 = vpop.f32.mrb[0].mxu0
  %1934 = vmatprep.mubr.f32.mxu0 0.0
  %1935 = vmatmul.mubr.f32.gmra.mrb[0].mxu0 %v1453
  %v1936 = vpop.f32.mrb[0].mxu0
  %v1937 = vadd.f32 %v1398, %v1936
  %v1938 = vpop.f32.mrb[0].mxu0
  %1939 = vmatprep.mubr.f32.mxu0 0.0
  %1940 = vmatmul.mubr.f32.gmra.mrb[0].mxu0 %v1456
  %v1941 = vpop.f32.mrb[0].mxu0
  %v1942 = vadd.f32 %v1398, %v1941
  %v1943 = vpop.f32.mrb[0].mxu0
  %1944 = vmatprep.mubr.f32.mxu0 0.0
  %1945 = vmatmul.mubr.f32.gmra.mrb[0].mxu0 %v1459
  %v1946 = vpop.f32.mrb[0].mxu0
  %v1947 = vadd.f32 %v1398, %v1946
  %v1948 = vpop.f32.mrb[0].mxu0
  %1949 = vmatprep.mubr.f32.mxu0 0.0
  %1950 = vmatmul.mubr.f32.gmra.mrb[0].mxu0 %v1462
  %v1951 = vpop.f32.mrb[0].mxu0
  %v1952 = vadd.f32 %v1398, %v1951
  %v1953 = vpop.f32.mrb[0].mxu0
  %1954 = vmatprep.mubr.f32.mxu0 0.0
  %1955 = vmatmul.mubr.f32.gmra.mrb[0].mxu0 %v1465
  %v1956 = vpop.f32.mrb[0].mxu0
  %v1957 = vadd.f32 %v1398, %v1956
  %v1958 = vpop.f32.mrb[0].mxu0
  %1959 = vmatprep.mubr.f32.mxu0 0.0
  %1960 = vmatmul.mubr.f32.gmra.mrb[0].mxu0 %v1468
  %v1961 = vpop.f32.mrb[0].mxu0
  %v1962 = vadd.f32 %v1398, %v1961
  %v1963 = vpop.f32.mrb[0].mxu0
  %1964 = vmatprep.mubr.f32.mxu0 0.0
  %1965 = vmatmul.mubr.f32.gmra.mrb[0].mxu0 %v1471
  %v1966 = vpop.f32.mrb[0].mxu0
  %v1967 = vadd.f32 %v1398, %v1966
  %v1968 = vpop.f32.mrb[0].mxu0
  %1969 = vmatprep.mubr.f32.mxu0 0.0
  %1970 = vmatmul.mubr.f32.gmra.mrb[0].mxu0 %v1474
  %v1971 = vpop.f32.mrb[0].mxu0
  %v1972 = vadd.f32 %v1398, %v1971
  %v1973 = vpop.f32.mrb[0].mxu0
  %1974 = vmatprep.mubr.f32.mxu0 0.0
  %1975 = vmatmul.mubr.f32.gmra.mrb[0].mxu0 %v1477
  %v1976 = vpop.f32.mrb[0].mxu0
  %v1977 = vadd.f32 %v1398, %v1976
  %v1978 = vpop.f32.mrb[0].mxu0
  %1979 = vmatprep.mubr.f32.mxu0 0.0
  %1980 = vmatmul.mubr.f32.gmra.mrb[0].mxu0 %v1480
  %v1981 = vpop.f32.mrb[0].mxu0
  %v1982 = vadd.f32 %v1398, %v1981
  %v1983 = vpop.f32.mrb[0].mxu0
  %1984 = vmatprep.mubr.f32.mxu0 0.0
  %1985 = vmatmul.mubr.f32.gmra.mrb[0].mxu0 %v1483
  %v1986 = vpop.f32.mrb[0].mxu0
  %v1987 = vadd.f32 %v1398, %v1986
  %v1988 = vpop.f32.mrb[0].mxu0
  %1989 = vmatprep.mubr.f32.mxu0 0.0
  %1990 = vmatmul.mubr.f32.gmra.mrb[0].mxu0 %v1486
  %v1991 = vpop.f32.mrb[0].mxu0
  %v1992 = vadd.f32 %v1398, %v1991
  %v1993 = vpop.f32.mrb[0].mxu0
  %1994 = vmatprep.mubr.f32.mxu0 0.0
  %1995 = vmatmul.mubr.f32.gmra.mrb[0].mxu0 %v1489
  %v1996 = vpop.f32.mrb[0].mxu0
  %v1997 = vadd.f32 %v1398, %v1996
  %v1998 = vpop.f32.mrb[0].mxu0
  %1999 = vmatprep.mubr.f32.mxu0 0.0
  %2000 = vmatmul.mubr.f32.gmra.mrb[0].mxu0 %v1492
  %v2001 = vpop.f32.mrb[0].mxu0
  %v2002 = vadd.f32 %v1398, %v2001
  %v2003 = vpop.f32.mrb[0].mxu0
  %2004 = vmatprep.mubr.f32.mxu0 0.0
  %2005 = vmatmul.mubr.f32.gmra.mrb[0].mxu0 %v1495
  %v2006 = vpop.f32.mrb[0].mxu0
  %v2007 = vadd.f32 %v1398, %v2006
  %v2008 = vpop.f32.mrb[0].mxu0
  %2009 = vmatprep.mubr.f32.mxu0 0.0
  %2010 = vmatmul.mubr.f32.gmra.mrb[0].mxu0 %v1498
  %v2011 = vpop.f32.mrb[0].mxu0
  %v2012 = vadd.f32 %v1398, %v2011
  %v2013 = vpop.f32.mrb[0].mxu0
  %2014 = vmatprep.mubr.f32.mxu0 0.0
  %2015 = vmatmul.mubr.f32.gmra.mrb[0].mxu0 %v1501
  %v2016 = vpop.f32.mrb[0].mxu0
  %v2017 = vadd.f32 %v1398, %v2016
  %v2018 = vpop.f32.mrb[0].mxu0
  %2019 = vmatprep.mubr.f32.mxu0 0.0
  %2020 = vmatmul.mubr.f32.gmra.mrb[0].mxu0 %v1504
  %v2021 = vpop.f32.mrb[0].mxu0
  %v2022 = vadd.f32 %v1398, %v2021
  %v2023 = vpop.f32.mrb[0].mxu0
  %2024 = vmatprep.mubr.f32.mxu0 0.0
  %2025 = vmatmul.mubr.f32.gmra.mrb[0].mxu0 %v1507
  %v2026 = vpop.f32.mrb[0].mxu0
  %v2027 = vadd.f32 %v1398, %v2026
  %v2028 = vpop.f32.mrb[0].mxu0
  %2029 = vmatprep.mubr.f32.mxu0 0.0
  %2030 = vmatmul.mubr.f32.gmra.mrb[0].mxu0 %v1510
  %v2031 = vpop.f32.mrb[0].mxu0
  %v2032 = vadd.f32 %v1398, %v2031
  %v2033 = vpop.f32.mrb[0].mxu0
  %2034 = vmatprep.mubr.f32.mxu0 0.0
  %2035 = vmatmul.mubr.f32.gmra.mrb[0].mxu0 %v1513
  %v2036 = vpop.f32.mrb[0].mxu0
  %v2037 = vadd.f32 %v1398, %v2036
  %v2038 = vpop.f32.mrb[0].mxu0
  %2039 = vmatprep.mubr.f32.mxu0 0.0
  %2040 = vmatmul.mubr.f32.gmra.mrb[0].mxu0 %v1516
  %v2041 = vpop.f32.mrb[0].mxu0
  %v2042 = vadd.f32 %v1398, %v2041
  %v2043 = vpop.f32.mrb[0].mxu0
  %2044 = vmatprep.mubr.f32.mxu0 0.0
  %2045 = vmatmul.mubr.f32.gmra.mrb[0].mxu0 %v1519
  %v2046 = vpop.f32.mrb[0].mxu0
  %v2047 = vadd.f32 %v1398, %v2046
  %v2048 = vpop.f32.mrb[0].mxu0
  %2049 = vmatprep.mubr.f32.mxu0 0.0
  %2050 = vmatmul.mubr.f32.gmra.mrb[0].mxu0 %v1522
  %v2051 = vpop.f32.mrb[0].mxu0
  %v2052 = vadd.f32 %v1398, %v2051
  %v2053 = vpop.f32.mrb[0].mxu0
  %2054 = vmatprep.mubr.f32.mxu0 0.0
  %2055 = vmatmul.mubr.f32.gmra.mrb[0].mxu0 %v1525
  %v2056 = vpop.f32.mrb[0].mxu0
  %v2057 = vadd.f32 %v1398, %v2056
  %v2058 = vpop.f32.mrb[0].mxu0
  %2059 = vmatprep.mubr.f32.mxu0 0.0
  %2060 = vmatmul.mubr.f32.gmra.mrb[0].mxu0 %v1528
  %v2061 = vpop.f32.mrb[0].mxu0
  %v2062 = vadd.f32 %v1398, %v2061
  %v2063 = vpop.f32.mrb[0].mxu0
  %2064 = vmatprep.mubr.f32.mxu0 0.0
  %2065 = vmatmul.mubr.f32.gmra.mrb[0].mxu0 %v1531
  %v2066 = vpop.f32.mrb[0].mxu0
  %v2067 = vadd.f32 %v1398, %v2066
  %v2068 = vpop.f32.mrb[0].mxu0
  %2069 = vmatprep.mubr.f32.mxu0 0.0
  %2070 = vmatmul.mubr.f32.gmra.mrb[0].mxu0 %v1534
  %v2071 = vpop.f32.mrb[0].mxu0
  %v2072 = vadd.f32 %v1398, %v2071
  %v2073 = vpop.f32.mrb[0].mxu0
  %2074 = vmatprep.mubr.f32.mxu0 0.0
  %2075 = vmatmul.mubr.f32.gmra.mrb[0].mxu0 %v1537
  %v2076 = vpop.f32.mrb[0].mxu0
  %v2077 = vadd.f32 %v1398, %v2076
  %v2078 = vpop.f32.mrb[0].mxu0
  %2079 = vmatprep.mubr.f32.mxu0 0.0
  %2080 = vmatmul.mubr.f32.gmra.mrb[0].mxu0 %v1540
  %v2081 = vpop.f32.mrb[0].mxu0
  %v2082 = vadd.f32 %v1398, %v2081
  %v2083 = vpop.f32.mrb[0].mxu0
  %2084 = vmatprep.mubr.f32.mxu0 0.0
  %2085 = vmatmul.mubr.f32.gmra.mrb[0].mxu0 %v1543
  %v2086 = vpop.f32.mrb[0].mxu0
  %v2087 = vadd.f32 %v1398, %v2086
  %v2088 = vpop.f32.mrb[0].mxu0
  %2089 = vmatprep.mubr.f32.mxu0 0.0
  %2090 = vmatmul.mubr.f32.gmra.mrb[0].mxu0 %v1546
  %v2091 = vpop.f32.mrb[0].mxu0
  %v2092 = vadd.f32 %v1398, %v2091
  %v2093 = vpop.f32.mrb[0].mxu0
  %2094 = vmatprep.mubr.f32.mxu0 0.0
  %2095 = vmatmul.mubr.f32.gmra.mrb[0].mxu0 %v1549
  %v2096 = vpop.f32.mrb[0].mxu0
  %v2097 = vadd.f32 %v1398, %v2096
  %v2098 = vpop.f32.mrb[0].mxu0
  %2099 = vmatprep.mubr.f32.mxu0 0.0
  %2100 = vmatmul.mubr.f32.gmra.mrb[0].mxu0 %v1552
  %v2101 = vpop.f32.mrb[0].mxu0
  %v2102 = vadd.f32 %v1398, %v2101
  %v2103 = vpop.f32.mrb[0].mxu0
  %2104 = vmatprep.mubr.f32.mxu0 0.0
  %2105 = vmatmul.mubr.f32.gmra.mrb[0].mxu0 %v1555
  %v2106 = vpop.f32.mrb[0].mxu0
  %v2107 = vadd.f32 %v1398, %v2106
  %v2108 = vpop.f32.mrb[0].mxu0
  %2109 = vmatprep.mubr.f32.mxu0 0.0
  %2110 = vmatmul.mubr.f32.gmra.mrb[0].mxu0 %v1558
  %v2111 = vpop.f32.mrb[0].mxu0
  %v2112 = vadd.f32 %v1398, %v2111
  %v2113 = vpop.f32.mrb[0].mxu0
  %2114 = vmatprep.mubr.f32.mxu0 0.0
  %2115 = vmatmul.mubr.f32.gmra.mrb[0].mxu0 %v1561
  %v2116 = vpop.f32.mrb[0].mxu0
  %v2117 = vadd.f32 %v1398, %v2116
  %v2118 = vpop.f32.mrb[0].mxu0
  %2119 = vmatprep.mubr.f32.mxu0 0.0
  %2120 = vmatmul.mubr.f32.gmra.mrb[0].mxu0 %v1564
  %v2121 = vpop.f32.mrb[0].mxu0
  %v2122 = vadd.f32 %v1398, %v2121
  %v2123 = vpop.f32.mrb[0].mxu0
  %2124 = vmatprep.mubr.f32.mxu0 0.0
  %2125 = vmatmul.mubr.f32.gmra.mrb[0].mxu0 %v1567
  %v2126 = vpop.f32.mrb[0].mxu0
  %v2127 = vadd.f32 %v1398, %v2126
  %v2128 = vpop.f32.mrb[0].mxu0
  %2129 = vmatprep.mubr.f32.mxu0 0.0
  %2130 = vmatmul.mubr.f32.gmra.mrb[0].mxu0 %v1570
  %v2131 = vpop.f32.mrb[0].mxu0
  %v2132 = vadd.f32 %v1398, %v2131
  %v2133 = vpop.f32.mrb[0].mxu0
  %2134 = vmatprep.mubr.f32.mxu0 0.0
  %2135 = vmatmul.mubr.f32.gmra.mrb[0].mxu0 %v1573
  %v2136 = vpop.f32.mrb[0].mxu0
  %v2137 = vadd.f32 %v1398, %v2136
  %v2138 = vpop.f32.mrb[0].mxu0
  %2139 = vmatprep.mubr.f32.mxu0 0.0
  %2140 = vmatmul.mubr.f32.gmra.mrb[0].mxu0 %v1576
  %v2141 = vpop.f32.mrb[0].mxu0
  %v2142 = vadd.f32 %v1398, %v2141
  %v2143 = vpop.f32.mrb[0].mxu0
  %2144 = vmatprep.mubr.f32.mxu0 0.0
  %2145 = vmatmul.mubr.f32.gmra.mrb[0].mxu0 %v1579
  %v2146 = vpop.f32.mrb[0].mxu0
  %v2147 = vadd.f32 %v1398, %v2146
  %v2148 = vpop.f32.mrb[0].mxu0
  %2149 = vmatprep.mubr.f32.mxu0 0.0
  %2150 = vmatmul.mubr.f32.gmra.mrb[0].mxu0 %v1582
  %v2151 = vpop.f32.mrb[0].mxu0
  %v2152 = vadd.f32 %v1398, %v2151
  %v2153 = vpop.f32.mrb[0].mxu0
  %2154 = vmatprep.mubr.f32.mxu0 0.0
  %2155 = vmatmul.mubr.f32.gmra.mrb[0].mxu0 %v1585
  %v2156 = vpop.f32.mrb[0].mxu0
  %v2157 = vadd.f32 %v1398, %v2156
  %v2158 = vpop.f32.mrb[0].mxu0
  %2159 = vmatprep.mubr.f32.mxu0 0.0
  %2160 = vmatmul.mubr.f32.gmra.mrb[0].mxu0 %v1588
  %v2161 = vpop.f32.mrb[0].mxu0
  %v2162 = vadd.f32 %v1398, %v2161
  %v2163 = vpop.f32.mrb[0].mxu0
  %2164 = vmatprep.mubr.f32.mxu0 0.0
  %2165 = vmatmul.mubr.f32.gmra.mrb[0].mxu0 %v1591
  %v2166 = vpop.f32.mrb[0].mxu0
  %v2167 = vadd.f32 %v1398, %v2166
  %v2168 = vpop.f32.mrb[0].mxu0
  %2169 = vmatprep.mubr.f32.mxu0 0.0
  %2170 = vmatmul.mubr.f32.gmra.mrb[0].mxu0 %v1594
  %v2171 = vpop.f32.mrb[0].mxu0
  %v2172 = vadd.f32 %v1398, %v2171
  %v2173 = vpop.f32.mrb[0].mxu0
  %2174 = vmatprep.mubr.f32.mxu0 0.0
  %2175 = vmatmul.mubr.f32.gmra.mrb[0].mxu0 %v1597
  %v2176 = vpop.f32.mrb[0].mxu0
  %v2177 = vadd.f32 %v1398, %v2176
  %v2178 = vpop.f32.mrb[0].mxu0
  %2179 = vmatprep.mubr.f32.mxu0 0.0
  %2180 = vmatmul.mubr.f32.gmra.mrb[0].mxu0 %v1600
  %v2181 = vpop.f32.mrb[0].mxu0
  %v2182 = vadd.f32 %v1398, %v2181
  %v2183 = vpop.f32.mrb[0].mxu0
  %2184 = vmatprep.mubr.f32.mxu0 0.0
  %2185 = vmatmul.mubr.f32.gmra.mrb[0].mxu0 %v1603
  %v2186 = vpop.f32.mrb[0].mxu0
  %v2187 = vadd.f32 %v1398, %v2186
  %v2188 = vpop.f32.mrb[0].mxu0
  %2189 = vmatprep.mubr.f32.mxu0 0.0
  %2190 = vmatmul.mubr.f32.gmra.mrb[0].mxu0 %v1606
  %v2191 = vpop.f32.mrb[0].mxu0
  %v2192 = vadd.f32 %v1398, %v2191
  %v2193 = vpop.f32.mrb[0].mxu0
  %2194 = vmatprep.mubr.f32.mxu0 0.0
  %2195 = vmatmul.mubr.f32.gmra.mrb[0].mxu0 %v1609
  %v2196 = vpop.f32.mrb[0].mxu0
  %v2197 = vadd.f32 %v1398, %v2196
  %v2198 = vpop.f32.mrb[0].mxu0
  %2199 = vmatprep.mubr.f32.mxu0 0.0
  %2200 = vmatmul.mubr.f32.gmra.mrb[0].mxu0 %v1612
  %v2201 = vpop.f32.mrb[0].mxu0
  %v2202 = vadd.f32 %v1398, %v2201
  %v2203 = vpop.f32.mrb[0].mxu0
  %2204 = vmatprep.mubr.f32.mxu0 0.0
  %2205 = vmatmul.mubr.f32.gmra.mrb[0].mxu0 %v1615
  %v2206 = vpop.f32.mrb[0].mxu0
  %v2207 = vadd.f32 %v1398, %v2206
  %v2208 = vpop.f32.mrb[0].mxu0
  %2209 = vmatprep.mubr.f32.mxu0 0.0
  %2210 = vmatmul.mubr.f32.gmra.mrb[0].mxu0 %v1618
  %v2211 = vpop.f32.mrb[0].mxu0
  %v2212 = vadd.f32 %v1398, %v2211
  %v2213 = vpop.f32.mrb[0].mxu0
  %2214 = vmatprep.mubr.f32.mxu0 0.0
  %2215 = vmatmul.mubr.f32.gmra.mrb[0].mxu0 %v1621
  %v2216 = vpop.f32.mrb[0].mxu0
  %v2217 = vadd.f32 %v1398, %v2216
  %v2218 = vpop.f32.mrb[0].mxu0
  %2219 = vmatprep.mubr.f32.mxu0 0.0
  %2220 = vmatmul.mubr.f32.gmra.mrb[0].mxu0 %v1624
  %v2221 = vpop.f32.mrb[0].mxu0
  %v2222 = vadd.f32 %v1398, %v2221
  %v2223 = vpop.f32.mrb[0].mxu0
  %2224 = vmatprep.mubr.f32.mxu0 0.0
  %2225 = vmatmul.mubr.f32.gmra.mrb[0].mxu0 %v1627
  %v2226 = vpop.f32.mrb[0].mxu0
  %v2227 = vadd.f32 %v1398, %v2226
  %v2228 = vpop.f32.mrb[0].mxu0
  %2229 = vmatprep.mubr.f32.mxu0 0.0
  %2230 = vmatmul.mubr.f32.gmra.mrb[0].mxu0 %v1630
  %v2231 = vpop.f32.mrb[0].mxu0
  %v2232 = vadd.f32 %v1398, %v2231
  %v2233 = vpop.f32.mrb[0].mxu0
  %2234 = vmatprep.mubr.f32.mxu0 0.0
  %2235 = vmatmul.mubr.f32.gmra.mrb[0].mxu0 %v1633
  %v2236 = vpop.f32.mrb[0].mxu0
  %v2237 = vadd.f32 %v1398, %v2236
  %v2238 = vpop.f32.mrb[0].mxu0
  %2239 = vmatprep.mubr.f32.mxu0 0.0
  %2240 = vmatmul.mubr.f32.gmra.mrb[0].mxu0 %v1636
  %v2241 = vpop.f32.mrb[0].mxu0
  %v2242 = vadd.f32 %v1398, %v2241
  %v2243 = vpop.f32.mrb[0].mxu0
  %2244 = vmatprep.mubr.f32.mxu0 0.0
  %2245 = vmatmul.mubr.f32.gmra.mrb[0].mxu0 %v1639
  %v2246 = vpop.f32.mrb[0].mxu0
  %v2247 = vadd.f32 %v1398, %v2246
  %v2248 = vpop.f32.mrb[0].mxu0
  %2249 = vmatprep.mubr.f32.mxu0 0.0
  %2250 = vmatmul.mubr.f32.gmra.mrb[0].mxu0 %v1642
  %v2251 = vpop.f32.mrb[0].mxu0
  %v2252 = vadd.f32 %v1398, %v2251
  %v2253 = vpop.f32.mrb[0].mxu0
  %2254 = vmatprep.mubr.f32.mxu0 0.0
  %2255 = vmatmul.mubr.f32.gmra.mrb[0].mxu0 %v1645
  %v2256 = vpop.f32.mrb[0].mxu0
  %v2257 = vadd.f32 %v1398, %v2256
  %v2258 = vpop.f32.mrb[0].mxu0
  %2259 = vmatprep.mubr.f32.mxu0 0.0
  %2260 = vmatmul.mubr.f32.gmra.mrb[0].mxu0 %v1648
  %v2261 = vpop.f32.mrb[0].mxu0
  %v2262 = vadd.f32 %v1398, %v2261
  %v2263 = vpop.f32.mrb[0].mxu0
  %2264 = vmatprep.mubr.f32.mxu0 0.0
  %2265 = vmatmul.mubr.f32.gmra.mrb[0].mxu0 %v1651
  %v2266 = vpop.f32.mrb[0].mxu0
  %v2267 = vadd.f32 %v1398, %v2266
  %v2268 = vpop.f32.mrb[0].mxu0
  %2269 = vmatprep.mubr.f32.mxu0 0.0
  %2270 = vmatmul.mubr.f32.gmra.mrb[0].mxu0 %v1654
  %v2271 = vpop.f32.mrb[0].mxu0
  %v2272 = vadd.f32 %v1398, %v2271
  %v2273 = vpop.f32.mrb[0].mxu0
  %2274 = vmatprep.mubr.f32.mxu0 0.0
  %2275 = vmatmul.mubr.f32.gmra.mrb[0].mxu0 %v1657
  %v2276 = vpop.f32.mrb[0].mxu0
  %v2277 = vadd.f32 %v1398, %v2276
  %v2278 = vpop.f32.mrb[0].mxu0
  %2279 = vmatprep.mubr.f32.mxu0 0.0
  %2280 = vmatmul.mubr.f32.gmra.mrb[0].mxu0 %v1660
  %v2281 = vpop.f32.mrb[0].mxu0
  %v2282 = vadd.f32 %v1398, %v2281
  %v2283 = vpop.f32.mrb[0].mxu0
  %2284 = vmatprep.mubr.f32.mxu0 0.0
  %2285 = vmatmul.mubr.f32.gmra.mrb[0].mxu0 %v1663
  %v2286 = vpop.f32.mrb[0].mxu0
  %v2287 = vadd.f32 %v1398, %v2286
  %v2288 = vpop.f32.mrb[0].mxu0
  %2289 = vmatprep.mubr.f32.mxu0 0.0
  %2290 = vmatmul.mubr.f32.gmra.mrb[0].mxu0 %v1666
  %v2291 = vpop.f32.mrb[0].mxu0
  %v2292 = vadd.f32 %v1398, %v2291
  %v2293 = vpop.f32.mrb[0].mxu0
  %2294 = vmatprep.mubr.f32.mxu0 0.0
  %2295 = vmatmul.mubr.f32.gmra.mrb[0].mxu0 %v1669
  %v2296 = vpop.f32.mrb[0].mxu0
  %v2297 = vadd.f32 %v1398, %v2296
  %v2298 = vpop.f32.mrb[0].mxu0
  %2299 = vmatprep.mubr.f32.mxu0 0.0
  %2300 = vmatmul.mubr.f32.gmra.mrb[0].mxu0 %v1672
  %v2301 = vpop.f32.mrb[0].mxu0
  %v2302 = vadd.f32 %v1398, %v2301
  %v2303 = vpop.f32.mrb[0].mxu0
  %2304 = vmatprep.mubr.f32.mxu0 0.0
  %2305 = vmatmul.mubr.f32.gmra.mrb[0].mxu0 %v1675
  %v2306 = vpop.f32.mrb[0].mxu0
  %v2307 = vadd.f32 %v1398, %v2306
  %v2308 = vpop.f32.mrb[0].mxu0
  %2309 = vmatprep.mubr.f32.mxu0 0.0
  %2310 = vmatmul.mubr.f32.gmra.mrb[0].mxu0 %v1678
  %v2311 = vpop.f32.mrb[0].mxu0
  %v2312 = vadd.f32 %v1398, %v2311
  %v2313 = vpop.f32.mrb[0].mxu0
  %2314 = vmatprep.mubr.f32.mxu0 0.0
  %2315 = vmatmul.mubr.f32.gmra.mrb[0].mxu0 %v1681
  %v2316 = vpop.f32.mrb[0].mxu0
  %v2317 = vadd.f32 %v1398, %v2316
  %v2318 = vpop.f32.mrb[0].mxu0
  %2319 = vmatprep.mubr.f32.mxu0 0.0
  %2320 = vmatmul.mubr.f32.gmra.mrb[0].mxu0 %v1684
  %v2321 = vpop.f32.mrb[0].mxu0
  %v2322 = vadd.f32 %v1398, %v2321
  %v2323 = vpop.f32.mrb[0].mxu0
  %2324 = vmatprep.mubr.f32.mxu0 0.0
  %2325 = vmatmul.mubr.f32.gmra.mrb[0].mxu0 %v1687
  %v2326 = vpop.f32.mrb[0].mxu0
  %v2327 = vadd.f32 %v1398, %v2326
  %v2328 = vpop.f32.mrb[0].mxu0
  %2329 = vmatprep.mubr.f32.mxu0 0.0
  %2330 = vmatmul.mubr.f32.gmra.mrb[0].mxu0 %v1690
  %v2331 = vpop.f32.mrb[0].mxu0
  %v2332 = vadd.f32 %v1398, %v2331
  %v2333 = vpop.f32.mrb[0].mxu0
  %2334 = vmatprep.mubr.f32.mxu0 0.0
  %2335 = vmatmul.mubr.f32.gmra.mrb[0].mxu0 %v1693
  %v2336 = vpop.f32.mrb[0].mxu0
  %v2337 = vadd.f32 %v1398, %v2336
  %v2338 = vpop.f32.mrb[0].mxu0
  %2339 = vmatprep.mubr.f32.mxu0 0.0
  %2340 = vmatmul.mubr.f32.gmra.mrb[0].mxu0 %v1696
  %v2341 = vpop.f32.mrb[0].mxu0
  %v2342 = vadd.f32 %v1398, %v2341
  %v2343 = vpop.f32.mrb[0].mxu0
  %2344 = vmatprep.mubr.f32.mxu0 0.0
  %2345 = vmatmul.mubr.f32.gmra.mrb[0].mxu0 %v1699
  %v2346 = vpop.f32.mrb[0].mxu0
  %v2347 = vadd.f32 %v1398, %v2346
  %v2348 = vpop.f32.mrb[0].mxu0
  %2349 = vmatprep.mubr.f32.mxu0 0.0
  %2350 = vmatmul.mubr.f32.gmra.mrb[0].mxu0 %v1702
  %v2351 = vpop.f32.mrb[0].mxu0
  %v2352 = vadd.f32 %v1398, %v2351
  %v2353 = vpop.f32.mrb[0].mxu0
  %2354 = vmatprep.mubr.f32.mxu0 0.0
  %2355 = vmatmul.mubr.f32.gmra.mrb[0].mxu0 %v1705
  %v2356 = vpop.f32.mrb[0].mxu0
  %v2357 = vadd.f32 %v1398, %v2356
  %v2358 = vpop.f32.mrb[0].mxu0
  %2359 = vmatprep.mubr.f32.mxu0 0.0
  %2360 = vmatmul.mubr.f32.gmra.mrb[0].mxu0 %v1708
  %v2361 = vpop.f32.mrb[0].mxu0
  %v2362 = vadd.f32 %v1398, %v2361
  %v2363 = vpop.f32.mrb[0].mxu0
  %2364 = vmatprep.mubr.f32.mxu0 0.0
  %2365 = vmatmul.mubr.f32.gmra.mrb[0].mxu0 %v1711
  %v2366 = vpop.f32.mrb[0].mxu0
  %v2367 = vadd.f32 %v1398, %v2366
  %v2368 = vpop.f32.mrb[0].mxu0
  %2369 = vmatprep.mubr.f32.mxu0 0.0
  %2370 = vmatmul.mubr.f32.gmra.mrb[0].mxu0 %v1714
  %v2371 = vpop.f32.mrb[0].mxu0
  %v2372 = vadd.f32 %v1398, %v2371
  %v2373 = vpop.f32.mrb[0].mxu0
  %2374 = vmatprep.mubr.f32.mxu0 0.0
  %2375 = vmatmul.mubr.f32.gmra.mrb[0].mxu0 %v1717
  %v2376 = vpop.f32.mrb[0].mxu0
  %v2377 = vadd.f32 %v1398, %v2376
  %v2378 = vpop.f32.mrb[0].mxu0
  %2379 = vmatprep.mubr.f32.mxu0 0.0
  %2380 = vmatmul.mubr.f32.gmra.mrb[0].mxu0 %v1720
  %v2381 = vpop.f32.mrb[0].mxu0
  %v2382 = vadd.f32 %v1398, %v2381
  %v2383 = vpop.f32.mrb[0].mxu0
  %2384 = vmatprep.mubr.f32.mxu0 0.0
  %2385 = vmatmul.mubr.f32.gmra.mrb[0].mxu0 %v1723
  %v2386 = vpop.f32.mrb[0].mxu0
  %v2387 = vadd.f32 %v1398, %v2386
  %v2388 = vpop.f32.mrb[0].mxu0
  %2389 = vmatprep.mubr.f32.mxu0 0.0
  %2390 = vmatmul.mubr.f32.gmra.mrb[0].mxu0 %v1726
  %v2391 = vpop.f32.mrb[0].mxu0
  %v2392 = vadd.f32 %v1398, %v2391
  %v2393 = vpop.f32.mrb[0].mxu0
  %2394 = vmatprep.mubr.f32.mxu0 0.0
  %2395 = vmatmul.mubr.f32.gmra.mrb[0].mxu0 %v1729
  %v2396 = vpop.f32.mrb[0].mxu0
  %v2397 = vadd.f32 %v1398, %v2396
  %v2398 = vpop.f32.mrb[0].mxu0
  %2399 = vmatprep.mubr.f32.mxu0 0.0
  %2400 = vmatmul.mubr.f32.gmra.mrb[0].mxu0 %v1732
  %v2401 = vpop.f32.mrb[0].mxu0
  %v2402 = vadd.f32 %v1398, %v2401
  %v2403 = vpop.f32.mrb[0].mxu0
  %2404 = vmatprep.mubr.f32.mxu0 0.0
  %2405 = vmatmul.mubr.f32.gmra.mrb[0].mxu0 %v1735
  %v2406 = vpop.f32.mrb[0].mxu0
  %v2407 = vadd.f32 %v1398, %v2406
  %v2408 = vpop.f32.mrb[0].mxu0
  %2409 = vmatprep.mubr.f32.mxu0 0.0
  %2410 = vmatmul.mubr.f32.gmra.mrb[0].mxu0 %v1738
  %v2411 = vpop.f32.mrb[0].mxu0
  %v2412 = vadd.f32 %v1398, %v2411
  %v2413 = vpop.f32.mrb[0].mxu0
  %2414 = vmatprep.mubr.f32.mxu0 0.0
  %2415 = vmatmul.mubr.f32.gmra.mrb[0].mxu0 %v1741
  %v2416 = vpop.f32.mrb[0].mxu0
  %v2417 = vadd.f32 %v1398, %v2416
  %v2418 = vpop.f32.mrb[0].mxu0
  %2419 = vmatprep.mubr.f32.mxu0 0.0
  %2420 = vmatmul.mubr.f32.gmra.mrb[0].mxu0 %v1744
  %v2421 = vpop.f32.mrb[0].mxu0
  %v2422 = vadd.f32 %v1398, %v2421
  %v2423 = vpop.f32.mrb[0].mxu0
  %2424 = vmatprep.mubr.f32.mxu0 0.0
  %2425 = vmatmul.mubr.f32.gmra.mrb[0].mxu0 %v1747
  %v2426 = vpop.f32.mrb[0].mxu0
  %v2427 = vadd.f32 %v1398, %v2426
  %v2428 = vpop.f32.mrb[0].mxu0
  %2429 = vmatprep.mubr.f32.mxu0 0.0
  %2430 = vmatmul.mubr.f32.gmra.mrb[0].mxu0 %v1750
  %v2431 = vpop.f32.mrb[0].mxu0
  %v2432 = vadd.f32 %v1398, %v2431
  %v2433 = vpop.f32.mrb[0].mxu0
  %2434 = vmatprep.mubr.f32.mxu0 0.0
  %2435 = vmatmul.mubr.f32.gmra.mrb[0].mxu0 %v1753
  %v2436 = vpop.f32.mrb[0].mxu0
  %v2437 = vadd.f32 %v1398, %v2436
  %v2438 = vpop.f32.mrb[0].mxu0
  %2439 = vmatprep.mubr.f32.mxu0 0.0
  %2440 = vmatmul.mubr.f32.gmra.mrb[0].mxu0 %v1756
  %v2441 = vpop.f32.mrb[0].mxu0
  %v2442 = vadd.f32 %v1398, %v2441
  %v2443 = vpop.f32.mrb[0].mxu0
  %2444 = vmatprep.mubr.f32.mxu0 0.0
  %2445 = vmatmul.mubr.f32.gmra.mrb[0].mxu0 %v1759
  %v2446 = vpop.f32.mrb[0].mxu0
  %v2447 = vadd.f32 %v1398, %v2446
  %v2448 = vpop.f32.mrb[0].mxu0
  %2449 = vmatprep.mubr.f32.mxu0 0.0
  %2450 = vmatmul.mubr.f32.gmra.mrb[0].mxu0 %v1762
  %v2451 = vpop.f32.mrb[0].mxu0
  %v2452 = vadd.f32 %v1398, %v2451
  %v2453 = vpop.f32.mrb[0].mxu0
  %2454 = vmatprep.mubr.f32.mxu0 0.0
  %2455 = vmatmul.mubr.f32.gmra.mrb[0].mxu0 %v1765
  %v2456 = vpop.f32.mrb[0].mxu0
  %v2457 = vadd.f32 %v1398, %v2456
  %v2458 = vpop.f32.mrb[0].mxu0
  %2459 = vmatprep.mubr.f32.mxu0 0.0
  %2460 = vmatmul.mubr.f32.gmra.mrb[0].mxu0 %v1768
  %v2461 = vpop.f32.mrb[0].mxu0
  %v2462 = vadd.f32 %v1398, %v2461
  %v2463 = vpop.f32.mrb[0].mxu0
  %2464 = vmatprep.mubr.f32.mxu0 0.0
  %2465 = vmatmul.mubr.f32.gmra.mrb[0].mxu0 %v1771
  %v2466 = vpop.f32.mrb[0].mxu0
  %v2467 = vadd.f32 %v1398, %v2466
  %v2468 = vpop.f32.mrb[0].mxu0
  %2469 = vmatprep.mubr.f32.mxu0 0.0
  %2470 = vmatmul.mubr.f32.gmra.mrb[0].mxu0 %v1774
  %v2471 = vpop.f32.mrb[0].mxu0
  %v2472 = vadd.f32 %v1398, %v2471
  %v2473 = vpop.f32.mrb[0].mxu0
  %2474 = vmatprep.mubr.f32.mxu0 0.0
  %2475 = vmatmul.mubr.f32.gmra.mrb[0].mxu0 %v1777
  %v2476 = vpop.f32.mrb[0].mxu0
  %v2477 = vadd.f32 %v1398, %v2476
  %v2478 = vpop.f32.mrb[0].mxu0
  %2479 = vmatprep.mubr.f32.mxu0 0.0
  %2480 = vmatmul.mubr.f32.gmra.mrb[0].mxu0 %v1780
  %v2481 = vpop.f32.mrb[0].mxu0
  %v2482 = vadd.f32 %v1398, %v2481
  %v2483 = vpop.f32.mrb[0].mxu0
  %2484 = vmatprep.mubr.f32.mxu0 0.0
  %2485 = vmatmul.mubr.f32.gmra.mrb[0].mxu0 %v1783
  %v2486 = vpop.f32.mrb[0].mxu0
  %v2487 = vadd.f32 %v1398, %v2486
  %v2488 = vpop.f32.mrb[0].mxu0
  %2489 = vdwg.mxu0
  %v2490 = vmax.f32 %v1852, 0.0
  %v2491 = vmax.f32 %v1857, 0.0
  %v2492 = vmax.f32 %v1862, 0.0
  %v2493 = vmax.f32 %v1867, 0.0
  %v2494 = vmax.f32 %v1872, 0.0
  %v2495 = vmax.f32 %v1877, 0.0
  %v2496 = vmax.f32 %v1882, 0.0
  %v2497 = vmax.f32 %v1887, 0.0
  %v2498 = vmax.f32 %v1892, 0.0
  %v2499 = vmax.f32 %v1897, 0.0
  %v2500 = vmax.f32 %v1902, 0.0
  %v2501 = vmax.f32 %v1907, 0.0
  %v2502 = vmax.f32 %v1912, 0.0
  %v2503 = vmax.f32 %v1917, 0.0
  %v2504 = vmax.f32 %v1922, 0.0
  %v2505 = vmax.f32 %v1927, 0.0
  %v2506 = vmax.f32 %v1932, 0.0
  %v2507 = vmax.f32 %v1937, 0.0
  %v2508 = vmax.f32 %v1942, 0.0
  %v2509 = vmax.f32 %v1947, 0.0
  %v2510 = vmax.f32 %v1952, 0.0
  %v2511 = vmax.f32 %v1957, 0.0
  %v2512 = vmax.f32 %v1962, 0.0
  %v2513 = vmax.f32 %v1967, 0.0
  %v2514 = vmax.f32 %v1972, 0.0
  %v2515 = vmax.f32 %v1977, 0.0
  %v2516 = vmax.f32 %v1982, 0.0
  %v2517 = vmax.f32 %v1987, 0.0
  %v2518 = vmax.f32 %v1992, 0.0
  %v2519 = vmax.f32 %v1997, 0.0
  %v2520 = vmax.f32 %v2002, 0.0
  %v2521 = vmax.f32 %v2007, 0.0
  %v2522 = vmax.f32 %v2012, 0.0
  %v2523 = vmax.f32 %v2017, 0.0
  %v2524 = vmax.f32 %v2022, 0.0
  %v2525 = vmax.f32 %v2027, 0.0
  %v2526 = vmax.f32 %v2032, 0.0
  %v2527 = vmax.f32 %v2037, 0.0
  %v2528 = vmax.f32 %v2042, 0.0
  %v2529 = vmax.f32 %v2047, 0.0
  %v2530 = vmax.f32 %v2052, 0.0
  %v2531 = vmax.f32 %v2057, 0.0
  %v2532 = vmax.f32 %v2062, 0.0
  %v2533 = vmax.f32 %v2067, 0.0
  %v2534 = vmax.f32 %v2072, 0.0
  %v2535 = vmax.f32 %v2077, 0.0
  %v2536 = vmax.f32 %v2082, 0.0
  %v2537 = vmax.f32 %v2087, 0.0
  %v2538 = vmax.f32 %v2092, 0.0
  %v2539 = vmax.f32 %v2097, 0.0
  %v2540 = vmax.f32 %v2102, 0.0
  %v2541 = vmax.f32 %v2107, 0.0
  %v2542 = vmax.f32 %v2112, 0.0
  %v2543 = vmax.f32 %v2117, 0.0
  %v2544 = vmax.f32 %v2122, 0.0
  %v2545 = vmax.f32 %v2127, 0.0
  %v2546 = vmax.f32 %v2132, 0.0
  %v2547 = vmax.f32 %v2137, 0.0
  %v2548 = vmax.f32 %v2142, 0.0
  %v2549 = vmax.f32 %v2147, 0.0
  %v2550 = vmax.f32 %v2152, 0.0
  %v2551 = vmax.f32 %v2157, 0.0
  %v2552 = vmax.f32 %v2162, 0.0
  %v2553 = vmax.f32 %v2167, 0.0
  %v2554 = vmax.f32 %v2172, 0.0
  %v2555 = vmax.f32 %v2177, 0.0
  %v2556 = vmax.f32 %v2182, 0.0
  %v2557 = vmax.f32 %v2187, 0.0
  %v2558 = vmax.f32 %v2192, 0.0
  %v2559 = vmax.f32 %v2197, 0.0
  %v2560 = vmax.f32 %v2202, 0.0
  %v2561 = vmax.f32 %v2207, 0.0
  %v2562 = vmax.f32 %v2212, 0.0
  %v2563 = vmax.f32 %v2217, 0.0
  %v2564 = vmax.f32 %v2222, 0.0
  %v2565 = vmax.f32 %v2227, 0.0
  %v2566 = vmax.f32 %v2232, 0.0
  %v2567 = vmax.f32 %v2237, 0.0
  %v2568 = vmax.f32 %v2242, 0.0
  %v2569 = vmax.f32 %v2247, 0.0
  %v2570 = vmax.f32 %v2252, 0.0
  %v2571 = vmax.f32 %v2257, 0.0
  %v2572 = vmax.f32 %v2262, 0.0
  %v2573 = vmax.f32 %v2267, 0.0
  %v2574 = vmax.f32 %v2272, 0.0
  %v2575 = vmax.f32 %v2277, 0.0
  %v2576 = vmax.f32 %v2282, 0.0
  %v2577 = vmax.f32 %v2287, 0.0
  %v2578 = vmax.f32 %v2292, 0.0
  %v2579 = vmax.f32 %v2297, 0.0
  %v2580 = vmax.f32 %v2302, 0.0
  %v2581 = vmax.f32 %v2307, 0.0
  %v2582 = vmax.f32 %v2312, 0.0
  %v2583 = vmax.f32 %v2317, 0.0
  %v2584 = vmax.f32 %v2322, 0.0
  %v2585 = vmax.f32 %v2327, 0.0
  %v2586 = vmax.f32 %v2332, 0.0
  %v2587 = vmax.f32 %v2337, 0.0
  %v2588 = vmax.f32 %v2342, 0.0
  %v2589 = vmax.f32 %v2347, 0.0
  %v2590 = vmax.f32 %v2352, 0.0
  %v2591 = vmax.f32 %v2357, 0.0
  %v2592 = vmax.f32 %v2362, 0.0
  %v2593 = vmax.f32 %v2367, 0.0
  %v2594 = vmax.f32 %v2372, 0.0
  %v2595 = vmax.f32 %v2377, 0.0
  %v2596 = vmax.f32 %v2382, 0.0
  %v2597 = vmax.f32 %v2387, 0.0
  %v2598 = vmax.f32 %v2392, 0.0
  %v2599 = vmax.f32 %v2397, 0.0
  %v2600 = vmax.f32 %v2402, 0.0
  %v2601 = vmax.f32 %v2407, 0.0
  %v2602 = vmax.f32 %v2412, 0.0
  %v2603 = vmax.f32 %v2417, 0.0
  %v2604 = vmax.f32 %v2422, 0.0
  %v2605 = vmax.f32 %v2427, 0.0
  %v2606 = vmax.f32 %v2432, 0.0
  %v2607 = vmax.f32 %v2437, 0.0
  %v2608 = vmax.f32 %v2442, 0.0
  %v2609 = vmax.f32 %v2447, 0.0
  %v2610 = vmax.f32 %v2452, 0.0
  %v2611 = vmax.f32 %v2457, 0.0
  %v2612 = vmax.f32 %v2462, 0.0
  %v2613 = vmax.f32 %v2467, 0.0
  %v2614 = vmax.f32 %v2472, 0.0
  %v2615 = vmax.f32 %v2477, 0.0
  %v2616 = vmax.f32 %v2482, 0.0
  %v2617 = vmax.f32 %v2487, 0.0
  %v2618 = vld [vmem:[%s5] sm:$0x1]
  %v2620 = vlaneseq
  %v2621 = vshrl.u32 %v2620, 7
  %v2622 = vsub.s32 0, %v2621
  %v2623 = vrot.slane %v2618, %v2622
  %v2625 = vmul.f32 %v2490, %v2623
  %v2626 = vmul.f32 %v2491, %v2623
  %v2627 = vmul.f32 %v2492, %v2623
  %v2628 = vmul.f32 %v2493, %v2623
  %v2629 = vmul.f32 %v2494, %v2623
  %v2630 = vmul.f32 %v2495, %v2623
  %v2631 = vmul.f32 %v2496, %v2623
  %v2632 = vmul.f32 %v2497, %v2623
  %v2633 = vmul.f32 %v2498, %v2623
  %v2634 = vmul.f32 %v2499, %v2623
  %v2635 = vmul.f32 %v2500, %v2623
  %v2636 = vmul.f32 %v2501, %v2623
  %v2637 = vmul.f32 %v2502, %v2623
  %v2638 = vmul.f32 %v2503, %v2623
  %v2639 = vmul.f32 %v2504, %v2623
  %v2640 = vmul.f32 %v2505, %v2623
  %v2641 = vmul.f32 %v2506, %v2623
  %v2642 = vmul.f32 %v2507, %v2623
  %v2643 = vmul.f32 %v2508, %v2623
  %v2644 = vmul.f32 %v2509, %v2623
  %v2645 = vmul.f32 %v2510, %v2623
  %v2646 = vmul.f32 %v2511, %v2623
  %v2647 = vmul.f32 %v2512, %v2623
  %v2648 = vmul.f32 %v2513, %v2623
  %v2649 = vmul.f32 %v2514, %v2623
  %v2650 = vmul.f32 %v2515, %v2623
  %v2651 = vmul.f32 %v2516, %v2623
  %v2652 = vmul.f32 %v2517, %v2623
  %v2653 = vmul.f32 %v2518, %v2623
  %v2654 = vmul.f32 %v2519, %v2623
  %v2655 = vmul.f32 %v2520, %v2623
  %v2656 = vmul.f32 %v2521, %v2623
  %v2657 = vmul.f32 %v2522, %v2623
  %v2658 = vmul.f32 %v2523, %v2623
  %v2659 = vmul.f32 %v2524, %v2623
  %v2660 = vmul.f32 %v2525, %v2623
  %v2661 = vmul.f32 %v2526, %v2623
  %v2662 = vmul.f32 %v2527, %v2623
  %v2663 = vmul.f32 %v2528, %v2623
  %v2664 = vmul.f32 %v2529, %v2623
  %v2665 = vmul.f32 %v2530, %v2623
  %v2666 = vmul.f32 %v2531, %v2623
  %v2667 = vmul.f32 %v2532, %v2623
  %v2668 = vmul.f32 %v2533, %v2623
  %v2669 = vmul.f32 %v2534, %v2623
  %v2670 = vmul.f32 %v2535, %v2623
  %v2671 = vmul.f32 %v2536, %v2623
  %v2672 = vmul.f32 %v2537, %v2623
  %v2673 = vmul.f32 %v2538, %v2623
  %v2674 = vmul.f32 %v2539, %v2623
  %v2675 = vmul.f32 %v2540, %v2623
  %v2676 = vmul.f32 %v2541, %v2623
  %v2677 = vmul.f32 %v2542, %v2623
  %v2678 = vmul.f32 %v2543, %v2623
  %v2679 = vmul.f32 %v2544, %v2623
  %v2680 = vmul.f32 %v2545, %v2623
  %v2681 = vmul.f32 %v2546, %v2623
  %v2682 = vmul.f32 %v2547, %v2623
  %v2683 = vmul.f32 %v2548, %v2623
  %v2684 = vmul.f32 %v2549, %v2623
  %v2685 = vmul.f32 %v2550, %v2623
  %v2686 = vmul.f32 %v2551, %v2623
  %v2687 = vmul.f32 %v2552, %v2623
  %v2688 = vmul.f32 %v2553, %v2623
  %v2689 = vmul.f32 %v2554, %v2623
  %v2690 = vmul.f32 %v2555, %v2623
  %v2691 = vmul.f32 %v2556, %v2623
  %v2692 = vmul.f32 %v2557, %v2623
  %v2693 = vmul.f32 %v2558, %v2623
  %v2694 = vmul.f32 %v2559, %v2623
  %v2695 = vmul.f32 %v2560, %v2623
  %v2696 = vmul.f32 %v2561, %v2623
  %v2697 = vmul.f32 %v2562, %v2623
  %v2698 = vmul.f32 %v2563, %v2623
  %v2699 = vmul.f32 %v2564, %v2623
  %v2700 = vmul.f32 %v2565, %v2623
  %v2701 = vmul.f32 %v2566, %v2623
  %v2702 = vmul.f32 %v2567, %v2623
  %v2703 = vmul.f32 %v2568, %v2623
  %v2704 = vmul.f32 %v2569, %v2623
  %v2705 = vmul.f32 %v2570, %v2623
  %v2706 = vmul.f32 %v2571, %v2623
  %v2707 = vmul.f32 %v2572, %v2623
  %v2708 = vmul.f32 %v2573, %v2623
  %v2709 = vmul.f32 %v2574, %v2623
  %v2710 = vmul.f32 %v2575, %v2623
  %v2711 = vmul.f32 %v2576, %v2623
  %v2712 = vmul.f32 %v2577, %v2623
  %v2713 = vmul.f32 %v2578, %v2623
  %v2714 = vmul.f32 %v2579, %v2623
  %v2715 = vmul.f32 %v2580, %v2623
  %v2716 = vmul.f32 %v2581, %v2623
  %v2717 = vmul.f32 %v2582, %v2623
  %v2718 = vmul.f32 %v2583, %v2623
  %v2719 = vmul.f32 %v2584, %v2623
  %v2720 = vmul.f32 %v2585, %v2623
  %v2721 = vmul.f32 %v2586, %v2623
  %v2722 = vmul.f32 %v2587, %v2623
  %v2723 = vmul.f32 %v2588, %v2623
  %v2724 = vmul.f32 %v2589, %v2623
  %v2725 = vmul.f32 %v2590, %v2623
  %v2726 = vmul.f32 %v2591, %v2623
  %v2727 = vmul.f32 %v2592, %v2623
  %v2728 = vmul.f32 %v2593, %v2623
  %v2729 = vmul.f32 %v2594, %v2623
  %v2730 = vmul.f32 %v2595, %v2623
  %v2731 = vmul.f32 %v2596, %v2623
  %v2732 = vmul.f32 %v2597, %v2623
  %v2733 = vmul.f32 %v2598, %v2623
  %v2734 = vmul.f32 %v2599, %v2623
  %v2735 = vmul.f32 %v2600, %v2623
  %v2736 = vmul.f32 %v2601, %v2623
  %v2737 = vmul.f32 %v2602, %v2623
  %v2738 = vmul.f32 %v2603, %v2623
  %v2739 = vmul.f32 %v2604, %v2623
  %v2740 = vmul.f32 %v2605, %v2623
  %v2741 = vmul.f32 %v2606, %v2623
  %v2742 = vmul.f32 %v2607, %v2623
  %v2743 = vmul.f32 %v2608, %v2623
  %v2744 = vmul.f32 %v2609, %v2623
  %v2745 = vmul.f32 %v2610, %v2623
  %v2746 = vmul.f32 %v2611, %v2623
  %v2747 = vmul.f32 %v2612, %v2623
  %v2748 = vmul.f32 %v2613, %v2623
  %v2749 = vmul.f32 %v2614, %v2623
  %v2750 = vmul.f32 %v2615, %v2623
  %v2751 = vmul.f32 %v2616, %v2623
  %v2752 = vmul.f32 %v2617, %v2623
  %v2753 = vsel %vm167, %v2625, 0.0
  %2754 = vadd.xlane.f32.xlu0 %v2753
  %v2755 = vpop.xlane.xlu0 %2754
  %v2756 = vsel %vm167, %v2626, 0.0
  %2757 = vadd.xlane.f32.xlu0 %v2756
  %v2758 = vpop.xlane.xlu0 %2757
  %v2759 = vsel %vm167, %v2627, 0.0
  %2760 = vadd.xlane.f32.xlu0 %v2759
  %v2761 = vpop.xlane.xlu0 %2760
  %v2762 = vsel %vm167, %v2628, 0.0
  %2763 = vadd.xlane.f32.xlu0 %v2762
  %v2764 = vpop.xlane.xlu0 %2763
  %v2765 = vsel %vm167, %v2629, 0.0
  %2766 = vadd.xlane.f32.xlu0 %v2765
  %v2767 = vpop.xlane.xlu0 %2766
  %v2768 = vsel %vm167, %v2630, 0.0
  %2769 = vadd.xlane.f32.xlu0 %v2768
  %v2770 = vpop.xlane.xlu0 %2769
  %v2771 = vsel %vm167, %v2631, 0.0
  %2772 = vadd.xlane.f32.xlu0 %v2771
  %v2773 = vpop.xlane.xlu0 %2772
  %v2774 = vsel %vm167, %v2632, 0.0
  %2775 = vadd.xlane.f32.xlu0 %v2774
  %v2776 = vpop.xlane.xlu0 %2775
  %v2777 = vsel %vm167, %v2633, 0.0
  %2778 = vadd.xlane.f32.xlu0 %v2777
  %v2779 = vpop.xlane.xlu0 %2778
  %v2780 = vsel %vm167, %v2634, 0.0
  %2781 = vadd.xlane.f32.xlu0 %v2780
  %v2782 = vpop.xlane.xlu0 %2781
  %v2783 = vsel %vm167, %v2635, 0.0
  %2784 = vadd.xlane.f32.xlu0 %v2783
  %v2785 = vpop.xlane.xlu0 %2784
  %v2786 = vsel %vm167, %v2636, 0.0
  %2787 = vadd.xlane.f32.xlu0 %v2786
  %v2788 = vpop.xlane.xlu0 %2787
  %v2789 = vsel %vm167, %v2637, 0.0
  %2790 = vadd.xlane.f32.xlu0 %v2789
  %v2791 = vpop.xlane.xlu0 %2790
  %v2792 = vsel %vm167, %v2638, 0.0
  %2793 = vadd.xlane.f32.xlu0 %v2792
  %v2794 = vpop.xlane.xlu0 %2793
  %v2795 = vsel %vm167, %v2639, 0.0
  %2796 = vadd.xlane.f32.xlu0 %v2795
  %v2797 = vpop.xlane.xlu0 %2796
  %v2798 = vsel %vm167, %v2640, 0.0
  %2799 = vadd.xlane.f32.xlu0 %v2798
  %v2800 = vpop.xlane.xlu0 %2799
  %v2801 = vsel %vm167, %v2641, 0.0
  %2802 = vadd.xlane.f32.xlu0 %v2801
  %v2803 = vpop.xlane.xlu0 %2802
  %v2804 = vsel %vm167, %v2642, 0.0
  %2805 = vadd.xlane.f32.xlu0 %v2804
  %v2806 = vpop.xlane.xlu0 %2805
  %v2807 = vsel %vm167, %v2643, 0.0
  %2808 = vadd.xlane.f32.xlu0 %v2807
  %v2809 = vpop.xlane.xlu0 %2808
  %v2810 = vsel %vm167, %v2644, 0.0
  %2811 = vadd.xlane.f32.xlu0 %v2810
  %v2812 = vpop.xlane.xlu0 %2811
  %v2813 = vsel %vm167, %v2645, 0.0
  %2814 = vadd.xlane.f32.xlu0 %v2813
  %v2815 = vpop.xlane.xlu0 %2814
  %v2816 = vsel %vm167, %v2646, 0.0
  %2817 = vadd.xlane.f32.xlu0 %v2816
  %v2818 = vpop.xlane.xlu0 %2817
  %v2819 = vsel %vm167, %v2647, 0.0
  %2820 = vadd.xlane.f32.xlu0 %v2819
  %v2821 = vpop.xlane.xlu0 %2820
  %v2822 = vsel %vm167, %v2648, 0.0
  %2823 = vadd.xlane.f32.xlu0 %v2822
  %v2824 = vpop.xlane.xlu0 %2823
  %v2825 = vsel %vm167, %v2649, 0.0
  %2826 = vadd.xlane.f32.xlu0 %v2825
  %v2827 = vpop.xlane.xlu0 %2826
  %v2828 = vsel %vm167, %v2650, 0.0
  %2829 = vadd.xlane.f32.xlu0 %v2828
  %v2830 = vpop.xlane.xlu0 %2829
  %v2831 = vsel %vm167, %v2651, 0.0
  %2832 = vadd.xlane.f32.xlu0 %v2831
  %v2833 = vpop.xlane.xlu0 %2832
  %v2834 = vsel %vm167, %v2652, 0.0
  %2835 = vadd.xlane.f32.xlu0 %v2834
  %v2836 = vpop.xlane.xlu0 %2835
  %v2837 = vsel %vm167, %v2653, 0.0
  %2838 = vadd.xlane.f32.xlu0 %v2837
  %v2839 = vpop.xlane.xlu0 %2838
  %v2840 = vsel %vm167, %v2654, 0.0
  %2841 = vadd.xlane.f32.xlu0 %v2840
  %v2842 = vpop.xlane.xlu0 %2841
  %v2843 = vsel %vm167, %v2655, 0.0
  %2844 = vadd.xlane.f32.xlu0 %v2843
  %v2845 = vpop.xlane.xlu0 %2844
  %v2846 = vsel %vm167, %v2656, 0.0
  %2847 = vadd.xlane.f32.xlu0 %v2846
  %v2848 = vpop.xlane.xlu0 %2847
  %v2849 = vsel %vm167, %v2657, 0.0
  %2850 = vadd.xlane.f32.xlu0 %v2849
  %v2851 = vpop.xlane.xlu0 %2850
  %v2852 = vsel %vm167, %v2658, 0.0
  %2853 = vadd.xlane.f32.xlu0 %v2852
  %v2854 = vpop.xlane.xlu0 %2853
  %v2855 = vsel %vm167, %v2659, 0.0
  %2856 = vadd.xlane.f32.xlu0 %v2855
  %v2857 = vpop.xlane.xlu0 %2856
  %v2858 = vsel %vm167, %v2660, 0.0
  %2859 = vadd.xlane.f32.xlu0 %v2858
  %v2860 = vpop.xlane.xlu0 %2859
  %v2861 = vsel %vm167, %v2661, 0.0
  %2862 = vadd.xlane.f32.xlu0 %v2861
  %v2863 = vpop.xlane.xlu0 %2862
  %v2864 = vsel %vm167, %v2662, 0.0
  %2865 = vadd.xlane.f32.xlu0 %v2864
  %v2866 = vpop.xlane.xlu0 %2865
  %v2867 = vsel %vm167, %v2663, 0.0
  %2868 = vadd.xlane.f32.xlu0 %v2867
  %v2869 = vpop.xlane.xlu0 %2868
  %v2870 = vsel %vm167, %v2664, 0.0
  %2871 = vadd.xlane.f32.xlu0 %v2870
  %v2872 = vpop.xlane.xlu0 %2871
  %v2873 = vsel %vm167, %v2665, 0.0
  %2874 = vadd.xlane.f32.xlu0 %v2873
  %v2875 = vpop.xlane.xlu0 %2874
  %v2876 = vsel %vm167, %v2666, 0.0
  %2877 = vadd.xlane.f32.xlu0 %v2876
  %v2878 = vpop.xlane.xlu0 %2877
  %v2879 = vsel %vm167, %v2667, 0.0
  %2880 = vadd.xlane.f32.xlu0 %v2879
  %v2881 = vpop.xlane.xlu0 %2880
  %v2882 = vsel %vm167, %v2668, 0.0
  %2883 = vadd.xlane.f32.xlu0 %v2882
  %v2884 = vpop.xlane.xlu0 %2883
  %v2885 = vsel %vm167, %v2669, 0.0
  %2886 = vadd.xlane.f32.xlu0 %v2885
  %v2887 = vpop.xlane.xlu0 %2886
  %v2888 = vsel %vm167, %v2670, 0.0
  %2889 = vadd.xlane.f32.xlu0 %v2888
  %v2890 = vpop.xlane.xlu0 %2889
  %v2891 = vsel %vm167, %v2671, 0.0
  %2892 = vadd.xlane.f32.xlu0 %v2891
  %v2893 = vpop.xlane.xlu0 %2892
  %v2894 = vsel %vm167, %v2672, 0.0
  %2895 = vadd.xlane.f32.xlu0 %v2894
  %v2896 = vpop.xlane.xlu0 %2895
  %v2897 = vsel %vm167, %v2673, 0.0
  %2898 = vadd.xlane.f32.xlu0 %v2897
  %v2899 = vpop.xlane.xlu0 %2898
  %v2900 = vsel %vm167, %v2674, 0.0
  %2901 = vadd.xlane.f32.xlu0 %v2900
  %v2902 = vpop.xlane.xlu0 %2901
  %v2903 = vsel %vm167, %v2675, 0.0
  %2904 = vadd.xlane.f32.xlu0 %v2903
  %v2905 = vpop.xlane.xlu0 %2904
  %v2906 = vsel %vm167, %v2676, 0.0
  %2907 = vadd.xlane.f32.xlu0 %v2906
  %v2908 = vpop.xlane.xlu0 %2907
  %v2909 = vsel %vm167, %v2677, 0.0
  %2910 = vadd.xlane.f32.xlu0 %v2909
  %v2911 = vpop.xlane.xlu0 %2910
  %v2912 = vsel %vm167, %v2678, 0.0
  %2913 = vadd.xlane.f32.xlu0 %v2912
  %v2914 = vpop.xlane.xlu0 %2913
  %v2915 = vsel %vm167, %v2679, 0.0
  %2916 = vadd.xlane.f32.xlu0 %v2915
  %v2917 = vpop.xlane.xlu0 %2916
  %v2918 = vsel %vm167, %v2680, 0.0
  %2919 = vadd.xlane.f32.xlu0 %v2918
  %v2920 = vpop.xlane.xlu0 %2919
  %v2921 = vsel %vm167, %v2681, 0.0
  %2922 = vadd.xlane.f32.xlu0 %v2921
  %v2923 = vpop.xlane.xlu0 %2922
  %v2924 = vsel %vm167, %v2682, 0.0
  %2925 = vadd.xlane.f32.xlu0 %v2924
  %v2926 = vpop.xlane.xlu0 %2925
  %v2927 = vsel %vm167, %v2683, 0.0
  %2928 = vadd.xlane.f32.xlu0 %v2927
  %v2929 = vpop.xlane.xlu0 %2928
  %v2930 = vsel %vm167, %v2684, 0.0
  %2931 = vadd.xlane.f32.xlu0 %v2930
  %v2932 = vpop.xlane.xlu0 %2931
  %v2933 = vsel %vm167, %v2685, 0.0
  %2934 = vadd.xlane.f32.xlu0 %v2933
  %v2935 = vpop.xlane.xlu0 %2934
  %v2936 = vsel %vm167, %v2686, 0.0
  %2937 = vadd.xlane.f32.xlu0 %v2936
  %v2938 = vpop.xlane.xlu0 %2937
  %v2939 = vsel %vm167, %v2687, 0.0
  %2940 = vadd.xlane.f32.xlu0 %v2939
  %v2941 = vpop.xlane.xlu0 %2940
  %v2942 = vsel %vm167, %v2688, 0.0
  %2943 = vadd.xlane.f32.xlu0 %v2942
  %v2944 = vpop.xlane.xlu0 %2943
  %v2945 = vsel %vm167, %v2689, 0.0
  %2946 = vadd.xlane.f32.xlu0 %v2945
  %v2947 = vpop.xlane.xlu0 %2946
  %v2948 = vsel %vm167, %v2690, 0.0
  %2949 = vadd.xlane.f32.xlu0 %v2948
  %v2950 = vpop.xlane.xlu0 %2949
  %v2951 = vsel %vm167, %v2691, 0.0
  %2952 = vadd.xlane.f32.xlu0 %v2951
  %v2953 = vpop.xlane.xlu0 %2952
  %v2954 = vsel %vm167, %v2692, 0.0
  %2955 = vadd.xlane.f32.xlu0 %v2954
  %v2956 = vpop.xlane.xlu0 %2955
  %v2957 = vsel %vm167, %v2693, 0.0
  %2958 = vadd.xlane.f32.xlu0 %v2957
  %v2959 = vpop.xlane.xlu0 %2958
  %v2960 = vsel %vm167, %v2694, 0.0
  %2961 = vadd.xlane.f32.xlu0 %v2960
  %v2962 = vpop.xlane.xlu0 %2961
  %v2963 = vsel %vm167, %v2695, 0.0
  %2964 = vadd.xlane.f32.xlu0 %v2963
  %v2965 = vpop.xlane.xlu0 %2964
  %v2966 = vsel %vm167, %v2696, 0.0
  %2967 = vadd.xlane.f32.xlu0 %v2966
  %v2968 = vpop.xlane.xlu0 %2967
  %v2969 = vsel %vm167, %v2697, 0.0
  %2970 = vadd.xlane.f32.xlu0 %v2969
  %v2971 = vpop.xlane.xlu0 %2970
  %v2972 = vsel %vm167, %v2698, 0.0
  %2973 = vadd.xlane.f32.xlu0 %v2972
  %v2974 = vpop.xlane.xlu0 %2973
  %v2975 = vsel %vm167, %v2699, 0.0
  %2976 = vadd.xlane.f32.xlu0 %v2975
  %v2977 = vpop.xlane.xlu0 %2976
  %v2978 = vsel %vm167, %v2700, 0.0
  %2979 = vadd.xlane.f32.xlu0 %v2978
  %v2980 = vpop.xlane.xlu0 %2979
  %v2981 = vsel %vm167, %v2701, 0.0
  %2982 = vadd.xlane.f32.xlu0 %v2981
  %v2983 = vpop.xlane.xlu0 %2982
  %v2984 = vsel %vm167, %v2702, 0.0
  %2985 = vadd.xlane.f32.xlu0 %v2984
  %v2986 = vpop.xlane.xlu0 %2985
  %v2987 = vsel %vm167, %v2703, 0.0
  %2988 = vadd.xlane.f32.xlu0 %v2987
  %v2989 = vpop.xlane.xlu0 %2988
  %v2990 = vsel %vm167, %v2704, 0.0
  %2991 = vadd.xlane.f32.xlu0 %v2990
  %v2992 = vpop.xlane.xlu0 %2991
  %v2993 = vsel %vm167, %v2705, 0.0
  %2994 = vadd.xlane.f32.xlu0 %v2993
  %v2995 = vpop.xlane.xlu0 %2994
  %v2996 = vsel %vm167, %v2706, 0.0
  %2997 = vadd.xlane.f32.xlu0 %v2996
  %v2998 = vpop.xlane.xlu0 %2997
  %v2999 = vsel %vm167, %v2707, 0.0
  %3000 = vadd.xlane.f32.xlu0 %v2999
  %v3001 = vpop.xlane.xlu0 %3000
  %v3002 = vsel %vm167, %v2708, 0.0
  %3003 = vadd.xlane.f32.xlu0 %v3002
  %v3004 = vpop.xlane.xlu0 %3003
  %v3005 = vsel %vm167, %v2709, 0.0
  %3006 = vadd.xlane.f32.xlu0 %v3005
  %v3007 = vpop.xlane.xlu0 %3006
  %v3008 = vsel %vm167, %v2710, 0.0
  %3009 = vadd.xlane.f32.xlu0 %v3008
  %v3010 = vpop.xlane.xlu0 %3009
  %v3011 = vsel %vm167, %v2711, 0.0
  %3012 = vadd.xlane.f32.xlu0 %v3011
  %v3013 = vpop.xlane.xlu0 %3012
  %v3014 = vsel %vm167, %v2712, 0.0
  %3015 = vadd.xlane.f32.xlu0 %v3014
  %v3016 = vpop.xlane.xlu0 %3015
  %v3017 = vsel %vm167, %v2713, 0.0
  %3018 = vadd.xlane.f32.xlu0 %v3017
  %v3019 = vpop.xlane.xlu0 %3018
  %v3020 = vsel %vm167, %v2714, 0.0
  %3021 = vadd.xlane.f32.xlu0 %v3020
  %v3022 = vpop.xlane.xlu0 %3021
  %v3023 = vsel %vm167, %v2715, 0.0
  %3024 = vadd.xlane.f32.xlu0 %v3023
  %v3025 = vpop.xlane.xlu0 %3024
  %v3026 = vsel %vm167, %v2716, 0.0
  %3027 = vadd.xlane.f32.xlu0 %v3026
  %v3028 = vpop.xlane.xlu0 %3027
  %v3029 = vsel %vm167, %v2717, 0.0
  %3030 = vadd.xlane.f32.xlu0 %v3029
  %v3031 = vpop.xlane.xlu0 %3030
  %v3032 = vsel %vm167, %v2718, 0.0
  %3033 = vadd.xlane.f32.xlu0 %v3032
  %v3034 = vpop.xlane.xlu0 %3033
  %v3035 = vsel %vm167, %v2719, 0.0
  %3036 = vadd.xlane.f32.xlu0 %v3035
  %v3037 = vpop.xlane.xlu0 %3036
  %v3038 = vsel %vm167, %v2720, 0.0
  %3039 = vadd.xlane.f32.xlu0 %v3038
  %v3040 = vpop.xlane.xlu0 %3039
  %v3041 = vsel %vm167, %v2721, 0.0
  %3042 = vadd.xlane.f32.xlu0 %v3041
  %v3043 = vpop.xlane.xlu0 %3042
  %v3044 = vsel %vm167, %v2722, 0.0
  %3045 = vadd.xlane.f32.xlu0 %v3044
  %v3046 = vpop.xlane.xlu0 %3045
  %v3047 = vsel %vm167, %v2723, 0.0
  %3048 = vadd.xlane.f32.xlu0 %v3047
  %v3049 = vpop.xlane.xlu0 %3048
  %v3050 = vsel %vm167, %v2724, 0.0
  %3051 = vadd.xlane.f32.xlu0 %v3050
  %v3052 = vpop.xlane.xlu0 %3051
  %v3053 = vsel %vm167, %v2725, 0.0
  %3054 = vadd.xlane.f32.xlu0 %v3053
  %v3055 = vpop.xlane.xlu0 %3054
  %v3056 = vsel %vm167, %v2726, 0.0
  %3057 = vadd.xlane.f32.xlu0 %v3056
  %v3058 = vpop.xlane.xlu0 %3057
  %v3059 = vsel %vm167, %v2727, 0.0
  %3060 = vadd.xlane.f32.xlu0 %v3059
  %v3061 = vpop.xlane.xlu0 %3060
  %v3062 = vsel %vm167, %v2728, 0.0
  %3063 = vadd.xlane.f32.xlu0 %v3062
  %v3064 = vpop.xlane.xlu0 %3063
  %v3065 = vsel %vm167, %v2729, 0.0
  %3066 = vadd.xlane.f32.xlu0 %v3065
  %v3067 = vpop.xlane.xlu0 %3066
  %v3068 = vsel %vm167, %v2730, 0.0
  %3069 = vadd.xlane.f32.xlu0 %v3068
  %v3070 = vpop.xlane.xlu0 %3069
  %v3071 = vsel %vm167, %v2731, 0.0
  %3072 = vadd.xlane.f32.xlu0 %v3071
  %v3073 = vpop.xlane.xlu0 %3072
  %v3074 = vsel %vm167, %v2732, 0.0
  %3075 = vadd.xlane.f32.xlu0 %v3074
  %v3076 = vpop.xlane.xlu0 %3075
  %v3077 = vsel %vm167, %v2733, 0.0
  %3078 = vadd.xlane.f32.xlu0 %v3077
  %v3079 = vpop.xlane.xlu0 %3078
  %v3080 = vsel %vm167, %v2734, 0.0
  %3081 = vadd.xlane.f32.xlu0 %v3080
  %v3082 = vpop.xlane.xlu0 %3081
  %v3083 = vsel %vm167, %v2735, 0.0
  %3084 = vadd.xlane.f32.xlu0 %v3083
  %v3085 = vpop.xlane.xlu0 %3084
  %v3086 = vsel %vm167, %v2736, 0.0
  %3087 = vadd.xlane.f32.xlu0 %v3086
  %v3088 = vpop.xlane.xlu0 %3087
  %v3089 = vsel %vm167, %v2737, 0.0
  %3090 = vadd.xlane.f32.xlu0 %v3089
  %v3091 = vpop.xlane.xlu0 %3090
  %v3092 = vsel %vm167, %v2738, 0.0
  %3093 = vadd.xlane.f32.xlu0 %v3092
  %v3094 = vpop.xlane.xlu0 %3093
  %v3095 = vsel %vm167, %v2739, 0.0
  %3096 = vadd.xlane.f32.xlu0 %v3095
  %v3097 = vpop.xlane.xlu0 %3096
  %v3098 = vsel %vm167, %v2740, 0.0
  %3099 = vadd.xlane.f32.xlu0 %v3098
  %v3100 = vpop.xlane.xlu0 %3099
  %v3101 = vsel %vm167, %v2741, 0.0
  %3102 = vadd.xlane.f32.xlu0 %v3101
  %v3103 = vpop.xlane.xlu0 %3102
  %v3104 = vsel %vm167, %v2742, 0.0
  %3105 = vadd.xlane.f32.xlu0 %v3104
  %v3106 = vpop.xlane.xlu0 %3105
  %v3107 = vsel %vm167, %v2743, 0.0
  %3108 = vadd.xlane.f32.xlu0 %v3107
  %v3109 = vpop.xlane.xlu0 %3108
  %v3110 = vsel %vm167, %v2744, 0.0
  %3111 = vadd.xlane.f32.xlu0 %v3110
  %v3112 = vpop.xlane.xlu0 %3111
  %v3113 = vsel %vm167, %v2745, 0.0
  %3114 = vadd.xlane.f32.xlu0 %v3113
  %v3115 = vpop.xlane.xlu0 %3114
  %v3116 = vsel %vm167, %v2746, 0.0
  %3117 = vadd.xlane.f32.xlu0 %v3116
  %v3118 = vpop.xlane.xlu0 %3117
  %v3119 = vsel %vm167, %v2747, 0.0
  %3120 = vadd.xlane.f32.xlu0 %v3119
  %v3121 = vpop.xlane.xlu0 %3120
  %v3122 = vsel %vm167, %v2748, 0.0
  %3123 = vadd.xlane.f32.xlu0 %v3122
  %v3124 = vpop.xlane.xlu0 %3123
  %v3125 = vsel %vm167, %v2749, 0.0
  %3126 = vadd.xlane.f32.xlu0 %v3125
  %v3127 = vpop.xlane.xlu0 %3126
  %v3128 = vsel %vm167, %v2750, 0.0
  %3129 = vadd.xlane.f32.xlu0 %v3128
  %v3130 = vpop.xlane.xlu0 %3129
  %v3131 = vsel %vm167, %v2751, 0.0
  %3132 = vadd.xlane.f32.xlu0 %v3131
  %v3133 = vpop.xlane.xlu0 %3132
  %v3134 = vsel %vm167, %v2752, 0.0
  %3135 = vadd.xlane.f32.xlu0 %v3134
  %v3136 = vpop.xlane.xlu0 %3135
  %v3137 = vld [vmem:[#allocation2] sm:$0x1]
  %v3139 = vlaneseq
  %v3140 = vshrl.u32 %v3139, 7
  %v3141 = vsub.s32 0, %v3140
  %v3142 = vrot.slane %v3137, %v3141
  %v3144 = vadd.f32 %v2755, %v3142
  %v3145 = vadd.f32 %v2758, %v3142
  %v3146 = vadd.f32 %v2761, %v3142
  %v3147 = vadd.f32 %v2764, %v3142
  %v3148 = vadd.f32 %v2767, %v3142
  %v3149 = vadd.f32 %v2770, %v3142
  %v3150 = vadd.f32 %v2773, %v3142
  %v3151 = vadd.f32 %v2776, %v3142
  %v3152 = vadd.f32 %v2779, %v3142
  %v3153 = vadd.f32 %v2782, %v3142
  %v3154 = vadd.f32 %v2785, %v3142
  %v3155 = vadd.f32 %v2788, %v3142
  %v3156 = vadd.f32 %v2791, %v3142
  %v3157 = vadd.f32 %v2794, %v3142
  %v3158 = vadd.f32 %v2797, %v3142
  %v3159 = vadd.f32 %v2800, %v3142
  %v3160 = vadd.f32 %v2803, %v3142
  %v3161 = vadd.f32 %v2806, %v3142
  %v3162 = vadd.f32 %v2809, %v3142
  %v3163 = vadd.f32 %v2812, %v3142
  %v3164 = vadd.f32 %v2815, %v3142
  %v3165 = vadd.f32 %v2818, %v3142
  %v3166 = vadd.f32 %v2821, %v3142
  %v3167 = vadd.f32 %v2824, %v3142
  %v3168 = vadd.f32 %v2827, %v3142
  %v3169 = vadd.f32 %v2830, %v3142
  %v3170 = vadd.f32 %v2833, %v3142
  %v3171 = vadd.f32 %v2836, %v3142
  %v3172 = vadd.f32 %v2839, %v3142
  %v3173 = vadd.f32 %v2842, %v3142
  %v3174 = vadd.f32 %v2845, %v3142
  %v3175 = vadd.f32 %v2848, %v3142
  %v3176 = vadd.f32 %v2851, %v3142
  %v3177 = vadd.f32 %v2854, %v3142
  %v3178 = vadd.f32 %v2857, %v3142
  %v3179 = vadd.f32 %v2860, %v3142
  %v3180 = vadd.f32 %v2863, %v3142
  %v3181 = vadd.f32 %v2866, %v3142
  %v3182 = vadd.f32 %v2869, %v3142
  %v3183 = vadd.f32 %v2872, %v3142
  %v3184 = vadd.f32 %v2875, %v3142
  %v3185 = vadd.f32 %v2878, %v3142
  %v3186 = vadd.f32 %v2881, %v3142
  %v3187 = vadd.f32 %v2884, %v3142
  %v3188 = vadd.f32 %v2887, %v3142
  %v3189 = vadd.f32 %v2890, %v3142
  %v3190 = vadd.f32 %v2893, %v3142
  %v3191 = vadd.f32 %v2896, %v3142
  %v3192 = vadd.f32 %v2899, %v3142
  %v3193 = vadd.f32 %v2902, %v3142
  %v3194 = vadd.f32 %v2905, %v3142
  %v3195 = vadd.f32 %v2908, %v3142
  %v3196 = vadd.f32 %v2911, %v3142
  %v3197 = vadd.f32 %v2914, %v3142
  %v3198 = vadd.f32 %v2917, %v3142
  %v3199 = vadd.f32 %v2920, %v3142
  %v3200 = vadd.f32 %v2923, %v3142
  %v3201 = vadd.f32 %v2926, %v3142
  %v3202 = vadd.f32 %v2929, %v3142
  %v3203 = vadd.f32 %v2932, %v3142
  %v3204 = vadd.f32 %v2935, %v3142
  %v3205 = vadd.f32 %v2938, %v3142
  %v3206 = vadd.f32 %v2941, %v3142
  %v3207 = vadd.f32 %v2944, %v3142
  %v3208 = vadd.f32 %v2947, %v3142
  %v3209 = vadd.f32 %v2950, %v3142
  %v3210 = vadd.f32 %v2953, %v3142
  %v3211 = vadd.f32 %v2956, %v3142
  %v3212 = vadd.f32 %v2959, %v3142
  %v3213 = vadd.f32 %v2962, %v3142
  %v3214 = vadd.f32 %v2965, %v3142
  %v3215 = vadd.f32 %v2968, %v3142
  %v3216 = vadd.f32 %v2971, %v3142
  %v3217 = vadd.f32 %v2974, %v3142
  %v3218 = vadd.f32 %v2977, %v3142
  %v3219 = vadd.f32 %v2980, %v3142
  %v3220 = vadd.f32 %v2983, %v3142
  %v3221 = vadd.f32 %v2986, %v3142
  %v3222 = vadd.f32 %v2989, %v3142
  %v3223 = vadd.f32 %v2992, %v3142
  %v3224 = vadd.f32 %v2995, %v3142
  %v3225 = vadd.f32 %v2998, %v3142
  %v3226 = vadd.f32 %v3001, %v3142
  %v3227 = vadd.f32 %v3004, %v3142
  %v3228 = vadd.f32 %v3007, %v3142
  %v3229 = vadd.f32 %v3010, %v3142
  %v3230 = vadd.f32 %v3013, %v3142
  %v3231 = vadd.f32 %v3016, %v3142
  %v3232 = vadd.f32 %v3019, %v3142
  %v3233 = vadd.f32 %v3022, %v3142
  %v3234 = vadd.f32 %v3025, %v3142
  %v3235 = vadd.f32 %v3028, %v3142
  %v3236 = vadd.f32 %v3031, %v3142
  %v3237 = vadd.f32 %v3034, %v3142
  %v3238 = vadd.f32 %v3037, %v3142
  %v3239 = vadd.f32 %v3040, %v3142
  %v3240 = vadd.f32 %v3043, %v3142
  %v3241 = vadd.f32 %v3046, %v3142
  %v3242 = vadd.f32 %v3049, %v3142
  %v3243 = vadd.f32 %v3052, %v3142
  %v3244 = vadd.f32 %v3055, %v3142
  %v3245 = vadd.f32 %v3058, %v3142
  %v3246 = vadd.f32 %v3061, %v3142
  %v3247 = vadd.f32 %v3064, %v3142
  %v3248 = vadd.f32 %v3067, %v3142
  %v3249 = vadd.f32 %v3070, %v3142
  %v3250 = vadd.f32 %v3073, %v3142
  %v3251 = vadd.f32 %v3076, %v3142
  %v3252 = vadd.f32 %v3079, %v3142
  %v3253 = vadd.f32 %v3082, %v3142
  %v3254 = vadd.f32 %v3085, %v3142
  %v3255 = vadd.f32 %v3088, %v3142
  %v3256 = vadd.f32 %v3091, %v3142
  %v3257 = vadd.f32 %v3094, %v3142
  %v3258 = vadd.f32 %v3097, %v3142
  %v3259 = vadd.f32 %v3100, %v3142
  %v3260 = vadd.f32 %v3103, %v3142
  %v3261 = vadd.f32 %v3106, %v3142
  %v3262 = vadd.f32 %v3109, %v3142
  %v3263 = vadd.f32 %v3112, %v3142
  %v3264 = vadd.f32 %v3115, %v3142
  %v3265 = vadd.f32 %v3118, %v3142
  %v3266 = vadd.f32 %v3121, %v3142
  %v3267 = vadd.f32 %v3124, %v3142
  %v3268 = vadd.f32 %v3127, %v3142
  %v3269 = vadd.f32 %v3130, %v3142
  %v3270 = vadd.f32 %v3133, %v3142
  %v3271 = vadd.f32 %v3136, %v3142
  %vm3272 = vcmask 7168
  %3273 = vst.msk [vmem:[%s7] sm:$0xff] %vm3272, %v3144
  %3274 = vst.msk [vmem:[%s7 + $0x8] sm:$0xff] %vm3272, %v3145
  %3275 = vst.msk [vmem:[%s7 + $0x10] sm:$0xff] %vm3272, %v3146
  %3276 = vst.msk [vmem:[%s7 + $0x18] sm:$0xff] %vm3272, %v3147
  %3277 = vst.msk [vmem:[%s7 + $0x20] sm:$0xff] %vm3272, %v3148
  %3278 = vst.msk [vmem:[%s7 + $0x28] sm:$0xff] %vm3272, %v3149
  %3279 = vst.msk [vmem:[%s7 + $0x30] sm:$0xff] %vm3272, %v3150
  %3280 = vst.msk [vmem:[%s7 + $0x38] sm:$0xff] %vm3272, %v3151
  %3281 = vst.msk [vmem:[%s7 + $0x40] sm:$0xff] %vm3272, %v3152
  %3282 = vst.msk [vmem:[%s7 + $0x48] sm:$0xff] %vm3272, %v3153
  %3283 = vst.msk [vmem:[%s7 + $0x50] sm:$0xff] %vm3272, %v3154
  %3284 = vst.msk [vmem:[%s7 + $0x58] sm:$0xff] %vm3272, %v3155
  %3285 = vst.msk [vmem:[%s7 + $0x60] sm:$0xff] %vm3272, %v3156
  %3286 = vst.msk [vmem:[%s7 + $0x68] sm:$0xff] %vm3272, %v3157
  %3287 = vst.msk [vmem:[%s7 + $0x70] sm:$0xff] %vm3272, %v3158
  %3288 = vst.msk [vmem:[%s7 + $0x78] sm:$0xff] %vm3272, %v3159
  %3289 = vst.msk [vmem:[%s7 + $0x80] sm:$0xff] %vm3272, %v3160
  %3290 = vst.msk [vmem:[%s7 + $0x88] sm:$0xff] %vm3272, %v3161
  %3291 = vst.msk [vmem:[%s7 + $0x90] sm:$0xff] %vm3272, %v3162
  %3292 = vst.msk [vmem:[%s7 + $0x98] sm:$0xff] %vm3272, %v3163
  %3293 = vst.msk [vmem:[%s7 + $0xa0] sm:$0xff] %vm3272, %v3164
  %3294 = vst.msk [vmem:[%s7 + $0xa8] sm:$0xff] %vm3272, %v3165
  %3295 = vst.msk [vmem:[%s7 + $0xb0] sm:$0xff] %vm3272, %v3166
  %3296 = vst.msk [vmem:[%s7 + $0xb8] sm:$0xff] %vm3272, %v3167
  %3297 = vst.msk [vmem:[%s7 + $0xc0] sm:$0xff] %vm3272, %v3168
  %3298 = vst.msk [vmem:[%s7 + $0xc8] sm:$0xff] %vm3272, %v3169
  %3299 = vst.msk [vmem:[%s7 + $0xd0] sm:$0xff] %vm3272, %v3170
  %3300 = vst.msk [vmem:[%s7 + $0xd8] sm:$0xff] %vm3272, %v3171
  %3301 = vst.msk [vmem:[%s7 + $0xe0] sm:$0xff] %vm3272, %v3172
  %3302 = vst.msk [vmem:[%s7 + $0xe8] sm:$0xff] %vm3272, %v3173
  %3303 = vst.msk [vmem:[%s7 + $0xf0] sm:$0xff] %vm3272, %v3174
  %3304 = vst.msk [vmem:[%s7 + $0xf8] sm:$0xff] %vm3272, %v3175
  %3305 = vst.msk [vmem:[%s7 + $0x100] sm:$0xff] %vm3272, %v3176
  %3306 = vst.msk [vmem:[%s7 + $0x108] sm:$0xff] %vm3272, %v3177
  %3307 = vst.msk [vmem:[%s7 + $0x110] sm:$0xff] %vm3272, %v3178
  %3308 = vst.msk [vmem:[%s7 + $0x118] sm:$0xff] %vm3272, %v3179
  %3309 = vst.msk [vmem:[%s7 + $0x120] sm:$0xff] %vm3272, %v3180
  %3310 = vst.msk [vmem:[%s7 + $0x128] sm:$0xff] %vm3272, %v3181
  %3311 = vst.msk [vmem:[%s7 + $0x130] sm:$0xff] %vm3272, %v3182
  %3312 = vst.msk [vmem:[%s7 + $0x138] sm:$0xff] %vm3272, %v3183
  %3313 = vst.msk [vmem:[%s7 + $0x140] sm:$0xff] %vm3272, %v3184
  %3314 = vst.msk [vmem:[%s7 + $0x148] sm:$0xff] %vm3272, %v3185
  %3315 = vst.msk [vmem:[%s7 + $0x150] sm:$0xff] %vm3272, %v3186
  %3316 = vst.msk [vmem:[%s7 + $0x158] sm:$0xff] %vm3272, %v3187
  %3317 = vst.msk [vmem:[%s7 + $0x160] sm:$0xff] %vm3272, %v3188
  %3318 = vst.msk [vmem:[%s7 + $0x168] sm:$0xff] %vm3272, %v3189
  %3319 = vst.msk [vmem:[%s7 + $0x170] sm:$0xff] %vm3272, %v3190
  %3320 = vst.msk [vmem:[%s7 + $0x178] sm:$0xff] %vm3272, %v3191
  %3321 = vst.msk [vmem:[%s7 + $0x180] sm:$0xff] %vm3272, %v3192
  %3322 = vst.msk [vmem:[%s7 + $0x188] sm:$0xff] %vm3272, %v3193
  %3323 = vst.msk [vmem:[%s7 + $0x190] sm:$0xff] %vm3272, %v3194
  %3324 = vst.msk [vmem:[%s7 + $0x198] sm:$0xff] %vm3272, %v3195
  %3325 = vst.msk [vmem:[%s7 + $0x1a0] sm:$0xff] %vm3272, %v3196
  %3326 = vst.msk [vmem:[%s7 + $0x1a8] sm:$0xff] %vm3272, %v3197
  %3327 = vst.msk [vmem:[%s7 + $0x1b0] sm:$0xff] %vm3272, %v3198
  %3328 = vst.msk [vmem:[%s7 + $0x1b8] sm:$0xff] %vm3272, %v3199
  %3329 = vst.msk [vmem:[%s7 + $0x1c0] sm:$0xff] %vm3272, %v3200
  %3330 = vst.msk [vmem:[%s7 + $0x1c8] sm:$0xff] %vm3272, %v3201
  %3331 = vst.msk [vmem:[%s7 + $0x1d0] sm:$0xff] %vm3272, %v3202
  %3332 = vst.msk [vmem:[%s7 + $0x1d8] sm:$0xff] %vm3272, %v3203
  %3333 = vst.msk [vmem:[%s7 + $0x1e0] sm:$0xff] %vm3272, %v3204
  %3334 = vst.msk [vmem:[%s7 + $0x1e8] sm:$0xff] %vm3272, %v3205
  %3335 = vst.msk [vmem:[%s7 + $0x1f0] sm:$0xff] %vm3272, %v3206
  %3336 = vst.msk [vmem:[%s7 + $0x1f8] sm:$0xff] %vm3272, %v3207
  %3337 = vst.msk [vmem:[%s7 + $0x200] sm:$0xff] %vm3272, %v3208
  %3338 = vst.msk [vmem:[%s7 + $0x208] sm:$0xff] %vm3272, %v3209
  %3339 = vst.msk [vmem:[%s7 + $0x210] sm:$0xff] %vm3272, %v3210
  %3340 = vst.msk [vmem:[%s7 + $0x218] sm:$0xff] %vm3272, %v3211
  %3341 = vst.msk [vmem:[%s7 + $0x220] sm:$0xff] %vm3272, %v3212
  %3342 = vst.msk [vmem:[%s7 + $0x228] sm:$0xff] %vm3272, %v3213
  %3343 = vst.msk [vmem:[%s7 + $0x230] sm:$0xff] %vm3272, %v3214
  %3344 = vst.msk [vmem:[%s7 + $0x238] sm:$0xff] %vm3272, %v3215
  %3345 = vst.msk [vmem:[%s7 + $0x240] sm:$0xff] %vm3272, %v3216
  %3346 = vst.msk [vmem:[%s7 + $0x248] sm:$0xff] %vm3272, %v3217
  %3347 = vst.msk [vmem:[%s7 + $0x250] sm:$0xff] %vm3272, %v3218
  %3348 = vst.msk [vmem:[%s7 + $0x258] sm:$0xff] %vm3272, %v3219
  %3349 = vst.msk [vmem:[%s7 + $0x260] sm:$0xff] %vm3272, %v3220
  %3350 = vst.msk [vmem:[%s7 + $0x268] sm:$0xff] %vm3272, %v3221
  %3351 = vst.msk [vmem:[%s7 + $0x270] sm:$0xff] %vm3272, %v3222
  %3352 = vst.msk [vmem:[%s7 + $0x278] sm:$0xff] %vm3272, %v3223
  %3353 = vst.msk [vmem:[%s7 + $0x280] sm:$0xff] %vm3272, %v3224
  %3354 = vst.msk [vmem:[%s7 + $0x288] sm:$0xff] %vm3272, %v3225
  %3355 = vst.msk [vmem:[%s7 + $0x290] sm:$0xff] %vm3272, %v3226
  %3356 = vst.msk [vmem:[%s7 + $0x298] sm:$0xff] %vm3272, %v3227
  %3357 = vst.msk [vmem:[%s7 + $0x2a0] sm:$0xff] %vm3272, %v3228
  %3358 = vst.msk [vmem:[%s7 + $0x2a8] sm:$0xff] %vm3272, %v3229
  %3359 = vst.msk [vmem:[%s7 + $0x2b0] sm:$0xff] %vm3272, %v3230
  %3360 = vst.msk [vmem:[%s7 + $0x2b8] sm:$0xff] %vm3272, %v3231
  %3361 = vst.msk [vmem:[%s7 + $0x2c0] sm:$0xff] %vm3272, %v3232
  %3362 = vst.msk [vmem:[%s7 + $0x2c8] sm:$0xff] %vm3272, %v3233
  %3363 = vst.msk [vmem:[%s7 + $0x2d0] sm:$0xff] %vm3272, %v3234
  %3364 = vst.msk [vmem:[%s7 + $0x2d8] sm:$0xff] %vm3272, %v3235
  %3365 = vst.msk [vmem:[%s7 + $0x2e0] sm:$0xff] %vm3272, %v3236
  %3366 = vst.msk [vmem:[%s7 + $0x2e8] sm:$0xff] %vm3272, %v3237
  %3367 = vst.msk [vmem:[%s7 + $0x2f0] sm:$0xff] %vm3272, %v3238
  %3368 = vst.msk [vmem:[%s7 + $0x2f8] sm:$0xff] %vm3272, %v3239
  %3369 = vst.msk [vmem:[%s7 + $0x300] sm:$0xff] %vm3272, %v3240
  %3370 = vst.msk [vmem:[%s7 + $0x308] sm:$0xff] %vm3272, %v3241
  %3371 = vst.msk [vmem:[%s7 + $0x310] sm:$0xff] %vm3272, %v3242
  %3372 = vst.msk [vmem:[%s7 + $0x318] sm:$0xff] %vm3272, %v3243
  %3373 = vst.msk [vmem:[%s7 + $0x320] sm:$0xff] %vm3272, %v3244
  %3374 = vst.msk [vmem:[%s7 + $0x328] sm:$0xff] %vm3272, %v3245
  %3375 = vst.msk [vmem:[%s7 + $0x330] sm:$0xff] %vm3272, %v3246
  %3376 = vst.msk [vmem:[%s7 + $0x338] sm:$0xff] %vm3272, %v3247
  %3377 = vst.msk [vmem:[%s7 + $0x340] sm:$0xff] %vm3272, %v3248
  %3378 = vst.msk [vmem:[%s7 + $0x348] sm:$0xff] %vm3272, %v3249
  %3379 = vst.msk [vmem:[%s7 + $0x350] sm:$0xff] %vm3272, %v3250
  %3380 = vst.msk [vmem:[%s7 + $0x358] sm:$0xff] %vm3272, %v3251
  %3381 = vst.msk [vmem:[%s7 + $0x360] sm:$0xff] %vm3272, %v3252
  %3382 = vst.msk [vmem:[%s7 + $0x368] sm:$0xff] %vm3272, %v3253
  %3383 = vst.msk [vmem:[%s7 + $0x370] sm:$0xff] %vm3272, %v3254
  %3384 = vst.msk [vmem:[%s7 + $0x378] sm:$0xff] %vm3272, %v3255
  %3385 = vst.msk [vmem:[%s7 + $0x380] sm:$0xff] %vm3272, %v3256
  %3386 = vst.msk [vmem:[%s7 + $0x388] sm:$0xff] %vm3272, %v3257
  %3387 = vst.msk [vmem:[%s7 + $0x390] sm:$0xff] %vm3272, %v3258
  %3388 = vst.msk [vmem:[%s7 + $0x398] sm:$0xff] %vm3272, %v3259
  %3389 = vst.msk [vmem:[%s7 + $0x3a0] sm:$0xff] %vm3272, %v3260
  %3390 = vst.msk [vmem:[%s7 + $0x3a8] sm:$0xff] %vm3272, %v3261
  %3391 = vst.msk [vmem:[%s7 + $0x3b0] sm:$0xff] %vm3272, %v3262
  %3392 = vst.msk [vmem:[%s7 + $0x3b8] sm:$0xff] %vm3272, %v3263
  %3393 = vst.msk [vmem:[%s7 + $0x3c0] sm:$0xff] %vm3272, %v3264
  %3394 = vst.msk [vmem:[%s7 + $0x3c8] sm:$0xff] %vm3272, %v3265
  %3395 = vst.msk [vmem:[%s7 + $0x3d0] sm:$0xff] %vm3272, %v3266
  %3396 = vst.msk [vmem:[%s7 + $0x3d8] sm:$0xff] %vm3272, %v3267
  %3397 = vst.msk [vmem:[%s7 + $0x3e0] sm:$0xff] %vm3272, %v3268
  %3398 = vst.msk [vmem:[%s7 + $0x3e8] sm:$0xff] %vm3272, %v3269
  %3399 = vst.msk [vmem:[%s7 + $0x3f0] sm:$0xff] %vm3272, %v3270
  %3400 = vst.msk [vmem:[%s7 + $0x3f8] sm:$0xff] %vm3272, %v3271
  // Predicated region
  $region30: #{tpu_custom_call.1} parent=0 // pred_check
    _
  $region31: #{tpu_custom_call.1} parent=0 // pred_check_branch
    %3402 = sbr.rel (0) target = $region33
  $region32: #{tpu_custom_call.1} parent=0 // pred_region
    _
  $region33: #{tpu_custom_call.1} parent=0 // pred_fallthru
    _
  // Predicated region
  $region34: #{tpu_custom_call.1} parent=0 // pred_check
    _
  $region35: #{tpu_custom_call.1} parent=0 // pred_check_branch
    %3404 = sbr.rel (0) target = $region37
  $region36: #{tpu_custom_call.1} parent=0 // pred_region
    _
  $region37: #{tpu_custom_call.1} parent=0 // pred_fallthru
    _

</llo_original>
